<compile_context>
chip_gen: v7x
topology: tpu7x:2x2x1
jax: 0.10.0
libtpu: 0.0.40
codegen_flags: <defaults>
</compile_context>

<pallas_src>
import functools

import jax
import jax.numpy as jnp
from jax.experimental import pallas as pl
from jax.experimental.pallas import tpu as pltpu

FEAT_C = 1280          # efficientnet_b0 feature channels
PATCH = 16             # patch size of the backbone stub
TILE_N_CAP = 256       # patch rows per grid step in the backbone kernel


def _vmem():
    return pl.BlockSpec(memory_space=pltpu.MemorySpace.VMEM)


def _pad_lanes(n):
    return -(-n // 128) * 128


# ----------------------------------------------------------------------------
# Kernel 1: backbone stub (patch-embed matmul + bias + ReLU) fused with the
#           spatial mean-pool.  Grid = (B, n_row_tiles); output (B,1,C) stays
#           resident across the reduction axis and accumulates per-batch sums.
# TODO(synk): stands in for efficientnet_b0(pretrained=True).features
# (pretrained weights not loadable in-script).
# ----------------------------------------------------------------------------
def _patch_pool_kernel(p_ref, w_ref, b_ref, o_ref, *, n_valid, tile_n):
    # p_ref : (1, tile_n, Kp)  bf16   patch rows of one batch element
    # w_ref : (Kp, C)          bf16   VMEM-resident patch-embedding weight
    # b_ref : (1, C)           f32
    # o_ref : (1, 1, C)        f32    pooled mean, resident over grid axis 1
    t = pl.program_id(1)

    feats = jnp.dot(p_ref[0], w_ref[...], preferred_element_type=jnp.float32)
    feats = jnp.maximum(feats + b_ref[...], 0.0)

    if n_valid % tile_n != 0:
        # mask zero-padded patch rows (their relu(bias) would pollute the mean)
        row = t * tile_n + jax.lax.broadcasted_iota(jnp.int32, (tile_n, 1), 0)
        feats = jnp.where(row < n_valid, feats, 0.0)

    tile_sum = jnp.sum(feats, axis=0, keepdims=True)          # (1, C)

    @pl.when(t == 0)
    def _():
        o_ref[...] = jnp.zeros_like(o_ref)

    o_ref[...] = o_ref[...] + tile_sum[None]

    @pl.when(t == pl.num_programs(1) - 1)
    def _():
        o_ref[...] = o_ref[...] * (1.0 / float(n_valid))


def backbone_pooled(patches, w, b):
    """mean_n(relu(patches @ w + b)) per batch.  patches: (B, Np, K) -> (B, C)."""
    B, n_p, k = patches.shape
    c = w.shape[1]
    tile_n = n_p if n_p <= TILE_N_CAP else TILE_N_CAP
    n_tiles = -(-n_p // tile_n)
    np_pad = n_tiles * tile_n
    if np_pad != n_p:
        patches = jnp.pad(patches, ((0, 0), (0, np_pad - n_p), (0, 0)))

    kern = functools.partial(_patch_pool_kernel, n_valid=n_p, tile_n=tile_n)
    out = pl.pallas_call(
        kern,
        out_shape=jax.ShapeDtypeStruct((B, 1, c), jnp.float32),
        grid_spec=pltpu.PrefetchScalarGridSpec(
            num_scalar_prefetch=0,
            grid=(B, n_tiles),
            in_specs=[
                pl.BlockSpec((1, tile_n, k), lambda bi, ti: (bi, ti, 0)),
                pl.BlockSpec((k, c), lambda bi, ti: (0, 0)),
                pl.BlockSpec((1, c), lambda bi, ti: (0, 0)),
            ],
            out_specs=pl.BlockSpec((1, 1, c), lambda bi, ti: (bi, 0, 0)),
        ),
        compiler_params=pltpu.CompilerParams(
            dimension_semantics=("parallel", "arbitrary")),
    )(patches.astype(jnp.bfloat16), w.astype(jnp.bfloat16),
      b.reshape(1, c).astype(jnp.float32))
    return out[:, 0, :]


# ----------------------------------------------------------------------------
# Kernel 2: fused head = two attention modules (on pooled features; exact since
#           mean_hw(x*y) == mean_hw(x)*y for spatially-constant y) + the fusion
#           MLP (Linear 2560->256, ReLU, Dropout(eval)=id, Linear 256->ncls,
#           Sigmoid).  fus_w1 is pre-split so no (B,2560) concat is needed.
# ----------------------------------------------------------------------------
def _head_kernel(pr_ref, pg_ref,
                 rw1_ref, rb1_ref, rw2_ref, rb2_ref,
                 gw1_ref, gb1_ref, gw2_ref, gb2_ref,
                 fw1r_ref, fw1g_ref, fb1_ref, fw2_ref, fb2_ref,
                 o_ref):
    def attend(p, w1, b1, w2, b2):
        h = jnp.maximum(
            jnp.dot(p, w1, preferred_element_type=jnp.float32) + b1, 0.0)
        y = jax.nn.sigmoid(
            jnp.dot(h, w2, preferred_element_type=jnp.float32) + b2)
        return p * y

    rv = attend(pr_ref[...], rw1_ref[...], rb1_ref[...], rw2_ref[...], rb2_ref[...])
    gv = attend(pg_ref[...], gw1_ref[...], gb1_ref[...], gw2_ref[...], gb2_ref[...])

    h = (jnp.dot(rv, fw1r_ref[...], preferred_element_type=jnp.float32)
         + jnp.dot(gv, fw1g_ref[...], preferred_element_type=jnp.float32)
         + fb1_ref[...])
    h = jnp.maximum(h, 0.0)                 # Dropout(0.5) is identity in eval
    o_ref[...] = jax.nn.sigmoid(
        jnp.dot(h, fw2_ref[...], preferred_element_type=jnp.float32) + fb2_ref[...])


def head(pooled_rgb, pooled_gray, params):
    B, c = pooled_rgb.shape
    hid = params["rgb_att_w1"].shape[1]
    hp = max(_pad_lanes(hid), 128)          # 160 -> 256 (zero-padded, exact)

    def pad_att(w1, b1, w2):
        return (jnp.pad(w1, ((0, 0), (0, hp - hid))),
                jnp.pad(b1, ((0, hp - hid),)).reshape(1, hp),
                jnp.pad(w2, ((0, hp - hid), (0, 0))))

    rw1, rb1, rw2 = pad_att(params["rgb_att_w1"], params["rgb_att_b1"],
                            params["rgb_att_w2"])
    gw1, gb1, gw2 = pad_att(params["gray_att_w1"], params["gray_att_b1"],
                            params["gray_att_w2"])
    fw1 = params["fus_w1"]
    ncls = params["fus_w2"].shape[1]

    return pl.pallas_call(
        _head_kernel,
        out_shape=jax.ShapeDtypeStruct((B, ncls), jnp.float32),
        in_specs=[_vmem()] * 15,
        out_specs=_vmem(),
    )(pooled_rgb, pooled_gray,
      rw1, rb1, rw2, params["rgb_att_b2"].reshape(1, c),
      gw1, gb1, gw2, params["gray_att_b2"].reshape(1, c),
      fw1[:c], fw1[c:], params["fus_b1"].reshape(1, -1),
      params["fus_w2"], params["fus_b2"].reshape(1, -1))


# ----------------------------------------------------------------------------
# Wrapper-side patch extraction (single NCHW->NHWC conversion + reshapes) and
# the algebraic fold of the gray 3x3 conv into the gray patch embedding.
# ----------------------------------------------------------------------------
def _rgb_patches(rgb_nchw):
    B, C, H, W = rgb_nchw.shape
    gh, gw = H // PATCH, W // PATCH
    x = jnp.transpose(rgb_nchw, (0, 2, 3, 1))                        # NHWC
    x = x.reshape(B, gh, PATCH, gw, PATCH, C).transpose(0, 1, 3, 2, 4, 5)
    return x.reshape(B, gh * gw, PATCH * PATCH * C)                  # (i,j,c) order


def _gray_windows(gray_nchw):
    """Overlapping (PATCH+2)x(PATCH+2) windows of the zero-padded gray image."""
    B, _, H, W = gray_nchw.shape
    gh, gw = H // PATCH, W // PATCH
    win = PATCH + 2
    xp = jnp.pad(gray_nchw[:, 0], ((0, 0), (1, 1), (1, 1)))          # (B,H+2,W+2)
    ridx = (jnp.arange(gh) * PATCH)[:, None] + jnp.arange(win)[None, :]
    cidx = (jnp.arange(gw) * PATCH)[:, None] + jnp.arange(win)[None, :]
    w = xp[:, ridx[:, None, :, None], cidx[None, :, None, :]]        # (B,gh,gw,18,18)
    return w.reshape(B, gh * gw, win * win)


def _fold_gray_conv(conv_w, conv_b, pe_w, pe_b):
    """Fold Conv2d(1,3,3,pad=1) into the gray patch-embedding weight.

    im2col(conv(x)) == windows18(x) @ T + bias_vec  (T sparse), hence
    relu(im2col(conv(x)) @ pe_w + pe_b)
        == relu(windows18(x) @ (T @ pe_w) + (bias_vec @ pe_w + pe_b)).
    """
    P, win = PATCH, PATCH + 2
    co, kh, kw, i, j = jnp.meshgrid(jnp.arange(3), jnp.arange(3), jnp.arange(3),
                                    jnp.arange(P), jnp.arange(P), indexing="ij")
    rows = ((i + kh) * win + (j + kw)).reshape(-1)
    cols = ((i * P + j) * 3 + co).reshape(-1)
    vals = conv_w[co, 0, kh, kw].reshape(-1)
    T = jnp.zeros((win * win, 3 * P * P), jnp.float32).at[rows, cols].add(vals)
    w_eff = T @ pe_w                                                 # (324, 1280)
    b_eff = jnp.tile(conv_b, P * P) @ pe_w + pe_b                    # (1280,)
    k_pad = _pad_lanes(win * win)                                    # 324 -> 384
    w_eff = jnp.pad(w_eff, ((0, k_pad - win * win), (0, 0)))
    return w_eff, b_eff, k_pad


# ----------------------------------------------------------------------------
# Parameters (deterministic) and full forward pass
# ----------------------------------------------------------------------------
def init_params(key, num_classes=1):
    def nrm(k, shape, fan_in):
        return jax.random.normal(k, shape, jnp.float32) / jnp.sqrt(float(fan_in))

    ks = jax.random.split(key, 16)
    pdim = 3 * PATCH * PATCH
    hid = FEAT_C // 8
    return dict(
        gray_conv_w=nrm(ks[0], (3, 1, 3, 3), 9),
        gray_conv_b=jnp.zeros((3,), jnp.float32),
        rgb_pe_w=nrm(ks[1], (pdim, FEAT_C), pdim),
        rgb_pe_b=jnp.zeros((FEAT_C,), jnp.float32),
        gray_pe_w=nrm(ks[2], (pdim, FEAT_C), pdim),
        gray_pe_b=jnp.zeros((FEAT_C,), jnp.float32),
        rgb_att_w1=nrm(ks[3], (FEAT_C, hid), FEAT_C),
        rgb_att_b1=jnp.zeros((hid,), jnp.float32),
        rgb_att_w2=nrm(ks[4], (hid, FEAT_C), hid),
        rgb_att_b2=jnp.zeros((FEAT_C,), jnp.float32),
        gray_att_w1=nrm(ks[5], (FEAT_C, hid), FEAT_C),
        gray_att_b1=jnp.zeros((hid,), jnp.float32),
        gray_att_w2=nrm(ks[6], (hid, FEAT_C), hid),
        gray_att_b2=jnp.zeros((FEAT_C,), jnp.float32),
        fus_w1=nrm(ks[7], (2 * FEAT_C, 256), 2 * FEAT_C),
        fus_b1=jnp.zeros((256,), jnp.float32),
        fus_w2=nrm(ks[8], (256, num_classes), 256),
        fus_b2=jnp.zeros((num_classes,), jnp.float32),
    )


def multi_branch_forward(params, rgb, gray):
    # RGB branch: patch-embed backbone stub fused with the spatial mean-pool.
    pooled_rgb = backbone_pooled(_rgb_patches(rgb),
                                 params["rgb_pe_w"], params["rgb_pe_b"])

    # Gray branch: 3x3 conv folded into the patch embedding (no g3 tensor).
    w_eff, b_eff, k_pad = _fold_gray_conv(params["gray_conv_w"],
                                          params["gray_conv_b"],
                                          params["gray_pe_w"],
                                          params["gray_pe_b"])
    gwin = _gray_windows(gray)
    gwin = jnp.pad(gwin, ((0, 0), (0, 0), (0, k_pad - gwin.shape[-1])))
    pooled_gray = backbone_pooled(gwin, w_eff, b_eff)

    # Attention (fused exactly with the spatial mean) + fusion MLP head.
    out = head(pooled_rgb, pooled_gray, params)                      # (B, ncls)
    return jnp.squeeze(out)                                          # matches .squeeze()


# ----------------------------------------------------------------------------
# Pure-JAX reference (direct conv, unfused attention/mean) for validation.
# ----------------------------------------------------------------------------
def reference_forward(params, rgb, gray):
    def backbone(patches, w, b):
        f = jnp.maximum(jnp.einsum("bnk,kc->bnc", patches, w) + b, 0.0)
        return jnp.mean(f, axis=1)

    def attend(p, w1, b1, w2, b2):
        h = jnp.maximum(p @ w1 + b1, 0.0)
        return p * jax.nn.sigmoid(h @ w2 + b2)

    pr = backbone(_rgb_patches(rgb), params["rgb_pe_w"], params["rgb_pe_b"])
    rv = attend(pr, params["rgb_att_w1"], params["rgb_att_b1"],
                params["rgb_att_w2"], params["rgb_att_b2"])

    B, _, H, W = gray.shape
    xp = jnp.pad(gray[:, 0], ((0, 0), (1, 1), (1, 1)))
    chans = []
    for co in range(3):
        acc = jnp.full((B, H, W), params["gray_conv_b"][co])
        for kh in range(3):
            for kw in range(3):
                acc = acc + params["gray_conv_w"][co, 0, kh, kw] * \
                    xp[:, kh:kh + H, kw:kw + W]
        chans.append(acc)
    g3 = jnp.stack(chans, axis=-1)                                   # (B,H,W,3)
    gh, gw = H // PATCH, W // PATCH
    gp = (g3.reshape(B, gh, PATCH, gw, PATCH, 3).transpose(0, 1, 3, 2, 4, 5)
          .reshape(B, gh * gw, 3 * PATCH * PATCH))
    pg = backbone(gp, params["gray_pe_w"], params["gray_pe_b"])
    gv = attend(pg, params["gray_att_w1"], params["gray_att_b1"],
                params["gray_att_w2"], params["gray_att_b2"])

    comb = jnp.concatenate([rv, gv], axis=1)
    h = jnp.maximum(comb @ params["fus_w1"] + params["fus_b1"], 0.0)
    return jnp.squeeze(jax.nn.sigmoid(h @ params["fus_w2"] + params["fus_b2"]))


if __name__ == "__main__":
    key = jax.random.PRNGKey(0)
    k_rgb, k_gray, k_par = jax.random.split(key, 3)

    B, H, W = 2, 32, 32
    rgb = jax.random.normal(k_rgb, (B, 3, H, W), jnp.float32)
    gray = jax.random.normal(k_gray, (B, 1, H, W), jnp.float32)
    params = init_params(k_par, num_classes=1)

    out = jax.jit(multi_branch_forward)(params, rgb, gray)
    out = jax.block_until_ready(out)

    ref = reference_forward(params, rgb, gray)
    assert out.shape == (B,)
    assert bool(jnp.all(jnp.isfinite(out)))
    # bf16 backbone matmul vs f32 reference -> loose but meaningful tolerance.
    assert bool(jnp.max(jnp.abs(out - ref)) < 5e-2), (out, ref)
    print("KERNEL_OK")
</pallas_src>

<mosaic_0001>
module attributes {stable_mosaic.version = 11 : i64} {
  func.func private @main(%arg0: i32) attributes {dimension_semantics = [#tpu.dimension_semantics<core_parallel>], iteration_bounds = array<i64: 2>, tpu.core_type = #tpu.core_type<sc_scalar_subcore>, window_params = []} {
    return
  }
}

module attributes {stable_mosaic.version = 11 : i64} {
  func.func private @main(%arg0: i32) attributes {dimension_semantics = [#tpu.dimension_semantics<core_parallel>], iteration_bounds = array<i64: 2>, tpu.core_type = #tpu.core_type<sc_scalar_subcore>, window_params = []} {
    return
  }
}

module attributes {stable_mosaic.version = 11 : i64} {
  func.func @_patch_pool_kernel(%arg0: i32, %arg1: i32, %arg2: memref<1x4x768xbf16, #tpu.memory_space<vmem>>, %arg3: memref<768x1280xbf16, #tpu.memory_space<vmem>>, %arg4: memref<1x1280xf32, #tpu.memory_space<vmem>>, %arg5: memref<1x1x1280xf32, #tpu.memory_space<vmem>>) attributes {dimension_semantics = [#tpu.dimension_semantics<parallel>, #tpu.dimension_semantics<arbitrary>], iteration_bounds = array<i64: 2, 1>, scalar_prefetch = 0 : i64, scratch_operands = 0 : i64, tpu.core_type = #tpu.core_type<tc>, window_params = [{transform_indices = @transform_0, window_bounds = array<i64: 1, 4, 768>}, {pipeline_mode = #tpu.pipeline_mode<synchronous>, transform_indices = @transform_1, window_bounds = array<i64: 768, 1280>}, {pipeline_mode = #tpu.pipeline_mode<synchronous>, transform_indices = @transform_2, window_bounds = array<i64: 1, 1280>}, {transform_indices = @transform_3, window_bounds = array<i64: 1, 1, 1280>}]} {
    %c0 = arith.constant 0 : index
    %c0_0 = arith.constant 0 : index
    %c0_1 = arith.constant 0 : index
    %0 = vector.load %arg2[%c0, %c0_0, %c0_1] : memref<1x4x768xbf16, #tpu.memory_space<vmem>>, vector<1x4x768xbf16>
    %1 = vector.shape_cast %0 : vector<1x4x768xbf16> to vector<4x768xbf16>
    %c0_2 = arith.constant 0 : index
    %c0_3 = arith.constant 0 : index
    %2 = vector.load %arg3[%c0_2, %c0_3] : memref<768x1280xbf16, #tpu.memory_space<vmem>>, vector<768x1280xbf16>
    %cst = arith.constant dense<0.000000e+00> : vector<4x1280xf32>
    %3 = tpu.matmul %1, %2, %cst {dimension_numbers = #tpu.dot_dimension_numbers<[1], [0], [0], [1], [0, 0, 1, 1], [], []>} : vector<4x768xbf16>, vector<768x1280xbf16>, vector<4x1280xf32> -> vector<4x1280xf32>
    %c0_4 = arith.constant 0 : index
    %c0_5 = arith.constant 0 : index
    %4 = vector.load %arg4[%c0_4, %c0_5] : memref<1x1280xf32, #tpu.memory_space<vmem>>, vector<1x1280xf32>
    %5 = vector.broadcast %4 : vector<1x1280xf32> to vector<4x1280xf32>
    %6 = arith.addf %3, %5 : vector<4x1280xf32>
    %cst_6 = arith.constant 0.000000e+00 : f32
    %7 = vector.broadcast %cst_6 : f32 to vector<4x1280xf32>
    %8 = arith.maximumf %6, %7 : vector<4x1280xf32>
    %cst_7 = arith.constant dense<0.000000e+00> : vector<1280xf32>
    %9 = vector.multi_reduction <add>, %8, %cst_7 [0] : vector<4x1280xf32> to vector<1280xf32>
    %10 = vector.shape_cast %9 : vector<1280xf32> to vector<1x1280xf32>
    %c0_i32 = arith.constant 0 : i32
    %11 = arith.cmpi eq, %arg1, %c0_i32 : i32
    %12 = arith.extui %11 : i1 to i32
    %c0_i32_8 = arith.constant 0 : i32
    %13 = arith.cmpi ne, %12, %c0_i32_8 : i32
    scf.if %13 {
      %cst_17 = arith.constant 0.000000e+00 : f32
      %21 = vector.broadcast %cst_17 : f32 to vector<1x1x1280xf32>
      %c0_18 = arith.constant 0 : index
      %c0_19 = arith.constant 0 : index
      %c0_20 = arith.constant 0 : index
      %22 = vector.load %arg5[%c0_18, %c0_19, %c0_20] : memref<1x1x1280xf32, #tpu.memory_space<vmem>>, vector<1x1x1280xf32>
      tpu.vector_store %arg5[%c0_18, %c0_19, %c0_20], %21 {strides = array<i32>} : memref<1x1x1280xf32, #tpu.memory_space<vmem>>, vector<1x1x1280xf32>,
    } else {
    }
    %c0_9 = arith.constant 0 : index
    %c0_10 = arith.constant 0 : index
    %c0_11 = arith.constant 0 : index
    %14 = vector.load %arg5[%c0_9, %c0_10, %c0_11] : memref<1x1x1280xf32, #tpu.memory_space<vmem>>, vector<1x1x1280xf32>
    %15 = vector.shape_cast %10 : vector<1x1280xf32> to vector<1x1x1280xf32>
    %16 = arith.addf %14, %15 : vector<1x1x1280xf32>
    %c0_12 = arith.constant 0 : index
    %c0_13 = arith.constant 0 : index
    %c0_14 = arith.constant 0 : index
    %17 = vector.load %arg5[%c0_12, %c0_13, %c0_14] : memref<1x1x1280xf32, #tpu.memory_space<vmem>>, vector<1x1x1280xf32>
    tpu.vector_store %arg5[%c0_12, %c0_13, %c0_14], %16 {strides = array<i32>} : memref<1x1x1280xf32, #tpu.memory_space<vmem>>, vector<1x1x1280xf32>,
    %c0_i32_15 = arith.constant 0 : i32
    %18 = arith.cmpi eq, %arg1, %c0_i32_15 : i32
    %19 = arith.extui %18 : i1 to i32
    %c0_i32_16 = arith.constant 0 : i32
    %20 = arith.cmpi ne, %19, %c0_i32_16 : i32
    scf.if %20 {
      %c0_17 = arith.constant 0 : index
      %c0_18 = arith.constant 0 : index
      %c0_19 = arith.constant 0 : index
      %21 = vector.load %arg5[%c0_17, %c0_18, %c0_19] : memref<1x1x1280xf32, #tpu.memory_space<vmem>>, vector<1x1x1280xf32>
      %cst_20 = arith.constant 2.500000e-01 : f32
      %22 = vector.broadcast %cst_20 : f32 to vector<1x1x1280xf32>
      %23 = arith.mulf %21, %22 : vector<1x1x1280xf32>
      %c0_21 = arith.constant 0 : index
      %c0_22 = arith.constant 0 : index
      %c0_23 = arith.constant 0 : index
      %24 = vector.load %arg5[%c0_21, %c0_22, %c0_23] : memref<1x1x1280xf32, #tpu.memory_space<vmem>>, vector<1x1x1280xf32>
      tpu.vector_store %arg5[%c0_21, %c0_22, %c0_23], %23 {strides = array<i32>} : memref<1x1x1280xf32, #tpu.memory_space<vmem>>, vector<1x1x1280xf32>,
    } else {
    }
    return
  }
  func.func @transform_0(%arg0: i32, %arg1: i32) -> (i32, i32, i32) {
    %c0_i32 = arith.constant 0 : i32
    %c0_i32_0 = arith.constant 0 : i32
    return %arg0, %arg1, %c0_i32 : i32, i32, i32
  }
  func.func @transform_1(%arg0: i32, %arg1: i32) -> (i32, i32) {
    %c0_i32 = arith.constant 0 : i32
    %c0_i32_0 = arith.constant 0 : i32
    %c0_i32_1 = arith.constant 0 : i32
    return %c0_i32, %c0_i32_0 : i32, i32
  }
  func.func @transform_2(%arg0: i32, %arg1: i32) -> (i32, i32) {
    %c0_i32 = arith.constant 0 : i32
    %c0_i32_0 = arith.constant 0 : i32
    %c0_i32_1 = arith.constant 0 : i32
    return %c0_i32, %c0_i32_0 : i32, i32
  }
  func.func @transform_3(%arg0: i32, %arg1: i32) -> (i32, i32, i32) {
    %c0_i32 = arith.constant 0 : i32
    %c0_i32_0 = arith.constant 0 : i32
    %c0_i32_1 = arith.constant 0 : i32
    return %arg0, %c0_i32, %c0_i32_0 : i32, i32, i32
  }
}

module attributes {stable_mosaic.version = 11 : i64} {
  func.func @_patch_pool_kernel(%arg0: i32, %arg1: i32, %arg2: memref<1x4x384xbf16, #tpu.memory_space<vmem>>, %arg3: memref<384x1280xbf16, #tpu.memory_space<vmem>>, %arg4: memref<1x1280xf32, #tpu.memory_space<vmem>>, %arg5: memref<1x1x1280xf32, #tpu.memory_space<vmem>>) attributes {dimension_semantics = [#tpu.dimension_semantics<parallel>, #tpu.dimension_semantics<arbitrary>], iteration_bounds = array<i64: 2, 1>, scalar_prefetch = 0 : i64, scratch_operands = 0 : i64, tpu.core_type = #tpu.core_type<tc>, window_params = [{transform_indices = @transform_0, window_bounds = array<i64: 1, 4, 384>}, {pipeline_mode = #tpu.pipeline_mode<synchronous>, transform_indices = @transform_1, window_bounds = array<i64: 384, 1280>}, {pipeline_mode = #tpu.pipeline_mode<synchronous>, transform_indices = @transform_2, window_bounds = array<i64: 1, 1280>}, {transform_indices = @transform_3, window_bounds = array<i64: 1, 1, 1280>}]} {
    %c0 = arith.constant 0 : index
    %c0_0 = arith.constant 0 : index
    %c0_1 = arith.constant 0 : index
    %0 = vector.load %arg2[%c0, %c0_0, %c0_1] : memref<1x4x384xbf16, #tpu.memory_space<vmem>>, vector<1x4x384xbf16>
    %1 = vector.shape_cast %0 : vector<1x4x384xbf16> to vector<4x384xbf16>
    %c0_2 = arith.constant 0 : index
    %c0_3 = arith.constant 0 : index
    %2 = vector.load %arg3[%c0_2, %c0_3] : memref<384x1280xbf16, #tpu.memory_space<vmem>>, vector<384x1280xbf16>
    %cst = arith.constant dense<0.000000e+00> : vector<4x1280xf32>
    %3 = tpu.matmul %1, %2, %cst {dimension_numbers = #tpu.dot_dimension_numbers<[1], [0], [0], [1], [0, 0, 1, 1], [], []>} : vector<4x384xbf16>, vector<384x1280xbf16>, vector<4x1280xf32> -> vector<4x1280xf32>
    %c0_4 = arith.constant 0 : index
    %c0_5 = arith.constant 0 : index
    %4 = vector.load %arg4[%c0_4, %c0_5] : memref<1x1280xf32, #tpu.memory_space<vmem>>, vector<1x1280xf32>
    %5 = vector.broadcast %4 : vector<1x1280xf32> to vector<4x1280xf32>
    %6 = arith.addf %3, %5 : vector<4x1280xf32>
    %cst_6 = arith.constant 0.000000e+00 : f32
    %7 = vector.broadcast %cst_6 : f32 to vector<4x1280xf32>
    %8 = arith.maximumf %6, %7 : vector<4x1280xf32>
    %cst_7 = arith.constant dense<0.000000e+00> : vector<1280xf32>
    %9 = vector.multi_reduction <add>, %8, %cst_7 [0] : vector<4x1280xf32> to vector<1280xf32>
    %10 = vector.shape_cast %9 : vector<1280xf32> to vector<1x1280xf32>
    %c0_i32 = arith.constant 0 : i32
    %11 = arith.cmpi eq, %arg1, %c0_i32 : i32
    %12 = arith.extui %11 : i1 to i32
    %c0_i32_8 = arith.constant 0 : i32
    %13 = arith.cmpi ne, %12, %c0_i32_8 : i32
    scf.if %13 {
      %cst_17 = arith.constant 0.000000e+00 : f32
      %21 = vector.broadcast %cst_17 : f32 to vector<1x1x1280xf32>
      %c0_18 = arith.constant 0 : index
      %c0_19 = arith.constant 0 : index
      %c0_20 = arith.constant 0 : index
      %22 = vector.load %arg5[%c0_18, %c0_19, %c0_20] : memref<1x1x1280xf32, #tpu.memory_space<vmem>>, vector<1x1x1280xf32>
      tpu.vector_store %arg5[%c0_18, %c0_19, %c0_20], %21 {strides = array<i32>} : memref<1x1x1280xf32, #tpu.memory_space<vmem>>, vector<1x1x1280xf32>,
    } else {
    }
    %c0_9 = arith.constant 0 : index
    %c0_10 = arith.constant 0 : index
    %c0_11 = arith.constant 0 : index
    %14 = vector.load %arg5[%c0_9, %c0_10, %c0_11] : memref<1x1x1280xf32, #tpu.memory_space<vmem>>, vector<1x1x1280xf32>
    %15 = vector.shape_cast %10 : vector<1x1280xf32> to vector<1x1x1280xf32>
    %16 = arith.addf %14, %15 : vector<1x1x1280xf32>
    %c0_12 = arith.constant 0 : index
    %c0_13 = arith.constant 0 : index
    %c0_14 = arith.constant 0 : index
    %17 = vector.load %arg5[%c0_12, %c0_13, %c0_14] : memref<1x1x1280xf32, #tpu.memory_space<vmem>>, vector<1x1x1280xf32>
    tpu.vector_store %arg5[%c0_12, %c0_13, %c0_14], %16 {strides = array<i32>} : memref<1x1x1280xf32, #tpu.memory_space<vmem>>, vector<1x1x1280xf32>,
    %c0_i32_15 = arith.constant 0 : i32
    %18 = arith.cmpi eq, %arg1, %c0_i32_15 : i32
    %19 = arith.extui %18 : i1 to i32
    %c0_i32_16 = arith.constant 0 : i32
    %20 = arith.cmpi ne, %19, %c0_i32_16 : i32
    scf.if %20 {
      %c0_17 = arith.constant 0 : index
      %c0_18 = arith.constant 0 : index
      %c0_19 = arith.constant 0 : index
      %21 = vector.load %arg5[%c0_17, %c0_18, %c0_19] : memref<1x1x1280xf32, #tpu.memory_space<vmem>>, vector<1x1x1280xf32>
      %cst_20 = arith.constant 2.500000e-01 : f32
      %22 = vector.broadcast %cst_20 : f32 to vector<1x1x1280xf32>
      %23 = arith.mulf %21, %22 : vector<1x1x1280xf32>
      %c0_21 = arith.constant 0 : index
      %c0_22 = arith.constant 0 : index
      %c0_23 = arith.constant 0 : index
      %24 = vector.load %arg5[%c0_21, %c0_22, %c0_23] : memref<1x1x1280xf32, #tpu.memory_space<vmem>>, vector<1x1x1280xf32>
      tpu.vector_store %arg5[%c0_21, %c0_22, %c0_23], %23 {strides = array<i32>} : memref<1x1x1280xf32, #tpu.memory_space<vmem>>, vector<1x1x1280xf32>,
    } else {
    }
    return
  }
  func.func @transform_0(%arg0: i32, %arg1: i32) -> (i32, i32, i32) {
    %c0_i32 = arith.constant 0 : i32
    %c0_i32_0 = arith.constant 0 : i32
    return %arg0, %arg1, %c0_i32 : i32, i32, i32
  }
  func.func @transform_1(%arg0: i32, %arg1: i32) -> (i32, i32) {
    %c0_i32 = arith.constant 0 : i32
    %c0_i32_0 = arith.constant 0 : i32
    %c0_i32_1 = arith.constant 0 : i32
    return %c0_i32, %c0_i32_0 : i32, i32
  }
  func.func @transform_2(%arg0: i32, %arg1: i32) -> (i32, i32) {
    %c0_i32 = arith.constant 0 : i32
    %c0_i32_0 = arith.constant 0 : i32
    %c0_i32_1 = arith.constant 0 : i32
    return %c0_i32, %c0_i32_0 : i32, i32
  }
  func.func @transform_3(%arg0: i32, %arg1: i32) -> (i32, i32, i32) {
    %c0_i32 = arith.constant 0 : i32
    %c0_i32_0 = arith.constant 0 : i32
    %c0_i32_1 = arith.constant 0 : i32
    return %arg0, %c0_i32, %c0_i32_0 : i32, i32, i32
  }
}

module attributes {stable_mosaic.version = 11 : i64} {
  func.func @_head_kernel(%arg0: memref<2x1280xf32, #tpu.memory_space<vmem>>, %arg1: memref<2x1280xf32, #tpu.memory_space<vmem>>, %arg2: memref<1280x256xf32, #tpu.memory_space<vmem>>, %arg3: memref<1x256xf32, #tpu.memory_space<vmem>>, %arg4: memref<256x1280xf32, #tpu.memory_space<vmem>>, %arg5: memref<1x1280xf32, #tpu.memory_space<vmem>>, %arg6: memref<1280x256xf32, #tpu.memory_space<vmem>>, %arg7: memref<1x256xf32, #tpu.memory_space<vmem>>, %arg8: memref<256x1280xf32, #tpu.memory_space<vmem>>, %arg9: memref<1x1280xf32, #tpu.memory_space<vmem>>, %arg10: memref<1280x256xf32, #tpu.memory_space<vmem>>, %arg11: memref<1280x256xf32, #tpu.memory_space<vmem>>, %arg12: memref<1x256xf32, #tpu.memory_space<vmem>>, %arg13: memref<256x1xf32, #tpu.memory_space<vmem>>, %arg14: memref<1x1xf32, #tpu.memory_space<vmem>>, %arg15: memref<2x1xf32, #tpu.memory_space<vmem>>) attributes {dimension_semantics = [], scalar_prefetch = 0 : i64, scratch_operands = 0 : i64, tpu.core_type = #tpu.core_type<tc>} {
    %c0 = arith.constant 0 : index
    %c0_0 = arith.constant 0 : index
    %0 = vector.load %arg0[%c0, %c0_0] : memref<2x1280xf32, #tpu.memory_space<vmem>>, vector<2x1280xf32>
    %c0_1 = arith.constant 0 : index
    %c0_2 = arith.constant 0 : index
    %1 = vector.load %arg2[%c0_1, %c0_2] : memref<1280x256xf32, #tpu.memory_space<vmem>>, vector<1280x256xf32>
    %c0_3 = arith.constant 0 : index
    %c0_4 = arith.constant 0 : index
    %2 = vector.load %arg3[%c0_3, %c0_4] : memref<1x256xf32, #tpu.memory_space<vmem>>, vector<1x256xf32>
    %c0_5 = arith.constant 0 : index
    %c0_6 = arith.constant 0 : index
    %3 = vector.load %arg4[%c0_5, %c0_6] : memref<256x1280xf32, #tpu.memory_space<vmem>>, vector<256x1280xf32>
    %c0_7 = arith.constant 0 : index
    %c0_8 = arith.constant 0 : index
    %4 = vector.load %arg5[%c0_7, %c0_8] : memref<1x1280xf32, #tpu.memory_space<vmem>>, vector<1x1280xf32>
    %cst = arith.constant dense<0.000000e+00> : vector<2x256xf32>
    %5 = tpu.matmul %0, %1, %cst {dimension_numbers = #tpu.dot_dimension_numbers<[1], [0], [0], [1], [0, 0, 1, 1], [], []>} : vector<2x1280xf32>, vector<1280x256xf32>, vector<2x256xf32> -> vector<2x256xf32>
    %6 = vector.broadcast %2 : vector<1x256xf32> to vector<2x256xf32>
    %7 = arith.addf %5, %6 : vector<2x256xf32>
    %cst_9 = arith.constant 0.000000e+00 : f32
    %8 = vector.broadcast %cst_9 : f32 to vector<2x256xf32>
    %9 = arith.maximumf %7, %8 : vector<2x256xf32>
    %cst_10 = arith.constant dense<0.000000e+00> : vector<2x1280xf32>
    %10 = tpu.matmul %9, %3, %cst_10 {dimension_numbers = #tpu.dot_dimension_numbers<[1], [0], [0], [1], [0, 0, 1, 1], [], []>} : vector<2x256xf32>, vector<256x1280xf32>, vector<2x1280xf32> -> vector<2x1280xf32>
    %11 = vector.broadcast %4 : vector<1x1280xf32> to vector<2x1280xf32>
    %12 = arith.addf %10, %11 : vector<2x1280xf32>
    %13 = arith.negf %12 : vector<2x1280xf32>
    %14 = math.exp %13 : vector<2x1280xf32>
    %cst_11 = arith.constant 1.000000e+00 : f32
    %15 = vector.broadcast %cst_11 : f32 to vector<2x1280xf32>
    %16 = arith.addf %15, %14 : vector<2x1280xf32>
    %17 = arith.divf %15, %16 : vector<2x1280xf32>
    %18 = arith.mulf %0, %17 : vector<2x1280xf32>
    %c0_12 = arith.constant 0 : index
    %c0_13 = arith.constant 0 : index
    %19 = vector.load %arg1[%c0_12, %c0_13] : memref<2x1280xf32, #tpu.memory_space<vmem>>, vector<2x1280xf32>
    %c0_14 = arith.constant 0 : index
    %c0_15 = arith.constant 0 : index
    %20 = vector.load %arg6[%c0_14, %c0_15] : memref<1280x256xf32, #tpu.memory_space<vmem>>, vector<1280x256xf32>
    %c0_16 = arith.constant 0 : index
    %c0_17 = arith.constant 0 : index
    %21 = vector.load %arg7[%c0_16, %c0_17] : memref<1x256xf32, #tpu.memory_space<vmem>>, vector<1x256xf32>
    %c0_18 = arith.constant 0 : index
    %c0_19 = arith.constant 0 : index
    %22 = vector.load %arg8[%c0_18, %c0_19] : memref<256x1280xf32, #tpu.memory_space<vmem>>, vector<256x1280xf32>
    %c0_20 = arith.constant 0 : index
    %c0_21 = arith.constant 0 : index
    %23 = vector.load %arg9[%c0_20, %c0_21] : memref<1x1280xf32, #tpu.memory_space<vmem>>, vector<1x1280xf32>
    %cst_22 = arith.constant dense<0.000000e+00> : vector<2x256xf32>
    %24 = tpu.matmul %19, %20, %cst_22 {dimension_numbers = #tpu.dot_dimension_numbers<[1], [0], [0], [1], [0, 0, 1, 1], [], []>} : vector<2x1280xf32>, vector<1280x256xf32>, vector<2x256xf32> -> vector<2x256xf32>
    %25 = vector.broadcast %21 : vector<1x256xf32> to vector<2x256xf32>
    %26 = arith.addf %24, %25 : vector<2x256xf32>
    %cst_23 = arith.constant 0.000000e+00 : f32
    %27 = vector.broadcast %cst_23 : f32 to vector<2x256xf32>
    %28 = arith.maximumf %26, %27 : vector<2x256xf32>
    %cst_24 = arith.constant dense<0.000000e+00> : vector<2x1280xf32>
    %29 = tpu.matmul %28, %22, %cst_24 {dimension_numbers = #tpu.dot_dimension_numbers<[1], [0], [0], [1], [0, 0, 1, 1], [], []>} : vector<2x256xf32>, vector<256x1280xf32>, vector<2x1280xf32> -> vector<2x1280xf32>
    %30 = vector.broadcast %23 : vector<1x1280xf32> to vector<2x1280xf32>
    %31 = arith.addf %29, %30 : vector<2x1280xf32>
    %32 = arith.negf %31 : vector<2x1280xf32>
    %33 = math.exp %32 : vector<2x1280xf32>
    %cst_25 = arith.constant 1.000000e+00 : f32
    %34 = vector.broadcast %cst_25 : f32 to vector<2x1280xf32>
    %35 = arith.addf %34, %33 : vector<2x1280xf32>
    %36 = arith.divf %34, %35 : vector<2x1280xf32>
    %37 = arith.mulf %19, %36 : vector<2x1280xf32>
    %c0_26 = arith.constant 0 : index
    %c0_27 = arith.constant 0 : index
    %38 = vector.load %arg10[%c0_26, %c0_27] : memref<1280x256xf32, #tpu.memory_space<vmem>>, vector<1280x256xf32>
    %cst_28 = arith.constant dense<0.000000e+00> : vector<2x256xf32>
    %39 = tpu.matmul %18, %38, %cst_28 {dimension_numbers = #tpu.dot_dimension_numbers<[1], [0], [0], [1], [0, 0, 1, 1], [], []>} : vector<2x1280xf32>, vector<1280x256xf32>, vector<2x256xf32> -> vector<2x256xf32>
    %c0_29 = arith.constant 0 : index
    %c0_30 = arith.constant 0 : index
    %40 = vector.load %arg11[%c0_29, %c0_30] : memref<1280x256xf32, #tpu.memory_space<vmem>>, vector<1280x256xf32>
    %cst_31 = arith.constant dense<0.000000e+00> : vector<2x256xf32>
    %41 = tpu.matmul %37, %40, %cst_31 {dimension_numbers = #tpu.dot_dimension_numbers<[1], [0], [0], [1], [0, 0, 1, 1], [], []>} : vector<2x1280xf32>, vector<1280x256xf32>, vector<2x256xf32> -> vector<2x256xf32>
    %42 = arith.addf %39, %41 : vector<2x256xf32>
    %c0_32 = arith.constant 0 : index
    %c0_33 = arith.constant 0 : index
    %43 = vector.load %arg12[%c0_32, %c0_33] : memref<1x256xf32, #tpu.memory_space<vmem>>, vector<1x256xf32>
    %44 = vector.broadcast %43 : vector<1x256xf32> to vector<2x256xf32>
    %45 = arith.addf %42, %44 : vector<2x256xf32>
    %cst_34 = arith.constant 0.000000e+00 : f32
    %46 = vector.broadcast %cst_34 : f32 to vector<2x256xf32>
    %47 = arith.maximumf %45, %46 : vector<2x256xf32>
    %c0_35 = arith.constant 0 : index
    %c0_36 = arith.constant 0 : index
    %48 = vector.load %arg13[%c0_35, %c0_36] : memref<256x1xf32, #tpu.memory_space<vmem>>, vector<256x1xf32>
    %cst_37 = arith.constant dense<0.000000e+00> : vector<2x1xf32>
    %49 = tpu.matmul %47, %48, %cst_37 {dimension_numbers = #tpu.dot_dimension_numbers<[1], [0], [0], [1], [0, 0, 1, 1], [], []>} : vector<2x256xf32>, vector<256x1xf32>, vector<2x1xf32> -> vector<2x1xf32>
    %c0_38 = arith.constant 0 : index
    %c0_39 = arith.constant 0 : index
    %50 = vector.load %arg14[%c0_38, %c0_39] : memref<1x1xf32, #tpu.memory_space<vmem>>, vector<1x1xf32>
    %51 = vector.broadcast %50 : vector<1x1xf32> to vector<2x1xf32>
    %52 = arith.addf %49, %51 : vector<2x1xf32>
    %53 = arith.negf %52 : vector<2x1xf32>
    %54 = math.exp %53 : vector<2x1xf32>
    %cst_40 = arith.constant 1.000000e+00 : f32
    %55 = vector.broadcast %cst_40 : f32 to vector<2x1xf32>
    %56 = arith.addf %55, %54 : vector<2x1xf32>
    %57 = arith.divf %55, %56 : vector<2x1xf32>
    %c0_41 = arith.constant 0 : index
    %c0_42 = arith.constant 0 : index
    %58 = vector.load %arg15[%c0_41, %c0_42] : memref<2x1xf32, #tpu.memory_space<vmem>>, vector<2x1xf32>
    tpu.vector_store %arg15[%c0_41, %c0_42], %57 {strides = array<i32>} : memref<2x1xf32, #tpu.memory_space<vmem>>, vector<2x1xf32>,
    return
  }
}

</mosaic_0001>

<llo_original>
// kernel: tile.8
$region0: #{tile.8}
  #allocation2 [shape = 's32[1]{0}', space=sflag, size = 0x4, scoped, tag = 'scoped memory for tile.8']
  %s0 = inlined_call_operand.hbm [shape: f32[3], index: 0, kind: input, shape index: {}]
  %s1 = inlined_call_operand.vmem [shape: f32[256,3], index: 1, kind: output, shape index: {}]
  $region1: #{tile.8} parent=0
    #allocation0 [shape = 'u8[512]{0}', space=vmem, size = 0x400, scoped, tag = 'operand span for operand 0']
    #allocation1 [shape = 's32[1]{0}', space=sflag, size = 0x4, scoped, tag = 'scoped memory for tile.8']
    %2 = vsyncpa [#allocation1], 0
    // Predicated region
    $region2: #{tile.8} parent=1 // pred_check
      _
    $region3: #{tile.8} parent=1 // pred_check_branch
      %4 = sbr.rel (0) target = $region5
    $region4: #{tile.8} parent=1 // pred_region
      %s6 = ssub.s32 16, 16
      %7 = vsyncadd [#allocation1], %s6
      %s9 = sshll.u32 [#allocation0], 4
      %s10 = int_to_ptr.vmem [resolvable:$true] %s9
      %12 = dma.hbm_to_vmem [thread:$0]  %s0, 16, %s10, [#allocation1]
    $region5: #{tile.8} parent=1 // pred_fallthru
      _
    // Predicated region
    $region6: #{tile.8} parent=1 // pred_check
      _
    $region7: #{tile.8} parent=1 // pred_check_branch
      %14 = sbr.rel (0) target = $region9
    $region8: #{tile.8} parent=1 // pred_region
      %15 = dma.done [#allocation1], 16
    $region9: #{tile.8} parent=1 // pred_fallthru
      _
    %v16 = vld [vmem:[#allocation0] ss:$0 sm:$0xff]
    %17 = vst [vmem:[%s1] sm:$0xff] %v16
    %s18 = scalar_lea.vmem %s1, 8
    %19 = vst [vmem:[%s18] sm:$0xff] %v16
    %s20 = scalar_lea.vmem %s1, 16
    %21 = vst [vmem:[%s20] sm:$0xff] %v16
    %s22 = scalar_lea.vmem %s1, 24
    %23 = vst [vmem:[%s22] sm:$0xff] %v16
    %s24 = scalar_lea.vmem %s1, 32
    %25 = vst [vmem:[%s24] sm:$0xff] %v16
    %s26 = scalar_lea.vmem %s1, 40
    %27 = vst [vmem:[%s26] sm:$0xff] %v16
    %s28 = scalar_lea.vmem %s1, 48
    %29 = vst [vmem:[%s28] sm:$0xff] %v16
    %s30 = scalar_lea.vmem %s1, 56
    %31 = vst [vmem:[%s30] sm:$0xff] %v16
    %s32 = scalar_lea.vmem %s1, 64
    %33 = vst [vmem:[%s32] sm:$0xff] %v16
    %s34 = scalar_lea.vmem %s1, 72
    %35 = vst [vmem:[%s34] sm:$0xff] %v16
    %s36 = scalar_lea.vmem %s1, 80
    %37 = vst [vmem:[%s36] sm:$0xff] %v16
    %s38 = scalar_lea.vmem %s1, 88
    %39 = vst [vmem:[%s38] sm:$0xff] %v16
    %s40 = scalar_lea.vmem %s1, 96
    %41 = vst [vmem:[%s40] sm:$0xff] %v16
    %s42 = scalar_lea.vmem %s1, 104
    %43 = vst [vmem:[%s42] sm:$0xff] %v16
    %s44 = scalar_lea.vmem %s1, 112
    %45 = vst [vmem:[%s44] sm:$0xff] %v16
    %s46 = scalar_lea.vmem %s1, 120
    %47 = vst [vmem:[%s46] sm:$0xff] %v16
    %s48 = scalar_lea.vmem %s1, 128
    %49 = vst [vmem:[%s48] sm:$0xff] %v16
    %s50 = scalar_lea.vmem %s1, 136
    %51 = vst [vmem:[%s50] sm:$0xff] %v16
    %s52 = scalar_lea.vmem %s1, 144
    %53 = vst [vmem:[%s52] sm:$0xff] %v16
    %s54 = scalar_lea.vmem %s1, 152
    %55 = vst [vmem:[%s54] sm:$0xff] %v16
    %s56 = scalar_lea.vmem %s1, 160
    %57 = vst [vmem:[%s56] sm:$0xff] %v16
    %s58 = scalar_lea.vmem %s1, 168
    %59 = vst [vmem:[%s58] sm:$0xff] %v16
    %s60 = scalar_lea.vmem %s1, 176
    %61 = vst [vmem:[%s60] sm:$0xff] %v16
    %s62 = scalar_lea.vmem %s1, 184
    %63 = vst [vmem:[%s62] sm:$0xff] %v16
    %s64 = scalar_lea.vmem %s1, 192
    %65 = vst [vmem:[%s64] sm:$0xff] %v16
    %s66 = scalar_lea.vmem %s1, 200
    %67 = vst [vmem:[%s66] sm:$0xff] %v16
    %s68 = scalar_lea.vmem %s1, 208
    %69 = vst [vmem:[%s68] sm:$0xff] %v16
    %s70 = scalar_lea.vmem %s1, 216
    %71 = vst [vmem:[%s70] sm:$0xff] %v16
    %s72 = scalar_lea.vmem %s1, 224
    %73 = vst [vmem:[%s72] sm:$0xff] %v16
    %s74 = scalar_lea.vmem %s1, 232
    %75 = vst [vmem:[%s74] sm:$0xff] %v16
    %s76 = scalar_lea.vmem %s1, 240
    %77 = vst [vmem:[%s76] sm:$0xff] %v16
    %s78 = scalar_lea.vmem %s1, 248
    %79 = vst [vmem:[%s78] sm:$0xff] %v16
    %80 = vsyncpa [#allocation1], 1

// kernel: tile.9
$region0: #{tile.9}
  %s0 = inlined_call_operand.vmem [shape: f32[256,3], index: 0, kind: input, shape index: {}]
  %s1 = inlined_call_operand.vmem [shape: f32[768], index: 1, kind: output, shape index: {}]
  %v2 = vld [vmem:[%s0] sm:$0x1]
  %s3 = scalar_lea.vmem %s0, 127
  %v4 = vld [vmem:[%s3] sm:$0x2]
  %vm5 = vcmask 1041409
  %v6 = vsel %vm5, %v4, %v2
  %vm7 = vcmask 23552
  %8 = vst.msk [vmem:[%s1] ss:$3 sm:$0x3] %vm7, %v6
  %s9 = scalar_lea.vmem %s0, 85
  %v10 = vld [vmem:[%s9] sm:$0x1]
  %s11 = scalar_lea.vmem %s0, 212
  %v12 = vld [vmem:[%s11] sm:$0x2]
  %vm13 = vcmask 1041409
  %v14 = vsel %vm13, %v12, %v10
  %s15 = scalar_lea.vmem %s0, 85
  %v16 = vld [vmem:[%s15] sm:$0x1]
  %s17 = scalar_lea.vmem %s0, 212
  %v18 = vld [vmem:[%s17] sm:$0x2]
  %vm19 = vcmask 1041409
  %v20 = vsel %vm19, %v18, %v16
  %vm21 = vcmask 7168
  %v22 = vsel %vm21, %v20, %v14
  %23 = vrot.lane.b32.xlu0 %v22, 127
  %v24 = vpop.permute.xlu0 %23
  %vm25 = vcmask 15360
  %s26 = scalar_lea.vmem %s1, 2
  %27 = vst.msk [vmem:[%s26] ss:$3 sm:$0x3] %vm25, %v24
  %vm28 = vcmask 1048568
  %s29 = scalar_lea.vmem %s1, 1
  %30 = vst.msk [vmem:[%s29] ss:$3 sm:$0x3] %vm28, %v24
  %s31 = scalar_lea.vmem %s0, 42
  %v32 = vld [vmem:[%s31] sm:$0x1]
  %s33 = scalar_lea.vmem %s0, 169
  %v34 = vld [vmem:[%s33] sm:$0x2]
  %vm35 = vcmask 1041409
  %v36 = vsel %vm35, %v34, %v32
  %s37 = scalar_lea.vmem %s0, 42
  %v38 = vld [vmem:[%s37] sm:$0x1]
  %s39 = scalar_lea.vmem %s0, 169
  %v40 = vld [vmem:[%s39] sm:$0x2]
  %vm41 = vcmask 1041409
  %v42 = vsel %vm41, %v40, %v38
  %vm43 = vcmask 15360
  %v44 = vsel %vm43, %v42, %v36
  %45 = vrot.lane.b32.xlu0 %v44, 126
  %v46 = vpop.permute.xlu0 %45
  %vm47 = vcmask 7168
  %s48 = scalar_lea.vmem %s1, 1
  %49 = vst.msk [vmem:[%s48] ss:$3 sm:$0x3] %vm47, %v46
  %vm50 = vcmask 1048560
  %51 = vst.msk [vmem:[%s1] ss:$3 sm:$0x3] %vm50, %v46
  %s52 = scalar_lea.vmem %s0, 127
  %v53 = vld [vmem:[%s52] sm:$0x1]
  %s54 = scalar_lea.vmem %s0, 254
  %v55 = vld [vmem:[%s54] sm:$0x2]
  %vm56 = vcmask 1041409
  %v57 = vsel %vm56, %v55, %v53
  %58 = vrot.lane.b32.xlu0 %v57, 125
  %v59 = vpop.permute.xlu0 %58
  %vm60 = vcmask 1048552
  %s61 = scalar_lea.vmem %s1, 2
  %62 = vst.msk [vmem:[%s61] ss:$3 sm:$0x3] %vm60, %v59
  %s63 = scalar_lea.vmem %s0, 84
  %v64 = vld [vmem:[%s63] sm:$0x1]
  %s65 = scalar_lea.vmem %s0, 211
  %v66 = vld [vmem:[%s65] sm:$0x2]
  %vm67 = vcmask 1041409
  %v68 = vsel %vm67, %v66, %v64
  %69 = vrot.lane.b32.xlu0 %v68, 124
  %v70 = vpop.permute.xlu0 %69
  %vm71 = vcmask 1040352
  %s72 = scalar_lea.vmem %s1, 1
  %73 = vst.msk [vmem:[%s72] ss:$3 sm:$0x3] %vm71, %v70
  %s74 = scalar_lea.vmem %s0, 41
  %v75 = vld [vmem:[%s74] sm:$0x1]
  %s76 = scalar_lea.vmem %s0, 168
  %v77 = vld [vmem:[%s76] sm:$0x2]
  %vm78 = vcmask 1041409
  %v79 = vsel %vm78, %v77, %v75
  %80 = vrot.lane.b32.xlu0 %v79, 123
  %v81 = vpop.permute.xlu0 %80
  %vm82 = vcmask 1032152
  %83 = vst.msk [vmem:[%s1] ss:$3 sm:$0x3] %vm82, %v81
  %s84 = scalar_lea.vmem %s0, 126
  %v85 = vld [vmem:[%s84] sm:$0x1]
  %s86 = scalar_lea.vmem %s0, 253
  %v87 = vld [vmem:[%s86] sm:$0x2]
  %vm88 = vcmask 1041409
  %v89 = vsel %vm88, %v87, %v85
  %90 = vrot.lane.b32.xlu0 %v89, 122
  %v91 = vpop.permute.xlu0 %90
  %vm92 = vcmask 1023952
  %s93 = scalar_lea.vmem %s1, 2
  %94 = vst.msk [vmem:[%s93] ss:$3 sm:$0x3] %vm92, %v91
  %s95 = scalar_lea.vmem %s0, 83
  %v96 = vld [vmem:[%s95] sm:$0x1]
  %s97 = scalar_lea.vmem %s0, 210
  %v98 = vld [vmem:[%s97] sm:$0x2]
  %vm99 = vcmask 1041409
  %v100 = vsel %vm99, %v98, %v96
  %101 = vrot.lane.b32.xlu0 %v100, 121
  %v102 = vpop.permute.xlu0 %101
  %vm103 = vcmask 1015752
  %s104 = scalar_lea.vmem %s1, 1
  %105 = vst.msk [vmem:[%s104] ss:$3 sm:$0x3] %vm103, %v102
  %s106 = scalar_lea.vmem %s0, 40
  %v107 = vld [vmem:[%s106] sm:$0x1]
  %s108 = scalar_lea.vmem %s0, 167
  %v109 = vld [vmem:[%s108] sm:$0x2]
  %vm110 = vcmask 1041409
  %v111 = vsel %vm110, %v109, %v107
  %112 = vrot.lane.b32.xlu0 %v111, 120
  %v113 = vpop.permute.xlu0 %112
  %vm114 = vcmask 1007552
  %115 = vst.msk [vmem:[%s1] ss:$3 sm:$0x3] %vm114, %v113
  %s116 = scalar_lea.vmem %s0, 125
  %v117 = vld [vmem:[%s116] sm:$0x1]
  %s118 = scalar_lea.vmem %s0, 252
  %v119 = vld [vmem:[%s118] sm:$0x2]
  %vm120 = vcmask 1041409
  %v121 = vsel %vm120, %v119, %v117
  %122 = vrot.lane.b32.xlu0 %v121, 119
  %v123 = vpop.permute.xlu0 %122
  %vm124 = vcmask 999352
  %s125 = scalar_lea.vmem %s1, 2
  %126 = vst.msk [vmem:[%s125] ss:$3 sm:$0x3] %vm124, %v123
  %s127 = scalar_lea.vmem %s0, 82
  %v128 = vld [vmem:[%s127] sm:$0x1]
  %s129 = scalar_lea.vmem %s0, 209
  %v130 = vld [vmem:[%s129] sm:$0x2]
  %vm131 = vcmask 1041409
  %v132 = vsel %vm131, %v130, %v128
  %133 = vrot.lane.b32.xlu0 %v132, 118
  %v134 = vpop.permute.xlu0 %133
  %vm135 = vcmask 991152
  %s136 = scalar_lea.vmem %s1, 1
  %137 = vst.msk [vmem:[%s136] ss:$3 sm:$0x3] %vm135, %v134
  %s138 = scalar_lea.vmem %s0, 39
  %v139 = vld [vmem:[%s138] sm:$0x1]
  %s140 = scalar_lea.vmem %s0, 166
  %v141 = vld [vmem:[%s140] sm:$0x2]
  %vm142 = vcmask 1041409
  %v143 = vsel %vm142, %v141, %v139
  %144 = vrot.lane.b32.xlu0 %v143, 117
  %v145 = vpop.permute.xlu0 %144
  %vm146 = vcmask 982952
  %147 = vst.msk [vmem:[%s1] ss:$3 sm:$0x3] %vm146, %v145
  %s148 = scalar_lea.vmem %s0, 124
  %v149 = vld [vmem:[%s148] sm:$0x1]
  %s150 = scalar_lea.vmem %s0, 251
  %v151 = vld [vmem:[%s150] sm:$0x2]
  %vm152 = vcmask 1041409
  %v153 = vsel %vm152, %v151, %v149
  %154 = vrot.lane.b32.xlu0 %v153, 116
  %v155 = vpop.permute.xlu0 %154
  %vm156 = vcmask 974752
  %s157 = scalar_lea.vmem %s1, 2
  %158 = vst.msk [vmem:[%s157] ss:$3 sm:$0x3] %vm156, %v155
  %s159 = scalar_lea.vmem %s0, 81
  %v160 = vld [vmem:[%s159] sm:$0x1]
  %s161 = scalar_lea.vmem %s0, 208
  %v162 = vld [vmem:[%s161] sm:$0x2]
  %vm163 = vcmask 1041409
  %v164 = vsel %vm163, %v162, %v160
  %165 = vrot.lane.b32.xlu0 %v164, 115
  %v166 = vpop.permute.xlu0 %165
  %vm167 = vcmask 966552
  %s168 = scalar_lea.vmem %s1, 1
  %169 = vst.msk [vmem:[%s168] ss:$3 sm:$0x3] %vm167, %v166
  %s170 = scalar_lea.vmem %s0, 38
  %v171 = vld [vmem:[%s170] sm:$0x1]
  %s172 = scalar_lea.vmem %s0, 165
  %v173 = vld [vmem:[%s172] sm:$0x2]
  %vm174 = vcmask 1041409
  %v175 = vsel %vm174, %v173, %v171
  %176 = vrot.lane.b32.xlu0 %v175, 114
  %v177 = vpop.permute.xlu0 %176
  %vm178 = vcmask 958352
  %179 = vst.msk [vmem:[%s1] ss:$3 sm:$0x3] %vm178, %v177
  %s180 = scalar_lea.vmem %s0, 123
  %v181 = vld [vmem:[%s180] sm:$0x1]
  %s182 = scalar_lea.vmem %s0, 250
  %v183 = vld [vmem:[%s182] sm:$0x2]
  %vm184 = vcmask 1041409
  %v185 = vsel %vm184, %v183, %v181
  %186 = vrot.lane.b32.xlu0 %v185, 113
  %v187 = vpop.permute.xlu0 %186
  %vm188 = vcmask 950152
  %s189 = scalar_lea.vmem %s1, 2
  %190 = vst.msk [vmem:[%s189] ss:$3 sm:$0x3] %vm188, %v187
  %s191 = scalar_lea.vmem %s0, 80
  %v192 = vld [vmem:[%s191] sm:$0x1]
  %s193 = scalar_lea.vmem %s0, 207
  %v194 = vld [vmem:[%s193] sm:$0x2]
  %vm195 = vcmask 1041409
  %v196 = vsel %vm195, %v194, %v192
  %197 = vrot.lane.b32.xlu0 %v196, 112
  %v198 = vpop.permute.xlu0 %197
  %vm199 = vcmask 941952
  %s200 = scalar_lea.vmem %s1, 1
  %201 = vst.msk [vmem:[%s200] ss:$3 sm:$0x3] %vm199, %v198
  %s202 = scalar_lea.vmem %s0, 37
  %v203 = vld [vmem:[%s202] sm:$0x1]
  %s204 = scalar_lea.vmem %s0, 164
  %v205 = vld [vmem:[%s204] sm:$0x2]
  %vm206 = vcmask 1041409
  %v207 = vsel %vm206, %v205, %v203
  %208 = vrot.lane.b32.xlu0 %v207, 111
  %v209 = vpop.permute.xlu0 %208
  %vm210 = vcmask 933752
  %211 = vst.msk [vmem:[%s1] ss:$3 sm:$0x3] %vm210, %v209
  %s212 = scalar_lea.vmem %s0, 122
  %v213 = vld [vmem:[%s212] sm:$0x1]
  %s214 = scalar_lea.vmem %s0, 249
  %v215 = vld [vmem:[%s214] sm:$0x2]
  %vm216 = vcmask 1041409
  %v217 = vsel %vm216, %v215, %v213
  %218 = vrot.lane.b32.xlu0 %v217, 110
  %v219 = vpop.permute.xlu0 %218
  %vm220 = vcmask 925552
  %s221 = scalar_lea.vmem %s1, 2
  %222 = vst.msk [vmem:[%s221] ss:$3 sm:$0x3] %vm220, %v219
  %s223 = scalar_lea.vmem %s0, 79
  %v224 = vld [vmem:[%s223] sm:$0x1]
  %s225 = scalar_lea.vmem %s0, 206
  %v226 = vld [vmem:[%s225] sm:$0x2]
  %vm227 = vcmask 1041409
  %v228 = vsel %vm227, %v226, %v224
  %229 = vrot.lane.b32.xlu0 %v228, 109
  %v230 = vpop.permute.xlu0 %229
  %vm231 = vcmask 917352
  %s232 = scalar_lea.vmem %s1, 1
  %233 = vst.msk [vmem:[%s232] ss:$3 sm:$0x3] %vm231, %v230
  %s234 = scalar_lea.vmem %s0, 36
  %v235 = vld [vmem:[%s234] sm:$0x1]
  %s236 = scalar_lea.vmem %s0, 163
  %v237 = vld [vmem:[%s236] sm:$0x2]
  %vm238 = vcmask 1041409
  %v239 = vsel %vm238, %v237, %v235
  %240 = vrot.lane.b32.xlu0 %v239, 108
  %v241 = vpop.permute.xlu0 %240
  %vm242 = vcmask 909152
  %243 = vst.msk [vmem:[%s1] ss:$3 sm:$0x3] %vm242, %v241
  %s244 = scalar_lea.vmem %s0, 121
  %v245 = vld [vmem:[%s244] sm:$0x1]
  %s246 = scalar_lea.vmem %s0, 248
  %v247 = vld [vmem:[%s246] sm:$0x2]
  %vm248 = vcmask 1041409
  %v249 = vsel %vm248, %v247, %v245
  %250 = vrot.lane.b32.xlu0 %v249, 107
  %v251 = vpop.permute.xlu0 %250
  %vm252 = vcmask 900952
  %s253 = scalar_lea.vmem %s1, 2
  %254 = vst.msk [vmem:[%s253] ss:$3 sm:$0x3] %vm252, %v251
  %s255 = scalar_lea.vmem %s0, 78
  %v256 = vld [vmem:[%s255] sm:$0x1]
  %s257 = scalar_lea.vmem %s0, 205
  %v258 = vld [vmem:[%s257] sm:$0x2]
  %vm259 = vcmask 1041409
  %v260 = vsel %vm259, %v258, %v256
  %261 = vrot.lane.b32.xlu0 %v260, 106
  %v262 = vpop.permute.xlu0 %261
  %vm263 = vcmask 892752
  %s264 = scalar_lea.vmem %s1, 1
  %265 = vst.msk [vmem:[%s264] ss:$3 sm:$0x3] %vm263, %v262
  %s266 = scalar_lea.vmem %s0, 35
  %v267 = vld [vmem:[%s266] sm:$0x1]
  %s268 = scalar_lea.vmem %s0, 162
  %v269 = vld [vmem:[%s268] sm:$0x2]
  %vm270 = vcmask 1041409
  %v271 = vsel %vm270, %v269, %v267
  %272 = vrot.lane.b32.xlu0 %v271, 105
  %v273 = vpop.permute.xlu0 %272
  %vm274 = vcmask 884552
  %275 = vst.msk [vmem:[%s1] ss:$3 sm:$0x3] %vm274, %v273
  %s276 = scalar_lea.vmem %s0, 120
  %v277 = vld [vmem:[%s276] sm:$0x1]
  %s278 = scalar_lea.vmem %s0, 247
  %v279 = vld [vmem:[%s278] sm:$0x2]
  %vm280 = vcmask 1041409
  %v281 = vsel %vm280, %v279, %v277
  %282 = vrot.lane.b32.xlu0 %v281, 104
  %v283 = vpop.permute.xlu0 %282
  %vm284 = vcmask 876352
  %s285 = scalar_lea.vmem %s1, 2
  %286 = vst.msk [vmem:[%s285] ss:$3 sm:$0x3] %vm284, %v283
  %s287 = scalar_lea.vmem %s0, 77
  %v288 = vld [vmem:[%s287] sm:$0x1]
  %s289 = scalar_lea.vmem %s0, 204
  %v290 = vld [vmem:[%s289] sm:$0x2]
  %vm291 = vcmask 1041409
  %v292 = vsel %vm291, %v290, %v288
  %293 = vrot.lane.b32.xlu0 %v292, 103
  %v294 = vpop.permute.xlu0 %293
  %vm295 = vcmask 868152
  %s296 = scalar_lea.vmem %s1, 1
  %297 = vst.msk [vmem:[%s296] ss:$3 sm:$0x3] %vm295, %v294
  %s298 = scalar_lea.vmem %s0, 34
  %v299 = vld [vmem:[%s298] sm:$0x1]
  %s300 = scalar_lea.vmem %s0, 161
  %v301 = vld [vmem:[%s300] sm:$0x2]
  %vm302 = vcmask 1041409
  %v303 = vsel %vm302, %v301, %v299
  %304 = vrot.lane.b32.xlu0 %v303, 102
  %v305 = vpop.permute.xlu0 %304
  %vm306 = vcmask 859952
  %307 = vst.msk [vmem:[%s1] ss:$3 sm:$0x3] %vm306, %v305
  %s308 = scalar_lea.vmem %s0, 119
  %v309 = vld [vmem:[%s308] sm:$0x1]
  %s310 = scalar_lea.vmem %s0, 246
  %v311 = vld [vmem:[%s310] sm:$0x2]
  %vm312 = vcmask 1041409
  %v313 = vsel %vm312, %v311, %v309
  %314 = vrot.lane.b32.xlu0 %v313, 101
  %v315 = vpop.permute.xlu0 %314
  %vm316 = vcmask 851752
  %s317 = scalar_lea.vmem %s1, 2
  %318 = vst.msk [vmem:[%s317] ss:$3 sm:$0x3] %vm316, %v315
  %s319 = scalar_lea.vmem %s0, 76
  %v320 = vld [vmem:[%s319] sm:$0x1]
  %s321 = scalar_lea.vmem %s0, 203
  %v322 = vld [vmem:[%s321] sm:$0x2]
  %vm323 = vcmask 1041409
  %v324 = vsel %vm323, %v322, %v320
  %325 = vrot.lane.b32.xlu0 %v324, 100
  %v326 = vpop.permute.xlu0 %325
  %vm327 = vcmask 843552
  %s328 = scalar_lea.vmem %s1, 1
  %329 = vst.msk [vmem:[%s328] ss:$3 sm:$0x3] %vm327, %v326
  %s330 = scalar_lea.vmem %s0, 33
  %v331 = vld [vmem:[%s330] sm:$0x1]
  %s332 = scalar_lea.vmem %s0, 160
  %v333 = vld [vmem:[%s332] sm:$0x2]
  %vm334 = vcmask 1041409
  %v335 = vsel %vm334, %v333, %v331
  %336 = vrot.lane.b32.xlu0 %v335, 99
  %v337 = vpop.permute.xlu0 %336
  %vm338 = vcmask 835352
  %339 = vst.msk [vmem:[%s1] ss:$3 sm:$0x3] %vm338, %v337
  %s340 = scalar_lea.vmem %s0, 118
  %v341 = vld [vmem:[%s340] sm:$0x1]
  %s342 = scalar_lea.vmem %s0, 245
  %v343 = vld [vmem:[%s342] sm:$0x2]
  %vm344 = vcmask 1041409
  %v345 = vsel %vm344, %v343, %v341
  %346 = vrot.lane.b32.xlu0 %v345, 98
  %v347 = vpop.permute.xlu0 %346
  %vm348 = vcmask 827152
  %s349 = scalar_lea.vmem %s1, 2
  %350 = vst.msk [vmem:[%s349] ss:$3 sm:$0x3] %vm348, %v347
  %s351 = scalar_lea.vmem %s0, 75
  %v352 = vld [vmem:[%s351] sm:$0x1]
  %s353 = scalar_lea.vmem %s0, 202
  %v354 = vld [vmem:[%s353] sm:$0x2]
  %vm355 = vcmask 1041409
  %v356 = vsel %vm355, %v354, %v352
  %357 = vrot.lane.b32.xlu0 %v356, 97
  %v358 = vpop.permute.xlu0 %357
  %vm359 = vcmask 818952
  %s360 = scalar_lea.vmem %s1, 1
  %361 = vst.msk [vmem:[%s360] ss:$3 sm:$0x3] %vm359, %v358
  %s362 = scalar_lea.vmem %s0, 32
  %v363 = vld [vmem:[%s362] sm:$0x1]
  %s364 = scalar_lea.vmem %s0, 159
  %v365 = vld [vmem:[%s364] sm:$0x2]
  %vm366 = vcmask 1041409
  %v367 = vsel %vm366, %v365, %v363
  %368 = vrot.lane.b32.xlu0 %v367, 96
  %v369 = vpop.permute.xlu0 %368
  %vm370 = vcmask 810752
  %371 = vst.msk [vmem:[%s1] ss:$3 sm:$0x3] %vm370, %v369
  %s372 = scalar_lea.vmem %s0, 117
  %v373 = vld [vmem:[%s372] sm:$0x1]
  %s374 = scalar_lea.vmem %s0, 244
  %v375 = vld [vmem:[%s374] sm:$0x2]
  %vm376 = vcmask 1041409
  %v377 = vsel %vm376, %v375, %v373
  %378 = vrot.lane.b32.xlu0 %v377, 95
  %v379 = vpop.permute.xlu0 %378
  %vm380 = vcmask 802552
  %s381 = scalar_lea.vmem %s1, 2
  %382 = vst.msk [vmem:[%s381] ss:$3 sm:$0x3] %vm380, %v379
  %s383 = scalar_lea.vmem %s0, 74
  %v384 = vld [vmem:[%s383] sm:$0x1]
  %s385 = scalar_lea.vmem %s0, 201
  %v386 = vld [vmem:[%s385] sm:$0x2]
  %vm387 = vcmask 1041409
  %v388 = vsel %vm387, %v386, %v384
  %389 = vrot.lane.b32.xlu0 %v388, 94
  %v390 = vpop.permute.xlu0 %389
  %vm391 = vcmask 794352
  %s392 = scalar_lea.vmem %s1, 1
  %393 = vst.msk [vmem:[%s392] ss:$3 sm:$0x3] %vm391, %v390
  %s394 = scalar_lea.vmem %s0, 31
  %v395 = vld [vmem:[%s394] sm:$0x1]
  %s396 = scalar_lea.vmem %s0, 158
  %v397 = vld [vmem:[%s396] sm:$0x2]
  %vm398 = vcmask 1041409
  %v399 = vsel %vm398, %v397, %v395
  %400 = vrot.lane.b32.xlu0 %v399, 93
  %v401 = vpop.permute.xlu0 %400
  %vm402 = vcmask 786152
  %403 = vst.msk [vmem:[%s1] ss:$3 sm:$0x3] %vm402, %v401
  %s404 = scalar_lea.vmem %s0, 116
  %v405 = vld [vmem:[%s404] sm:$0x1]
  %s406 = scalar_lea.vmem %s0, 243
  %v407 = vld [vmem:[%s406] sm:$0x2]
  %vm408 = vcmask 1041409
  %v409 = vsel %vm408, %v407, %v405
  %410 = vrot.lane.b32.xlu0 %v409, 92
  %v411 = vpop.permute.xlu0 %410
  %vm412 = vcmask 777952
  %s413 = scalar_lea.vmem %s1, 2
  %414 = vst.msk [vmem:[%s413] ss:$3 sm:$0x3] %vm412, %v411
  %s415 = scalar_lea.vmem %s0, 73
  %v416 = vld [vmem:[%s415] sm:$0x1]
  %s417 = scalar_lea.vmem %s0, 200
  %v418 = vld [vmem:[%s417] sm:$0x2]
  %vm419 = vcmask 1041409
  %v420 = vsel %vm419, %v418, %v416
  %421 = vrot.lane.b32.xlu0 %v420, 91
  %v422 = vpop.permute.xlu0 %421
  %vm423 = vcmask 769752
  %s424 = scalar_lea.vmem %s1, 1
  %425 = vst.msk [vmem:[%s424] ss:$3 sm:$0x3] %vm423, %v422
  %s426 = scalar_lea.vmem %s0, 30
  %v427 = vld [vmem:[%s426] sm:$0x1]
  %s428 = scalar_lea.vmem %s0, 157
  %v429 = vld [vmem:[%s428] sm:$0x2]
  %vm430 = vcmask 1041409
  %v431 = vsel %vm430, %v429, %v427
  %432 = vrot.lane.b32.xlu0 %v431, 90
  %v433 = vpop.permute.xlu0 %432
  %vm434 = vcmask 761552
  %435 = vst.msk [vmem:[%s1] ss:$3 sm:$0x3] %vm434, %v433
  %s436 = scalar_lea.vmem %s0, 115
  %v437 = vld [vmem:[%s436] sm:$0x1]
  %s438 = scalar_lea.vmem %s0, 242
  %v439 = vld [vmem:[%s438] sm:$0x2]
  %vm440 = vcmask 1041409
  %v441 = vsel %vm440, %v439, %v437
  %442 = vrot.lane.b32.xlu0 %v441, 89
  %v443 = vpop.permute.xlu0 %442
  %vm444 = vcmask 753352
  %s445 = scalar_lea.vmem %s1, 2
  %446 = vst.msk [vmem:[%s445] ss:$3 sm:$0x3] %vm444, %v443
  %s447 = scalar_lea.vmem %s0, 72
  %v448 = vld [vmem:[%s447] sm:$0x1]
  %s449 = scalar_lea.vmem %s0, 199
  %v450 = vld [vmem:[%s449] sm:$0x2]
  %vm451 = vcmask 1041409
  %v452 = vsel %vm451, %v450, %v448
  %453 = vrot.lane.b32.xlu0 %v452, 88
  %v454 = vpop.permute.xlu0 %453
  %vm455 = vcmask 745152
  %s456 = scalar_lea.vmem %s1, 1
  %457 = vst.msk [vmem:[%s456] ss:$3 sm:$0x3] %vm455, %v454
  %s458 = scalar_lea.vmem %s0, 29
  %v459 = vld [vmem:[%s458] sm:$0x1]
  %s460 = scalar_lea.vmem %s0, 156
  %v461 = vld [vmem:[%s460] sm:$0x2]
  %vm462 = vcmask 1041409
  %v463 = vsel %vm462, %v461, %v459
  %464 = vrot.lane.b32.xlu0 %v463, 87
  %v465 = vpop.permute.xlu0 %464
  %vm466 = vcmask 736952
  %467 = vst.msk [vmem:[%s1] ss:$3 sm:$0x3] %vm466, %v465
  %s468 = scalar_lea.vmem %s0, 114
  %v469 = vld [vmem:[%s468] sm:$0x1]
  %s470 = scalar_lea.vmem %s0, 241
  %v471 = vld [vmem:[%s470] sm:$0x2]
  %vm472 = vcmask 1041409
  %v473 = vsel %vm472, %v471, %v469
  %474 = vrot.lane.b32.xlu0 %v473, 86
  %v475 = vpop.permute.xlu0 %474
  %vm476 = vcmask 728752
  %s477 = scalar_lea.vmem %s1, 2
  %478 = vst.msk [vmem:[%s477] ss:$3 sm:$0x3] %vm476, %v475
  %s479 = scalar_lea.vmem %s0, 71
  %v480 = vld [vmem:[%s479] sm:$0x1]
  %s481 = scalar_lea.vmem %s0, 198
  %v482 = vld [vmem:[%s481] sm:$0x2]
  %vm483 = vcmask 1041409
  %v484 = vsel %vm483, %v482, %v480
  %485 = vrot.lane.b32.xlu0 %v484, 85
  %v486 = vpop.permute.xlu0 %485
  %vm487 = vcmask 720552
  %s488 = scalar_lea.vmem %s1, 1
  %489 = vst.msk [vmem:[%s488] ss:$3 sm:$0x3] %vm487, %v486
  %s490 = scalar_lea.vmem %s0, 28
  %v491 = vld [vmem:[%s490] sm:$0x1]
  %s492 = scalar_lea.vmem %s0, 155
  %v493 = vld [vmem:[%s492] sm:$0x2]
  %vm494 = vcmask 1041409
  %v495 = vsel %vm494, %v493, %v491
  %496 = vrot.lane.b32.xlu0 %v495, 84
  %v497 = vpop.permute.xlu0 %496
  %vm498 = vcmask 712352
  %499 = vst.msk [vmem:[%s1] ss:$3 sm:$0x3] %vm498, %v497
  %s500 = scalar_lea.vmem %s0, 113
  %v501 = vld [vmem:[%s500] sm:$0x1]
  %s502 = scalar_lea.vmem %s0, 240
  %v503 = vld [vmem:[%s502] sm:$0x2]
  %vm504 = vcmask 1041409
  %v505 = vsel %vm504, %v503, %v501
  %506 = vrot.lane.b32.xlu0 %v505, 83
  %v507 = vpop.permute.xlu0 %506
  %vm508 = vcmask 704152
  %s509 = scalar_lea.vmem %s1, 2
  %510 = vst.msk [vmem:[%s509] ss:$3 sm:$0x3] %vm508, %v507
  %s511 = scalar_lea.vmem %s0, 70
  %v512 = vld [vmem:[%s511] sm:$0x1]
  %s513 = scalar_lea.vmem %s0, 197
  %v514 = vld [vmem:[%s513] sm:$0x2]
  %vm515 = vcmask 1041409
  %v516 = vsel %vm515, %v514, %v512
  %517 = vrot.lane.b32.xlu0 %v516, 82
  %v518 = vpop.permute.xlu0 %517
  %vm519 = vcmask 695952
  %s520 = scalar_lea.vmem %s1, 1
  %521 = vst.msk [vmem:[%s520] ss:$3 sm:$0x3] %vm519, %v518
  %s522 = scalar_lea.vmem %s0, 27
  %v523 = vld [vmem:[%s522] sm:$0x1]
  %s524 = scalar_lea.vmem %s0, 154
  %v525 = vld [vmem:[%s524] sm:$0x2]
  %vm526 = vcmask 1041409
  %v527 = vsel %vm526, %v525, %v523
  %528 = vrot.lane.b32.xlu0 %v527, 81
  %v529 = vpop.permute.xlu0 %528
  %vm530 = vcmask 687752
  %531 = vst.msk [vmem:[%s1] ss:$3 sm:$0x3] %vm530, %v529
  %s532 = scalar_lea.vmem %s0, 112
  %v533 = vld [vmem:[%s532] sm:$0x1]
  %s534 = scalar_lea.vmem %s0, 239
  %v535 = vld [vmem:[%s534] sm:$0x2]
  %vm536 = vcmask 1041409
  %v537 = vsel %vm536, %v535, %v533
  %538 = vrot.lane.b32.xlu0 %v537, 80
  %v539 = vpop.permute.xlu0 %538
  %vm540 = vcmask 679552
  %s541 = scalar_lea.vmem %s1, 2
  %542 = vst.msk [vmem:[%s541] ss:$3 sm:$0x3] %vm540, %v539
  %s543 = scalar_lea.vmem %s0, 69
  %v544 = vld [vmem:[%s543] sm:$0x1]
  %s545 = scalar_lea.vmem %s0, 196
  %v546 = vld [vmem:[%s545] sm:$0x2]
  %vm547 = vcmask 1041409
  %v548 = vsel %vm547, %v546, %v544
  %549 = vrot.lane.b32.xlu0 %v548, 79
  %v550 = vpop.permute.xlu0 %549
  %vm551 = vcmask 671352
  %s552 = scalar_lea.vmem %s1, 1
  %553 = vst.msk [vmem:[%s552] ss:$3 sm:$0x3] %vm551, %v550
  %s554 = scalar_lea.vmem %s0, 26
  %v555 = vld [vmem:[%s554] sm:$0x1]
  %s556 = scalar_lea.vmem %s0, 153
  %v557 = vld [vmem:[%s556] sm:$0x2]
  %vm558 = vcmask 1041409
  %v559 = vsel %vm558, %v557, %v555
  %560 = vrot.lane.b32.xlu0 %v559, 78
  %v561 = vpop.permute.xlu0 %560
  %vm562 = vcmask 663152
  %563 = vst.msk [vmem:[%s1] ss:$3 sm:$0x3] %vm562, %v561
  %s564 = scalar_lea.vmem %s0, 111
  %v565 = vld [vmem:[%s564] sm:$0x1]
  %s566 = scalar_lea.vmem %s0, 238
  %v567 = vld [vmem:[%s566] sm:$0x2]
  %vm568 = vcmask 1041409
  %v569 = vsel %vm568, %v567, %v565
  %570 = vrot.lane.b32.xlu0 %v569, 77
  %v571 = vpop.permute.xlu0 %570
  %vm572 = vcmask 654952
  %s573 = scalar_lea.vmem %s1, 2
  %574 = vst.msk [vmem:[%s573] ss:$3 sm:$0x3] %vm572, %v571
  %s575 = scalar_lea.vmem %s0, 68
  %v576 = vld [vmem:[%s575] sm:$0x1]
  %s577 = scalar_lea.vmem %s0, 195
  %v578 = vld [vmem:[%s577] sm:$0x2]
  %vm579 = vcmask 1041409
  %v580 = vsel %vm579, %v578, %v576
  %581 = vrot.lane.b32.xlu0 %v580, 76
  %v582 = vpop.permute.xlu0 %581
  %vm583 = vcmask 646752
  %s584 = scalar_lea.vmem %s1, 1
  %585 = vst.msk [vmem:[%s584] ss:$3 sm:$0x3] %vm583, %v582
  %s586 = scalar_lea.vmem %s0, 25
  %v587 = vld [vmem:[%s586] sm:$0x1]
  %s588 = scalar_lea.vmem %s0, 152
  %v589 = vld [vmem:[%s588] sm:$0x2]
  %vm590 = vcmask 1041409
  %v591 = vsel %vm590, %v589, %v587
  %592 = vrot.lane.b32.xlu0 %v591, 75
  %v593 = vpop.permute.xlu0 %592
  %vm594 = vcmask 638552
  %595 = vst.msk [vmem:[%s1] ss:$3 sm:$0x3] %vm594, %v593
  %s596 = scalar_lea.vmem %s0, 110
  %v597 = vld [vmem:[%s596] sm:$0x1]
  %s598 = scalar_lea.vmem %s0, 237
  %v599 = vld [vmem:[%s598] sm:$0x2]
  %vm600 = vcmask 1041409
  %v601 = vsel %vm600, %v599, %v597
  %602 = vrot.lane.b32.xlu0 %v601, 74
  %v603 = vpop.permute.xlu0 %602
  %vm604 = vcmask 630352
  %s605 = scalar_lea.vmem %s1, 2
  %606 = vst.msk [vmem:[%s605] ss:$3 sm:$0x3] %vm604, %v603
  %s607 = scalar_lea.vmem %s0, 67
  %v608 = vld [vmem:[%s607] sm:$0x1]
  %s609 = scalar_lea.vmem %s0, 194
  %v610 = vld [vmem:[%s609] sm:$0x2]
  %vm611 = vcmask 1041409
  %v612 = vsel %vm611, %v610, %v608
  %613 = vrot.lane.b32.xlu0 %v612, 73
  %v614 = vpop.permute.xlu0 %613
  %vm615 = vcmask 622152
  %s616 = scalar_lea.vmem %s1, 1
  %617 = vst.msk [vmem:[%s616] ss:$3 sm:$0x3] %vm615, %v614
  %s618 = scalar_lea.vmem %s0, 24
  %v619 = vld [vmem:[%s618] sm:$0x1]
  %s620 = scalar_lea.vmem %s0, 151
  %v621 = vld [vmem:[%s620] sm:$0x2]
  %vm622 = vcmask 1041409
  %v623 = vsel %vm622, %v621, %v619
  %624 = vrot.lane.b32.xlu0 %v623, 72
  %v625 = vpop.permute.xlu0 %624
  %vm626 = vcmask 613952
  %627 = vst.msk [vmem:[%s1] ss:$3 sm:$0x3] %vm626, %v625
  %s628 = scalar_lea.vmem %s0, 109
  %v629 = vld [vmem:[%s628] sm:$0x1]
  %s630 = scalar_lea.vmem %s0, 236
  %v631 = vld [vmem:[%s630] sm:$0x2]
  %vm632 = vcmask 1041409
  %v633 = vsel %vm632, %v631, %v629
  %634 = vrot.lane.b32.xlu0 %v633, 71
  %v635 = vpop.permute.xlu0 %634
  %vm636 = vcmask 605752
  %s637 = scalar_lea.vmem %s1, 2
  %638 = vst.msk [vmem:[%s637] ss:$3 sm:$0x3] %vm636, %v635
  %s639 = scalar_lea.vmem %s0, 66
  %v640 = vld [vmem:[%s639] sm:$0x1]
  %s641 = scalar_lea.vmem %s0, 193
  %v642 = vld [vmem:[%s641] sm:$0x2]
  %vm643 = vcmask 1041409
  %v644 = vsel %vm643, %v642, %v640
  %645 = vrot.lane.b32.xlu0 %v644, 70
  %v646 = vpop.permute.xlu0 %645
  %vm647 = vcmask 597552
  %s648 = scalar_lea.vmem %s1, 1
  %649 = vst.msk [vmem:[%s648] ss:$3 sm:$0x3] %vm647, %v646
  %s650 = scalar_lea.vmem %s0, 23
  %v651 = vld [vmem:[%s650] sm:$0x1]
  %s652 = scalar_lea.vmem %s0, 150
  %v653 = vld [vmem:[%s652] sm:$0x2]
  %vm654 = vcmask 1041409
  %v655 = vsel %vm654, %v653, %v651
  %656 = vrot.lane.b32.xlu0 %v655, 69
  %v657 = vpop.permute.xlu0 %656
  %vm658 = vcmask 589352
  %659 = vst.msk [vmem:[%s1] ss:$3 sm:$0x3] %vm658, %v657
  %s660 = scalar_lea.vmem %s0, 108
  %v661 = vld [vmem:[%s660] sm:$0x1]
  %s662 = scalar_lea.vmem %s0, 235
  %v663 = vld [vmem:[%s662] sm:$0x2]
  %vm664 = vcmask 1041409
  %v665 = vsel %vm664, %v663, %v661
  %666 = vrot.lane.b32.xlu0 %v665, 68
  %v667 = vpop.permute.xlu0 %666
  %vm668 = vcmask 581152
  %s669 = scalar_lea.vmem %s1, 2
  %670 = vst.msk [vmem:[%s669] ss:$3 sm:$0x3] %vm668, %v667
  %s671 = scalar_lea.vmem %s0, 65
  %v672 = vld [vmem:[%s671] sm:$0x1]
  %s673 = scalar_lea.vmem %s0, 192
  %v674 = vld [vmem:[%s673] sm:$0x2]
  %vm675 = vcmask 1041409
  %v676 = vsel %vm675, %v674, %v672
  %677 = vrot.lane.b32.xlu0 %v676, 67
  %v678 = vpop.permute.xlu0 %677
  %vm679 = vcmask 572952
  %s680 = scalar_lea.vmem %s1, 1
  %681 = vst.msk [vmem:[%s680] ss:$3 sm:$0x3] %vm679, %v678
  %s682 = scalar_lea.vmem %s0, 22
  %v683 = vld [vmem:[%s682] sm:$0x1]
  %s684 = scalar_lea.vmem %s0, 149
  %v685 = vld [vmem:[%s684] sm:$0x2]
  %vm686 = vcmask 1041409
  %v687 = vsel %vm686, %v685, %v683
  %688 = vrot.lane.b32.xlu0 %v687, 66
  %v689 = vpop.permute.xlu0 %688
  %vm690 = vcmask 564752
  %691 = vst.msk [vmem:[%s1] ss:$3 sm:$0x3] %vm690, %v689
  %s692 = scalar_lea.vmem %s0, 107
  %v693 = vld [vmem:[%s692] sm:$0x1]
  %s694 = scalar_lea.vmem %s0, 234
  %v695 = vld [vmem:[%s694] sm:$0x2]
  %vm696 = vcmask 1041409
  %v697 = vsel %vm696, %v695, %v693
  %698 = vrot.lane.b32.xlu0 %v697, 65
  %v699 = vpop.permute.xlu0 %698
  %vm700 = vcmask 556552
  %s701 = scalar_lea.vmem %s1, 2
  %702 = vst.msk [vmem:[%s701] ss:$3 sm:$0x3] %vm700, %v699
  %s703 = scalar_lea.vmem %s0, 64
  %v704 = vld [vmem:[%s703] sm:$0x1]
  %s705 = scalar_lea.vmem %s0, 191
  %v706 = vld [vmem:[%s705] sm:$0x2]
  %vm707 = vcmask 1041409
  %v708 = vsel %vm707, %v706, %v704
  %709 = vrot.lane.b32.xlu0 %v708, 64
  %v710 = vpop.permute.xlu0 %709
  %vm711 = vcmask 548352
  %s712 = scalar_lea.vmem %s1, 1
  %713 = vst.msk [vmem:[%s712] ss:$3 sm:$0x3] %vm711, %v710
  %s714 = scalar_lea.vmem %s0, 21
  %v715 = vld [vmem:[%s714] sm:$0x1]
  %s716 = scalar_lea.vmem %s0, 148
  %v717 = vld [vmem:[%s716] sm:$0x2]
  %vm718 = vcmask 1041409
  %v719 = vsel %vm718, %v717, %v715
  %720 = vrot.lane.b32.xlu0 %v719, 63
  %v721 = vpop.permute.xlu0 %720
  %vm722 = vcmask 540152
  %723 = vst.msk [vmem:[%s1] ss:$3 sm:$0x3] %vm722, %v721
  %s724 = scalar_lea.vmem %s0, 106
  %v725 = vld [vmem:[%s724] sm:$0x1]
  %s726 = scalar_lea.vmem %s0, 233
  %v727 = vld [vmem:[%s726] sm:$0x2]
  %vm728 = vcmask 1041409
  %v729 = vsel %vm728, %v727, %v725
  %730 = vrot.lane.b32.xlu0 %v729, 62
  %v731 = vpop.permute.xlu0 %730
  %vm732 = vcmask 531952
  %s733 = scalar_lea.vmem %s1, 2
  %734 = vst.msk [vmem:[%s733] ss:$3 sm:$0x3] %vm732, %v731
  %s735 = scalar_lea.vmem %s0, 63
  %v736 = vld [vmem:[%s735] sm:$0x1]
  %s737 = scalar_lea.vmem %s0, 190
  %v738 = vld [vmem:[%s737] sm:$0x2]
  %vm739 = vcmask 1041409
  %v740 = vsel %vm739, %v738, %v736
  %741 = vrot.lane.b32.xlu0 %v740, 61
  %v742 = vpop.permute.xlu0 %741
  %vm743 = vcmask 523752
  %s744 = scalar_lea.vmem %s1, 1
  %745 = vst.msk [vmem:[%s744] ss:$3 sm:$0x3] %vm743, %v742
  %s746 = scalar_lea.vmem %s0, 20
  %v747 = vld [vmem:[%s746] sm:$0x1]
  %s748 = scalar_lea.vmem %s0, 147
  %v749 = vld [vmem:[%s748] sm:$0x2]
  %vm750 = vcmask 1041409
  %v751 = vsel %vm750, %v749, %v747
  %752 = vrot.lane.b32.xlu0 %v751, 60
  %v753 = vpop.permute.xlu0 %752
  %vm754 = vcmask 515552
  %755 = vst.msk [vmem:[%s1] ss:$3 sm:$0x3] %vm754, %v753
  %s756 = scalar_lea.vmem %s0, 105
  %v757 = vld [vmem:[%s756] sm:$0x1]
  %s758 = scalar_lea.vmem %s0, 232
  %v759 = vld [vmem:[%s758] sm:$0x2]
  %vm760 = vcmask 1041409
  %v761 = vsel %vm760, %v759, %v757
  %762 = vrot.lane.b32.xlu0 %v761, 59
  %v763 = vpop.permute.xlu0 %762
  %vm764 = vcmask 507352
  %s765 = scalar_lea.vmem %s1, 2
  %766 = vst.msk [vmem:[%s765] ss:$3 sm:$0x3] %vm764, %v763
  %s767 = scalar_lea.vmem %s0, 62
  %v768 = vld [vmem:[%s767] sm:$0x1]
  %s769 = scalar_lea.vmem %s0, 189
  %v770 = vld [vmem:[%s769] sm:$0x2]
  %vm771 = vcmask 1041409
  %v772 = vsel %vm771, %v770, %v768
  %773 = vrot.lane.b32.xlu0 %v772, 58
  %v774 = vpop.permute.xlu0 %773
  %vm775 = vcmask 499152
  %s776 = scalar_lea.vmem %s1, 1
  %777 = vst.msk [vmem:[%s776] ss:$3 sm:$0x3] %vm775, %v774
  %s778 = scalar_lea.vmem %s0, 19
  %v779 = vld [vmem:[%s778] sm:$0x1]
  %s780 = scalar_lea.vmem %s0, 146
  %v781 = vld [vmem:[%s780] sm:$0x2]
  %vm782 = vcmask 1041409
  %v783 = vsel %vm782, %v781, %v779
  %784 = vrot.lane.b32.xlu0 %v783, 57
  %v785 = vpop.permute.xlu0 %784
  %vm786 = vcmask 490952
  %787 = vst.msk [vmem:[%s1] ss:$3 sm:$0x3] %vm786, %v785
  %s788 = scalar_lea.vmem %s0, 104
  %v789 = vld [vmem:[%s788] sm:$0x1]
  %s790 = scalar_lea.vmem %s0, 231
  %v791 = vld [vmem:[%s790] sm:$0x2]
  %vm792 = vcmask 1041409
  %v793 = vsel %vm792, %v791, %v789
  %794 = vrot.lane.b32.xlu0 %v793, 56
  %v795 = vpop.permute.xlu0 %794
  %vm796 = vcmask 482752
  %s797 = scalar_lea.vmem %s1, 2
  %798 = vst.msk [vmem:[%s797] ss:$3 sm:$0x3] %vm796, %v795
  %s799 = scalar_lea.vmem %s0, 61
  %v800 = vld [vmem:[%s799] sm:$0x1]
  %s801 = scalar_lea.vmem %s0, 188
  %v802 = vld [vmem:[%s801] sm:$0x2]
  %vm803 = vcmask 1041409
  %v804 = vsel %vm803, %v802, %v800
  %805 = vrot.lane.b32.xlu0 %v804, 55
  %v806 = vpop.permute.xlu0 %805
  %vm807 = vcmask 474552
  %s808 = scalar_lea.vmem %s1, 1
  %809 = vst.msk [vmem:[%s808] ss:$3 sm:$0x3] %vm807, %v806
  %s810 = scalar_lea.vmem %s0, 18
  %v811 = vld [vmem:[%s810] sm:$0x1]
  %s812 = scalar_lea.vmem %s0, 145
  %v813 = vld [vmem:[%s812] sm:$0x2]
  %vm814 = vcmask 1041409
  %v815 = vsel %vm814, %v813, %v811
  %816 = vrot.lane.b32.xlu0 %v815, 54
  %v817 = vpop.permute.xlu0 %816
  %vm818 = vcmask 466352
  %819 = vst.msk [vmem:[%s1] ss:$3 sm:$0x3] %vm818, %v817
  %s820 = scalar_lea.vmem %s0, 103
  %v821 = vld [vmem:[%s820] sm:$0x1]
  %s822 = scalar_lea.vmem %s0, 230
  %v823 = vld [vmem:[%s822] sm:$0x2]
  %vm824 = vcmask 1041409
  %v825 = vsel %vm824, %v823, %v821
  %826 = vrot.lane.b32.xlu0 %v825, 53
  %v827 = vpop.permute.xlu0 %826
  %vm828 = vcmask 458152
  %s829 = scalar_lea.vmem %s1, 2
  %830 = vst.msk [vmem:[%s829] ss:$3 sm:$0x3] %vm828, %v827
  %s831 = scalar_lea.vmem %s0, 60
  %v832 = vld [vmem:[%s831] sm:$0x1]
  %s833 = scalar_lea.vmem %s0, 187
  %v834 = vld [vmem:[%s833] sm:$0x2]
  %vm835 = vcmask 1041409
  %v836 = vsel %vm835, %v834, %v832
  %837 = vrot.lane.b32.xlu0 %v836, 52
  %v838 = vpop.permute.xlu0 %837
  %vm839 = vcmask 449952
  %s840 = scalar_lea.vmem %s1, 1
  %841 = vst.msk [vmem:[%s840] ss:$3 sm:$0x3] %vm839, %v838
  %s842 = scalar_lea.vmem %s0, 17
  %v843 = vld [vmem:[%s842] sm:$0x1]
  %s844 = scalar_lea.vmem %s0, 144
  %v845 = vld [vmem:[%s844] sm:$0x2]
  %vm846 = vcmask 1041409
  %v847 = vsel %vm846, %v845, %v843
  %848 = vrot.lane.b32.xlu0 %v847, 51
  %v849 = vpop.permute.xlu0 %848
  %vm850 = vcmask 441752
  %851 = vst.msk [vmem:[%s1] ss:$3 sm:$0x3] %vm850, %v849
  %s852 = scalar_lea.vmem %s0, 102
  %v853 = vld [vmem:[%s852] sm:$0x1]
  %s854 = scalar_lea.vmem %s0, 229
  %v855 = vld [vmem:[%s854] sm:$0x2]
  %vm856 = vcmask 1041409
  %v857 = vsel %vm856, %v855, %v853
  %858 = vrot.lane.b32.xlu0 %v857, 50
  %v859 = vpop.permute.xlu0 %858
  %vm860 = vcmask 433552
  %s861 = scalar_lea.vmem %s1, 2
  %862 = vst.msk [vmem:[%s861] ss:$3 sm:$0x3] %vm860, %v859
  %s863 = scalar_lea.vmem %s0, 59
  %v864 = vld [vmem:[%s863] sm:$0x1]
  %s865 = scalar_lea.vmem %s0, 186
  %v866 = vld [vmem:[%s865] sm:$0x2]
  %vm867 = vcmask 1041409
  %v868 = vsel %vm867, %v866, %v864
  %869 = vrot.lane.b32.xlu0 %v868, 49
  %v870 = vpop.permute.xlu0 %869
  %vm871 = vcmask 425352
  %s872 = scalar_lea.vmem %s1, 1
  %873 = vst.msk [vmem:[%s872] ss:$3 sm:$0x3] %vm871, %v870
  %s874 = scalar_lea.vmem %s0, 16
  %v875 = vld [vmem:[%s874] sm:$0x1]
  %s876 = scalar_lea.vmem %s0, 143
  %v877 = vld [vmem:[%s876] sm:$0x2]
  %vm878 = vcmask 1041409
  %v879 = vsel %vm878, %v877, %v875
  %880 = vrot.lane.b32.xlu0 %v879, 48
  %v881 = vpop.permute.xlu0 %880
  %vm882 = vcmask 417152
  %883 = vst.msk [vmem:[%s1] ss:$3 sm:$0x3] %vm882, %v881
  %s884 = scalar_lea.vmem %s0, 101
  %v885 = vld [vmem:[%s884] sm:$0x1]
  %s886 = scalar_lea.vmem %s0, 228
  %v887 = vld [vmem:[%s886] sm:$0x2]
  %vm888 = vcmask 1041409
  %v889 = vsel %vm888, %v887, %v885
  %890 = vrot.lane.b32.xlu0 %v889, 47
  %v891 = vpop.permute.xlu0 %890
  %vm892 = vcmask 408952
  %s893 = scalar_lea.vmem %s1, 2
  %894 = vst.msk [vmem:[%s893] ss:$3 sm:$0x3] %vm892, %v891
  %s895 = scalar_lea.vmem %s0, 58
  %v896 = vld [vmem:[%s895] sm:$0x1]
  %s897 = scalar_lea.vmem %s0, 185
  %v898 = vld [vmem:[%s897] sm:$0x2]
  %vm899 = vcmask 1041409
  %v900 = vsel %vm899, %v898, %v896
  %901 = vrot.lane.b32.xlu0 %v900, 46
  %v902 = vpop.permute.xlu0 %901
  %vm903 = vcmask 400752
  %s904 = scalar_lea.vmem %s1, 1
  %905 = vst.msk [vmem:[%s904] ss:$3 sm:$0x3] %vm903, %v902
  %s906 = scalar_lea.vmem %s0, 15
  %v907 = vld [vmem:[%s906] sm:$0x1]
  %s908 = scalar_lea.vmem %s0, 142
  %v909 = vld [vmem:[%s908] sm:$0x2]
  %vm910 = vcmask 1041409
  %v911 = vsel %vm910, %v909, %v907
  %912 = vrot.lane.b32.xlu0 %v911, 45
  %v913 = vpop.permute.xlu0 %912
  %vm914 = vcmask 392552
  %915 = vst.msk [vmem:[%s1] ss:$3 sm:$0x3] %vm914, %v913
  %s916 = scalar_lea.vmem %s0, 100
  %v917 = vld [vmem:[%s916] sm:$0x1]
  %s918 = scalar_lea.vmem %s0, 227
  %v919 = vld [vmem:[%s918] sm:$0x2]
  %vm920 = vcmask 1041409
  %v921 = vsel %vm920, %v919, %v917
  %922 = vrot.lane.b32.xlu0 %v921, 44
  %v923 = vpop.permute.xlu0 %922
  %vm924 = vcmask 384352
  %s925 = scalar_lea.vmem %s1, 2
  %926 = vst.msk [vmem:[%s925] ss:$3 sm:$0x3] %vm924, %v923
  %s927 = scalar_lea.vmem %s0, 57
  %v928 = vld [vmem:[%s927] sm:$0x1]
  %s929 = scalar_lea.vmem %s0, 184
  %v930 = vld [vmem:[%s929] sm:$0x2]
  %vm931 = vcmask 1041409
  %v932 = vsel %vm931, %v930, %v928
  %933 = vrot.lane.b32.xlu0 %v932, 43
  %v934 = vpop.permute.xlu0 %933
  %vm935 = vcmask 376152
  %s936 = scalar_lea.vmem %s1, 1
  %937 = vst.msk [vmem:[%s936] ss:$3 sm:$0x3] %vm935, %v934
  %s938 = scalar_lea.vmem %s0, 14
  %v939 = vld [vmem:[%s938] sm:$0x1]
  %s940 = scalar_lea.vmem %s0, 141
  %v941 = vld [vmem:[%s940] sm:$0x2]
  %vm942 = vcmask 1041409
  %v943 = vsel %vm942, %v941, %v939
  %944 = vrot.lane.b32.xlu0 %v943, 42
  %v945 = vpop.permute.xlu0 %944
  %vm946 = vcmask 367952
  %947 = vst.msk [vmem:[%s1] ss:$3 sm:$0x3] %vm946, %v945
  %s948 = scalar_lea.vmem %s0, 99
  %v949 = vld [vmem:[%s948] sm:$0x1]
  %s950 = scalar_lea.vmem %s0, 226
  %v951 = vld [vmem:[%s950] sm:$0x2]
  %vm952 = vcmask 1041409
  %v953 = vsel %vm952, %v951, %v949
  %954 = vrot.lane.b32.xlu0 %v953, 41
  %v955 = vpop.permute.xlu0 %954
  %vm956 = vcmask 359752
  %s957 = scalar_lea.vmem %s1, 2
  %958 = vst.msk [vmem:[%s957] ss:$3 sm:$0x3] %vm956, %v955
  %s959 = scalar_lea.vmem %s0, 56
  %v960 = vld [vmem:[%s959] sm:$0x1]
  %s961 = scalar_lea.vmem %s0, 183
  %v962 = vld [vmem:[%s961] sm:$0x2]
  %vm963 = vcmask 1041409
  %v964 = vsel %vm963, %v962, %v960
  %965 = vrot.lane.b32.xlu0 %v964, 40
  %v966 = vpop.permute.xlu0 %965
  %vm967 = vcmask 351552
  %s968 = scalar_lea.vmem %s1, 1
  %969 = vst.msk [vmem:[%s968] ss:$3 sm:$0x3] %vm967, %v966
  %s970 = scalar_lea.vmem %s0, 13
  %v971 = vld [vmem:[%s970] sm:$0x1]
  %s972 = scalar_lea.vmem %s0, 140
  %v973 = vld [vmem:[%s972] sm:$0x2]
  %vm974 = vcmask 1041409
  %v975 = vsel %vm974, %v973, %v971
  %976 = vrot.lane.b32.xlu0 %v975, 39
  %v977 = vpop.permute.xlu0 %976
  %vm978 = vcmask 343352
  %979 = vst.msk [vmem:[%s1] ss:$3 sm:$0x3] %vm978, %v977
  %s980 = scalar_lea.vmem %s0, 98
  %v981 = vld [vmem:[%s980] sm:$0x1]
  %s982 = scalar_lea.vmem %s0, 225
  %v983 = vld [vmem:[%s982] sm:$0x2]
  %vm984 = vcmask 1041409
  %v985 = vsel %vm984, %v983, %v981
  %986 = vrot.lane.b32.xlu0 %v985, 38
  %v987 = vpop.permute.xlu0 %986
  %vm988 = vcmask 335152
  %s989 = scalar_lea.vmem %s1, 2
  %990 = vst.msk [vmem:[%s989] ss:$3 sm:$0x3] %vm988, %v987
  %s991 = scalar_lea.vmem %s0, 55
  %v992 = vld [vmem:[%s991] sm:$0x1]
  %s993 = scalar_lea.vmem %s0, 182
  %v994 = vld [vmem:[%s993] sm:$0x2]
  %vm995 = vcmask 1041409
  %v996 = vsel %vm995, %v994, %v992
  %997 = vrot.lane.b32.xlu0 %v996, 37
  %v998 = vpop.permute.xlu0 %997
  %vm999 = vcmask 326952
  %s1000 = scalar_lea.vmem %s1, 1
  %1001 = vst.msk [vmem:[%s1000] ss:$3 sm:$0x3] %vm999, %v998
  %s1002 = scalar_lea.vmem %s0, 12
  %v1003 = vld [vmem:[%s1002] sm:$0x1]
  %s1004 = scalar_lea.vmem %s0, 139
  %v1005 = vld [vmem:[%s1004] sm:$0x2]
  %vm1006 = vcmask 1041409
  %v1007 = vsel %vm1006, %v1005, %v1003
  %1008 = vrot.lane.b32.xlu0 %v1007, 36
  %v1009 = vpop.permute.xlu0 %1008
  %vm1010 = vcmask 318752
  %1011 = vst.msk [vmem:[%s1] ss:$3 sm:$0x3] %vm1010, %v1009
  %s1012 = scalar_lea.vmem %s0, 97
  %v1013 = vld [vmem:[%s1012] sm:$0x1]
  %s1014 = scalar_lea.vmem %s0, 224
  %v1015 = vld [vmem:[%s1014] sm:$0x2]
  %vm1016 = vcmask 1041409
  %v1017 = vsel %vm1016, %v1015, %v1013
  %1018 = vrot.lane.b32.xlu0 %v1017, 35
  %v1019 = vpop.permute.xlu0 %1018
  %vm1020 = vcmask 310552
  %s1021 = scalar_lea.vmem %s1, 2
  %1022 = vst.msk [vmem:[%s1021] ss:$3 sm:$0x3] %vm1020, %v1019
  %s1023 = scalar_lea.vmem %s0, 54
  %v1024 = vld [vmem:[%s1023] sm:$0x1]
  %s1025 = scalar_lea.vmem %s0, 181
  %v1026 = vld [vmem:[%s1025] sm:$0x2]
  %vm1027 = vcmask 1041409
  %v1028 = vsel %vm1027, %v1026, %v1024
  %1029 = vrot.lane.b32.xlu0 %v1028, 34
  %v1030 = vpop.permute.xlu0 %1029
  %vm1031 = vcmask 302352
  %s1032 = scalar_lea.vmem %s1, 1
  %1033 = vst.msk [vmem:[%s1032] ss:$3 sm:$0x3] %vm1031, %v1030
  %s1034 = scalar_lea.vmem %s0, 11
  %v1035 = vld [vmem:[%s1034] sm:$0x1]
  %s1036 = scalar_lea.vmem %s0, 138
  %v1037 = vld [vmem:[%s1036] sm:$0x2]
  %vm1038 = vcmask 1041409
  %v1039 = vsel %vm1038, %v1037, %v1035
  %1040 = vrot.lane.b32.xlu0 %v1039, 33
  %v1041 = vpop.permute.xlu0 %1040
  %vm1042 = vcmask 294152
  %1043 = vst.msk [vmem:[%s1] ss:$3 sm:$0x3] %vm1042, %v1041
  %s1044 = scalar_lea.vmem %s0, 96
  %v1045 = vld [vmem:[%s1044] sm:$0x1]
  %s1046 = scalar_lea.vmem %s0, 223
  %v1047 = vld [vmem:[%s1046] sm:$0x2]
  %vm1048 = vcmask 1041409
  %v1049 = vsel %vm1048, %v1047, %v1045
  %1050 = vrot.lane.b32.xlu0 %v1049, 32
  %v1051 = vpop.permute.xlu0 %1050
  %vm1052 = vcmask 285952
  %s1053 = scalar_lea.vmem %s1, 2
  %1054 = vst.msk [vmem:[%s1053] ss:$3 sm:$0x3] %vm1052, %v1051
  %s1055 = scalar_lea.vmem %s0, 53
  %v1056 = vld [vmem:[%s1055] sm:$0x1]
  %s1057 = scalar_lea.vmem %s0, 180
  %v1058 = vld [vmem:[%s1057] sm:$0x2]
  %vm1059 = vcmask 1041409
  %v1060 = vsel %vm1059, %v1058, %v1056
  %1061 = vrot.lane.b32.xlu0 %v1060, 31
  %v1062 = vpop.permute.xlu0 %1061
  %vm1063 = vcmask 277752
  %s1064 = scalar_lea.vmem %s1, 1
  %1065 = vst.msk [vmem:[%s1064] ss:$3 sm:$0x3] %vm1063, %v1062
  %s1066 = scalar_lea.vmem %s0, 10
  %v1067 = vld [vmem:[%s1066] sm:$0x1]
  %s1068 = scalar_lea.vmem %s0, 137
  %v1069 = vld [vmem:[%s1068] sm:$0x2]
  %vm1070 = vcmask 1041409
  %v1071 = vsel %vm1070, %v1069, %v1067
  %1072 = vrot.lane.b32.xlu0 %v1071, 30
  %v1073 = vpop.permute.xlu0 %1072
  %vm1074 = vcmask 269552
  %1075 = vst.msk [vmem:[%s1] ss:$3 sm:$0x3] %vm1074, %v1073
  %s1076 = scalar_lea.vmem %s0, 95
  %v1077 = vld [vmem:[%s1076] sm:$0x1]
  %s1078 = scalar_lea.vmem %s0, 222
  %v1079 = vld [vmem:[%s1078] sm:$0x2]
  %vm1080 = vcmask 1041409
  %v1081 = vsel %vm1080, %v1079, %v1077
  %1082 = vrot.lane.b32.xlu0 %v1081, 29
  %v1083 = vpop.permute.xlu0 %1082
  %vm1084 = vcmask 261352
  %s1085 = scalar_lea.vmem %s1, 2
  %1086 = vst.msk [vmem:[%s1085] ss:$3 sm:$0x3] %vm1084, %v1083
  %s1087 = scalar_lea.vmem %s0, 52
  %v1088 = vld [vmem:[%s1087] sm:$0x1]
  %s1089 = scalar_lea.vmem %s0, 179
  %v1090 = vld [vmem:[%s1089] sm:$0x2]
  %vm1091 = vcmask 1041409
  %v1092 = vsel %vm1091, %v1090, %v1088
  %1093 = vrot.lane.b32.xlu0 %v1092, 28
  %v1094 = vpop.permute.xlu0 %1093
  %vm1095 = vcmask 253152
  %s1096 = scalar_lea.vmem %s1, 1
  %1097 = vst.msk [vmem:[%s1096] ss:$3 sm:$0x3] %vm1095, %v1094
  %s1098 = scalar_lea.vmem %s0, 9
  %v1099 = vld [vmem:[%s1098] sm:$0x1]
  %s1100 = scalar_lea.vmem %s0, 136
  %v1101 = vld [vmem:[%s1100] sm:$0x2]
  %vm1102 = vcmask 1041409
  %v1103 = vsel %vm1102, %v1101, %v1099
  %1104 = vrot.lane.b32.xlu0 %v1103, 27
  %v1105 = vpop.permute.xlu0 %1104
  %vm1106 = vcmask 244952
  %1107 = vst.msk [vmem:[%s1] ss:$3 sm:$0x3] %vm1106, %v1105
  %s1108 = scalar_lea.vmem %s0, 94
  %v1109 = vld [vmem:[%s1108] sm:$0x1]
  %s1110 = scalar_lea.vmem %s0, 221
  %v1111 = vld [vmem:[%s1110] sm:$0x2]
  %vm1112 = vcmask 1041409
  %v1113 = vsel %vm1112, %v1111, %v1109
  %1114 = vrot.lane.b32.xlu0 %v1113, 26
  %v1115 = vpop.permute.xlu0 %1114
  %vm1116 = vcmask 236752
  %s1117 = scalar_lea.vmem %s1, 2
  %1118 = vst.msk [vmem:[%s1117] ss:$3 sm:$0x3] %vm1116, %v1115
  %s1119 = scalar_lea.vmem %s0, 51
  %v1120 = vld [vmem:[%s1119] sm:$0x1]
  %s1121 = scalar_lea.vmem %s0, 178
  %v1122 = vld [vmem:[%s1121] sm:$0x2]
  %vm1123 = vcmask 1041409
  %v1124 = vsel %vm1123, %v1122, %v1120
  %1125 = vrot.lane.b32.xlu0 %v1124, 25
  %v1126 = vpop.permute.xlu0 %1125
  %vm1127 = vcmask 228552
  %s1128 = scalar_lea.vmem %s1, 1
  %1129 = vst.msk [vmem:[%s1128] ss:$3 sm:$0x3] %vm1127, %v1126
  %s1130 = scalar_lea.vmem %s0, 8
  %v1131 = vld [vmem:[%s1130] sm:$0x1]
  %s1132 = scalar_lea.vmem %s0, 135
  %v1133 = vld [vmem:[%s1132] sm:$0x2]
  %vm1134 = vcmask 1041409
  %v1135 = vsel %vm1134, %v1133, %v1131
  %1136 = vrot.lane.b32.xlu0 %v1135, 24
  %v1137 = vpop.permute.xlu0 %1136
  %vm1138 = vcmask 220352
  %1139 = vst.msk [vmem:[%s1] ss:$3 sm:$0x3] %vm1138, %v1137
  %s1140 = scalar_lea.vmem %s0, 93
  %v1141 = vld [vmem:[%s1140] sm:$0x1]
  %s1142 = scalar_lea.vmem %s0, 220
  %v1143 = vld [vmem:[%s1142] sm:$0x2]
  %vm1144 = vcmask 1041409
  %v1145 = vsel %vm1144, %v1143, %v1141
  %1146 = vrot.lane.b32.xlu0 %v1145, 23
  %v1147 = vpop.permute.xlu0 %1146
  %vm1148 = vcmask 212152
  %s1149 = scalar_lea.vmem %s1, 2
  %1150 = vst.msk [vmem:[%s1149] ss:$3 sm:$0x3] %vm1148, %v1147
  %s1151 = scalar_lea.vmem %s0, 50
  %v1152 = vld [vmem:[%s1151] sm:$0x1]
  %s1153 = scalar_lea.vmem %s0, 177
  %v1154 = vld [vmem:[%s1153] sm:$0x2]
  %vm1155 = vcmask 1041409
  %v1156 = vsel %vm1155, %v1154, %v1152
  %1157 = vrot.lane.b32.xlu0 %v1156, 22
  %v1158 = vpop.permute.xlu0 %1157
  %vm1159 = vcmask 203952
  %s1160 = scalar_lea.vmem %s1, 1
  %1161 = vst.msk [vmem:[%s1160] ss:$3 sm:$0x3] %vm1159, %v1158
  %s1162 = scalar_lea.vmem %s0, 7
  %v1163 = vld [vmem:[%s1162] sm:$0x1]
  %s1164 = scalar_lea.vmem %s0, 134
  %v1165 = vld [vmem:[%s1164] sm:$0x2]
  %vm1166 = vcmask 1041409
  %v1167 = vsel %vm1166, %v1165, %v1163
  %1168 = vrot.lane.b32.xlu0 %v1167, 21
  %v1169 = vpop.permute.xlu0 %1168
  %vm1170 = vcmask 195752
  %1171 = vst.msk [vmem:[%s1] ss:$3 sm:$0x3] %vm1170, %v1169
  %s1172 = scalar_lea.vmem %s0, 92
  %v1173 = vld [vmem:[%s1172] sm:$0x1]
  %s1174 = scalar_lea.vmem %s0, 219
  %v1175 = vld [vmem:[%s1174] sm:$0x2]
  %vm1176 = vcmask 1041409
  %v1177 = vsel %vm1176, %v1175, %v1173
  %1178 = vrot.lane.b32.xlu0 %v1177, 20
  %v1179 = vpop.permute.xlu0 %1178
  %vm1180 = vcmask 187552
  %s1181 = scalar_lea.vmem %s1, 2
  %1182 = vst.msk [vmem:[%s1181] ss:$3 sm:$0x3] %vm1180, %v1179
  %s1183 = scalar_lea.vmem %s0, 49
  %v1184 = vld [vmem:[%s1183] sm:$0x1]
  %s1185 = scalar_lea.vmem %s0, 176
  %v1186 = vld [vmem:[%s1185] sm:$0x2]
  %vm1187 = vcmask 1041409
  %v1188 = vsel %vm1187, %v1186, %v1184
  %1189 = vrot.lane.b32.xlu0 %v1188, 19
  %v1190 = vpop.permute.xlu0 %1189
  %vm1191 = vcmask 179352
  %s1192 = scalar_lea.vmem %s1, 1
  %1193 = vst.msk [vmem:[%s1192] ss:$3 sm:$0x3] %vm1191, %v1190
  %s1194 = scalar_lea.vmem %s0, 6
  %v1195 = vld [vmem:[%s1194] sm:$0x1]
  %s1196 = scalar_lea.vmem %s0, 133
  %v1197 = vld [vmem:[%s1196] sm:$0x2]
  %vm1198 = vcmask 1041409
  %v1199 = vsel %vm1198, %v1197, %v1195
  %1200 = vrot.lane.b32.xlu0 %v1199, 18
  %v1201 = vpop.permute.xlu0 %1200
  %vm1202 = vcmask 171152
  %1203 = vst.msk [vmem:[%s1] ss:$3 sm:$0x3] %vm1202, %v1201
  %s1204 = scalar_lea.vmem %s0, 91
  %v1205 = vld [vmem:[%s1204] sm:$0x1]
  %s1206 = scalar_lea.vmem %s0, 218
  %v1207 = vld [vmem:[%s1206] sm:$0x2]
  %vm1208 = vcmask 1041409
  %v1209 = vsel %vm1208, %v1207, %v1205
  %1210 = vrot.lane.b32.xlu0 %v1209, 17
  %v1211 = vpop.permute.xlu0 %1210
  %vm1212 = vcmask 162952
  %s1213 = scalar_lea.vmem %s1, 2
  %1214 = vst.msk [vmem:[%s1213] ss:$3 sm:$0x3] %vm1212, %v1211
  %s1215 = scalar_lea.vmem %s0, 48
  %v1216 = vld [vmem:[%s1215] sm:$0x1]
  %s1217 = scalar_lea.vmem %s0, 175
  %v1218 = vld [vmem:[%s1217] sm:$0x2]
  %vm1219 = vcmask 1041409
  %v1220 = vsel %vm1219, %v1218, %v1216
  %1221 = vrot.lane.b32.xlu0 %v1220, 16
  %v1222 = vpop.permute.xlu0 %1221
  %vm1223 = vcmask 154752
  %s1224 = scalar_lea.vmem %s1, 1
  %1225 = vst.msk [vmem:[%s1224] ss:$3 sm:$0x3] %vm1223, %v1222
  %s1226 = scalar_lea.vmem %s0, 5
  %v1227 = vld [vmem:[%s1226] sm:$0x1]
  %s1228 = scalar_lea.vmem %s0, 132
  %v1229 = vld [vmem:[%s1228] sm:$0x2]
  %vm1230 = vcmask 1041409
  %v1231 = vsel %vm1230, %v1229, %v1227
  %1232 = vrot.lane.b32.xlu0 %v1231, 15
  %v1233 = vpop.permute.xlu0 %1232
  %vm1234 = vcmask 146552
  %1235 = vst.msk [vmem:[%s1] ss:$3 sm:$0x3] %vm1234, %v1233
  %s1236 = scalar_lea.vmem %s0, 90
  %v1237 = vld [vmem:[%s1236] sm:$0x1]
  %s1238 = scalar_lea.vmem %s0, 217
  %v1239 = vld [vmem:[%s1238] sm:$0x2]
  %vm1240 = vcmask 1041409
  %v1241 = vsel %vm1240, %v1239, %v1237
  %1242 = vrot.lane.b32.xlu0 %v1241, 14
  %v1243 = vpop.permute.xlu0 %1242
  %vm1244 = vcmask 138352
  %s1245 = scalar_lea.vmem %s1, 2
  %1246 = vst.msk [vmem:[%s1245] ss:$3 sm:$0x3] %vm1244, %v1243
  %s1247 = scalar_lea.vmem %s0, 47
  %v1248 = vld [vmem:[%s1247] sm:$0x1]
  %s1249 = scalar_lea.vmem %s0, 174
  %v1250 = vld [vmem:[%s1249] sm:$0x2]
  %vm1251 = vcmask 1041409
  %v1252 = vsel %vm1251, %v1250, %v1248
  %1253 = vrot.lane.b32.xlu0 %v1252, 13
  %v1254 = vpop.permute.xlu0 %1253
  %vm1255 = vcmask 130152
  %s1256 = scalar_lea.vmem %s1, 1
  %1257 = vst.msk [vmem:[%s1256] ss:$3 sm:$0x3] %vm1255, %v1254
  %s1258 = scalar_lea.vmem %s0, 4
  %v1259 = vld [vmem:[%s1258] sm:$0x1]
  %s1260 = scalar_lea.vmem %s0, 131
  %v1261 = vld [vmem:[%s1260] sm:$0x2]
  %vm1262 = vcmask 1041409
  %v1263 = vsel %vm1262, %v1261, %v1259
  %1264 = vrot.lane.b32.xlu0 %v1263, 12
  %v1265 = vpop.permute.xlu0 %1264
  %vm1266 = vcmask 121952
  %1267 = vst.msk [vmem:[%s1] ss:$3 sm:$0x3] %vm1266, %v1265
  %s1268 = scalar_lea.vmem %s0, 89
  %v1269 = vld [vmem:[%s1268] sm:$0x1]
  %s1270 = scalar_lea.vmem %s0, 216
  %v1271 = vld [vmem:[%s1270] sm:$0x2]
  %vm1272 = vcmask 1041409
  %v1273 = vsel %vm1272, %v1271, %v1269
  %1274 = vrot.lane.b32.xlu0 %v1273, 11
  %v1275 = vpop.permute.xlu0 %1274
  %vm1276 = vcmask 113752
  %s1277 = scalar_lea.vmem %s1, 2
  %1278 = vst.msk [vmem:[%s1277] ss:$3 sm:$0x3] %vm1276, %v1275
  %s1279 = scalar_lea.vmem %s0, 46
  %v1280 = vld [vmem:[%s1279] sm:$0x1]
  %s1281 = scalar_lea.vmem %s0, 173
  %v1282 = vld [vmem:[%s1281] sm:$0x2]
  %vm1283 = vcmask 1041409
  %v1284 = vsel %vm1283, %v1282, %v1280
  %1285 = vrot.lane.b32.xlu0 %v1284, 10
  %v1286 = vpop.permute.xlu0 %1285
  %vm1287 = vcmask 105552
  %s1288 = scalar_lea.vmem %s1, 1
  %1289 = vst.msk [vmem:[%s1288] ss:$3 sm:$0x3] %vm1287, %v1286
  %s1290 = scalar_lea.vmem %s0, 3
  %v1291 = vld [vmem:[%s1290] sm:$0x1]
  %s1292 = scalar_lea.vmem %s0, 130
  %v1293 = vld [vmem:[%s1292] sm:$0x2]
  %vm1294 = vcmask 1041409
  %v1295 = vsel %vm1294, %v1293, %v1291
  %1296 = vrot.lane.b32.xlu0 %v1295, 9
  %v1297 = vpop.permute.xlu0 %1296
  %vm1298 = vcmask 97352
  %1299 = vst.msk [vmem:[%s1] ss:$3 sm:$0x3] %vm1298, %v1297
  %s1300 = scalar_lea.vmem %s0, 88
  %v1301 = vld [vmem:[%s1300] sm:$0x1]
  %s1302 = scalar_lea.vmem %s0, 215
  %v1303 = vld [vmem:[%s1302] sm:$0x2]
  %vm1304 = vcmask 1041409
  %v1305 = vsel %vm1304, %v1303, %v1301
  %1306 = vrot.lane.b32.xlu0 %v1305, 8
  %v1307 = vpop.permute.xlu0 %1306
  %vm1308 = vcmask 89152
  %s1309 = scalar_lea.vmem %s1, 2
  %1310 = vst.msk [vmem:[%s1309] ss:$3 sm:$0x3] %vm1308, %v1307
  %s1311 = scalar_lea.vmem %s0, 45
  %v1312 = vld [vmem:[%s1311] sm:$0x1]
  %s1313 = scalar_lea.vmem %s0, 172
  %v1314 = vld [vmem:[%s1313] sm:$0x2]
  %vm1315 = vcmask 1041409
  %v1316 = vsel %vm1315, %v1314, %v1312
  %1317 = vrot.lane.b32.xlu0 %v1316, 7
  %v1318 = vpop.permute.xlu0 %1317
  %vm1319 = vcmask 80952
  %s1320 = scalar_lea.vmem %s1, 1
  %1321 = vst.msk [vmem:[%s1320] ss:$3 sm:$0x3] %vm1319, %v1318
  %s1322 = scalar_lea.vmem %s0, 2
  %v1323 = vld [vmem:[%s1322] sm:$0x1]
  %s1324 = scalar_lea.vmem %s0, 129
  %v1325 = vld [vmem:[%s1324] sm:$0x2]
  %vm1326 = vcmask 1041409
  %v1327 = vsel %vm1326, %v1325, %v1323
  %1328 = vrot.lane.b32.xlu0 %v1327, 6
  %v1329 = vpop.permute.xlu0 %1328
  %vm1330 = vcmask 72752
  %1331 = vst.msk [vmem:[%s1] ss:$3 sm:$0x3] %vm1330, %v1329
  %s1332 = scalar_lea.vmem %s0, 87
  %v1333 = vld [vmem:[%s1332] sm:$0x1]
  %s1334 = scalar_lea.vmem %s0, 214
  %v1335 = vld [vmem:[%s1334] sm:$0x2]
  %vm1336 = vcmask 1041409
  %v1337 = vsel %vm1336, %v1335, %v1333
  %1338 = vrot.lane.b32.xlu0 %v1337, 5
  %v1339 = vpop.permute.xlu0 %1338
  %vm1340 = vcmask 64552
  %s1341 = scalar_lea.vmem %s1, 2
  %1342 = vst.msk [vmem:[%s1341] ss:$3 sm:$0x3] %vm1340, %v1339
  %s1343 = scalar_lea.vmem %s0, 44
  %v1344 = vld [vmem:[%s1343] sm:$0x1]
  %s1345 = scalar_lea.vmem %s0, 171
  %v1346 = vld [vmem:[%s1345] sm:$0x2]
  %vm1347 = vcmask 1041409
  %v1348 = vsel %vm1347, %v1346, %v1344
  %1349 = vrot.lane.b32.xlu0 %v1348, 4
  %v1350 = vpop.permute.xlu0 %1349
  %vm1351 = vcmask 56352
  %s1352 = scalar_lea.vmem %s1, 1
  %1353 = vst.msk [vmem:[%s1352] ss:$3 sm:$0x3] %vm1351, %v1350
  %s1354 = scalar_lea.vmem %s0, 1
  %v1355 = vld [vmem:[%s1354] sm:$0x1]
  %s1356 = scalar_lea.vmem %s0, 128
  %v1357 = vld [vmem:[%s1356] sm:$0x2]
  %vm1358 = vcmask 1041409
  %v1359 = vsel %vm1358, %v1357, %v1355
  %1360 = vrot.lane.b32.xlu0 %v1359, 3
  %v1361 = vpop.permute.xlu0 %1360
  %vm1362 = vcmask 48152
  %1363 = vst.msk [vmem:[%s1] ss:$3 sm:$0x3] %vm1362, %v1361
  %s1364 = scalar_lea.vmem %s0, 86
  %v1365 = vld [vmem:[%s1364] sm:$0x1]
  %s1366 = scalar_lea.vmem %s0, 213
  %v1367 = vld [vmem:[%s1366] sm:$0x2]
  %vm1368 = vcmask 1041409
  %v1369 = vsel %vm1368, %v1367, %v1365
  %1370 = vrot.lane.b32.xlu0 %v1369, 2
  %v1371 = vpop.permute.xlu0 %1370
  %vm1372 = vcmask 39952
  %s1373 = scalar_lea.vmem %s1, 2
  %1374 = vst.msk [vmem:[%s1373] ss:$3 sm:$0x3] %vm1372, %v1371
  %s1375 = scalar_lea.vmem %s0, 43
  %v1376 = vld [vmem:[%s1375] sm:$0x1]
  %s1377 = scalar_lea.vmem %s0, 170
  %v1378 = vld [vmem:[%s1377] sm:$0x2]
  %vm1379 = vcmask 1041409
  %v1380 = vsel %vm1379, %v1378, %v1376
  %1381 = vrot.lane.b32.xlu0 %v1380, 1
  %v1382 = vpop.permute.xlu0 %1381
  %vm1383 = vcmask 31752
  %s1384 = scalar_lea.vmem %s1, 1
  %1385 = vst.msk [vmem:[%s1384] ss:$3 sm:$0x3] %vm1383, %v1382

// kernel: multi_branch_forward.3
$region0: #{multi_branch_forward.3}
  #allocation0 [shape = 'u32[]', space=smem, size = 0x4, offset = 0x4, fixed_abs, tag = 'smem constant byte address 0x4 - core index']
  #allocation1 [shape = 'u32[144,128]{1,0:T(1,128)}', space=vmem, size = 0x12000, scoped, tag = 'internal scratch']
  %s0 = inlined_call_operand.vmem [shape: bf16[2,4,768], index: 0, kind: input, shape index: {}]
  %s1 = inlined_call_operand.vmem [shape: bf16[768,1280], index: 1, kind: input, shape index: {}]
  %s2 = inlined_call_operand.vmem [shape: f32[1,1280], index: 2, kind: input, shape index: {}]
  %s3 = inlined_call_operand.vmem [shape: f32[2,1,1280], index: 3, kind: output, shape index: {}]
  %s4 = sld [smem:[#allocation0]]
  $region53: #{multi_branch_forward.3} parent=0
    _
  %s6 = ssub.s32 1, %s4
  %s7 = scalar_select 0, %s6, %s4
  loop: start=0, step=1, limit=4
  $region2: #{multi_branch_forward.3} parent=0 // loop_pre_header
    _
  $region3: #{multi_branch_forward.3} parent=0 // loop_header
    %s9 = sphi 0, %s13
    %p10 = scmp.ge.s32.totalorder %s9, 4
    %s16 = sphi 0, %s28
    %s17 = sphi 0, %s24
    %s18 = sphi 0, %s16
    %s19 = sphi 0, %s17
    %s20 = sphi 0, %s18
    %s21 = sphi 0, %s19
    %s33 = sphi 0, %s35
    %s36 = sphi 0, %s33
    %s37 = sphi 0, %s36
    %s53 = sphi 0, %s37
    %s57 = sphi 0, %s57
    %s59 = sphi 0, %s57
    %s60 = sphi 0, %s59
    %s74 = sphi 0, %s60
    %s78 = sphi 0, %s78
    %s80 = sphi 0, %s78
    %s81 = sphi 0, %s80
    %s95 = sphi 0, %s81
    %s101 = sphi 0, %s103
    %s104 = sphi 0, %s101
    %s105 = sphi 0, %s104
    %s121 = sphi 0, %s105
  $region4: #{multi_branch_forward.3} parent=0 // loop_header_branch
    %12 = sbr.rel (%p10) target = $region8
  $region5: #{multi_branch_forward.3} parent=0 // loop_body
    %s14 = ssub.s32 %s9, 1
    %s15 = ssub.s32 %s9, 2
    %s22 = sadd.s32 1, %s17
    %p23 = scmp.ge.s32.totalorder %s22, 1
    %s24 = scalar_select %p23, 0, %s22
    %s25 = sadd.s32 1, %s16
    %s26 = scalar_select %p23, %s25, %s16
    %p27 = scmp.ge.s32.totalorder %s26, 2
    %s28 = scalar_select %p27, 0, %s26
    %s29 = ssub.s32 %s16, %s28
    %s30 = ssub.s32 %s17, %s24
    %s31 = sor.u32 %s29, %s30
    %p32 = scmp.eq.s32.totalorder %s31, 0
    %s34 = sadd.s32 %s33, 1
    %s35 = scalar_select %p32, %s33, %s34
    %p38 = pneg %p32
    %p39 = scmp.eq.s32.totalorder %s9, 1
    %p40 = por %p38, %p39
    %p41 = scmp.ne.s32.totalorder %s33, %s36
    %p42 = scmp.eq.s32.totalorder %s9, 0
    %p43 = por %p41, %p42
    %p44 = scmp.ne.s32.totalorder %s33, %s36
    %p45 = scmp.eq.s32.totalorder %s14, 1
    %p46 = por %p44, %p45
    %p47 = scmp.ne.s32.totalorder %s36, %s37
    %p48 = scmp.eq.s32.totalorder %s14, 0
    %p49 = por %p47, %p48
    %p50 = scmp.ne.s32.totalorder %s36, %s37
    %p51 = scmp.eq.s32.totalorder %s15, 1
    %p52 = por %p50, %p51
    %p54 = scmp.ne.s32.totalorder %s37, %s53
    %p55 = scmp.eq.s32.totalorder %s15, 0
    %p56 = por %p54, %p55
    %s58 = sadd.s32 %s57, 1
    %p61 = scmp.eq.s32.totalorder %s9, 1
    %p62 = scmp.ne.s32.totalorder %s57, %s59
    %p63 = scmp.eq.s32.totalorder %s9, 0
    %p64 = por %p62, %p63
    %p65 = scmp.ne.s32.totalorder %s57, %s59
    %p66 = scmp.eq.s32.totalorder %s14, 1
    %p67 = por %p65, %p66
    %p68 = scmp.ne.s32.totalorder %s59, %s60
    %p69 = scmp.eq.s32.totalorder %s14, 0
    %p70 = por %p68, %p69
    %p71 = scmp.ne.s32.totalorder %s59, %s60
    %p72 = scmp.eq.s32.totalorder %s15, 1
    %p73 = por %p71, %p72
    %p75 = scmp.ne.s32.totalorder %s60, %s74
    %p76 = scmp.eq.s32.totalorder %s15, 0
    %p77 = por %p75, %p76
    %s79 = sadd.s32 %s78, 1
    %p82 = scmp.eq.s32.totalorder %s9, 1
    %p83 = scmp.ne.s32.totalorder %s78, %s80
    %p84 = scmp.eq.s32.totalorder %s9, 0
    %p85 = por %p83, %p84
    %p86 = scmp.ne.s32.totalorder %s78, %s80
    %p87 = scmp.eq.s32.totalorder %s14, 1
    %p88 = por %p86, %p87
    %p89 = scmp.ne.s32.totalorder %s80, %s81
    %p90 = scmp.eq.s32.totalorder %s14, 0
    %p91 = por %p89, %p90
    %p92 = scmp.ne.s32.totalorder %s80, %s81
    %p93 = scmp.eq.s32.totalorder %s15, 1
    %p94 = por %p92, %p93
    %p96 = scmp.ne.s32.totalorder %s81, %s95
    %p97 = scmp.eq.s32.totalorder %s15, 0
    %p98 = por %p96, %p97
    %s99 = ssub.s32 %s16, %s28
    %p100 = scmp.eq.s32.totalorder %s99, 0
    %s102 = sadd.s32 %s101, 1
    %s103 = scalar_select %p100, %s101, %s102
    %p106 = pneg %p100
    %p107 = scmp.eq.s32.totalorder %s9, 1
    %p108 = por %p106, %p107
    %p109 = scmp.ne.s32.totalorder %s101, %s104
    %p110 = scmp.eq.s32.totalorder %s9, 0
    %p111 = por %p109, %p110
    %p112 = scmp.ne.s32.totalorder %s101, %s104
    %p113 = scmp.eq.s32.totalorder %s14, 1
    %p114 = por %p112, %p113
    %p115 = scmp.ne.s32.totalorder %s104, %s105
    %p116 = scmp.eq.s32.totalorder %s14, 0
    %p117 = por %p115, %p116
    %p118 = scmp.ne.s32.totalorder %s104, %s105
    %p119 = scmp.eq.s32.totalorder %s15, 1
    %p120 = por %p118, %p119
    %p122 = scmp.ne.s32.totalorder %s105, %s121
    %p123 = scmp.eq.s32.totalorder %s15, 0
    %p124 = por %p122, %p123
    %p125 = scmp.le.s32.totalorder 1, %s9
    %p126 = scmp.lt.s32.totalorder %s9, 3
    %p127 = pnand %p125, %p126
    %p128 = pneg %p127
    // Predicated region
    $region9: #{multi_branch_forward.3} parent=5 // pred_check
      _
    $region10: #{multi_branch_forward.3} parent=5 // pred_check_branch
      %130 = sbr.rel (%p127) target = $region12
    $region11: #{multi_branch_forward.3} parent=5 // pred_region
      %s131 = ssub.s32 %s9, 1
      // Predicated region
      $region13: #{multi_branch_forward.3} parent=11 // pred_check
        %p132 = pneg %p70
      $region14: #{multi_branch_forward.3} parent=11 // pred_check_branch
        %134 = sbr.rel (%p132) target = $region16
      $region15: #{multi_branch_forward.3} parent=11 // pred_region
        _
      $region16: #{multi_branch_forward.3} parent=11 // pred_fallthru
        _
      // Predicated region
      $region17: #{multi_branch_forward.3} parent=11 // pred_check
        %p135 = pneg %p91
      $region18: #{multi_branch_forward.3} parent=11 // pred_check_branch
        %137 = sbr.rel (%p135) target = $region20
      $region19: #{multi_branch_forward.3} parent=11 // pred_region
        _
      $region20: #{multi_branch_forward.3} parent=11 // pred_fallthru
        _
    $region12: #{multi_branch_forward.3} parent=5 // pred_fallthru
      _
    %p138 = scmp.lt.s32.totalorder %s9, 2
    // Predicated region
    $region21: #{multi_branch_forward.3} parent=5 // pred_check
      %p139 = pneg %p138
    $region22: #{multi_branch_forward.3} parent=5 // pred_check_branch
      %141 = sbr.rel (%p139) target = $region24
    $region23: #{multi_branch_forward.3} parent=5 // pred_region
      // Predicated region
      $region25: #{multi_branch_forward.3} parent=23 // pred_check
        %p142 = pneg %p43
      $region26: #{multi_branch_forward.3} parent=23 // pred_check_branch
        %144 = sbr.rel (%p142) target = $region28
      $region27: #{multi_branch_forward.3} parent=23 // pred_region
        %p145 = scmp.lt.s32.totalorder %s16, 1
        %s146 = scalar_select %p145, %s16, 1
        %p147 = scmp.lt.s32.totalorder %s17, 0
        %s148 = scalar_select %p147, %s17, 0
        %s149 = smul.addr %s148, 6
        %s150 = smul.addr %s146, 6
        %s151 = sadd.s32 %s149, %s150
        %s152 = smul.addr %s151, 2
        %s153 = scalar_lea.vmem %s0, %s152
      $region28: #{multi_branch_forward.3} parent=23 // pred_fallthru
        _
    $region24: #{multi_branch_forward.3} parent=5 // pred_fallthru
      _
    %p154 = scmp.le.s32.totalorder 1, %s9
    %p155 = scmp.lt.s32.totalorder %s9, 3
    %p156 = pnand %p154, %p155
    %p157 = pneg %p156
    // Predicated region
    $region29: #{multi_branch_forward.3} parent=5 // pred_check
      _
    $region30: #{multi_branch_forward.3} parent=5 // pred_check_branch
      %159 = sbr.rel (%p156) target = $region32
    $region31: #{multi_branch_forward.3} parent=5 // pred_region
      %s160 = ssub.s32 %s9, 1
      %p161 = scmp.lt.s32.totalorder %s18, 1
      %s162 = scalar_select %p161, %s18, 1
      %p163 = scmp.lt.s32.totalorder %s19, 0
      %s164 = scalar_select %p163, %s19, 0
      %s165 = smul.addr %s164, 6
      %s166 = smul.addr %s162, 6
      %s167 = sadd.s32 %s165, %s166
      %s168 = smul.addr %s167, 2
      %s169 = scalar_lea.vmem %s0, %s168
      %p170 = pneg %p49
      %p171 = pneg %p46
      %p172 = pneg %p70
      %p173 = pneg %p67
      %p174 = pneg %p91
      %p175 = pneg %p88
      %p176 = pneg %p117
      %p177 = pneg %p114
      %p178 = scmp.lt.s32.totalorder %s18, 1
      %s179 = scalar_select %p178, %s18, 1
      %s180 = smul.addr %s179, 10
      %s181 = scalar_lea.vmem %s3, %s180
      %p182 = scmp.lt.s32.totalorder %s18, 1
      %s183 = scalar_select %p182, %s18, 1
      %p184 = scmp.lt.s32.totalorder %s19, 0
      %s185 = scalar_select %p184, %s19, 0
      %s186 = smul.addr %s185, 6
      %s187 = smul.addr %s183, 6
      %s188 = sadd.s32 %s186, %s187
      %s189 = smul.addr %s188, 2
      %s190 = scalar_lea.vmem %s0, %s189
      %p191 = scmp.lt.s32.totalorder %s18, 1
      %s192 = scalar_select %p191, %s18, 1
      %s193 = smul.addr %s192, 10
      %s194 = scalar_lea.vmem %s3, %s193
      %v195 = vld [vmem:[%s190] sm:$0xff]
      %v196 = vld [vmem:[%s190 + $0x8] sm:$0xf]
      %v197 = vld [vmem:[%s1] sm:$0xff]
      %v198 = vld [vmem:[%s1 + $0x8] sm:$0xff]
      %v199 = vld [vmem:[%s1 + $0x10] sm:$0xff]
      %v200 = vld [vmem:[%s1 + $0x18] sm:$0xff]
      %v201 = vld [vmem:[%s1 + $0x20] sm:$0xff]
      %v202 = vld [vmem:[%s1 + $0x28] sm:$0xff]
      %v203 = vld [vmem:[%s1 + $0x30] sm:$0xff]
      %v204 = vld [vmem:[%s1 + $0x38] sm:$0xff]
      %v205 = vld [vmem:[%s1 + $0x40] sm:$0xff]
      %v206 = vld [vmem:[%s1 + $0x48] sm:$0xff]
      %v207 = vld [vmem:[%s1 + $0x50] sm:$0xff]
      %v208 = vld [vmem:[%s1 + $0x58] sm:$0xff]
      %v209 = vld [vmem:[%s1 + $0x60] sm:$0xff]
      %v210 = vld [vmem:[%s1 + $0x68] sm:$0xff]
      %v211 = vld [vmem:[%s1 + $0x70] sm:$0xff]
      %v212 = vld [vmem:[%s1 + $0x78] sm:$0xff]
      %v213 = vld [vmem:[%s1 + $0x80] sm:$0xff]
      %v214 = vld [vmem:[%s1 + $0x88] sm:$0xff]
      %v215 = vld [vmem:[%s1 + $0x90] sm:$0xff]
      %v216 = vld [vmem:[%s1 + $0x98] sm:$0xff]
      %v217 = vld [vmem:[%s1 + $0xa0] sm:$0xff]
      %v218 = vld [vmem:[%s1 + $0xa8] sm:$0xff]
      %v219 = vld [vmem:[%s1 + $0xb0] sm:$0xff]
      %v220 = vld [vmem:[%s1 + $0xb8] sm:$0xff]
      %v221 = vld [vmem:[%s1 + $0xc0] sm:$0xff]
      %v222 = vld [vmem:[%s1 + $0xc8] sm:$0xff]
      %v223 = vld [vmem:[%s1 + $0xd0] sm:$0xff]
      %v224 = vld [vmem:[%s1 + $0xd8] sm:$0xff]
      %v225 = vld [vmem:[%s1 + $0xe0] sm:$0xff]
      %v226 = vld [vmem:[%s1 + $0xe8] sm:$0xff]
      %v227 = vld [vmem:[%s1 + $0xf0] sm:$0xff]
      %v228 = vld [vmem:[%s1 + $0xf8] sm:$0xff]
      %v229 = vld [vmem:[%s1 + $0x100] sm:$0xff]
      %v230 = vld [vmem:[%s1 + $0x108] sm:$0xff]
      %v231 = vld [vmem:[%s1 + $0x110] sm:$0xff]
      %v232 = vld [vmem:[%s1 + $0x118] sm:$0xff]
      %v233 = vld [vmem:[%s1 + $0x120] sm:$0xff]
      %v234 = vld [vmem:[%s1 + $0x128] sm:$0xff]
      %v235 = vld [vmem:[%s1 + $0x130] sm:$0xff]
      %v236 = vld [vmem:[%s1 + $0x138] sm:$0xff]
      %v237 = vld [vmem:[%s1 + $0x140] sm:$0xff]
      %v238 = vld [vmem:[%s1 + $0x148] sm:$0xff]
      %v239 = vld [vmem:[%s1 + $0x150] sm:$0xff]
      %v240 = vld [vmem:[%s1 + $0x158] sm:$0xff]
      %v241 = vld [vmem:[%s1 + $0x160] sm:$0xff]
      %v242 = vld [vmem:[%s1 + $0x168] sm:$0xff]
      %v243 = vld [vmem:[%s1 + $0x170] sm:$0xff]
      %v244 = vld [vmem:[%s1 + $0x178] sm:$0xff]
      %v245 = vld [vmem:[%s1 + $0x180] sm:$0xff]
      %v246 = vld [vmem:[%s1 + $0x188] sm:$0xff]
      %v247 = vld [vmem:[%s1 + $0x190] sm:$0xff]
      %v248 = vld [vmem:[%s1 + $0x198] sm:$0xff]
      %v249 = vld [vmem:[%s1 + $0x1a0] sm:$0xff]
      %v250 = vld [vmem:[%s1 + $0x1a8] sm:$0xff]
      %v251 = vld [vmem:[%s1 + $0x1b0] sm:$0xff]
      %v252 = vld [vmem:[%s1 + $0x1b8] sm:$0xff]
      %v253 = vld [vmem:[%s1 + $0x1c0] sm:$0xff]
      %v254 = vld [vmem:[%s1 + $0x1c8] sm:$0xff]
      %v255 = vld [vmem:[%s1 + $0x1d0] sm:$0xff]
      %v256 = vld [vmem:[%s1 + $0x1d8] sm:$0xff]
      %v257 = vld [vmem:[%s1 + $0x1e0] sm:$0xff]
      %v258 = vld [vmem:[%s1 + $0x1e8] sm:$0xff]
      %v259 = vld [vmem:[%s1 + $0x1f0] sm:$0xff]
      %v260 = vld [vmem:[%s1 + $0x1f8] sm:$0xff]
      %v261 = vld [vmem:[%s1 + $0x200] sm:$0xff]
      %v262 = vld [vmem:[%s1 + $0x208] sm:$0xff]
      %v263 = vld [vmem:[%s1 + $0x210] sm:$0xff]
      %v264 = vld [vmem:[%s1 + $0x218] sm:$0xff]
      %v265 = vld [vmem:[%s1 + $0x220] sm:$0xff]
      %v266 = vld [vmem:[%s1 + $0x228] sm:$0xff]
      %v267 = vld [vmem:[%s1 + $0x230] sm:$0xff]
      %v268 = vld [vmem:[%s1 + $0x238] sm:$0xff]
      %v269 = vld [vmem:[%s1 + $0x240] sm:$0xff]
      %v270 = vld [vmem:[%s1 + $0x248] sm:$0xff]
      %v271 = vld [vmem:[%s1 + $0x250] sm:$0xff]
      %v272 = vld [vmem:[%s1 + $0x258] sm:$0xff]
      %v273 = vld [vmem:[%s1 + $0x260] sm:$0xff]
      %v274 = vld [vmem:[%s1 + $0x268] sm:$0xff]
      %v275 = vld [vmem:[%s1 + $0x270] sm:$0xff]
      %v276 = vld [vmem:[%s1 + $0x278] sm:$0xff]
      %v277 = vld [vmem:[%s1 + $0x280] sm:$0xff]
      %v278 = vld [vmem:[%s1 + $0x288] sm:$0xff]
      %v279 = vld [vmem:[%s1 + $0x290] sm:$0xff]
      %v280 = vld [vmem:[%s1 + $0x298] sm:$0xff]
      %v281 = vld [vmem:[%s1 + $0x2a0] sm:$0xff]
      %v282 = vld [vmem:[%s1 + $0x2a8] sm:$0xff]
      %v283 = vld [vmem:[%s1 + $0x2b0] sm:$0xff]
      %v284 = vld [vmem:[%s1 + $0x2b8] sm:$0xff]
      %v285 = vld [vmem:[%s1 + $0x2c0] sm:$0xff]
      %v286 = vld [vmem:[%s1 + $0x2c8] sm:$0xff]
      %v287 = vld [vmem:[%s1 + $0x2d0] sm:$0xff]
      %v288 = vld [vmem:[%s1 + $0x2d8] sm:$0xff]
      %v289 = vld [vmem:[%s1 + $0x2e0] sm:$0xff]
      %v290 = vld [vmem:[%s1 + $0x2e8] sm:$0xff]
      %v291 = vld [vmem:[%s1 + $0x2f0] sm:$0xff]
      %v292 = vld [vmem:[%s1 + $0x2f8] sm:$0xff]
      %v293 = vld [vmem:[%s1 + $0x300] sm:$0xff]
      %v294 = vld [vmem:[%s1 + $0x308] sm:$0xff]
      %v295 = vld [vmem:[%s1 + $0x310] sm:$0xff]
      %v296 = vld [vmem:[%s1 + $0x318] sm:$0xff]
      %v297 = vld [vmem:[%s1 + $0x320] sm:$0xff]
      %v298 = vld [vmem:[%s1 + $0x328] sm:$0xff]
      %v299 = vld [vmem:[%s1 + $0x330] sm:$0xff]
      %v300 = vld [vmem:[%s1 + $0x338] sm:$0xff]
      %v301 = vld [vmem:[%s1 + $0x340] sm:$0xff]
      %v302 = vld [vmem:[%s1 + $0x348] sm:$0xff]
      %v303 = vld [vmem:[%s1 + $0x350] sm:$0xff]
      %v304 = vld [vmem:[%s1 + $0x358] sm:$0xff]
      %v305 = vld [vmem:[%s1 + $0x360] sm:$0xff]
      %v306 = vld [vmem:[%s1 + $0x368] sm:$0xff]
      %v307 = vld [vmem:[%s1 + $0x370] sm:$0xff]
      %v308 = vld [vmem:[%s1 + $0x378] sm:$0xff]
      %v309 = vld [vmem:[%s1 + $0x380] sm:$0xff]
      %v310 = vld [vmem:[%s1 + $0x388] sm:$0xff]
      %v311 = vld [vmem:[%s1 + $0x390] sm:$0xff]
      %v312 = vld [vmem:[%s1 + $0x398] sm:$0xff]
      %v313 = vld [vmem:[%s1 + $0x3a0] sm:$0xff]
      %v314 = vld [vmem:[%s1 + $0x3a8] sm:$0xff]
      %v315 = vld [vmem:[%s1 + $0x3b0] sm:$0xff]
      %v316 = vld [vmem:[%s1 + $0x3b8] sm:$0xff]
      %v317 = vld [vmem:[%s1 + $0x3c0] sm:$0xff]
      %v318 = vld [vmem:[%s1 + $0x3c8] sm:$0xff]
      %v319 = vld [vmem:[%s1 + $0x3d0] sm:$0xff]
      %v320 = vld [vmem:[%s1 + $0x3d8] sm:$0xff]
      %v321 = vld [vmem:[%s1 + $0x3e0] sm:$0xff]
      %v322 = vld [vmem:[%s1 + $0x3e8] sm:$0xff]
      %v323 = vld [vmem:[%s1 + $0x3f0] sm:$0xff]
      %v324 = vld [vmem:[%s1 + $0x3f8] sm:$0xff]
      %v325 = vld [vmem:[%s1 + $0x400] sm:$0xff]
      %v326 = vld [vmem:[%s1 + $0x408] sm:$0xff]
      %v327 = vld [vmem:[%s1 + $0x410] sm:$0xff]
      %v328 = vld [vmem:[%s1 + $0x418] sm:$0xff]
      %v329 = vld [vmem:[%s1 + $0x420] sm:$0xff]
      %v330 = vld [vmem:[%s1 + $0x428] sm:$0xff]
      %v331 = vld [vmem:[%s1 + $0x430] sm:$0xff]
      %v332 = vld [vmem:[%s1 + $0x438] sm:$0xff]
      %v333 = vld [vmem:[%s1 + $0x440] sm:$0xff]
      %v334 = vld [vmem:[%s1 + $0x448] sm:$0xff]
      %v335 = vld [vmem:[%s1 + $0x450] sm:$0xff]
      %v336 = vld [vmem:[%s1 + $0x458] sm:$0xff]
      %v337 = vld [vmem:[%s1 + $0x460] sm:$0xff]
      %v338 = vld [vmem:[%s1 + $0x468] sm:$0xff]
      %v339 = vld [vmem:[%s1 + $0x470] sm:$0xff]
      %v340 = vld [vmem:[%s1 + $0x478] sm:$0xff]
      %v341 = vld [vmem:[%s1 + $0x480] sm:$0xff]
      %v342 = vld [vmem:[%s1 + $0x488] sm:$0xff]
      %v343 = vld [vmem:[%s1 + $0x490] sm:$0xff]
      %v344 = vld [vmem:[%s1 + $0x498] sm:$0xff]
      %v345 = vld [vmem:[%s1 + $0x4a0] sm:$0xff]
      %v346 = vld [vmem:[%s1 + $0x4a8] sm:$0xff]
      %v347 = vld [vmem:[%s1 + $0x4b0] sm:$0xff]
      %v348 = vld [vmem:[%s1 + $0x4b8] sm:$0xff]
      %v349 = vld [vmem:[%s1 + $0x4c0] sm:$0xff]
      %v350 = vld [vmem:[%s1 + $0x4c8] sm:$0xff]
      %v351 = vld [vmem:[%s1 + $0x4d0] sm:$0xff]
      %v352 = vld [vmem:[%s1 + $0x4d8] sm:$0xff]
      %v353 = vld [vmem:[%s1 + $0x4e0] sm:$0xff]
      %v354 = vld [vmem:[%s1 + $0x4e8] sm:$0xff]
      %v355 = vld [vmem:[%s1 + $0x4f0] sm:$0xff]
      %v356 = vld [vmem:[%s1 + $0x4f8] sm:$0xff]
      %v357 = vld [vmem:[%s1 + $0x500] sm:$0xff]
      %v358 = vld [vmem:[%s1 + $0x508] sm:$0xff]
      %v359 = vld [vmem:[%s1 + $0x510] sm:$0xff]
      %v360 = vld [vmem:[%s1 + $0x518] sm:$0xff]
      %v361 = vld [vmem:[%s1 + $0x520] sm:$0xff]
      %v362 = vld [vmem:[%s1 + $0x528] sm:$0xff]
      %v363 = vld [vmem:[%s1 + $0x530] sm:$0xff]
      %v364 = vld [vmem:[%s1 + $0x538] sm:$0xff]
      %v365 = vld [vmem:[%s1 + $0x540] sm:$0xff]
      %v366 = vld [vmem:[%s1 + $0x548] sm:$0xff]
      %v367 = vld [vmem:[%s1 + $0x550] sm:$0xff]
      %v368 = vld [vmem:[%s1 + $0x558] sm:$0xff]
      %v369 = vld [vmem:[%s1 + $0x560] sm:$0xff]
      %v370 = vld [vmem:[%s1 + $0x568] sm:$0xff]
      %v371 = vld [vmem:[%s1 + $0x570] sm:$0xff]
      %v372 = vld [vmem:[%s1 + $0x578] sm:$0xff]
      %v373 = vld [vmem:[%s1 + $0x580] sm:$0xff]
      %v374 = vld [vmem:[%s1 + $0x588] sm:$0xff]
      %v375 = vld [vmem:[%s1 + $0x590] sm:$0xff]
      %v376 = vld [vmem:[%s1 + $0x598] sm:$0xff]
      %v377 = vld [vmem:[%s1 + $0x5a0] sm:$0xff]
      %v378 = vld [vmem:[%s1 + $0x5a8] sm:$0xff]
      %v379 = vld [vmem:[%s1 + $0x5b0] sm:$0xff]
      %v380 = vld [vmem:[%s1 + $0x5b8] sm:$0xff]
      %v381 = vld [vmem:[%s1 + $0x5c0] sm:$0xff]
      %v382 = vld [vmem:[%s1 + $0x5c8] sm:$0xff]
      %v383 = vld [vmem:[%s1 + $0x5d0] sm:$0xff]
      %v384 = vld [vmem:[%s1 + $0x5d8] sm:$0xff]
      %v385 = vld [vmem:[%s1 + $0x5e0] sm:$0xff]
      %v386 = vld [vmem:[%s1 + $0x5e8] sm:$0xff]
      %v387 = vld [vmem:[%s1 + $0x5f0] sm:$0xff]
      %v388 = vld [vmem:[%s1 + $0x5f8] sm:$0xff]
      %v389 = vld [vmem:[%s1 + $0x600] sm:$0xff]
      %v390 = vld [vmem:[%s1 + $0x608] sm:$0xff]
      %v391 = vld [vmem:[%s1 + $0x610] sm:$0xff]
      %v392 = vld [vmem:[%s1 + $0x618] sm:$0xff]
      %v393 = vld [vmem:[%s1 + $0x620] sm:$0xff]
      %v394 = vld [vmem:[%s1 + $0x628] sm:$0xff]
      %v395 = vld [vmem:[%s1 + $0x630] sm:$0xff]
      %v396 = vld [vmem:[%s1 + $0x638] sm:$0xff]
      %v397 = vld [vmem:[%s1 + $0x640] sm:$0xff]
      %v398 = vld [vmem:[%s1 + $0x648] sm:$0xff]
      %v399 = vld [vmem:[%s1 + $0x650] sm:$0xff]
      %v400 = vld [vmem:[%s1 + $0x658] sm:$0xff]
      %v401 = vld [vmem:[%s1 + $0x660] sm:$0xff]
      %v402 = vld [vmem:[%s1 + $0x668] sm:$0xff]
      %v403 = vld [vmem:[%s1 + $0x670] sm:$0xff]
      %v404 = vld [vmem:[%s1 + $0x678] sm:$0xff]
      %v405 = vld [vmem:[%s1 + $0x680] sm:$0xff]
      %v406 = vld [vmem:[%s1 + $0x688] sm:$0xff]
      %v407 = vld [vmem:[%s1 + $0x690] sm:$0xff]
      %v408 = vld [vmem:[%s1 + $0x698] sm:$0xff]
      %v409 = vld [vmem:[%s1 + $0x6a0] sm:$0xff]
      %v410 = vld [vmem:[%s1 + $0x6a8] sm:$0xff]
      %v411 = vld [vmem:[%s1 + $0x6b0] sm:$0xff]
      %v412 = vld [vmem:[%s1 + $0x6b8] sm:$0xff]
      %v413 = vld [vmem:[%s1 + $0x6c0] sm:$0xff]
      %v414 = vld [vmem:[%s1 + $0x6c8] sm:$0xff]
      %v415 = vld [vmem:[%s1 + $0x6d0] sm:$0xff]
      %v416 = vld [vmem:[%s1 + $0x6d8] sm:$0xff]
      %v417 = vld [vmem:[%s1 + $0x6e0] sm:$0xff]
      %v418 = vld [vmem:[%s1 + $0x6e8] sm:$0xff]
      %v419 = vld [vmem:[%s1 + $0x6f0] sm:$0xff]
      %v420 = vld [vmem:[%s1 + $0x6f8] sm:$0xff]
      %v421 = vld [vmem:[%s1 + $0x700] sm:$0xff]
      %v422 = vld [vmem:[%s1 + $0x708] sm:$0xff]
      %v423 = vld [vmem:[%s1 + $0x710] sm:$0xff]
      %v424 = vld [vmem:[%s1 + $0x718] sm:$0xff]
      %v425 = vld [vmem:[%s1 + $0x720] sm:$0xff]
      %v426 = vld [vmem:[%s1 + $0x728] sm:$0xff]
      %v427 = vld [vmem:[%s1 + $0x730] sm:$0xff]
      %v428 = vld [vmem:[%s1 + $0x738] sm:$0xff]
      %v429 = vld [vmem:[%s1 + $0x740] sm:$0xff]
      %v430 = vld [vmem:[%s1 + $0x748] sm:$0xff]
      %v431 = vld [vmem:[%s1 + $0x750] sm:$0xff]
      %v432 = vld [vmem:[%s1 + $0x758] sm:$0xff]
      %v433 = vld [vmem:[%s1 + $0x760] sm:$0xff]
      %v434 = vld [vmem:[%s1 + $0x768] sm:$0xff]
      %v435 = vld [vmem:[%s1 + $0x770] sm:$0xff]
      %v436 = vld [vmem:[%s1 + $0x778] sm:$0xff]
      %v437 = vld [vmem:[%s1 + $0x780] sm:$0xff]
      %v438 = vld [vmem:[%s1 + $0x788] sm:$0xff]
      %v439 = vld [vmem:[%s1 + $0x790] sm:$0xff]
      %v440 = vld [vmem:[%s1 + $0x798] sm:$0xff]
      %v441 = vld [vmem:[%s1 + $0x7a0] sm:$0xff]
      %v442 = vld [vmem:[%s1 + $0x7a8] sm:$0xff]
      %v443 = vld [vmem:[%s1 + $0x7b0] sm:$0xff]
      %v444 = vld [vmem:[%s1 + $0x7b8] sm:$0xff]
      %v445 = vld [vmem:[%s1 + $0x7c0] sm:$0xff]
      %v446 = vld [vmem:[%s1 + $0x7c8] sm:$0xff]
      %v447 = vld [vmem:[%s1 + $0x7d0] sm:$0xff]
      %v448 = vld [vmem:[%s1 + $0x7d8] sm:$0xff]
      %v449 = vld [vmem:[%s1 + $0x7e0] sm:$0xff]
      %v450 = vld [vmem:[%s1 + $0x7e8] sm:$0xff]
      %v451 = vld [vmem:[%s1 + $0x7f0] sm:$0xff]
      %v452 = vld [vmem:[%s1 + $0x7f8] sm:$0xff]
      %v453 = vld [vmem:[%s1 + $0x800] sm:$0xff]
      %v454 = vld [vmem:[%s1 + $0x808] sm:$0xff]
      %v455 = vld [vmem:[%s1 + $0x810] sm:$0xff]
      %v456 = vld [vmem:[%s1 + $0x818] sm:$0xff]
      %v457 = vld [vmem:[%s1 + $0x820] sm:$0xff]
      %v458 = vld [vmem:[%s1 + $0x828] sm:$0xff]
      %v459 = vld [vmem:[%s1 + $0x830] sm:$0xff]
      %v460 = vld [vmem:[%s1 + $0x838] sm:$0xff]
      %v461 = vld [vmem:[%s1 + $0x840] sm:$0xff]
      %v462 = vld [vmem:[%s1 + $0x848] sm:$0xff]
      %v463 = vld [vmem:[%s1 + $0x850] sm:$0xff]
      %v464 = vld [vmem:[%s1 + $0x858] sm:$0xff]
      %v465 = vld [vmem:[%s1 + $0x860] sm:$0xff]
      %v466 = vld [vmem:[%s1 + $0x868] sm:$0xff]
      %v467 = vld [vmem:[%s1 + $0x870] sm:$0xff]
      %v468 = vld [vmem:[%s1 + $0x878] sm:$0xff]
      %v469 = vld [vmem:[%s1 + $0x880] sm:$0xff]
      %v470 = vld [vmem:[%s1 + $0x888] sm:$0xff]
      %v471 = vld [vmem:[%s1 + $0x890] sm:$0xff]
      %v472 = vld [vmem:[%s1 + $0x898] sm:$0xff]
      %v473 = vld [vmem:[%s1 + $0x8a0] sm:$0xff]
      %v474 = vld [vmem:[%s1 + $0x8a8] sm:$0xff]
      %v475 = vld [vmem:[%s1 + $0x8b0] sm:$0xff]
      %v476 = vld [vmem:[%s1 + $0x8b8] sm:$0xff]
      %v477 = vld [vmem:[%s1 + $0x8c0] sm:$0xff]
      %v478 = vld [vmem:[%s1 + $0x8c8] sm:$0xff]
      %v479 = vld [vmem:[%s1 + $0x8d0] sm:$0xff]
      %v480 = vld [vmem:[%s1 + $0x8d8] sm:$0xff]
      %v481 = vld [vmem:[%s1 + $0x8e0] sm:$0xff]
      %v482 = vld [vmem:[%s1 + $0x8e8] sm:$0xff]
      %v483 = vld [vmem:[%s1 + $0x8f0] sm:$0xff]
      %v484 = vld [vmem:[%s1 + $0x8f8] sm:$0xff]
      %v485 = vld [vmem:[%s1 + $0x900] sm:$0xff]
      %v486 = vld [vmem:[%s1 + $0x908] sm:$0xff]
      %v487 = vld [vmem:[%s1 + $0x910] sm:$0xff]
      %v488 = vld [vmem:[%s1 + $0x918] sm:$0xff]
      %v489 = vld [vmem:[%s1 + $0x920] sm:$0xff]
      %v490 = vld [vmem:[%s1 + $0x928] sm:$0xff]
      %v491 = vld [vmem:[%s1 + $0x930] sm:$0xff]
      %v492 = vld [vmem:[%s1 + $0x938] sm:$0xff]
      %v493 = vld [vmem:[%s1 + $0x940] sm:$0xff]
      %v494 = vld [vmem:[%s1 + $0x948] sm:$0xff]
      %v495 = vld [vmem:[%s1 + $0x950] sm:$0xff]
      %v496 = vld [vmem:[%s1 + $0x958] sm:$0xff]
      %v497 = vld [vmem:[%s1 + $0x960] sm:$0xff]
      %v498 = vld [vmem:[%s1 + $0x968] sm:$0xff]
      %v499 = vld [vmem:[%s1 + $0x970] sm:$0xff]
      %v500 = vld [vmem:[%s1 + $0x978] sm:$0xff]
      %v501 = vld [vmem:[%s1 + $0x980] sm:$0xff]
      %v502 = vld [vmem:[%s1 + $0x988] sm:$0xff]
      %v503 = vld [vmem:[%s1 + $0x990] sm:$0xff]
      %v504 = vld [vmem:[%s1 + $0x998] sm:$0xff]
      %v505 = vld [vmem:[%s1 + $0x9a0] sm:$0xff]
      %v506 = vld [vmem:[%s1 + $0x9a8] sm:$0xff]
      %v507 = vld [vmem:[%s1 + $0x9b0] sm:$0xff]
      %v508 = vld [vmem:[%s1 + $0x9b8] sm:$0xff]
      %v509 = vld [vmem:[%s1 + $0x9c0] sm:$0xff]
      %v510 = vld [vmem:[%s1 + $0x9c8] sm:$0xff]
      %v511 = vld [vmem:[%s1 + $0x9d0] sm:$0xff]
      %v512 = vld [vmem:[%s1 + $0x9d8] sm:$0xff]
      %v513 = vld [vmem:[%s1 + $0x9e0] sm:$0xff]
      %v514 = vld [vmem:[%s1 + $0x9e8] sm:$0xff]
      %v515 = vld [vmem:[%s1 + $0x9f0] sm:$0xff]
      %v516 = vld [vmem:[%s1 + $0x9f8] sm:$0xff]
      %v517 = vld [vmem:[%s1 + $0xa00] sm:$0xff]
      %v518 = vld [vmem:[%s1 + $0xa08] sm:$0xff]
      %v519 = vld [vmem:[%s1 + $0xa10] sm:$0xff]
      %v520 = vld [vmem:[%s1 + $0xa18] sm:$0xff]
      %v521 = vld [vmem:[%s1 + $0xa20] sm:$0xff]
      %v522 = vld [vmem:[%s1 + $0xa28] sm:$0xff]
      %v523 = vld [vmem:[%s1 + $0xa30] sm:$0xff]
      %v524 = vld [vmem:[%s1 + $0xa38] sm:$0xff]
      %v525 = vld [vmem:[%s1 + $0xa40] sm:$0xff]
      %v526 = vld [vmem:[%s1 + $0xa48] sm:$0xff]
      %v527 = vld [vmem:[%s1 + $0xa50] sm:$0xff]
      %v528 = vld [vmem:[%s1 + $0xa58] sm:$0xff]
      %v529 = vld [vmem:[%s1 + $0xa60] sm:$0xff]
      %v530 = vld [vmem:[%s1 + $0xa68] sm:$0xff]
      %v531 = vld [vmem:[%s1 + $0xa70] sm:$0xff]
      %v532 = vld [vmem:[%s1 + $0xa78] sm:$0xff]
      %v533 = vld [vmem:[%s1 + $0xa80] sm:$0xff]
      %v534 = vld [vmem:[%s1 + $0xa88] sm:$0xff]
      %v535 = vld [vmem:[%s1 + $0xa90] sm:$0xff]
      %v536 = vld [vmem:[%s1 + $0xa98] sm:$0xff]
      %v537 = vld [vmem:[%s1 + $0xaa0] sm:$0xff]
      %v538 = vld [vmem:[%s1 + $0xaa8] sm:$0xff]
      %v539 = vld [vmem:[%s1 + $0xab0] sm:$0xff]
      %v540 = vld [vmem:[%s1 + $0xab8] sm:$0xff]
      %v541 = vld [vmem:[%s1 + $0xac0] sm:$0xff]
      %v542 = vld [vmem:[%s1 + $0xac8] sm:$0xff]
      %v543 = vld [vmem:[%s1 + $0xad0] sm:$0xff]
      %v544 = vld [vmem:[%s1 + $0xad8] sm:$0xff]
      %v545 = vld [vmem:[%s1 + $0xae0] sm:$0xff]
      %v546 = vld [vmem:[%s1 + $0xae8] sm:$0xff]
      %v547 = vld [vmem:[%s1 + $0xaf0] sm:$0xff]
      %v548 = vld [vmem:[%s1 + $0xaf8] sm:$0xff]
      %v549 = vld [vmem:[%s1 + $0xb00] sm:$0xff]
      %v550 = vld [vmem:[%s1 + $0xb08] sm:$0xff]
      %v551 = vld [vmem:[%s1 + $0xb10] sm:$0xff]
      %v552 = vld [vmem:[%s1 + $0xb18] sm:$0xff]
      %v553 = vld [vmem:[%s1 + $0xb20] sm:$0xff]
      %v554 = vld [vmem:[%s1 + $0xb28] sm:$0xff]
      %v555 = vld [vmem:[%s1 + $0xb30] sm:$0xff]
      %v556 = vld [vmem:[%s1 + $0xb38] sm:$0xff]
      %v557 = vld [vmem:[%s1 + $0xb40] sm:$0xff]
      %v558 = vld [vmem:[%s1 + $0xb48] sm:$0xff]
      %v559 = vld [vmem:[%s1 + $0xb50] sm:$0xff]
      %v560 = vld [vmem:[%s1 + $0xb58] sm:$0xff]
      %v561 = vld [vmem:[%s1 + $0xb60] sm:$0xff]
      %v562 = vld [vmem:[%s1 + $0xb68] sm:$0xff]
      %v563 = vld [vmem:[%s1 + $0xb70] sm:$0xff]
      %v564 = vld [vmem:[%s1 + $0xb78] sm:$0xff]
      %v565 = vld [vmem:[%s1 + $0xb80] sm:$0xff]
      %v566 = vld [vmem:[%s1 + $0xb88] sm:$0xff]
      %v567 = vld [vmem:[%s1 + $0xb90] sm:$0xff]
      %v568 = vld [vmem:[%s1 + $0xb98] sm:$0xff]
      %v569 = vld [vmem:[%s1 + $0xba0] sm:$0xff]
      %v570 = vld [vmem:[%s1 + $0xba8] sm:$0xff]
      %v571 = vld [vmem:[%s1 + $0xbb0] sm:$0xff]
      %v572 = vld [vmem:[%s1 + $0xbb8] sm:$0xff]
      %v573 = vld [vmem:[%s1 + $0xbc0] sm:$0xff]
      %v574 = vld [vmem:[%s1 + $0xbc8] sm:$0xff]
      %v575 = vld [vmem:[%s1 + $0xbd0] sm:$0xff]
      %v576 = vld [vmem:[%s1 + $0xbd8] sm:$0xff]
      %v577 = vld [vmem:[%s1 + $0xbe0] sm:$0xff]
      %v578 = vld [vmem:[%s1 + $0xbe8] sm:$0xff]
      %v579 = vld [vmem:[%s1 + $0xbf0] sm:$0xff]
      %v580 = vld [vmem:[%s1 + $0xbf8] sm:$0xff]
      %v581 = vld [vmem:[%s1 + $0xc00] sm:$0xff]
      %v582 = vld [vmem:[%s1 + $0xc08] sm:$0xff]
      %v583 = vld [vmem:[%s1 + $0xc10] sm:$0xff]
      %v584 = vld [vmem:[%s1 + $0xc18] sm:$0xff]
      %v585 = vld [vmem:[%s1 + $0xc20] sm:$0xff]
      %v586 = vld [vmem:[%s1 + $0xc28] sm:$0xff]
      %v587 = vld [vmem:[%s1 + $0xc30] sm:$0xff]
      %v588 = vld [vmem:[%s1 + $0xc38] sm:$0xff]
      %v589 = vld [vmem:[%s1 + $0xc40] sm:$0xff]
      %v590 = vld [vmem:[%s1 + $0xc48] sm:$0xff]
      %v591 = vld [vmem:[%s1 + $0xc50] sm:$0xff]
      %v592 = vld [vmem:[%s1 + $0xc58] sm:$0xff]
      %v593 = vld [vmem:[%s1 + $0xc60] sm:$0xff]
      %v594 = vld [vmem:[%s1 + $0xc68] sm:$0xff]
      %v595 = vld [vmem:[%s1 + $0xc70] sm:$0xff]
      %v596 = vld [vmem:[%s1 + $0xc78] sm:$0xff]
      %v597 = vld [vmem:[%s1 + $0xc80] sm:$0xff]
      %v598 = vld [vmem:[%s1 + $0xc88] sm:$0xff]
      %v599 = vld [vmem:[%s1 + $0xc90] sm:$0xff]
      %v600 = vld [vmem:[%s1 + $0xc98] sm:$0xff]
      %v601 = vld [vmem:[%s1 + $0xca0] sm:$0xff]
      %v602 = vld [vmem:[%s1 + $0xca8] sm:$0xff]
      %v603 = vld [vmem:[%s1 + $0xcb0] sm:$0xff]
      %v604 = vld [vmem:[%s1 + $0xcb8] sm:$0xff]
      %v605 = vld [vmem:[%s1 + $0xcc0] sm:$0xff]
      %v606 = vld [vmem:[%s1 + $0xcc8] sm:$0xff]
      %v607 = vld [vmem:[%s1 + $0xcd0] sm:$0xff]
      %v608 = vld [vmem:[%s1 + $0xcd8] sm:$0xff]
      %v609 = vld [vmem:[%s1 + $0xce0] sm:$0xff]
      %v610 = vld [vmem:[%s1 + $0xce8] sm:$0xff]
      %v611 = vld [vmem:[%s1 + $0xcf0] sm:$0xff]
      %v612 = vld [vmem:[%s1 + $0xcf8] sm:$0xff]
      %v613 = vld [vmem:[%s1 + $0xd00] sm:$0xff]
      %v614 = vld [vmem:[%s1 + $0xd08] sm:$0xff]
      %v615 = vld [vmem:[%s1 + $0xd10] sm:$0xff]
      %v616 = vld [vmem:[%s1 + $0xd18] sm:$0xff]
      %v617 = vld [vmem:[%s1 + $0xd20] sm:$0xff]
      %v618 = vld [vmem:[%s1 + $0xd28] sm:$0xff]
      %v619 = vld [vmem:[%s1 + $0xd30] sm:$0xff]
      %v620 = vld [vmem:[%s1 + $0xd38] sm:$0xff]
      %v621 = vld [vmem:[%s1 + $0xd40] sm:$0xff]
      %v622 = vld [vmem:[%s1 + $0xd48] sm:$0xff]
      %v623 = vld [vmem:[%s1 + $0xd50] sm:$0xff]
      %v624 = vld [vmem:[%s1 + $0xd58] sm:$0xff]
      %v625 = vld [vmem:[%s1 + $0xd60] sm:$0xff]
      %v626 = vld [vmem:[%s1 + $0xd68] sm:$0xff]
      %v627 = vld [vmem:[%s1 + $0xd70] sm:$0xff]
      %v628 = vld [vmem:[%s1 + $0xd78] sm:$0xff]
      %v629 = vld [vmem:[%s1 + $0xd80] sm:$0xff]
      %v630 = vld [vmem:[%s1 + $0xd88] sm:$0xff]
      %v631 = vld [vmem:[%s1 + $0xd90] sm:$0xff]
      %v632 = vld [vmem:[%s1 + $0xd98] sm:$0xff]
      %v633 = vld [vmem:[%s1 + $0xda0] sm:$0xff]
      %v634 = vld [vmem:[%s1 + $0xda8] sm:$0xff]
      %v635 = vld [vmem:[%s1 + $0xdb0] sm:$0xff]
      %v636 = vld [vmem:[%s1 + $0xdb8] sm:$0xff]
      %v637 = vld [vmem:[%s1 + $0xdc0] sm:$0xff]
      %v638 = vld [vmem:[%s1 + $0xdc8] sm:$0xff]
      %v639 = vld [vmem:[%s1 + $0xdd0] sm:$0xff]
      %v640 = vld [vmem:[%s1 + $0xdd8] sm:$0xff]
      %v641 = vld [vmem:[%s1 + $0xde0] sm:$0xff]
      %v642 = vld [vmem:[%s1 + $0xde8] sm:$0xff]
      %v643 = vld [vmem:[%s1 + $0xdf0] sm:$0xff]
      %v644 = vld [vmem:[%s1 + $0xdf8] sm:$0xff]
      %v645 = vld [vmem:[%s1 + $0xe00] sm:$0xff]
      %v646 = vld [vmem:[%s1 + $0xe08] sm:$0xff]
      %v647 = vld [vmem:[%s1 + $0xe10] sm:$0xff]
      %v648 = vld [vmem:[%s1 + $0xe18] sm:$0xff]
      %v649 = vld [vmem:[%s1 + $0xe20] sm:$0xff]
      %v650 = vld [vmem:[%s1 + $0xe28] sm:$0xff]
      %v651 = vld [vmem:[%s1 + $0xe30] sm:$0xff]
      %v652 = vld [vmem:[%s1 + $0xe38] sm:$0xff]
      %v653 = vld [vmem:[%s1 + $0xe40] sm:$0xff]
      %v654 = vld [vmem:[%s1 + $0xe48] sm:$0xff]
      %v655 = vld [vmem:[%s1 + $0xe50] sm:$0xff]
      %v656 = vld [vmem:[%s1 + $0xe58] sm:$0xff]
      %v657 = vld [vmem:[%s1 + $0xe60] sm:$0xff]
      %v658 = vld [vmem:[%s1 + $0xe68] sm:$0xff]
      %v659 = vld [vmem:[%s1 + $0xe70] sm:$0xff]
      %v660 = vld [vmem:[%s1 + $0xe78] sm:$0xff]
      %v661 = vld [vmem:[%s1 + $0xe80] sm:$0xff]
      %v662 = vld [vmem:[%s1 + $0xe88] sm:$0xff]
      %v663 = vld [vmem:[%s1 + $0xe90] sm:$0xff]
      %v664 = vld [vmem:[%s1 + $0xe98] sm:$0xff]
      %v665 = vld [vmem:[%s1 + $0xea0] sm:$0xff]
      %v666 = vld [vmem:[%s1 + $0xea8] sm:$0xff]
      %v667 = vld [vmem:[%s1 + $0xeb0] sm:$0xff]
      %v668 = vld [vmem:[%s1 + $0xeb8] sm:$0xff]
      %v669 = vld [vmem:[%s1 + $0xec0] sm:$0xff]
      %v670 = vld [vmem:[%s1 + $0xec8] sm:$0xff]
      %v671 = vld [vmem:[%s1 + $0xed0] sm:$0xff]
      %v672 = vld [vmem:[%s1 + $0xed8] sm:$0xff]
      %v673 = vld [vmem:[%s1 + $0xee0] sm:$0xff]
      %v674 = vld [vmem:[%s1 + $0xee8] sm:$0xff]
      %v675 = vld [vmem:[%s1 + $0xef0] sm:$0xff]
      %v676 = vld [vmem:[%s1 + $0xef8] sm:$0xff]
      %v677 = vld [vmem:[%s2] sm:$0xff]
      %v678 = vld [vmem:[%s2 + $0x8] sm:$0x3]
      %v681 = vlaneseq
      %v682 = vshrl.u32 %v681, 7
      %v683 = vsub.s32 0, %v682
      %v684 = vrot.slane %v677, %v683
      %v685 = vlaneseq
      %v686 = vshrl.u32 %v685, 7
      %v687 = vsub.s32 1, %v686
      %v688 = vrot.slane %v677, %v687
      %v689 = vlaneseq
      %v690 = vshrl.u32 %v689, 7
      %v691 = vsub.s32 2, %v690
      %v692 = vrot.slane %v677, %v691
      %v693 = vlaneseq
      %v694 = vshrl.u32 %v693, 7
      %v695 = vsub.s32 3, %v694
      %v696 = vrot.slane %v677, %v695
      %v697 = vlaneseq
      %v698 = vshrl.u32 %v697, 7
      %v699 = vsub.s32 4, %v698
      %v700 = vrot.slane %v677, %v699
      %v701 = vlaneseq
      %v702 = vshrl.u32 %v701, 7
      %v703 = vsub.s32 5, %v702
      %v704 = vrot.slane %v677, %v703
      %v705 = vlaneseq
      %v706 = vshrl.u32 %v705, 7
      %v707 = vsub.s32 6, %v706
      %v708 = vrot.slane %v677, %v707
      %v709 = vlaneseq
      %v710 = vshrl.u32 %v709, 7
      %v711 = vsub.s32 7, %v710
      %v712 = vrot.slane %v677, %v711
      %v713 = vlaneseq
      %v714 = vshrl.u32 %v713, 7
      %v715 = vsub.s32 0, %v714
      %v716 = vrot.slane %v678, %v715
      %v717 = vlaneseq
      %v718 = vshrl.u32 %v717, 7
      %v719 = vsub.s32 1, %v718
      %v720 = vrot.slane %v678, %v719
      %v733 = vcombine.high %v195, %v195
      %v735 = vunpack.c.l.s4 1983009808
      %v736 = vunpack.c.0.s8 %v735
      %v737 = vlaneseq
      %v738 = vshrl.u32 %v737, 7
      %v739 = vsub.s32 %v736, %v738
      %v740 = vrot.slane %v195, %v739
      %v742 = vunpack.c.l.s4 1983009808
      %v743 = vunpack.c.0.s8 %v742
      %v744 = vlaneseq
      %v745 = vshrl.u32 %v744, 7
      %v746 = vsub.s32 %v743, %v745
      %v747 = vrot.slane %v733, %v746
      %v748 = vcombine.high %v740, %v740
      %v749 = vcombine.high %v747, %v747
      %v751 = vunpack.c.l.s4 1983009808
      %v752 = vunpack.c.0.s8 %v751
      %v753 = vlaneseq
      %v754 = vshrl.u32 %v753, 7
      %v755 = vsub.s32 %v752, %v754
      %v756 = vrot.slane %v196, %v755
      %v757 = vcombine.high %v756, %v756
      %v1244 = vunpack.c.l.b16 %v197
      %v1245 = vunpack.c.h.b16 %v197
      %v1246 = vunpack.c.l.b16 %v198
      %v1247 = vunpack.c.h.b16 %v198
      %v1248 = vunpack.c.l.b16 %v199
      %v1249 = vunpack.c.h.b16 %v199
      %v1250 = vunpack.c.l.b16 %v200
      %v1251 = vunpack.c.h.b16 %v200
      %v1252 = vunpack.c.l.b16 %v201
      %v1253 = vunpack.c.h.b16 %v201
      %v1254 = vunpack.c.l.b16 %v202
      %v1255 = vunpack.c.h.b16 %v202
      %v1256 = vunpack.c.l.b16 %v203
      %v1257 = vunpack.c.h.b16 %v203
      %v1258 = vunpack.c.l.b16 %v204
      %v1259 = vunpack.c.h.b16 %v204
      %v1260 = vunpack.c.l.b16 %v205
      %v1261 = vunpack.c.h.b16 %v205
      %v1262 = vunpack.c.l.b16 %v206
      %v1263 = vunpack.c.h.b16 %v206
      %v1264 = vunpack.c.l.b16 %v207
      %v1265 = vunpack.c.h.b16 %v207
      %v1266 = vunpack.c.l.b16 %v208
      %v1267 = vunpack.c.h.b16 %v208
      %v1268 = vunpack.c.l.b16 %v209
      %v1269 = vunpack.c.h.b16 %v209
      %v1270 = vunpack.c.l.b16 %v210
      %v1271 = vunpack.c.h.b16 %v210
      %v1272 = vunpack.c.l.b16 %v211
      %v1273 = vunpack.c.h.b16 %v211
      %v1274 = vunpack.c.l.b16 %v212
      %v1275 = vunpack.c.h.b16 %v212
      %v1276 = vunpack.c.l.b16 %v213
      %v1277 = vunpack.c.h.b16 %v213
      %v1278 = vunpack.c.l.b16 %v214
      %v1279 = vunpack.c.h.b16 %v214
      %v1280 = vunpack.c.l.b16 %v215
      %v1281 = vunpack.c.h.b16 %v215
      %v1282 = vunpack.c.l.b16 %v216
      %v1283 = vunpack.c.h.b16 %v216
      %v1284 = vunpack.c.l.b16 %v217
      %v1285 = vunpack.c.h.b16 %v217
      %v1286 = vunpack.c.l.b16 %v218
      %v1287 = vunpack.c.h.b16 %v218
      %v1288 = vunpack.c.l.b16 %v219
      %v1289 = vunpack.c.h.b16 %v219
      %v1290 = vunpack.c.l.b16 %v220
      %v1291 = vunpack.c.h.b16 %v220
      %v1292 = vunpack.c.l.b16 %v221
      %v1293 = vunpack.c.h.b16 %v221
      %v1294 = vunpack.c.l.b16 %v222
      %v1295 = vunpack.c.h.b16 %v222
      %v1296 = vunpack.c.l.b16 %v223
      %v1297 = vunpack.c.h.b16 %v223
      %v1298 = vunpack.c.l.b16 %v224
      %v1299 = vunpack.c.h.b16 %v224
      %v1300 = vunpack.c.l.b16 %v225
      %v1301 = vunpack.c.h.b16 %v225
      %v1302 = vunpack.c.l.b16 %v226
      %v1303 = vunpack.c.h.b16 %v226
      %v1304 = vunpack.c.l.b16 %v227
      %v1305 = vunpack.c.h.b16 %v227
      %v1306 = vunpack.c.l.b16 %v228
      %v1307 = vunpack.c.h.b16 %v228
      %v1308 = vunpack.c.l.b16 %v229
      %v1309 = vunpack.c.h.b16 %v229
      %v1310 = vunpack.c.l.b16 %v230
      %v1311 = vunpack.c.h.b16 %v230
      %v1312 = vunpack.c.l.b16 %v231
      %v1313 = vunpack.c.h.b16 %v231
      %v1314 = vunpack.c.l.b16 %v232
      %v1315 = vunpack.c.h.b16 %v232
      %v1316 = vunpack.c.l.b16 %v233
      %v1317 = vunpack.c.h.b16 %v233
      %v1318 = vunpack.c.l.b16 %v234
      %v1319 = vunpack.c.h.b16 %v234
      %v1320 = vunpack.c.l.b16 %v235
      %v1321 = vunpack.c.h.b16 %v235
      %v1322 = vunpack.c.l.b16 %v236
      %v1323 = vunpack.c.h.b16 %v236
      %v1324 = vunpack.c.l.b16 %v237
      %v1325 = vunpack.c.h.b16 %v237
      %v1326 = vunpack.c.l.b16 %v238
      %v1327 = vunpack.c.h.b16 %v238
      %v1328 = vunpack.c.l.b16 %v239
      %v1329 = vunpack.c.h.b16 %v239
      %v1330 = vunpack.c.l.b16 %v240
      %v1331 = vunpack.c.h.b16 %v240
      %v1332 = vunpack.c.l.b16 %v241
      %v1333 = vunpack.c.h.b16 %v241
      %v1334 = vunpack.c.l.b16 %v242
      %v1335 = vunpack.c.h.b16 %v242
      %v1336 = vunpack.c.l.b16 %v243
      %v1337 = vunpack.c.h.b16 %v243
      %v1338 = vunpack.c.l.b16 %v244
      %v1339 = vunpack.c.h.b16 %v244
      %v1340 = vunpack.c.l.b16 %v245
      %v1341 = vunpack.c.h.b16 %v245
      %v1342 = vunpack.c.l.b16 %v246
      %v1343 = vunpack.c.h.b16 %v246
      %v1344 = vunpack.c.l.b16 %v247
      %v1345 = vunpack.c.h.b16 %v247
      %v1346 = vunpack.c.l.b16 %v248
      %v1347 = vunpack.c.h.b16 %v248
      %v1348 = vunpack.c.l.b16 %v249
      %v1349 = vunpack.c.h.b16 %v249
      %v1350 = vunpack.c.l.b16 %v250
      %v1351 = vunpack.c.h.b16 %v250
      %v1352 = vunpack.c.l.b16 %v251
      %v1353 = vunpack.c.h.b16 %v251
      %v1354 = vunpack.c.l.b16 %v252
      %v1355 = vunpack.c.h.b16 %v252
      %v1356 = vunpack.c.l.b16 %v253
      %v1357 = vunpack.c.h.b16 %v253
      %v1358 = vunpack.c.l.b16 %v254
      %v1359 = vunpack.c.h.b16 %v254
      %v1360 = vunpack.c.l.b16 %v255
      %v1361 = vunpack.c.h.b16 %v255
      %v1362 = vunpack.c.l.b16 %v256
      %v1363 = vunpack.c.h.b16 %v256
      %v1364 = vunpack.c.l.b16 %v257
      %v1365 = vunpack.c.h.b16 %v257
      %v1366 = vunpack.c.l.b16 %v258
      %v1367 = vunpack.c.h.b16 %v258
      %v1368 = vunpack.c.l.b16 %v259
      %v1369 = vunpack.c.h.b16 %v259
      %v1370 = vunpack.c.l.b16 %v260
      %v1371 = vunpack.c.h.b16 %v260
      %v1372 = vunpack.c.l.b16 %v261
      %v1373 = vunpack.c.h.b16 %v261
      %v1374 = vunpack.c.l.b16 %v262
      %v1375 = vunpack.c.h.b16 %v262
      %v1376 = vunpack.c.l.b16 %v263
      %v1377 = vunpack.c.h.b16 %v263
      %v1378 = vunpack.c.l.b16 %v264
      %v1379 = vunpack.c.h.b16 %v264
      %v1380 = vunpack.c.l.b16 %v265
      %v1381 = vunpack.c.h.b16 %v265
      %v1382 = vunpack.c.l.b16 %v266
      %v1383 = vunpack.c.h.b16 %v266
      %v1384 = vunpack.c.l.b16 %v267
      %v1385 = vunpack.c.h.b16 %v267
      %v1386 = vunpack.c.l.b16 %v268
      %v1387 = vunpack.c.h.b16 %v268
      %v1388 = vunpack.c.l.b16 %v269
      %v1389 = vunpack.c.h.b16 %v269
      %v1390 = vunpack.c.l.b16 %v270
      %v1391 = vunpack.c.h.b16 %v270
      %v1392 = vunpack.c.l.b16 %v271
      %v1393 = vunpack.c.h.b16 %v271
      %v1394 = vunpack.c.l.b16 %v272
      %v1395 = vunpack.c.h.b16 %v272
      %v1396 = vunpack.c.l.b16 %v273
      %v1397 = vunpack.c.h.b16 %v273
      %v1398 = vunpack.c.l.b16 %v274
      %v1399 = vunpack.c.h.b16 %v274
      %v1400 = vunpack.c.l.b16 %v275
      %v1401 = vunpack.c.h.b16 %v275
      %v1402 = vunpack.c.l.b16 %v276
      %v1403 = vunpack.c.h.b16 %v276
      %v1404 = vunpack.c.l.b16 %v277
      %v1405 = vunpack.c.h.b16 %v277
      %v1406 = vunpack.c.l.b16 %v278
      %v1407 = vunpack.c.h.b16 %v278
      %v1408 = vunpack.c.l.b16 %v279
      %v1409 = vunpack.c.h.b16 %v279
      %v1410 = vunpack.c.l.b16 %v280
      %v1411 = vunpack.c.h.b16 %v280
      %v1412 = vunpack.c.l.b16 %v281
      %v1413 = vunpack.c.h.b16 %v281
      %v1414 = vunpack.c.l.b16 %v282
      %v1415 = vunpack.c.h.b16 %v282
      %v1416 = vunpack.c.l.b16 %v283
      %v1417 = vunpack.c.h.b16 %v283
      %v1418 = vunpack.c.l.b16 %v284
      %v1419 = vunpack.c.h.b16 %v284
      %v1420 = vunpack.c.l.b16 %v285
      %v1421 = vunpack.c.h.b16 %v285
      %v1422 = vunpack.c.l.b16 %v286
      %v1423 = vunpack.c.h.b16 %v286
      %v1424 = vunpack.c.l.b16 %v287
      %v1425 = vunpack.c.h.b16 %v287
      %v1426 = vunpack.c.l.b16 %v288
      %v1427 = vunpack.c.h.b16 %v288
      %v1428 = vunpack.c.l.b16 %v289
      %v1429 = vunpack.c.h.b16 %v289
      %v1430 = vunpack.c.l.b16 %v290
      %v1431 = vunpack.c.h.b16 %v290
      %v1432 = vunpack.c.l.b16 %v291
      %v1433 = vunpack.c.h.b16 %v291
      %v1434 = vunpack.c.l.b16 %v292
      %v1435 = vunpack.c.h.b16 %v292
      %v1436 = vunpack.c.l.b16 %v293
      %v1437 = vunpack.c.h.b16 %v293
      %v1438 = vunpack.c.l.b16 %v294
      %v1439 = vunpack.c.h.b16 %v294
      %v1440 = vunpack.c.l.b16 %v295
      %v1441 = vunpack.c.h.b16 %v295
      %v1442 = vunpack.c.l.b16 %v296
      %v1443 = vunpack.c.h.b16 %v296
      %v1444 = vunpack.c.l.b16 %v297
      %v1445 = vunpack.c.h.b16 %v297
      %v1446 = vunpack.c.l.b16 %v298
      %v1447 = vunpack.c.h.b16 %v298
      %v1448 = vunpack.c.l.b16 %v299
      %v1449 = vunpack.c.h.b16 %v299
      %v1450 = vunpack.c.l.b16 %v300
      %v1451 = vunpack.c.h.b16 %v300
      %v1452 = vunpack.c.l.b16 %v301
      %v1453 = vunpack.c.h.b16 %v301
      %v1454 = vunpack.c.l.b16 %v302
      %v1455 = vunpack.c.h.b16 %v302
      %v1456 = vunpack.c.l.b16 %v303
      %v1457 = vunpack.c.h.b16 %v303
      %v1458 = vunpack.c.l.b16 %v304
      %v1459 = vunpack.c.h.b16 %v304
      %v1460 = vunpack.c.l.b16 %v305
      %v1461 = vunpack.c.h.b16 %v305
      %v1462 = vunpack.c.l.b16 %v306
      %v1463 = vunpack.c.h.b16 %v306
      %v1464 = vunpack.c.l.b16 %v307
      %v1465 = vunpack.c.h.b16 %v307
      %v1466 = vunpack.c.l.b16 %v308
      %v1467 = vunpack.c.h.b16 %v308
      %v1468 = vunpack.c.l.b16 %v309
      %v1469 = vunpack.c.h.b16 %v309
      %v1470 = vunpack.c.l.b16 %v310
      %v1471 = vunpack.c.h.b16 %v310
      %v1472 = vunpack.c.l.b16 %v311
      %v1473 = vunpack.c.h.b16 %v311
      %v1474 = vunpack.c.l.b16 %v312
      %v1475 = vunpack.c.h.b16 %v312
      %v1476 = vunpack.c.l.b16 %v313
      %v1477 = vunpack.c.h.b16 %v313
      %v1478 = vunpack.c.l.b16 %v314
      %v1479 = vunpack.c.h.b16 %v314
      %v1480 = vunpack.c.l.b16 %v315
      %v1481 = vunpack.c.h.b16 %v315
      %v1482 = vunpack.c.l.b16 %v316
      %v1483 = vunpack.c.h.b16 %v316
      %v1484 = vunpack.c.l.b16 %v317
      %v1485 = vunpack.c.h.b16 %v317
      %v1486 = vunpack.c.l.b16 %v318
      %v1487 = vunpack.c.h.b16 %v318
      %v1488 = vunpack.c.l.b16 %v319
      %v1489 = vunpack.c.h.b16 %v319
      %v1490 = vunpack.c.l.b16 %v320
      %v1491 = vunpack.c.h.b16 %v320
      %v1492 = vunpack.c.l.b16 %v321
      %v1493 = vunpack.c.h.b16 %v321
      %v1494 = vunpack.c.l.b16 %v322
      %v1495 = vunpack.c.h.b16 %v322
      %v1496 = vunpack.c.l.b16 %v323
      %v1497 = vunpack.c.h.b16 %v323
      %v1498 = vunpack.c.l.b16 %v324
      %v1499 = vunpack.c.h.b16 %v324
      %v1500 = vunpack.c.l.b16 %v325
      %v1501 = vunpack.c.h.b16 %v325
      %v1502 = vunpack.c.l.b16 %v326
      %v1503 = vunpack.c.h.b16 %v326
      %v1504 = vunpack.c.l.b16 %v327
      %v1505 = vunpack.c.h.b16 %v327
      %v1506 = vunpack.c.l.b16 %v328
      %v1507 = vunpack.c.h.b16 %v328
      %v1508 = vunpack.c.l.b16 %v329
      %v1509 = vunpack.c.h.b16 %v329
      %v1510 = vunpack.c.l.b16 %v330
      %v1511 = vunpack.c.h.b16 %v330
      %v1512 = vunpack.c.l.b16 %v331
      %v1513 = vunpack.c.h.b16 %v331
      %v1514 = vunpack.c.l.b16 %v332
      %v1515 = vunpack.c.h.b16 %v332
      %v1516 = vunpack.c.l.b16 %v333
      %v1517 = vunpack.c.h.b16 %v333
      %v1518 = vunpack.c.l.b16 %v334
      %v1519 = vunpack.c.h.b16 %v334
      %v1520 = vunpack.c.l.b16 %v335
      %v1521 = vunpack.c.h.b16 %v335
      %v1522 = vunpack.c.l.b16 %v336
      %v1523 = vunpack.c.h.b16 %v336
      %v1524 = vunpack.c.l.b16 %v337
      %v1525 = vunpack.c.h.b16 %v337
      %v1526 = vunpack.c.l.b16 %v338
      %v1527 = vunpack.c.h.b16 %v338
      %v1528 = vunpack.c.l.b16 %v339
      %v1529 = vunpack.c.h.b16 %v339
      %v1530 = vunpack.c.l.b16 %v340
      %v1531 = vunpack.c.h.b16 %v340
      %v1532 = vunpack.c.l.b16 %v341
      %v1533 = vunpack.c.h.b16 %v341
      %v1534 = vunpack.c.l.b16 %v342
      %v1535 = vunpack.c.h.b16 %v342
      %v1536 = vunpack.c.l.b16 %v343
      %v1537 = vunpack.c.h.b16 %v343
      %v1538 = vunpack.c.l.b16 %v344
      %v1539 = vunpack.c.h.b16 %v344
      %v1540 = vunpack.c.l.b16 %v345
      %v1541 = vunpack.c.h.b16 %v345
      %v1542 = vunpack.c.l.b16 %v346
      %v1543 = vunpack.c.h.b16 %v346
      %v1544 = vunpack.c.l.b16 %v347
      %v1545 = vunpack.c.h.b16 %v347
      %v1546 = vunpack.c.l.b16 %v348
      %v1547 = vunpack.c.h.b16 %v348
      %v1548 = vunpack.c.l.b16 %v349
      %v1549 = vunpack.c.h.b16 %v349
      %v1550 = vunpack.c.l.b16 %v350
      %v1551 = vunpack.c.h.b16 %v350
      %v1552 = vunpack.c.l.b16 %v351
      %v1553 = vunpack.c.h.b16 %v351
      %v1554 = vunpack.c.l.b16 %v352
      %v1555 = vunpack.c.h.b16 %v352
      %v1556 = vunpack.c.l.b16 %v353
      %v1557 = vunpack.c.h.b16 %v353
      %v1558 = vunpack.c.l.b16 %v354
      %v1559 = vunpack.c.h.b16 %v354
      %v1560 = vunpack.c.l.b16 %v355
      %v1561 = vunpack.c.h.b16 %v355
      %v1562 = vunpack.c.l.b16 %v356
      %v1563 = vunpack.c.h.b16 %v356
      %v1564 = vunpack.c.l.b16 %v357
      %v1565 = vunpack.c.h.b16 %v357
      %v1566 = vunpack.c.l.b16 %v358
      %v1567 = vunpack.c.h.b16 %v358
      %v1568 = vunpack.c.l.b16 %v359
      %v1569 = vunpack.c.h.b16 %v359
      %v1570 = vunpack.c.l.b16 %v360
      %v1571 = vunpack.c.h.b16 %v360
      %v1572 = vunpack.c.l.b16 %v361
      %v1573 = vunpack.c.h.b16 %v361
      %v1574 = vunpack.c.l.b16 %v362
      %v1575 = vunpack.c.h.b16 %v362
      %v1576 = vunpack.c.l.b16 %v363
      %v1577 = vunpack.c.h.b16 %v363
      %v1578 = vunpack.c.l.b16 %v364
      %v1579 = vunpack.c.h.b16 %v364
      %v1580 = vunpack.c.l.b16 %v365
      %v1581 = vunpack.c.h.b16 %v365
      %v1582 = vunpack.c.l.b16 %v366
      %v1583 = vunpack.c.h.b16 %v366
      %v1584 = vunpack.c.l.b16 %v367
      %v1585 = vunpack.c.h.b16 %v367
      %v1586 = vunpack.c.l.b16 %v368
      %v1587 = vunpack.c.h.b16 %v368
      %v1588 = vunpack.c.l.b16 %v369
      %v1589 = vunpack.c.h.b16 %v369
      %v1590 = vunpack.c.l.b16 %v370
      %v1591 = vunpack.c.h.b16 %v370
      %v1592 = vunpack.c.l.b16 %v371
      %v1593 = vunpack.c.h.b16 %v371
      %v1594 = vunpack.c.l.b16 %v372
      %v1595 = vunpack.c.h.b16 %v372
      %v1596 = vunpack.c.l.b16 %v373
      %v1597 = vunpack.c.h.b16 %v373
      %v1598 = vunpack.c.l.b16 %v374
      %v1599 = vunpack.c.h.b16 %v374
      %v1600 = vunpack.c.l.b16 %v375
      %v1601 = vunpack.c.h.b16 %v375
      %v1602 = vunpack.c.l.b16 %v376
      %v1603 = vunpack.c.h.b16 %v376
      %v1604 = vunpack.c.l.b16 %v377
      %v1605 = vunpack.c.h.b16 %v377
      %v1606 = vunpack.c.l.b16 %v378
      %v1607 = vunpack.c.h.b16 %v378
      %v1608 = vunpack.c.l.b16 %v379
      %v1609 = vunpack.c.h.b16 %v379
      %v1610 = vunpack.c.l.b16 %v380
      %v1611 = vunpack.c.h.b16 %v380
      %v1612 = vunpack.c.l.b16 %v381
      %v1613 = vunpack.c.h.b16 %v381
      %v1614 = vunpack.c.l.b16 %v382
      %v1615 = vunpack.c.h.b16 %v382
      %v1616 = vunpack.c.l.b16 %v383
      %v1617 = vunpack.c.h.b16 %v383
      %v1618 = vunpack.c.l.b16 %v384
      %v1619 = vunpack.c.h.b16 %v384
      %v1620 = vunpack.c.l.b16 %v385
      %v1621 = vunpack.c.h.b16 %v385
      %v1622 = vunpack.c.l.b16 %v386
      %v1623 = vunpack.c.h.b16 %v386
      %v1624 = vunpack.c.l.b16 %v387
      %v1625 = vunpack.c.h.b16 %v387
      %v1626 = vunpack.c.l.b16 %v388
      %v1627 = vunpack.c.h.b16 %v388
      %v1628 = vunpack.c.l.b16 %v389
      %v1629 = vunpack.c.h.b16 %v389
      %v1630 = vunpack.c.l.b16 %v390
      %v1631 = vunpack.c.h.b16 %v390
      %v1632 = vunpack.c.l.b16 %v391
      %v1633 = vunpack.c.h.b16 %v391
      %v1634 = vunpack.c.l.b16 %v392
      %v1635 = vunpack.c.h.b16 %v392
      %v1636 = vunpack.c.l.b16 %v393
      %v1637 = vunpack.c.h.b16 %v393
      %v1638 = vunpack.c.l.b16 %v394
      %v1639 = vunpack.c.h.b16 %v394
      %v1640 = vunpack.c.l.b16 %v395
      %v1641 = vunpack.c.h.b16 %v395
      %v1642 = vunpack.c.l.b16 %v396
      %v1643 = vunpack.c.h.b16 %v396
      %v1644 = vunpack.c.l.b16 %v397
      %v1645 = vunpack.c.h.b16 %v397
      %v1646 = vunpack.c.l.b16 %v398
      %v1647 = vunpack.c.h.b16 %v398
      %v1648 = vunpack.c.l.b16 %v399
      %v1649 = vunpack.c.h.b16 %v399
      %v1650 = vunpack.c.l.b16 %v400
      %v1651 = vunpack.c.h.b16 %v400
      %v1652 = vunpack.c.l.b16 %v401
      %v1653 = vunpack.c.h.b16 %v401
      %v1654 = vunpack.c.l.b16 %v402
      %v1655 = vunpack.c.h.b16 %v402
      %v1656 = vunpack.c.l.b16 %v403
      %v1657 = vunpack.c.h.b16 %v403
      %v1658 = vunpack.c.l.b16 %v404
      %v1659 = vunpack.c.h.b16 %v404
      %v1660 = vunpack.c.l.b16 %v405
      %v1661 = vunpack.c.h.b16 %v405
      %v1662 = vunpack.c.l.b16 %v406
      %v1663 = vunpack.c.h.b16 %v406
      %v1664 = vunpack.c.l.b16 %v407
      %v1665 = vunpack.c.h.b16 %v407
      %v1666 = vunpack.c.l.b16 %v408
      %v1667 = vunpack.c.h.b16 %v408
      %v1668 = vunpack.c.l.b16 %v409
      %v1669 = vunpack.c.h.b16 %v409
      %v1670 = vunpack.c.l.b16 %v410
      %v1671 = vunpack.c.h.b16 %v410
      %v1672 = vunpack.c.l.b16 %v411
      %v1673 = vunpack.c.h.b16 %v411
      %v1674 = vunpack.c.l.b16 %v412
      %v1675 = vunpack.c.h.b16 %v412
      %v1676 = vunpack.c.l.b16 %v413
      %v1677 = vunpack.c.h.b16 %v413
      %v1678 = vunpack.c.l.b16 %v414
      %v1679 = vunpack.c.h.b16 %v414
      %v1680 = vunpack.c.l.b16 %v415
      %v1681 = vunpack.c.h.b16 %v415
      %v1682 = vunpack.c.l.b16 %v416
      %v1683 = vunpack.c.h.b16 %v416
      %v1684 = vunpack.c.l.b16 %v417
      %v1685 = vunpack.c.h.b16 %v417
      %v1686 = vunpack.c.l.b16 %v418
      %v1687 = vunpack.c.h.b16 %v418
      %v1688 = vunpack.c.l.b16 %v419
      %v1689 = vunpack.c.h.b16 %v419
      %v1690 = vunpack.c.l.b16 %v420
      %v1691 = vunpack.c.h.b16 %v420
      %v1692 = vunpack.c.l.b16 %v421
      %v1693 = vunpack.c.h.b16 %v421
      %v1694 = vunpack.c.l.b16 %v422
      %v1695 = vunpack.c.h.b16 %v422
      %v1696 = vunpack.c.l.b16 %v423
      %v1697 = vunpack.c.h.b16 %v423
      %v1698 = vunpack.c.l.b16 %v424
      %v1699 = vunpack.c.h.b16 %v424
      %v1700 = vunpack.c.l.b16 %v425
      %v1701 = vunpack.c.h.b16 %v425
      %v1702 = vunpack.c.l.b16 %v426
      %v1703 = vunpack.c.h.b16 %v426
      %v1704 = vunpack.c.l.b16 %v427
      %v1705 = vunpack.c.h.b16 %v427
      %v1706 = vunpack.c.l.b16 %v428
      %v1707 = vunpack.c.h.b16 %v428
      %v1708 = vunpack.c.l.b16 %v429
      %v1709 = vunpack.c.h.b16 %v429
      %v1710 = vunpack.c.l.b16 %v430
      %v1711 = vunpack.c.h.b16 %v430
      %v1712 = vunpack.c.l.b16 %v431
      %v1713 = vunpack.c.h.b16 %v431
      %v1714 = vunpack.c.l.b16 %v432
      %v1715 = vunpack.c.h.b16 %v432
      %v1716 = vunpack.c.l.b16 %v433
      %v1717 = vunpack.c.h.b16 %v433
      %v1718 = vunpack.c.l.b16 %v434
      %v1719 = vunpack.c.h.b16 %v434
      %v1720 = vunpack.c.l.b16 %v435
      %v1721 = vunpack.c.h.b16 %v435
      %v1722 = vunpack.c.l.b16 %v436
      %v1723 = vunpack.c.h.b16 %v436
      %v1724 = vunpack.c.l.b16 %v437
      %v1725 = vunpack.c.h.b16 %v437
      %v1726 = vunpack.c.l.b16 %v438
      %v1727 = vunpack.c.h.b16 %v438
      %v1728 = vunpack.c.l.b16 %v439
      %v1729 = vunpack.c.h.b16 %v439
      %v1730 = vunpack.c.l.b16 %v440
      %v1731 = vunpack.c.h.b16 %v440
      %v1732 = vunpack.c.l.b16 %v441
      %v1733 = vunpack.c.h.b16 %v441
      %v1734 = vunpack.c.l.b16 %v442
      %v1735 = vunpack.c.h.b16 %v442
      %v1736 = vunpack.c.l.b16 %v443
      %v1737 = vunpack.c.h.b16 %v443
      %v1738 = vunpack.c.l.b16 %v444
      %v1739 = vunpack.c.h.b16 %v444
      %v1740 = vunpack.c.l.b16 %v445
      %v1741 = vunpack.c.h.b16 %v445
      %v1742 = vunpack.c.l.b16 %v446
      %v1743 = vunpack.c.h.b16 %v446
      %v1744 = vunpack.c.l.b16 %v447
      %v1745 = vunpack.c.h.b16 %v447
      %v1746 = vunpack.c.l.b16 %v448
      %v1747 = vunpack.c.h.b16 %v448
      %v1748 = vunpack.c.l.b16 %v449
      %v1749 = vunpack.c.h.b16 %v449
      %v1750 = vunpack.c.l.b16 %v450
      %v1751 = vunpack.c.h.b16 %v450
      %v1752 = vunpack.c.l.b16 %v451
      %v1753 = vunpack.c.h.b16 %v451
      %v1754 = vunpack.c.l.b16 %v452
      %v1755 = vunpack.c.h.b16 %v452
      %v1756 = vunpack.c.l.b16 %v453
      %v1757 = vunpack.c.h.b16 %v453
      %v1758 = vunpack.c.l.b16 %v454
      %v1759 = vunpack.c.h.b16 %v454
      %v1760 = vunpack.c.l.b16 %v455
      %v1761 = vunpack.c.h.b16 %v455
      %v1762 = vunpack.c.l.b16 %v456
      %v1763 = vunpack.c.h.b16 %v456
      %v1764 = vunpack.c.l.b16 %v457
      %v1765 = vunpack.c.h.b16 %v457
      %v1766 = vunpack.c.l.b16 %v458
      %v1767 = vunpack.c.h.b16 %v458
      %v1768 = vunpack.c.l.b16 %v459
      %v1769 = vunpack.c.h.b16 %v459
      %v1770 = vunpack.c.l.b16 %v460
      %v1771 = vunpack.c.h.b16 %v460
      %v1772 = vunpack.c.l.b16 %v461
      %v1773 = vunpack.c.h.b16 %v461
      %v1774 = vunpack.c.l.b16 %v462
      %v1775 = vunpack.c.h.b16 %v462
      %v1776 = vunpack.c.l.b16 %v463
      %v1777 = vunpack.c.h.b16 %v463
      %v1778 = vunpack.c.l.b16 %v464
      %v1779 = vunpack.c.h.b16 %v464
      %v1780 = vunpack.c.l.b16 %v465
      %v1781 = vunpack.c.h.b16 %v465
      %v1782 = vunpack.c.l.b16 %v466
      %v1783 = vunpack.c.h.b16 %v466
      %v1784 = vunpack.c.l.b16 %v467
      %v1785 = vunpack.c.h.b16 %v467
      %v1786 = vunpack.c.l.b16 %v468
      %v1787 = vunpack.c.h.b16 %v468
      %v1788 = vunpack.c.l.b16 %v469
      %v1789 = vunpack.c.h.b16 %v469
      %v1790 = vunpack.c.l.b16 %v470
      %v1791 = vunpack.c.h.b16 %v470
      %v1792 = vunpack.c.l.b16 %v471
      %v1793 = vunpack.c.h.b16 %v471
      %v1794 = vunpack.c.l.b16 %v472
      %v1795 = vunpack.c.h.b16 %v472
      %v1796 = vunpack.c.l.b16 %v473
      %v1797 = vunpack.c.h.b16 %v473
      %v1798 = vunpack.c.l.b16 %v474
      %v1799 = vunpack.c.h.b16 %v474
      %v1800 = vunpack.c.l.b16 %v475
      %v1801 = vunpack.c.h.b16 %v475
      %v1802 = vunpack.c.l.b16 %v476
      %v1803 = vunpack.c.h.b16 %v476
      %v1804 = vunpack.c.l.b16 %v477
      %v1805 = vunpack.c.h.b16 %v477
      %v1806 = vunpack.c.l.b16 %v478
      %v1807 = vunpack.c.h.b16 %v478
      %v1808 = vunpack.c.l.b16 %v479
      %v1809 = vunpack.c.h.b16 %v479
      %v1810 = vunpack.c.l.b16 %v480
      %v1811 = vunpack.c.h.b16 %v480
      %v1812 = vunpack.c.l.b16 %v481
      %v1813 = vunpack.c.h.b16 %v481
      %v1814 = vunpack.c.l.b16 %v482
      %v1815 = vunpack.c.h.b16 %v482
      %v1816 = vunpack.c.l.b16 %v483
      %v1817 = vunpack.c.h.b16 %v483
      %v1818 = vunpack.c.l.b16 %v484
      %v1819 = vunpack.c.h.b16 %v484
      %v1820 = vunpack.c.l.b16 %v485
      %v1821 = vunpack.c.h.b16 %v485
      %v1822 = vunpack.c.l.b16 %v486
      %v1823 = vunpack.c.h.b16 %v486
      %v1824 = vunpack.c.l.b16 %v487
      %v1825 = vunpack.c.h.b16 %v487
      %v1826 = vunpack.c.l.b16 %v488
      %v1827 = vunpack.c.h.b16 %v488
      %v1828 = vunpack.c.l.b16 %v489
      %v1829 = vunpack.c.h.b16 %v489
      %v1830 = vunpack.c.l.b16 %v490
      %v1831 = vunpack.c.h.b16 %v490
      %v1832 = vunpack.c.l.b16 %v491
      %v1833 = vunpack.c.h.b16 %v491
      %v1834 = vunpack.c.l.b16 %v492
      %v1835 = vunpack.c.h.b16 %v492
      %v1836 = vunpack.c.l.b16 %v493
      %v1837 = vunpack.c.h.b16 %v493
      %v1838 = vunpack.c.l.b16 %v494
      %v1839 = vunpack.c.h.b16 %v494
      %v1840 = vunpack.c.l.b16 %v495
      %v1841 = vunpack.c.h.b16 %v495
      %v1842 = vunpack.c.l.b16 %v496
      %v1843 = vunpack.c.h.b16 %v496
      %v1844 = vunpack.c.l.b16 %v497
      %v1845 = vunpack.c.h.b16 %v497
      %v1846 = vunpack.c.l.b16 %v498
      %v1847 = vunpack.c.h.b16 %v498
      %v1848 = vunpack.c.l.b16 %v499
      %v1849 = vunpack.c.h.b16 %v499
      %v1850 = vunpack.c.l.b16 %v500
      %v1851 = vunpack.c.h.b16 %v500
      %v1852 = vunpack.c.l.b16 %v501
      %v1853 = vunpack.c.h.b16 %v501
      %v1854 = vunpack.c.l.b16 %v502
      %v1855 = vunpack.c.h.b16 %v502
      %v1856 = vunpack.c.l.b16 %v503
      %v1857 = vunpack.c.h.b16 %v503
      %v1858 = vunpack.c.l.b16 %v504
      %v1859 = vunpack.c.h.b16 %v504
      %v1860 = vunpack.c.l.b16 %v505
      %v1861 = vunpack.c.h.b16 %v505
      %v1862 = vunpack.c.l.b16 %v506
      %v1863 = vunpack.c.h.b16 %v506
      %v1864 = vunpack.c.l.b16 %v507
      %v1865 = vunpack.c.h.b16 %v507
      %v1866 = vunpack.c.l.b16 %v508
      %v1867 = vunpack.c.h.b16 %v508
      %v1868 = vunpack.c.l.b16 %v509
      %v1869 = vunpack.c.h.b16 %v509
      %v1870 = vunpack.c.l.b16 %v510
      %v1871 = vunpack.c.h.b16 %v510
      %v1872 = vunpack.c.l.b16 %v511
      %v1873 = vunpack.c.h.b16 %v511
      %v1874 = vunpack.c.l.b16 %v512
      %v1875 = vunpack.c.h.b16 %v512
      %v1876 = vunpack.c.l.b16 %v513
      %v1877 = vunpack.c.h.b16 %v513
      %v1878 = vunpack.c.l.b16 %v514
      %v1879 = vunpack.c.h.b16 %v514
      %v1880 = vunpack.c.l.b16 %v515
      %v1881 = vunpack.c.h.b16 %v515
      %v1882 = vunpack.c.l.b16 %v516
      %v1883 = vunpack.c.h.b16 %v516
      %v1884 = vunpack.c.l.b16 %v517
      %v1885 = vunpack.c.h.b16 %v517
      %v1886 = vunpack.c.l.b16 %v518
      %v1887 = vunpack.c.h.b16 %v518
      %v1888 = vunpack.c.l.b16 %v519
      %v1889 = vunpack.c.h.b16 %v519
      %v1890 = vunpack.c.l.b16 %v520
      %v1891 = vunpack.c.h.b16 %v520
      %v1892 = vunpack.c.l.b16 %v521
      %v1893 = vunpack.c.h.b16 %v521
      %v1894 = vunpack.c.l.b16 %v522
      %v1895 = vunpack.c.h.b16 %v522
      %v1896 = vunpack.c.l.b16 %v523
      %v1897 = vunpack.c.h.b16 %v523
      %v1898 = vunpack.c.l.b16 %v524
      %v1899 = vunpack.c.h.b16 %v524
      %v1900 = vunpack.c.l.b16 %v525
      %v1901 = vunpack.c.h.b16 %v525
      %v1902 = vunpack.c.l.b16 %v526
      %v1903 = vunpack.c.h.b16 %v526
      %v1904 = vunpack.c.l.b16 %v527
      %v1905 = vunpack.c.h.b16 %v527
      %v1906 = vunpack.c.l.b16 %v528
      %v1907 = vunpack.c.h.b16 %v528
      %v1908 = vunpack.c.l.b16 %v529
      %v1909 = vunpack.c.h.b16 %v529
      %v1910 = vunpack.c.l.b16 %v530
      %v1911 = vunpack.c.h.b16 %v530
      %v1912 = vunpack.c.l.b16 %v531
      %v1913 = vunpack.c.h.b16 %v531
      %v1914 = vunpack.c.l.b16 %v532
      %v1915 = vunpack.c.h.b16 %v532
      %v1916 = vunpack.c.l.b16 %v533
      %v1917 = vunpack.c.h.b16 %v533
      %v1918 = vunpack.c.l.b16 %v534
      %v1919 = vunpack.c.h.b16 %v534
      %v1920 = vunpack.c.l.b16 %v535
      %v1921 = vunpack.c.h.b16 %v535
      %v1922 = vunpack.c.l.b16 %v536
      %v1923 = vunpack.c.h.b16 %v536
      %v1924 = vunpack.c.l.b16 %v537
      %v1925 = vunpack.c.h.b16 %v537
      %v1926 = vunpack.c.l.b16 %v538
      %v1927 = vunpack.c.h.b16 %v538
      %v1928 = vunpack.c.l.b16 %v539
      %v1929 = vunpack.c.h.b16 %v539
      %v1930 = vunpack.c.l.b16 %v540
      %v1931 = vunpack.c.h.b16 %v540
      %v1932 = vunpack.c.l.b16 %v541
      %v1933 = vunpack.c.h.b16 %v541
      %v1934 = vunpack.c.l.b16 %v542
      %v1935 = vunpack.c.h.b16 %v542
      %v1936 = vunpack.c.l.b16 %v543
      %v1937 = vunpack.c.h.b16 %v543
      %v1938 = vunpack.c.l.b16 %v544
      %v1939 = vunpack.c.h.b16 %v544
      %v1940 = vunpack.c.l.b16 %v545
      %v1941 = vunpack.c.h.b16 %v545
      %v1942 = vunpack.c.l.b16 %v546
      %v1943 = vunpack.c.h.b16 %v546
      %v1944 = vunpack.c.l.b16 %v547
      %v1945 = vunpack.c.h.b16 %v547
      %v1946 = vunpack.c.l.b16 %v548
      %v1947 = vunpack.c.h.b16 %v548
      %v1948 = vunpack.c.l.b16 %v549
      %v1949 = vunpack.c.h.b16 %v549
      %v1950 = vunpack.c.l.b16 %v550
      %v1951 = vunpack.c.h.b16 %v550
      %v1952 = vunpack.c.l.b16 %v551
      %v1953 = vunpack.c.h.b16 %v551
      %v1954 = vunpack.c.l.b16 %v552
      %v1955 = vunpack.c.h.b16 %v552
      %v1956 = vunpack.c.l.b16 %v553
      %v1957 = vunpack.c.h.b16 %v553
      %v1958 = vunpack.c.l.b16 %v554
      %v1959 = vunpack.c.h.b16 %v554
      %v1960 = vunpack.c.l.b16 %v555
      %v1961 = vunpack.c.h.b16 %v555
      %v1962 = vunpack.c.l.b16 %v556
      %v1963 = vunpack.c.h.b16 %v556
      %v1964 = vunpack.c.l.b16 %v557
      %v1965 = vunpack.c.h.b16 %v557
      %v1966 = vunpack.c.l.b16 %v558
      %v1967 = vunpack.c.h.b16 %v558
      %v1968 = vunpack.c.l.b16 %v559
      %v1969 = vunpack.c.h.b16 %v559
      %v1970 = vunpack.c.l.b16 %v560
      %v1971 = vunpack.c.h.b16 %v560
      %v1972 = vunpack.c.l.b16 %v561
      %v1973 = vunpack.c.h.b16 %v561
      %v1974 = vunpack.c.l.b16 %v562
      %v1975 = vunpack.c.h.b16 %v562
      %v1976 = vunpack.c.l.b16 %v563
      %v1977 = vunpack.c.h.b16 %v563
      %v1978 = vunpack.c.l.b16 %v564
      %v1979 = vunpack.c.h.b16 %v564
      %v1980 = vunpack.c.l.b16 %v565
      %v1981 = vunpack.c.h.b16 %v565
      %v1982 = vunpack.c.l.b16 %v566
      %v1983 = vunpack.c.h.b16 %v566
      %v1984 = vunpack.c.l.b16 %v567
      %v1985 = vunpack.c.h.b16 %v567
      %v1986 = vunpack.c.l.b16 %v568
      %v1987 = vunpack.c.h.b16 %v568
      %v1988 = vunpack.c.l.b16 %v569
      %v1989 = vunpack.c.h.b16 %v569
      %v1990 = vunpack.c.l.b16 %v570
      %v1991 = vunpack.c.h.b16 %v570
      %v1992 = vunpack.c.l.b16 %v571
      %v1993 = vunpack.c.h.b16 %v571
      %v1994 = vunpack.c.l.b16 %v572
      %v1995 = vunpack.c.h.b16 %v572
      %v1996 = vunpack.c.l.b16 %v573
      %v1997 = vunpack.c.h.b16 %v573
      %v1998 = vunpack.c.l.b16 %v574
      %v1999 = vunpack.c.h.b16 %v574
      %v2000 = vunpack.c.l.b16 %v575
      %v2001 = vunpack.c.h.b16 %v575
      %v2002 = vunpack.c.l.b16 %v576
      %v2003 = vunpack.c.h.b16 %v576
      %v2004 = vunpack.c.l.b16 %v577
      %v2005 = vunpack.c.h.b16 %v577
      %v2006 = vunpack.c.l.b16 %v578
      %v2007 = vunpack.c.h.b16 %v578
      %v2008 = vunpack.c.l.b16 %v579
      %v2009 = vunpack.c.h.b16 %v579
      %v2010 = vunpack.c.l.b16 %v580
      %v2011 = vunpack.c.h.b16 %v580
      %v2012 = vunpack.c.l.b16 %v581
      %v2013 = vunpack.c.h.b16 %v581
      %v2014 = vunpack.c.l.b16 %v582
      %v2015 = vunpack.c.h.b16 %v582
      %v2016 = vunpack.c.l.b16 %v583
      %v2017 = vunpack.c.h.b16 %v583
      %v2018 = vunpack.c.l.b16 %v584
      %v2019 = vunpack.c.h.b16 %v584
      %v2020 = vunpack.c.l.b16 %v585
      %v2021 = vunpack.c.h.b16 %v585
      %v2022 = vunpack.c.l.b16 %v586
      %v2023 = vunpack.c.h.b16 %v586
      %v2024 = vunpack.c.l.b16 %v587
      %v2025 = vunpack.c.h.b16 %v587
      %v2026 = vunpack.c.l.b16 %v588
      %v2027 = vunpack.c.h.b16 %v588
      %v2028 = vunpack.c.l.b16 %v589
      %v2029 = vunpack.c.h.b16 %v589
      %v2030 = vunpack.c.l.b16 %v590
      %v2031 = vunpack.c.h.b16 %v590
      %v2032 = vunpack.c.l.b16 %v591
      %v2033 = vunpack.c.h.b16 %v591
      %v2034 = vunpack.c.l.b16 %v592
      %v2035 = vunpack.c.h.b16 %v592
      %v2036 = vunpack.c.l.b16 %v593
      %v2037 = vunpack.c.h.b16 %v593
      %v2038 = vunpack.c.l.b16 %v594
      %v2039 = vunpack.c.h.b16 %v594
      %v2040 = vunpack.c.l.b16 %v595
      %v2041 = vunpack.c.h.b16 %v595
      %v2042 = vunpack.c.l.b16 %v596
      %v2043 = vunpack.c.h.b16 %v596
      %v2044 = vunpack.c.l.b16 %v597
      %v2045 = vunpack.c.h.b16 %v597
      %v2046 = vunpack.c.l.b16 %v598
      %v2047 = vunpack.c.h.b16 %v598
      %v2048 = vunpack.c.l.b16 %v599
      %v2049 = vunpack.c.h.b16 %v599
      %v2050 = vunpack.c.l.b16 %v600
      %v2051 = vunpack.c.h.b16 %v600
      %v2052 = vunpack.c.l.b16 %v601
      %v2053 = vunpack.c.h.b16 %v601
      %v2054 = vunpack.c.l.b16 %v602
      %v2055 = vunpack.c.h.b16 %v602
      %v2056 = vunpack.c.l.b16 %v603
      %v2057 = vunpack.c.h.b16 %v603
      %v2058 = vunpack.c.l.b16 %v604
      %v2059 = vunpack.c.h.b16 %v604
      %v2060 = vunpack.c.l.b16 %v605
      %v2061 = vunpack.c.h.b16 %v605
      %v2062 = vunpack.c.l.b16 %v606
      %v2063 = vunpack.c.h.b16 %v606
      %v2064 = vunpack.c.l.b16 %v607
      %v2065 = vunpack.c.h.b16 %v607
      %v2066 = vunpack.c.l.b16 %v608
      %v2067 = vunpack.c.h.b16 %v608
      %v2068 = vunpack.c.l.b16 %v609
      %v2069 = vunpack.c.h.b16 %v609
      %v2070 = vunpack.c.l.b16 %v610
      %v2071 = vunpack.c.h.b16 %v610
      %v2072 = vunpack.c.l.b16 %v611
      %v2073 = vunpack.c.h.b16 %v611
      %v2074 = vunpack.c.l.b16 %v612
      %v2075 = vunpack.c.h.b16 %v612
      %v2076 = vunpack.c.l.b16 %v613
      %v2077 = vunpack.c.h.b16 %v613
      %v2078 = vunpack.c.l.b16 %v614
      %v2079 = vunpack.c.h.b16 %v614
      %v2080 = vunpack.c.l.b16 %v615
      %v2081 = vunpack.c.h.b16 %v615
      %v2082 = vunpack.c.l.b16 %v616
      %v2083 = vunpack.c.h.b16 %v616
      %v2084 = vunpack.c.l.b16 %v617
      %v2085 = vunpack.c.h.b16 %v617
      %v2086 = vunpack.c.l.b16 %v618
      %v2087 = vunpack.c.h.b16 %v618
      %v2088 = vunpack.c.l.b16 %v619
      %v2089 = vunpack.c.h.b16 %v619
      %v2090 = vunpack.c.l.b16 %v620
      %v2091 = vunpack.c.h.b16 %v620
      %v2092 = vunpack.c.l.b16 %v621
      %v2093 = vunpack.c.h.b16 %v621
      %v2094 = vunpack.c.l.b16 %v622
      %v2095 = vunpack.c.h.b16 %v622
      %v2096 = vunpack.c.l.b16 %v623
      %v2097 = vunpack.c.h.b16 %v623
      %v2098 = vunpack.c.l.b16 %v624
      %v2099 = vunpack.c.h.b16 %v624
      %v2100 = vunpack.c.l.b16 %v625
      %v2101 = vunpack.c.h.b16 %v625
      %v2102 = vunpack.c.l.b16 %v626
      %v2103 = vunpack.c.h.b16 %v626
      %v2104 = vunpack.c.l.b16 %v627
      %v2105 = vunpack.c.h.b16 %v627
      %v2106 = vunpack.c.l.b16 %v628
      %v2107 = vunpack.c.h.b16 %v628
      %v2108 = vunpack.c.l.b16 %v629
      %v2109 = vunpack.c.h.b16 %v629
      %v2110 = vunpack.c.l.b16 %v630
      %v2111 = vunpack.c.h.b16 %v630
      %v2112 = vunpack.c.l.b16 %v631
      %v2113 = vunpack.c.h.b16 %v631
      %v2114 = vunpack.c.l.b16 %v632
      %v2115 = vunpack.c.h.b16 %v632
      %v2116 = vunpack.c.l.b16 %v633
      %v2117 = vunpack.c.h.b16 %v633
      %v2118 = vunpack.c.l.b16 %v634
      %v2119 = vunpack.c.h.b16 %v634
      %v2120 = vunpack.c.l.b16 %v635
      %v2121 = vunpack.c.h.b16 %v635
      %v2122 = vunpack.c.l.b16 %v636
      %v2123 = vunpack.c.h.b16 %v636
      %v2124 = vunpack.c.l.b16 %v637
      %v2125 = vunpack.c.h.b16 %v637
      %v2126 = vunpack.c.l.b16 %v638
      %v2127 = vunpack.c.h.b16 %v638
      %v2128 = vunpack.c.l.b16 %v639
      %v2129 = vunpack.c.h.b16 %v639
      %v2130 = vunpack.c.l.b16 %v640
      %v2131 = vunpack.c.h.b16 %v640
      %v2132 = vunpack.c.l.b16 %v641
      %v2133 = vunpack.c.h.b16 %v641
      %v2134 = vunpack.c.l.b16 %v642
      %v2135 = vunpack.c.h.b16 %v642
      %v2136 = vunpack.c.l.b16 %v643
      %v2137 = vunpack.c.h.b16 %v643
      %v2138 = vunpack.c.l.b16 %v644
      %v2139 = vunpack.c.h.b16 %v644
      %v2140 = vunpack.c.l.b16 %v645
      %v2141 = vunpack.c.h.b16 %v645
      %v2142 = vunpack.c.l.b16 %v646
      %v2143 = vunpack.c.h.b16 %v646
      %v2144 = vunpack.c.l.b16 %v647
      %v2145 = vunpack.c.h.b16 %v647
      %v2146 = vunpack.c.l.b16 %v648
      %v2147 = vunpack.c.h.b16 %v648
      %v2148 = vunpack.c.l.b16 %v649
      %v2149 = vunpack.c.h.b16 %v649
      %v2150 = vunpack.c.l.b16 %v650
      %v2151 = vunpack.c.h.b16 %v650
      %v2152 = vunpack.c.l.b16 %v651
      %v2153 = vunpack.c.h.b16 %v651
      %v2154 = vunpack.c.l.b16 %v652
      %v2155 = vunpack.c.h.b16 %v652
      %v2156 = vunpack.c.l.b16 %v653
      %v2157 = vunpack.c.h.b16 %v653
      %v2158 = vunpack.c.l.b16 %v654
      %v2159 = vunpack.c.h.b16 %v654
      %v2160 = vunpack.c.l.b16 %v655
      %v2161 = vunpack.c.h.b16 %v655
      %v2162 = vunpack.c.l.b16 %v656
      %v2163 = vunpack.c.h.b16 %v656
      %v2164 = vunpack.c.l.b16 %v657
      %v2165 = vunpack.c.h.b16 %v657
      %v2166 = vunpack.c.l.b16 %v658
      %v2167 = vunpack.c.h.b16 %v658
      %v2168 = vunpack.c.l.b16 %v659
      %v2169 = vunpack.c.h.b16 %v659
      %v2170 = vunpack.c.l.b16 %v660
      %v2171 = vunpack.c.h.b16 %v660
      %v2172 = vunpack.c.l.b16 %v661
      %v2173 = vunpack.c.h.b16 %v661
      %v2174 = vunpack.c.l.b16 %v662
      %v2175 = vunpack.c.h.b16 %v662
      %v2176 = vunpack.c.l.b16 %v663
      %v2177 = vunpack.c.h.b16 %v663
      %v2178 = vunpack.c.l.b16 %v664
      %v2179 = vunpack.c.h.b16 %v664
      %v2180 = vunpack.c.l.b16 %v665
      %v2181 = vunpack.c.h.b16 %v665
      %v2182 = vunpack.c.l.b16 %v666
      %v2183 = vunpack.c.h.b16 %v666
      %v2184 = vunpack.c.l.b16 %v667
      %v2185 = vunpack.c.h.b16 %v667
      %v2186 = vunpack.c.l.b16 %v668
      %v2187 = vunpack.c.h.b16 %v668
      %v2188 = vunpack.c.l.b16 %v669
      %v2189 = vunpack.c.h.b16 %v669
      %v2190 = vunpack.c.l.b16 %v670
      %v2191 = vunpack.c.h.b16 %v670
      %v2192 = vunpack.c.l.b16 %v671
      %v2193 = vunpack.c.h.b16 %v671
      %v2194 = vunpack.c.l.b16 %v672
      %v2195 = vunpack.c.h.b16 %v672
      %v2196 = vunpack.c.l.b16 %v673
      %v2197 = vunpack.c.h.b16 %v673
      %v2198 = vunpack.c.l.b16 %v674
      %v2199 = vunpack.c.h.b16 %v674
      %v2200 = vunpack.c.l.b16 %v675
      %v2201 = vunpack.c.h.b16 %v675
      %v2202 = vunpack.c.l.b16 %v676
      %v2203 = vunpack.c.h.b16 %v676
      %v2204 = vpack.c.b16 %v1254, %v1244
      %v2205 = vpack.c.b16 %v1255, %v1245
      %v2206 = vpack.c.b16 %v1256, %v1246
      %v2207 = vpack.c.b16 %v1257, %v1247
      %v2208 = vpack.c.b16 %v1258, %v1248
      %v2209 = vpack.c.b16 %v1259, %v1249
      %v2210 = vpack.c.b16 %v1260, %v1250
      %v2211 = vpack.c.b16 %v1261, %v1251
      %v2212 = vpack.c.b16 %v1262, %v1252
      %v2213 = vpack.c.b16 %v1263, %v1253
      %v2214 = vpack.c.b16 %v1274, %v1264
      %v2215 = vpack.c.b16 %v1275, %v1265
      %v2216 = vpack.c.b16 %v1276, %v1266
      %v2217 = vpack.c.b16 %v1277, %v1267
      %v2218 = vpack.c.b16 %v1278, %v1268
      %v2219 = vpack.c.b16 %v1279, %v1269
      %v2220 = vpack.c.b16 %v1280, %v1270
      %v2221 = vpack.c.b16 %v1281, %v1271
      %v2222 = vpack.c.b16 %v1282, %v1272
      %v2223 = vpack.c.b16 %v1283, %v1273
      %v2224 = vpack.c.b16 %v1294, %v1284
      %v2225 = vpack.c.b16 %v1295, %v1285
      %v2226 = vpack.c.b16 %v1296, %v1286
      %v2227 = vpack.c.b16 %v1297, %v1287
      %v2228 = vpack.c.b16 %v1298, %v1288
      %v2229 = vpack.c.b16 %v1299, %v1289
      %v2230 = vpack.c.b16 %v1300, %v1290
      %v2231 = vpack.c.b16 %v1301, %v1291
      %v2232 = vpack.c.b16 %v1302, %v1292
      %v2233 = vpack.c.b16 %v1303, %v1293
      %v2234 = vpack.c.b16 %v1314, %v1304
      %v2235 = vpack.c.b16 %v1315, %v1305
      %v2236 = vpack.c.b16 %v1316, %v1306
      %v2237 = vpack.c.b16 %v1317, %v1307
      %v2238 = vpack.c.b16 %v1318, %v1308
      %v2239 = vpack.c.b16 %v1319, %v1309
      %v2240 = vpack.c.b16 %v1320, %v1310
      %v2241 = vpack.c.b16 %v1321, %v1311
      %v2242 = vpack.c.b16 %v1322, %v1312
      %v2243 = vpack.c.b16 %v1323, %v1313
      %v2244 = vpack.c.b16 %v1334, %v1324
      %v2245 = vpack.c.b16 %v1335, %v1325
      %v2246 = vpack.c.b16 %v1336, %v1326
      %v2247 = vpack.c.b16 %v1337, %v1327
      %v2248 = vpack.c.b16 %v1338, %v1328
      %v2249 = vpack.c.b16 %v1339, %v1329
      %v2250 = vpack.c.b16 %v1340, %v1330
      %v2251 = vpack.c.b16 %v1341, %v1331
      %v2252 = vpack.c.b16 %v1342, %v1332
      %v2253 = vpack.c.b16 %v1343, %v1333
      %v2254 = vpack.c.b16 %v1354, %v1344
      %v2255 = vpack.c.b16 %v1355, %v1345
      %v2256 = vpack.c.b16 %v1356, %v1346
      %v2257 = vpack.c.b16 %v1357, %v1347
      %v2258 = vpack.c.b16 %v1358, %v1348
      %v2259 = vpack.c.b16 %v1359, %v1349
      %v2260 = vpack.c.b16 %v1360, %v1350
      %v2261 = vpack.c.b16 %v1361, %v1351
      %v2262 = vpack.c.b16 %v1362, %v1352
      %v2263 = vpack.c.b16 %v1363, %v1353
      %v2264 = vpack.c.b16 %v1374, %v1364
      %v2265 = vpack.c.b16 %v1375, %v1365
      %v2266 = vpack.c.b16 %v1376, %v1366
      %v2267 = vpack.c.b16 %v1377, %v1367
      %v2268 = vpack.c.b16 %v1378, %v1368
      %v2269 = vpack.c.b16 %v1379, %v1369
      %v2270 = vpack.c.b16 %v1380, %v1370
      %v2271 = vpack.c.b16 %v1381, %v1371
      %v2272 = vpack.c.b16 %v1382, %v1372
      %v2273 = vpack.c.b16 %v1383, %v1373
      %v2274 = vpack.c.b16 %v1394, %v1384
      %v2275 = vpack.c.b16 %v1395, %v1385
      %v2276 = vpack.c.b16 %v1396, %v1386
      %v2277 = vpack.c.b16 %v1397, %v1387
      %v2278 = vpack.c.b16 %v1398, %v1388
      %v2279 = vpack.c.b16 %v1399, %v1389
      %v2280 = vpack.c.b16 %v1400, %v1390
      %v2281 = vpack.c.b16 %v1401, %v1391
      %v2282 = vpack.c.b16 %v1402, %v1392
      %v2283 = vpack.c.b16 %v1403, %v1393
      %v2284 = vpack.c.b16 %v1414, %v1404
      %v2285 = vpack.c.b16 %v1415, %v1405
      %v2286 = vpack.c.b16 %v1416, %v1406
      %v2287 = vpack.c.b16 %v1417, %v1407
      %v2288 = vpack.c.b16 %v1418, %v1408
      %v2289 = vpack.c.b16 %v1419, %v1409
      %v2290 = vpack.c.b16 %v1420, %v1410
      %v2291 = vpack.c.b16 %v1421, %v1411
      %v2292 = vpack.c.b16 %v1422, %v1412
      %v2293 = vpack.c.b16 %v1423, %v1413
      %v2294 = vpack.c.b16 %v1434, %v1424
      %v2295 = vpack.c.b16 %v1435, %v1425
      %v2296 = vpack.c.b16 %v1436, %v1426
      %v2297 = vpack.c.b16 %v1437, %v1427
      %v2298 = vpack.c.b16 %v1438, %v1428
      %v2299 = vpack.c.b16 %v1439, %v1429
      %v2300 = vpack.c.b16 %v1440, %v1430
      %v2301 = vpack.c.b16 %v1441, %v1431
      %v2302 = vpack.c.b16 %v1442, %v1432
      %v2303 = vpack.c.b16 %v1443, %v1433
      %v2304 = vpack.c.b16 %v1454, %v1444
      %v2305 = vpack.c.b16 %v1455, %v1445
      %v2306 = vpack.c.b16 %v1456, %v1446
      %v2307 = vpack.c.b16 %v1457, %v1447
      %v2308 = vpack.c.b16 %v1458, %v1448
      %v2309 = vpack.c.b16 %v1459, %v1449
      %v2310 = vpack.c.b16 %v1460, %v1450
      %v2311 = vpack.c.b16 %v1461, %v1451
      %v2312 = vpack.c.b16 %v1462, %v1452
      %v2313 = vpack.c.b16 %v1463, %v1453
      %v2314 = vpack.c.b16 %v1474, %v1464
      %v2315 = vpack.c.b16 %v1475, %v1465
      %v2316 = vpack.c.b16 %v1476, %v1466
      %v2317 = vpack.c.b16 %v1477, %v1467
      %v2318 = vpack.c.b16 %v1478, %v1468
      %v2319 = vpack.c.b16 %v1479, %v1469
      %v2320 = vpack.c.b16 %v1480, %v1470
      %v2321 = vpack.c.b16 %v1481, %v1471
      %v2322 = vpack.c.b16 %v1482, %v1472
      %v2323 = vpack.c.b16 %v1483, %v1473
      %v2324 = vpack.c.b16 %v1494, %v1484
      %v2325 = vpack.c.b16 %v1495, %v1485
      %v2326 = vpack.c.b16 %v1496, %v1486
      %v2327 = vpack.c.b16 %v1497, %v1487
      %v2328 = vpack.c.b16 %v1498, %v1488
      %v2329 = vpack.c.b16 %v1499, %v1489
      %v2330 = vpack.c.b16 %v1500, %v1490
      %v2331 = vpack.c.b16 %v1501, %v1491
      %v2332 = vpack.c.b16 %v1502, %v1492
      %v2333 = vpack.c.b16 %v1503, %v1493
      %v2334 = vpack.c.b16 %v1514, %v1504
      %v2335 = vpack.c.b16 %v1515, %v1505
      %v2336 = vpack.c.b16 %v1516, %v1506
      %v2337 = vpack.c.b16 %v1517, %v1507
      %v2338 = vpack.c.b16 %v1518, %v1508
      %v2339 = vpack.c.b16 %v1519, %v1509
      %v2340 = vpack.c.b16 %v1520, %v1510
      %v2341 = vpack.c.b16 %v1521, %v1511
      %v2342 = vpack.c.b16 %v1522, %v1512
      %v2343 = vpack.c.b16 %v1523, %v1513
      %v2344 = vpack.c.b16 %v1534, %v1524
      %v2345 = vpack.c.b16 %v1535, %v1525
      %v2346 = vpack.c.b16 %v1536, %v1526
      %v2347 = vpack.c.b16 %v1537, %v1527
      %v2348 = vpack.c.b16 %v1538, %v1528
      %v2349 = vpack.c.b16 %v1539, %v1529
      %v2350 = vpack.c.b16 %v1540, %v1530
      %v2351 = vpack.c.b16 %v1541, %v1531
      %v2352 = vpack.c.b16 %v1542, %v1532
      %v2353 = vpack.c.b16 %v1543, %v1533
      %v2354 = vpack.c.b16 %v1554, %v1544
      %v2355 = vpack.c.b16 %v1555, %v1545
      %v2356 = vpack.c.b16 %v1556, %v1546
      %v2357 = vpack.c.b16 %v1557, %v1547
      %v2358 = vpack.c.b16 %v1558, %v1548
      %v2359 = vpack.c.b16 %v1559, %v1549
      %v2360 = vpack.c.b16 %v1560, %v1550
      %v2361 = vpack.c.b16 %v1561, %v1551
      %v2362 = vpack.c.b16 %v1562, %v1552
      %v2363 = vpack.c.b16 %v1563, %v1553
      %v2364 = vpack.c.b16 %v1574, %v1564
      %v2365 = vpack.c.b16 %v1575, %v1565
      %v2366 = vpack.c.b16 %v1576, %v1566
      %v2367 = vpack.c.b16 %v1577, %v1567
      %v2368 = vpack.c.b16 %v1578, %v1568
      %v2369 = vpack.c.b16 %v1579, %v1569
      %v2370 = vpack.c.b16 %v1580, %v1570
      %v2371 = vpack.c.b16 %v1581, %v1571
      %v2372 = vpack.c.b16 %v1582, %v1572
      %v2373 = vpack.c.b16 %v1583, %v1573
      %v2374 = vpack.c.b16 %v1594, %v1584
      %v2375 = vpack.c.b16 %v1595, %v1585
      %v2376 = vpack.c.b16 %v1596, %v1586
      %v2377 = vpack.c.b16 %v1597, %v1587
      %v2378 = vpack.c.b16 %v1598, %v1588
      %v2379 = vpack.c.b16 %v1599, %v1589
      %v2380 = vpack.c.b16 %v1600, %v1590
      %v2381 = vpack.c.b16 %v1601, %v1591
      %v2382 = vpack.c.b16 %v1602, %v1592
      %v2383 = vpack.c.b16 %v1603, %v1593
      %v2384 = vpack.c.b16 %v1614, %v1604
      %v2385 = vpack.c.b16 %v1615, %v1605
      %v2386 = vpack.c.b16 %v1616, %v1606
      %v2387 = vpack.c.b16 %v1617, %v1607
      %v2388 = vpack.c.b16 %v1618, %v1608
      %v2389 = vpack.c.b16 %v1619, %v1609
      %v2390 = vpack.c.b16 %v1620, %v1610
      %v2391 = vpack.c.b16 %v1621, %v1611
      %v2392 = vpack.c.b16 %v1622, %v1612
      %v2393 = vpack.c.b16 %v1623, %v1613
      %v2394 = vpack.c.b16 %v1634, %v1624
      %v2395 = vpack.c.b16 %v1635, %v1625
      %v2396 = vpack.c.b16 %v1636, %v1626
      %v2397 = vpack.c.b16 %v1637, %v1627
      %v2398 = vpack.c.b16 %v1638, %v1628
      %v2399 = vpack.c.b16 %v1639, %v1629
      %v2400 = vpack.c.b16 %v1640, %v1630
      %v2401 = vpack.c.b16 %v1641, %v1631
      %v2402 = vpack.c.b16 %v1642, %v1632
      %v2403 = vpack.c.b16 %v1643, %v1633
      %v2404 = vpack.c.b16 %v1654, %v1644
      %v2405 = vpack.c.b16 %v1655, %v1645
      %v2406 = vpack.c.b16 %v1656, %v1646
      %v2407 = vpack.c.b16 %v1657, %v1647
      %v2408 = vpack.c.b16 %v1658, %v1648
      %v2409 = vpack.c.b16 %v1659, %v1649
      %v2410 = vpack.c.b16 %v1660, %v1650
      %v2411 = vpack.c.b16 %v1661, %v1651
      %v2412 = vpack.c.b16 %v1662, %v1652
      %v2413 = vpack.c.b16 %v1663, %v1653
      %v2414 = vpack.c.b16 %v1674, %v1664
      %v2415 = vpack.c.b16 %v1675, %v1665
      %v2416 = vpack.c.b16 %v1676, %v1666
      %v2417 = vpack.c.b16 %v1677, %v1667
      %v2418 = vpack.c.b16 %v1678, %v1668
      %v2419 = vpack.c.b16 %v1679, %v1669
      %v2420 = vpack.c.b16 %v1680, %v1670
      %v2421 = vpack.c.b16 %v1681, %v1671
      %v2422 = vpack.c.b16 %v1682, %v1672
      %v2423 = vpack.c.b16 %v1683, %v1673
      %v2424 = vpack.c.b16 %v1694, %v1684
      %v2425 = vpack.c.b16 %v1695, %v1685
      %v2426 = vpack.c.b16 %v1696, %v1686
      %v2427 = vpack.c.b16 %v1697, %v1687
      %v2428 = vpack.c.b16 %v1698, %v1688
      %v2429 = vpack.c.b16 %v1699, %v1689
      %v2430 = vpack.c.b16 %v1700, %v1690
      %v2431 = vpack.c.b16 %v1701, %v1691
      %v2432 = vpack.c.b16 %v1702, %v1692
      %v2433 = vpack.c.b16 %v1703, %v1693
      %v2434 = vpack.c.b16 %v1714, %v1704
      %v2435 = vpack.c.b16 %v1715, %v1705
      %v2436 = vpack.c.b16 %v1716, %v1706
      %v2437 = vpack.c.b16 %v1717, %v1707
      %v2438 = vpack.c.b16 %v1718, %v1708
      %v2439 = vpack.c.b16 %v1719, %v1709
      %v2440 = vpack.c.b16 %v1720, %v1710
      %v2441 = vpack.c.b16 %v1721, %v1711
      %v2442 = vpack.c.b16 %v1722, %v1712
      %v2443 = vpack.c.b16 %v1723, %v1713
      %v2444 = vpack.c.b16 %v1734, %v1724
      %v2445 = vpack.c.b16 %v1735, %v1725
      %v2446 = vpack.c.b16 %v1736, %v1726
      %v2447 = vpack.c.b16 %v1737, %v1727
      %v2448 = vpack.c.b16 %v1738, %v1728
      %v2449 = vpack.c.b16 %v1739, %v1729
      %v2450 = vpack.c.b16 %v1740, %v1730
      %v2451 = vpack.c.b16 %v1741, %v1731
      %v2452 = vpack.c.b16 %v1742, %v1732
      %v2453 = vpack.c.b16 %v1743, %v1733
      %v2454 = vpack.c.b16 %v1754, %v1744
      %v2455 = vpack.c.b16 %v1755, %v1745
      %v2456 = vpack.c.b16 %v1756, %v1746
      %v2457 = vpack.c.b16 %v1757, %v1747
      %v2458 = vpack.c.b16 %v1758, %v1748
      %v2459 = vpack.c.b16 %v1759, %v1749
      %v2460 = vpack.c.b16 %v1760, %v1750
      %v2461 = vpack.c.b16 %v1761, %v1751
      %v2462 = vpack.c.b16 %v1762, %v1752
      %v2463 = vpack.c.b16 %v1763, %v1753
      %v2464 = vpack.c.b16 %v1774, %v1764
      %v2465 = vpack.c.b16 %v1775, %v1765
      %v2466 = vpack.c.b16 %v1776, %v1766
      %v2467 = vpack.c.b16 %v1777, %v1767
      %v2468 = vpack.c.b16 %v1778, %v1768
      %v2469 = vpack.c.b16 %v1779, %v1769
      %v2470 = vpack.c.b16 %v1780, %v1770
      %v2471 = vpack.c.b16 %v1781, %v1771
      %v2472 = vpack.c.b16 %v1782, %v1772
      %v2473 = vpack.c.b16 %v1783, %v1773
      %v2474 = vpack.c.b16 %v1794, %v1784
      %v2475 = vpack.c.b16 %v1795, %v1785
      %v2476 = vpack.c.b16 %v1796, %v1786
      %v2477 = vpack.c.b16 %v1797, %v1787
      %v2478 = vpack.c.b16 %v1798, %v1788
      %v2479 = vpack.c.b16 %v1799, %v1789
      %v2480 = vpack.c.b16 %v1800, %v1790
      %v2481 = vpack.c.b16 %v1801, %v1791
      %v2482 = vpack.c.b16 %v1802, %v1792
      %v2483 = vpack.c.b16 %v1803, %v1793
      %v2484 = vpack.c.b16 %v1814, %v1804
      %v2485 = vpack.c.b16 %v1815, %v1805
      %v2486 = vpack.c.b16 %v1816, %v1806
      %v2487 = vpack.c.b16 %v1817, %v1807
      %v2488 = vpack.c.b16 %v1818, %v1808
      %v2489 = vpack.c.b16 %v1819, %v1809
      %v2490 = vpack.c.b16 %v1820, %v1810
      %v2491 = vpack.c.b16 %v1821, %v1811
      %v2492 = vpack.c.b16 %v1822, %v1812
      %v2493 = vpack.c.b16 %v1823, %v1813
      %v2494 = vpack.c.b16 %v1834, %v1824
      %v2495 = vpack.c.b16 %v1835, %v1825
      %v2496 = vpack.c.b16 %v1836, %v1826
      %v2497 = vpack.c.b16 %v1837, %v1827
      %v2498 = vpack.c.b16 %v1838, %v1828
      %v2499 = vpack.c.b16 %v1839, %v1829
      %v2500 = vpack.c.b16 %v1840, %v1830
      %v2501 = vpack.c.b16 %v1841, %v1831
      %v2502 = vpack.c.b16 %v1842, %v1832
      %v2503 = vpack.c.b16 %v1843, %v1833
      %v2504 = vpack.c.b16 %v1854, %v1844
      %v2505 = vpack.c.b16 %v1855, %v1845
      %v2506 = vpack.c.b16 %v1856, %v1846
      %v2507 = vpack.c.b16 %v1857, %v1847
      %v2508 = vpack.c.b16 %v1858, %v1848
      %v2509 = vpack.c.b16 %v1859, %v1849
      %v2510 = vpack.c.b16 %v1860, %v1850
      %v2511 = vpack.c.b16 %v1861, %v1851
      %v2512 = vpack.c.b16 %v1862, %v1852
      %v2513 = vpack.c.b16 %v1863, %v1853
      %v2514 = vpack.c.b16 %v1874, %v1864
      %v2515 = vpack.c.b16 %v1875, %v1865
      %v2516 = vpack.c.b16 %v1876, %v1866
      %v2517 = vpack.c.b16 %v1877, %v1867
      %v2518 = vpack.c.b16 %v1878, %v1868
      %v2519 = vpack.c.b16 %v1879, %v1869
      %v2520 = vpack.c.b16 %v1880, %v1870
      %v2521 = vpack.c.b16 %v1881, %v1871
      %v2522 = vpack.c.b16 %v1882, %v1872
      %v2523 = vpack.c.b16 %v1883, %v1873
      %v2524 = vpack.c.b16 %v1894, %v1884
      %v2525 = vpack.c.b16 %v1895, %v1885
      %v2526 = vpack.c.b16 %v1896, %v1886
      %v2527 = vpack.c.b16 %v1897, %v1887
      %v2528 = vpack.c.b16 %v1898, %v1888
      %v2529 = vpack.c.b16 %v1899, %v1889
      %v2530 = vpack.c.b16 %v1900, %v1890
      %v2531 = vpack.c.b16 %v1901, %v1891
      %v2532 = vpack.c.b16 %v1902, %v1892
      %v2533 = vpack.c.b16 %v1903, %v1893
      %v2534 = vpack.c.b16 %v1914, %v1904
      %v2535 = vpack.c.b16 %v1915, %v1905
      %v2536 = vpack.c.b16 %v1916, %v1906
      %v2537 = vpack.c.b16 %v1917, %v1907
      %v2538 = vpack.c.b16 %v1918, %v1908
      %v2539 = vpack.c.b16 %v1919, %v1909
      %v2540 = vpack.c.b16 %v1920, %v1910
      %v2541 = vpack.c.b16 %v1921, %v1911
      %v2542 = vpack.c.b16 %v1922, %v1912
      %v2543 = vpack.c.b16 %v1923, %v1913
      %v2544 = vpack.c.b16 %v1934, %v1924
      %v2545 = vpack.c.b16 %v1935, %v1925
      %v2546 = vpack.c.b16 %v1936, %v1926
      %v2547 = vpack.c.b16 %v1937, %v1927
      %v2548 = vpack.c.b16 %v1938, %v1928
      %v2549 = vpack.c.b16 %v1939, %v1929
      %v2550 = vpack.c.b16 %v1940, %v1930
      %v2551 = vpack.c.b16 %v1941, %v1931
      %v2552 = vpack.c.b16 %v1942, %v1932
      %v2553 = vpack.c.b16 %v1943, %v1933
      %v2554 = vpack.c.b16 %v1954, %v1944
      %v2555 = vpack.c.b16 %v1955, %v1945
      %v2556 = vpack.c.b16 %v1956, %v1946
      %v2557 = vpack.c.b16 %v1957, %v1947
      %v2558 = vpack.c.b16 %v1958, %v1948
      %v2559 = vpack.c.b16 %v1959, %v1949
      %v2560 = vpack.c.b16 %v1960, %v1950
      %v2561 = vpack.c.b16 %v1961, %v1951
      %v2562 = vpack.c.b16 %v1962, %v1952
      %v2563 = vpack.c.b16 %v1963, %v1953
      %v2564 = vpack.c.b16 %v1974, %v1964
      %v2565 = vpack.c.b16 %v1975, %v1965
      %v2566 = vpack.c.b16 %v1976, %v1966
      %v2567 = vpack.c.b16 %v1977, %v1967
      %v2568 = vpack.c.b16 %v1978, %v1968
      %v2569 = vpack.c.b16 %v1979, %v1969
      %v2570 = vpack.c.b16 %v1980, %v1970
      %v2571 = vpack.c.b16 %v1981, %v1971
      %v2572 = vpack.c.b16 %v1982, %v1972
      %v2573 = vpack.c.b16 %v1983, %v1973
      %v2574 = vpack.c.b16 %v1994, %v1984
      %v2575 = vpack.c.b16 %v1995, %v1985
      %v2576 = vpack.c.b16 %v1996, %v1986
      %v2577 = vpack.c.b16 %v1997, %v1987
      %v2578 = vpack.c.b16 %v1998, %v1988
      %v2579 = vpack.c.b16 %v1999, %v1989
      %v2580 = vpack.c.b16 %v2000, %v1990
      %v2581 = vpack.c.b16 %v2001, %v1991
      %v2582 = vpack.c.b16 %v2002, %v1992
      %v2583 = vpack.c.b16 %v2003, %v1993
      %v2584 = vpack.c.b16 %v2014, %v2004
      %v2585 = vpack.c.b16 %v2015, %v2005
      %v2586 = vpack.c.b16 %v2016, %v2006
      %v2587 = vpack.c.b16 %v2017, %v2007
      %v2588 = vpack.c.b16 %v2018, %v2008
      %v2589 = vpack.c.b16 %v2019, %v2009
      %v2590 = vpack.c.b16 %v2020, %v2010
      %v2591 = vpack.c.b16 %v2021, %v2011
      %v2592 = vpack.c.b16 %v2022, %v2012
      %v2593 = vpack.c.b16 %v2023, %v2013
      %v2594 = vpack.c.b16 %v2034, %v2024
      %v2595 = vpack.c.b16 %v2035, %v2025
      %v2596 = vpack.c.b16 %v2036, %v2026
      %v2597 = vpack.c.b16 %v2037, %v2027
      %v2598 = vpack.c.b16 %v2038, %v2028
      %v2599 = vpack.c.b16 %v2039, %v2029
      %v2600 = vpack.c.b16 %v2040, %v2030
      %v2601 = vpack.c.b16 %v2041, %v2031
      %v2602 = vpack.c.b16 %v2042, %v2032
      %v2603 = vpack.c.b16 %v2043, %v2033
      %v2604 = vpack.c.b16 %v2054, %v2044
      %v2605 = vpack.c.b16 %v2055, %v2045
      %v2606 = vpack.c.b16 %v2056, %v2046
      %v2607 = vpack.c.b16 %v2057, %v2047
      %v2608 = vpack.c.b16 %v2058, %v2048
      %v2609 = vpack.c.b16 %v2059, %v2049
      %v2610 = vpack.c.b16 %v2060, %v2050
      %v2611 = vpack.c.b16 %v2061, %v2051
      %v2612 = vpack.c.b16 %v2062, %v2052
      %v2613 = vpack.c.b16 %v2063, %v2053
      %v2614 = vpack.c.b16 %v2074, %v2064
      %v2615 = vpack.c.b16 %v2075, %v2065
      %v2616 = vpack.c.b16 %v2076, %v2066
      %v2617 = vpack.c.b16 %v2077, %v2067
      %v2618 = vpack.c.b16 %v2078, %v2068
      %v2619 = vpack.c.b16 %v2079, %v2069
      %v2620 = vpack.c.b16 %v2080, %v2070
      %v2621 = vpack.c.b16 %v2081, %v2071
      %v2622 = vpack.c.b16 %v2082, %v2072
      %v2623 = vpack.c.b16 %v2083, %v2073
      %v2624 = vpack.c.b16 %v2094, %v2084
      %v2625 = vpack.c.b16 %v2095, %v2085
      %v2626 = vpack.c.b16 %v2096, %v2086
      %v2627 = vpack.c.b16 %v2097, %v2087
      %v2628 = vpack.c.b16 %v2098, %v2088
      %v2629 = vpack.c.b16 %v2099, %v2089
      %v2630 = vpack.c.b16 %v2100, %v2090
      %v2631 = vpack.c.b16 %v2101, %v2091
      %v2632 = vpack.c.b16 %v2102, %v2092
      %v2633 = vpack.c.b16 %v2103, %v2093
      %v2634 = vpack.c.b16 %v2114, %v2104
      %v2635 = vpack.c.b16 %v2115, %v2105
      %v2636 = vpack.c.b16 %v2116, %v2106
      %v2637 = vpack.c.b16 %v2117, %v2107
      %v2638 = vpack.c.b16 %v2118, %v2108
      %v2639 = vpack.c.b16 %v2119, %v2109
      %v2640 = vpack.c.b16 %v2120, %v2110
      %v2641 = vpack.c.b16 %v2121, %v2111
      %v2642 = vpack.c.b16 %v2122, %v2112
      %v2643 = vpack.c.b16 %v2123, %v2113
      %v2644 = vpack.c.b16 %v2134, %v2124
      %v2645 = vpack.c.b16 %v2135, %v2125
      %v2646 = vpack.c.b16 %v2136, %v2126
      %v2647 = vpack.c.b16 %v2137, %v2127
      %v2648 = vpack.c.b16 %v2138, %v2128
      %v2649 = vpack.c.b16 %v2139, %v2129
      %v2650 = vpack.c.b16 %v2140, %v2130
      %v2651 = vpack.c.b16 %v2141, %v2131
      %v2652 = vpack.c.b16 %v2142, %v2132
      %v2653 = vpack.c.b16 %v2143, %v2133
      %v2654 = vpack.c.b16 %v2154, %v2144
      %v2655 = vpack.c.b16 %v2155, %v2145
      %v2656 = vpack.c.b16 %v2156, %v2146
      %v2657 = vpack.c.b16 %v2157, %v2147
      %v2658 = vpack.c.b16 %v2158, %v2148
      %v2659 = vpack.c.b16 %v2159, %v2149
      %v2660 = vpack.c.b16 %v2160, %v2150
      %v2661 = vpack.c.b16 %v2161, %v2151
      %v2662 = vpack.c.b16 %v2162, %v2152
      %v2663 = vpack.c.b16 %v2163, %v2153
      %v2664 = vpack.c.b16 %v2174, %v2164
      %v2665 = vpack.c.b16 %v2175, %v2165
      %v2666 = vpack.c.b16 %v2176, %v2166
      %v2667 = vpack.c.b16 %v2177, %v2167
      %v2668 = vpack.c.b16 %v2178, %v2168
      %v2669 = vpack.c.b16 %v2179, %v2169
      %v2670 = vpack.c.b16 %v2180, %v2170
      %v2671 = vpack.c.b16 %v2181, %v2171
      %v2672 = vpack.c.b16 %v2182, %v2172
      %v2673 = vpack.c.b16 %v2183, %v2173
      %v2674 = vpack.c.b16 %v2194, %v2184
      %v2675 = vpack.c.b16 %v2195, %v2185
      %v2676 = vpack.c.b16 %v2196, %v2186
      %v2677 = vpack.c.b16 %v2197, %v2187
      %v2678 = vpack.c.b16 %v2198, %v2188
      %v2679 = vpack.c.b16 %v2199, %v2189
      %v2680 = vpack.c.b16 %v2200, %v2190
      %v2681 = vpack.c.b16 %v2201, %v2191
      %v2682 = vpack.c.b16 %v2202, %v2192
      %v2683 = vpack.c.b16 %v2203, %v2193
      %3164 = vmatprep.subr.bf16.mxu0 %v2205
      %3165 = vmatpush1.bf16.msra.mxu0 %v2204
      %3166 = vmatprep.subr.bf16.mxu0 %v2215
      %3167 = vmatpush1.bf16.msra.mxu0 %v2214
      %3168 = vmatprep.subr.bf16.mxu0 %v2225
      %3169 = vmatpush1.bf16.msra.mxu0 %v2224
      %3170 = vmatprep.subr.bf16.mxu0 %v2235
      %3171 = vmatpush1.bf16.msra.mxu0 %v2234
      %3172 = vmatprep.subr.bf16.mxu0 %v2245
      %3173 = vmatpush1.bf16.msra.mxu0 %v2244
      %3174 = vmatprep.subr.bf16.mxu0 %v2255
      %3175 = vmatpush1.bf16.msra.mxu0 %v2254
      %3176 = vmatprep.subr.bf16.mxu0 %v2265
      %3177 = vmatpush1.bf16.msra.mxu0 %v2264
      %3178 = vmatprep.subr.bf16.mxu0 %v2275
      %3179 = vmatpush1.bf16.msra.mxu0 %v2274
      %3180 = vmatprep.subr.bf16.mxu0 %v2285
      %3181 = vmatpush1.bf16.msra.mxu0 %v2284
      %3182 = vmatprep.subr.bf16.mxu0 %v2295
      %3183 = vmatpush1.bf16.msra.mxu0 %v2294
      %3184 = vmatprep.subr.bf16.mxu0 %v2305
      %3185 = vmatpush1.bf16.msra.mxu0 %v2304
      %3186 = vmatprep.subr.bf16.mxu0 %v2315
      %3187 = vmatpush1.bf16.msra.mxu0 %v2314
      %3188 = vmatprep.subr.bf16.mxu0 %v2325
      %3189 = vmatpush1.bf16.msra.mxu0 %v2324
      %3190 = vmatprep.subr.bf16.mxu0 %v2335
      %3191 = vmatpush1.bf16.msra.mxu0 %v2334
      %3192 = vmatprep.subr.bf16.mxu0 %v2345
      %3193 = vmatpush1.bf16.msra.mxu0 %v2344
      %3194 = vmatprep.subr.bf16.mxu0 %v2355
      %3195 = vmatpush1.bf16.msra.mxu0 %v2354
      %3196 = vmatprep.mubr.bf16.mxu0 %v748
      %3197 = vmatmul.mubr.bf16.gmra.mrb[0].mxu0 %v740
      %v3198 = vpop.f32.mrb[0].mxu0
      %v3199 = vadd.f32 %v684, %v3198
      %v3200 = vpop.f32.mrb[0].mxu0
      %v3201 = vadd.f32 %v688, %v3200
      %v3202 = vpop.f32.mrb[0].mxu0
      %v3203 = vpop.f32.mrb[0].mxu0
      %3204 = vdwg.mxu0
      %3205 = vmatprep.subr.bf16.mxu0 %v2365
      %3206 = vmatpush1.bf16.msra.mxu0 %v2364
      %3207 = vmatprep.subr.bf16.mxu0 %v2375
      %3208 = vmatpush1.bf16.msra.mxu0 %v2374
      %3209 = vmatprep.subr.bf16.mxu0 %v2385
      %3210 = vmatpush1.bf16.msra.mxu0 %v2384
      %3211 = vmatprep.subr.bf16.mxu0 %v2395
      %3212 = vmatpush1.bf16.msra.mxu0 %v2394
      %3213 = vmatprep.subr.bf16.mxu0 %v2405
      %3214 = vmatpush1.bf16.msra.mxu0 %v2404
      %3215 = vmatprep.subr.bf16.mxu0 %v2415
      %3216 = vmatpush1.bf16.msra.mxu0 %v2414
      %3217 = vmatprep.subr.bf16.mxu0 %v2425
      %3218 = vmatpush1.bf16.msra.mxu0 %v2424
      %3219 = vmatprep.subr.bf16.mxu0 %v2435
      %3220 = vmatpush1.bf16.msra.mxu0 %v2434
      %3221 = vmatprep.subr.bf16.mxu0 %v2445
      %3222 = vmatpush1.bf16.msra.mxu0 %v2444
      %3223 = vmatprep.subr.bf16.mxu0 %v2455
      %3224 = vmatpush1.bf16.msra.mxu0 %v2454
      %3225 = vmatprep.subr.bf16.mxu0 %v2465
      %3226 = vmatpush1.bf16.msra.mxu0 %v2464
      %3227 = vmatprep.subr.bf16.mxu0 %v2475
      %3228 = vmatpush1.bf16.msra.mxu0 %v2474
      %3229 = vmatprep.subr.bf16.mxu0 %v2485
      %3230 = vmatpush1.bf16.msra.mxu0 %v2484
      %3231 = vmatprep.subr.bf16.mxu0 %v2495
      %3232 = vmatpush1.bf16.msra.mxu0 %v2494
      %3233 = vmatprep.subr.bf16.mxu0 %v2505
      %3234 = vmatpush1.bf16.msra.mxu0 %v2504
      %3235 = vmatprep.subr.bf16.mxu0 %v2515
      %3236 = vmatpush1.bf16.msra.mxu0 %v2514
      %3237 = vmatprep.mubr.bf16.mxu0 %v749
      %3238 = vmatmul.mubr.bf16.gmra.mrb[0].mxu0 %v747
      %v3239 = vpop.f32.mrb[0].mxu0
      %v3240 = vadd.f32 %v3199, %v3239
      %v3241 = vpop.f32.mrb[0].mxu0
      %v3242 = vadd.f32 %v3201, %v3241
      %v3243 = vpop.f32.mrb[0].mxu0
      %v3244 = vpop.f32.mrb[0].mxu0
      %3245 = vdwg.mxu0
      %3246 = vmatprep.subr.bf16.mxu0 %v2525
      %3247 = vmatpush1.bf16.msra.mxu0 %v2524
      %3248 = vmatprep.subr.bf16.mxu0 %v2535
      %3249 = vmatpush1.bf16.msra.mxu0 %v2534
      %3250 = vmatprep.subr.bf16.mxu0 %v2545
      %3251 = vmatpush1.bf16.msra.mxu0 %v2544
      %3252 = vmatprep.subr.bf16.mxu0 %v2555
      %3253 = vmatpush1.bf16.msra.mxu0 %v2554
      %3254 = vmatprep.subr.bf16.mxu0 %v2565
      %3255 = vmatpush1.bf16.msra.mxu0 %v2564
      %3256 = vmatprep.subr.bf16.mxu0 %v2575
      %3257 = vmatpush1.bf16.msra.mxu0 %v2574
      %3258 = vmatprep.subr.bf16.mxu0 %v2585
      %3259 = vmatpush1.bf16.msra.mxu0 %v2584
      %3260 = vmatprep.subr.bf16.mxu0 %v2595
      %3261 = vmatpush1.bf16.msra.mxu0 %v2594
      %3262 = vmatprep.subr.bf16.mxu0 %v2605
      %3263 = vmatpush1.bf16.msra.mxu0 %v2604
      %3264 = vmatprep.subr.bf16.mxu0 %v2615
      %3265 = vmatpush1.bf16.msra.mxu0 %v2614
      %3266 = vmatprep.subr.bf16.mxu0 %v2625
      %3267 = vmatpush1.bf16.msra.mxu0 %v2624
      %3268 = vmatprep.subr.bf16.mxu0 %v2635
      %3269 = vmatpush1.bf16.msra.mxu0 %v2634
      %3270 = vmatprep.subr.bf16.mxu0 %v2645
      %3271 = vmatpush1.bf16.msra.mxu0 %v2644
      %3272 = vmatprep.subr.bf16.mxu0 %v2655
      %3273 = vmatpush1.bf16.msra.mxu0 %v2654
      %3274 = vmatprep.subr.bf16.mxu0 %v2665
      %3275 = vmatpush1.bf16.msra.mxu0 %v2664
      %3276 = vmatprep.subr.bf16.mxu0 %v2675
      %3277 = vmatpush1.bf16.msra.mxu0 %v2674
      %3278 = vmatprep.mubr.bf16.mxu0 %v757
      %3279 = vmatmul.mubr.bf16.gmra.mrb[0].mxu0 %v756
      %v3280 = vpop.f32.mrb[0].mxu0
      %v3281 = vadd.f32 %v3240, %v3280
      %v3282 = vpop.f32.mrb[0].mxu0
      %v3283 = vadd.f32 %v3242, %v3282
      %v3284 = vpop.f32.mrb[0].mxu0
      %v3285 = vpop.f32.mrb[0].mxu0
      %3286 = vdwg.mxu0
      %3287 = vmatprep.subr.bf16.mxu0 %v2207
      %3288 = vmatpush1.bf16.msra.mxu0 %v2206
      %3289 = vmatprep.subr.bf16.mxu0 %v2217
      %3290 = vmatpush1.bf16.msra.mxu0 %v2216
      %3291 = vmatprep.subr.bf16.mxu0 %v2227
      %3292 = vmatpush1.bf16.msra.mxu0 %v2226
      %3293 = vmatprep.subr.bf16.mxu0 %v2237
      %3294 = vmatpush1.bf16.msra.mxu0 %v2236
      %3295 = vmatprep.subr.bf16.mxu0 %v2247
      %3296 = vmatpush1.bf16.msra.mxu0 %v2246
      %3297 = vmatprep.subr.bf16.mxu0 %v2257
      %3298 = vmatpush1.bf16.msra.mxu0 %v2256
      %3299 = vmatprep.subr.bf16.mxu0 %v2267
      %3300 = vmatpush1.bf16.msra.mxu0 %v2266
      %3301 = vmatprep.subr.bf16.mxu0 %v2277
      %3302 = vmatpush1.bf16.msra.mxu0 %v2276
      %3303 = vmatprep.subr.bf16.mxu0 %v2287
      %3304 = vmatpush1.bf16.msra.mxu0 %v2286
      %3305 = vmatprep.subr.bf16.mxu0 %v2297
      %3306 = vmatpush1.bf16.msra.mxu0 %v2296
      %3307 = vmatprep.subr.bf16.mxu0 %v2307
      %3308 = vmatpush1.bf16.msra.mxu0 %v2306
      %3309 = vmatprep.subr.bf16.mxu0 %v2317
      %3310 = vmatpush1.bf16.msra.mxu0 %v2316
      %3311 = vmatprep.subr.bf16.mxu0 %v2327
      %3312 = vmatpush1.bf16.msra.mxu0 %v2326
      %3313 = vmatprep.subr.bf16.mxu0 %v2337
      %3314 = vmatpush1.bf16.msra.mxu0 %v2336
      %3315 = vmatprep.subr.bf16.mxu0 %v2347
      %3316 = vmatpush1.bf16.msra.mxu0 %v2346
      %3317 = vmatprep.subr.bf16.mxu0 %v2357
      %3318 = vmatpush1.bf16.msra.mxu0 %v2356
      %3319 = vmatprep.mubr.bf16.mxu0 %v748
      %3320 = vmatmul.mubr.bf16.gmra.mrb[0].mxu0 %v740
      %v3321 = vpop.f32.mrb[0].mxu0
      %v3322 = vadd.f32 %v692, %v3321
      %v3323 = vpop.f32.mrb[0].mxu0
      %v3324 = vadd.f32 %v696, %v3323
      %v3325 = vpop.f32.mrb[0].mxu0
      %v3326 = vpop.f32.mrb[0].mxu0
      %3327 = vdwg.mxu0
      %3328 = vmatprep.subr.bf16.mxu0 %v2367
      %3329 = vmatpush1.bf16.msra.mxu0 %v2366
      %3330 = vmatprep.subr.bf16.mxu0 %v2377
      %3331 = vmatpush1.bf16.msra.mxu0 %v2376
      %3332 = vmatprep.subr.bf16.mxu0 %v2387
      %3333 = vmatpush1.bf16.msra.mxu0 %v2386
      %3334 = vmatprep.subr.bf16.mxu0 %v2397
      %3335 = vmatpush1.bf16.msra.mxu0 %v2396
      %3336 = vmatprep.subr.bf16.mxu0 %v2407
      %3337 = vmatpush1.bf16.msra.mxu0 %v2406
      %3338 = vmatprep.subr.bf16.mxu0 %v2417
      %3339 = vmatpush1.bf16.msra.mxu0 %v2416
      %3340 = vmatprep.subr.bf16.mxu0 %v2427
      %3341 = vmatpush1.bf16.msra.mxu0 %v2426
      %3342 = vmatprep.subr.bf16.mxu0 %v2437
      %3343 = vmatpush1.bf16.msra.mxu0 %v2436
      %3344 = vmatprep.subr.bf16.mxu0 %v2447
      %3345 = vmatpush1.bf16.msra.mxu0 %v2446
      %3346 = vmatprep.subr.bf16.mxu0 %v2457
      %3347 = vmatpush1.bf16.msra.mxu0 %v2456
      %3348 = vmatprep.subr.bf16.mxu0 %v2467
      %3349 = vmatpush1.bf16.msra.mxu0 %v2466
      %3350 = vmatprep.subr.bf16.mxu0 %v2477
      %3351 = vmatpush1.bf16.msra.mxu0 %v2476
      %3352 = vmatprep.subr.bf16.mxu0 %v2487
      %3353 = vmatpush1.bf16.msra.mxu0 %v2486
      %3354 = vmatprep.subr.bf16.mxu0 %v2497
      %3355 = vmatpush1.bf16.msra.mxu0 %v2496
      %3356 = vmatprep.subr.bf16.mxu0 %v2507
      %3357 = vmatpush1.bf16.msra.mxu0 %v2506
      %3358 = vmatprep.subr.bf16.mxu0 %v2517
      %3359 = vmatpush1.bf16.msra.mxu0 %v2516
      %3360 = vmatprep.mubr.bf16.mxu0 %v749
      %3361 = vmatmul.mubr.bf16.gmra.mrb[0].mxu0 %v747
      %v3362 = vpop.f32.mrb[0].mxu0
      %v3363 = vadd.f32 %v3322, %v3362
      %v3364 = vpop.f32.mrb[0].mxu0
      %v3365 = vadd.f32 %v3324, %v3364
      %v3366 = vpop.f32.mrb[0].mxu0
      %v3367 = vpop.f32.mrb[0].mxu0
      %3368 = vdwg.mxu0
      %3369 = vmatprep.subr.bf16.mxu0 %v2527
      %3370 = vmatpush1.bf16.msra.mxu0 %v2526
      %3371 = vmatprep.subr.bf16.mxu0 %v2537
      %3372 = vmatpush1.bf16.msra.mxu0 %v2536
      %3373 = vmatprep.subr.bf16.mxu0 %v2547
      %3374 = vmatpush1.bf16.msra.mxu0 %v2546
      %3375 = vmatprep.subr.bf16.mxu0 %v2557
      %3376 = vmatpush1.bf16.msra.mxu0 %v2556
      %3377 = vmatprep.subr.bf16.mxu0 %v2567
      %3378 = vmatpush1.bf16.msra.mxu0 %v2566
      %3379 = vmatprep.subr.bf16.mxu0 %v2577
      %3380 = vmatpush1.bf16.msra.mxu0 %v2576
      %3381 = vmatprep.subr.bf16.mxu0 %v2587
      %3382 = vmatpush1.bf16.msra.mxu0 %v2586
      %3383 = vmatprep.subr.bf16.mxu0 %v2597
      %3384 = vmatpush1.bf16.msra.mxu0 %v2596
      %3385 = vmatprep.subr.bf16.mxu0 %v2607
      %3386 = vmatpush1.bf16.msra.mxu0 %v2606
      %3387 = vmatprep.subr.bf16.mxu0 %v2617
      %3388 = vmatpush1.bf16.msra.mxu0 %v2616
      %3389 = vmatprep.subr.bf16.mxu0 %v2627
      %3390 = vmatpush1.bf16.msra.mxu0 %v2626
      %3391 = vmatprep.subr.bf16.mxu0 %v2637
      %3392 = vmatpush1.bf16.msra.mxu0 %v2636
      %3393 = vmatprep.subr.bf16.mxu0 %v2647
      %3394 = vmatpush1.bf16.msra.mxu0 %v2646
      %3395 = vmatprep.subr.bf16.mxu0 %v2657
      %3396 = vmatpush1.bf16.msra.mxu0 %v2656
      %3397 = vmatprep.subr.bf16.mxu0 %v2667
      %3398 = vmatpush1.bf16.msra.mxu0 %v2666
      %3399 = vmatprep.subr.bf16.mxu0 %v2677
      %3400 = vmatpush1.bf16.msra.mxu0 %v2676
      %3401 = vmatprep.mubr.bf16.mxu0 %v757
      %3402 = vmatmul.mubr.bf16.gmra.mrb[0].mxu0 %v756
      %v3403 = vpop.f32.mrb[0].mxu0
      %v3404 = vadd.f32 %v3363, %v3403
      %v3405 = vpop.f32.mrb[0].mxu0
      %v3406 = vadd.f32 %v3365, %v3405
      %v3407 = vpop.f32.mrb[0].mxu0
      %v3408 = vpop.f32.mrb[0].mxu0
      %3409 = vdwg.mxu0
      %3410 = vmatprep.subr.bf16.mxu0 %v2209
      %3411 = vmatpush1.bf16.msra.mxu0 %v2208
      %3412 = vmatprep.subr.bf16.mxu0 %v2219
      %3413 = vmatpush1.bf16.msra.mxu0 %v2218
      %3414 = vmatprep.subr.bf16.mxu0 %v2229
      %3415 = vmatpush1.bf16.msra.mxu0 %v2228
      %3416 = vmatprep.subr.bf16.mxu0 %v2239
      %3417 = vmatpush1.bf16.msra.mxu0 %v2238
      %3418 = vmatprep.subr.bf16.mxu0 %v2249
      %3419 = vmatpush1.bf16.msra.mxu0 %v2248
      %3420 = vmatprep.subr.bf16.mxu0 %v2259
      %3421 = vmatpush1.bf16.msra.mxu0 %v2258
      %3422 = vmatprep.subr.bf16.mxu0 %v2269
      %3423 = vmatpush1.bf16.msra.mxu0 %v2268
      %3424 = vmatprep.subr.bf16.mxu0 %v2279
      %3425 = vmatpush1.bf16.msra.mxu0 %v2278
      %3426 = vmatprep.subr.bf16.mxu0 %v2289
      %3427 = vmatpush1.bf16.msra.mxu0 %v2288
      %3428 = vmatprep.subr.bf16.mxu0 %v2299
      %3429 = vmatpush1.bf16.msra.mxu0 %v2298
      %3430 = vmatprep.subr.bf16.mxu0 %v2309
      %3431 = vmatpush1.bf16.msra.mxu0 %v2308
      %3432 = vmatprep.subr.bf16.mxu0 %v2319
      %3433 = vmatpush1.bf16.msra.mxu0 %v2318
      %3434 = vmatprep.subr.bf16.mxu0 %v2329
      %3435 = vmatpush1.bf16.msra.mxu0 %v2328
      %3436 = vmatprep.subr.bf16.mxu0 %v2339
      %3437 = vmatpush1.bf16.msra.mxu0 %v2338
      %3438 = vmatprep.subr.bf16.mxu0 %v2349
      %3439 = vmatpush1.bf16.msra.mxu0 %v2348
      %3440 = vmatprep.subr.bf16.mxu0 %v2359
      %3441 = vmatpush1.bf16.msra.mxu0 %v2358
      %3442 = vmatprep.mubr.bf16.mxu0 %v748
      %3443 = vmatmul.mubr.bf16.gmra.mrb[0].mxu0 %v740
      %v3444 = vpop.f32.mrb[0].mxu0
      %v3445 = vadd.f32 %v700, %v3444
      %v3446 = vpop.f32.mrb[0].mxu0
      %v3447 = vadd.f32 %v704, %v3446
      %v3448 = vpop.f32.mrb[0].mxu0
      %v3449 = vpop.f32.mrb[0].mxu0
      %3450 = vdwg.mxu0
      %3451 = vmatprep.subr.bf16.mxu0 %v2369
      %3452 = vmatpush1.bf16.msra.mxu0 %v2368
      %3453 = vmatprep.subr.bf16.mxu0 %v2379
      %3454 = vmatpush1.bf16.msra.mxu0 %v2378
      %3455 = vmatprep.subr.bf16.mxu0 %v2389
      %3456 = vmatpush1.bf16.msra.mxu0 %v2388
      %3457 = vmatprep.subr.bf16.mxu0 %v2399
      %3458 = vmatpush1.bf16.msra.mxu0 %v2398
      %3459 = vmatprep.subr.bf16.mxu0 %v2409
      %3460 = vmatpush1.bf16.msra.mxu0 %v2408
      %3461 = vmatprep.subr.bf16.mxu0 %v2419
      %3462 = vmatpush1.bf16.msra.mxu0 %v2418
      %3463 = vmatprep.subr.bf16.mxu0 %v2429
      %3464 = vmatpush1.bf16.msra.mxu0 %v2428
      %3465 = vmatprep.subr.bf16.mxu0 %v2439
      %3466 = vmatpush1.bf16.msra.mxu0 %v2438
      %3467 = vmatprep.subr.bf16.mxu0 %v2449
      %3468 = vmatpush1.bf16.msra.mxu0 %v2448
      %3469 = vmatprep.subr.bf16.mxu0 %v2459
      %3470 = vmatpush1.bf16.msra.mxu0 %v2458
      %3471 = vmatprep.subr.bf16.mxu0 %v2469
      %3472 = vmatpush1.bf16.msra.mxu0 %v2468
      %3473 = vmatprep.subr.bf16.mxu0 %v2479
      %3474 = vmatpush1.bf16.msra.mxu0 %v2478
      %3475 = vmatprep.subr.bf16.mxu0 %v2489
      %3476 = vmatpush1.bf16.msra.mxu0 %v2488
      %3477 = vmatprep.subr.bf16.mxu0 %v2499
      %3478 = vmatpush1.bf16.msra.mxu0 %v2498
      %3479 = vmatprep.subr.bf16.mxu0 %v2509
      %3480 = vmatpush1.bf16.msra.mxu0 %v2508
      %3481 = vmatprep.subr.bf16.mxu0 %v2519
      %3482 = vmatpush1.bf16.msra.mxu0 %v2518
      %3483 = vmatprep.mubr.bf16.mxu0 %v749
      %3484 = vmatmul.mubr.bf16.gmra.mrb[0].mxu0 %v747
      %v3485 = vpop.f32.mrb[0].mxu0
      %v3486 = vadd.f32 %v3445, %v3485
      %v3487 = vpop.f32.mrb[0].mxu0
      %v3488 = vadd.f32 %v3447, %v3487
      %v3489 = vpop.f32.mrb[0].mxu0
      %v3490 = vpop.f32.mrb[0].mxu0
      %3491 = vdwg.mxu0
      %3492 = vmatprep.subr.bf16.mxu0 %v2529
      %3493 = vmatpush1.bf16.msra.mxu0 %v2528
      %3494 = vmatprep.subr.bf16.mxu0 %v2539
      %3495 = vmatpush1.bf16.msra.mxu0 %v2538
      %3496 = vmatprep.subr.bf16.mxu0 %v2549
      %3497 = vmatpush1.bf16.msra.mxu0 %v2548
      %3498 = vmatprep.subr.bf16.mxu0 %v2559
      %3499 = vmatpush1.bf16.msra.mxu0 %v2558
      %3500 = vmatprep.subr.bf16.mxu0 %v2569
      %3501 = vmatpush1.bf16.msra.mxu0 %v2568
      %3502 = vmatprep.subr.bf16.mxu0 %v2579
      %3503 = vmatpush1.bf16.msra.mxu0 %v2578
      %3504 = vmatprep.subr.bf16.mxu0 %v2589
      %3505 = vmatpush1.bf16.msra.mxu0 %v2588
      %3506 = vmatprep.subr.bf16.mxu0 %v2599
      %3507 = vmatpush1.bf16.msra.mxu0 %v2598
      %3508 = vmatprep.subr.bf16.mxu0 %v2609
      %3509 = vmatpush1.bf16.msra.mxu0 %v2608
      %3510 = vmatprep.subr.bf16.mxu0 %v2619
      %3511 = vmatpush1.bf16.msra.mxu0 %v2618
      %3512 = vmatprep.subr.bf16.mxu0 %v2629
      %3513 = vmatpush1.bf16.msra.mxu0 %v2628
      %3514 = vmatprep.subr.bf16.mxu0 %v2639
      %3515 = vmatpush1.bf16.msra.mxu0 %v2638
      %3516 = vmatprep.subr.bf16.mxu0 %v2649
      %3517 = vmatpush1.bf16.msra.mxu0 %v2648
      %3518 = vmatprep.subr.bf16.mxu0 %v2659
      %3519 = vmatpush1.bf16.msra.mxu0 %v2658
      %3520 = vmatprep.subr.bf16.mxu0 %v2669
      %3521 = vmatpush1.bf16.msra.mxu0 %v2668
      %3522 = vmatprep.subr.bf16.mxu0 %v2679
      %3523 = vmatpush1.bf16.msra.mxu0 %v2678
      %3524 = vmatprep.mubr.bf16.mxu0 %v757
      %3525 = vmatmul.mubr.bf16.gmra.mrb[0].mxu0 %v756
      %v3526 = vpop.f32.mrb[0].mxu0
      %v3527 = vadd.f32 %v3486, %v3526
      %v3528 = vpop.f32.mrb[0].mxu0
      %v3529 = vadd.f32 %v3488, %v3528
      %v3530 = vpop.f32.mrb[0].mxu0
      %v3531 = vpop.f32.mrb[0].mxu0
      %3532 = vdwg.mxu0
      %3533 = vmatprep.subr.bf16.mxu0 %v2211
      %3534 = vmatpush1.bf16.msra.mxu0 %v2210
      %3535 = vmatprep.subr.bf16.mxu0 %v2221
      %3536 = vmatpush1.bf16.msra.mxu0 %v2220
      %3537 = vmatprep.subr.bf16.mxu0 %v2231
      %3538 = vmatpush1.bf16.msra.mxu0 %v2230
      %3539 = vmatprep.subr.bf16.mxu0 %v2241
      %3540 = vmatpush1.bf16.msra.mxu0 %v2240
      %3541 = vmatprep.subr.bf16.mxu0 %v2251
      %3542 = vmatpush1.bf16.msra.mxu0 %v2250
      %3543 = vmatprep.subr.bf16.mxu0 %v2261
      %3544 = vmatpush1.bf16.msra.mxu0 %v2260
      %3545 = vmatprep.subr.bf16.mxu0 %v2271
      %3546 = vmatpush1.bf16.msra.mxu0 %v2270
      %3547 = vmatprep.subr.bf16.mxu0 %v2281
      %3548 = vmatpush1.bf16.msra.mxu0 %v2280
      %3549 = vmatprep.subr.bf16.mxu0 %v2291
      %3550 = vmatpush1.bf16.msra.mxu0 %v2290
      %3551 = vmatprep.subr.bf16.mxu0 %v2301
      %3552 = vmatpush1.bf16.msra.mxu0 %v2300
      %3553 = vmatprep.subr.bf16.mxu0 %v2311
      %3554 = vmatpush1.bf16.msra.mxu0 %v2310
      %3555 = vmatprep.subr.bf16.mxu0 %v2321
      %3556 = vmatpush1.bf16.msra.mxu0 %v2320
      %3557 = vmatprep.subr.bf16.mxu0 %v2331
      %3558 = vmatpush1.bf16.msra.mxu0 %v2330
      %3559 = vmatprep.subr.bf16.mxu0 %v2341
      %3560 = vmatpush1.bf16.msra.mxu0 %v2340
      %3561 = vmatprep.subr.bf16.mxu0 %v2351
      %3562 = vmatpush1.bf16.msra.mxu0 %v2350
      %3563 = vmatprep.subr.bf16.mxu0 %v2361
      %3564 = vmatpush1.bf16.msra.mxu0 %v2360
      %3565 = vmatprep.mubr.bf16.mxu0 %v748
      %3566 = vmatmul.mubr.bf16.gmra.mrb[0].mxu0 %v740
      %v3567 = vpop.f32.mrb[0].mxu0
      %v3568 = vadd.f32 %v708, %v3567
      %v3569 = vpop.f32.mrb[0].mxu0
      %v3570 = vadd.f32 %v712, %v3569
      %v3571 = vpop.f32.mrb[0].mxu0
      %v3572 = vpop.f32.mrb[0].mxu0
      %3573 = vdwg.mxu0
      %3574 = vmatprep.subr.bf16.mxu0 %v2371
      %3575 = vmatpush1.bf16.msra.mxu0 %v2370
      %3576 = vmatprep.subr.bf16.mxu0 %v2381
      %3577 = vmatpush1.bf16.msra.mxu0 %v2380
      %3578 = vmatprep.subr.bf16.mxu0 %v2391
      %3579 = vmatpush1.bf16.msra.mxu0 %v2390
      %3580 = vmatprep.subr.bf16.mxu0 %v2401
      %3581 = vmatpush1.bf16.msra.mxu0 %v2400
      %3582 = vmatprep.subr.bf16.mxu0 %v2411
      %3583 = vmatpush1.bf16.msra.mxu0 %v2410
      %3584 = vmatprep.subr.bf16.mxu0 %v2421
      %3585 = vmatpush1.bf16.msra.mxu0 %v2420
      %3586 = vmatprep.subr.bf16.mxu0 %v2431
      %3587 = vmatpush1.bf16.msra.mxu0 %v2430
      %3588 = vmatprep.subr.bf16.mxu0 %v2441
      %3589 = vmatpush1.bf16.msra.mxu0 %v2440
      %3590 = vmatprep.subr.bf16.mxu0 %v2451
      %3591 = vmatpush1.bf16.msra.mxu0 %v2450
      %3592 = vmatprep.subr.bf16.mxu0 %v2461
      %3593 = vmatpush1.bf16.msra.mxu0 %v2460
      %3594 = vmatprep.subr.bf16.mxu0 %v2471
      %3595 = vmatpush1.bf16.msra.mxu0 %v2470
      %3596 = vmatprep.subr.bf16.mxu0 %v2481
      %3597 = vmatpush1.bf16.msra.mxu0 %v2480
      %3598 = vmatprep.subr.bf16.mxu0 %v2491
      %3599 = vmatpush1.bf16.msra.mxu0 %v2490
      %3600 = vmatprep.subr.bf16.mxu0 %v2501
      %3601 = vmatpush1.bf16.msra.mxu0 %v2500
      %3602 = vmatprep.subr.bf16.mxu0 %v2511
      %3603 = vmatpush1.bf16.msra.mxu0 %v2510
      %3604 = vmatprep.subr.bf16.mxu0 %v2521
      %3605 = vmatpush1.bf16.msra.mxu0 %v2520
      %3606 = vmatprep.mubr.bf16.mxu0 %v749
      %3607 = vmatmul.mubr.bf16.gmra.mrb[0].mxu0 %v747
      %v3608 = vpop.f32.mrb[0].mxu0
      %v3609 = vadd.f32 %v3568, %v3608
      %v3610 = vpop.f32.mrb[0].mxu0
      %v3611 = vadd.f32 %v3570, %v3610
      %v3612 = vpop.f32.mrb[0].mxu0
      %v3613 = vpop.f32.mrb[0].mxu0
      %3614 = vdwg.mxu0
      %3615 = vmatprep.subr.bf16.mxu0 %v2531
      %3616 = vmatpush1.bf16.msra.mxu0 %v2530
      %3617 = vmatprep.subr.bf16.mxu0 %v2541
      %3618 = vmatpush1.bf16.msra.mxu0 %v2540
      %3619 = vmatprep.subr.bf16.mxu0 %v2551
      %3620 = vmatpush1.bf16.msra.mxu0 %v2550
      %3621 = vmatprep.subr.bf16.mxu0 %v2561
      %3622 = vmatpush1.bf16.msra.mxu0 %v2560
      %3623 = vmatprep.subr.bf16.mxu0 %v2571
      %3624 = vmatpush1.bf16.msra.mxu0 %v2570
      %3625 = vmatprep.subr.bf16.mxu0 %v2581
      %3626 = vmatpush1.bf16.msra.mxu0 %v2580
      %3627 = vmatprep.subr.bf16.mxu0 %v2591
      %3628 = vmatpush1.bf16.msra.mxu0 %v2590
      %3629 = vmatprep.subr.bf16.mxu0 %v2601
      %3630 = vmatpush1.bf16.msra.mxu0 %v2600
      %3631 = vmatprep.subr.bf16.mxu0 %v2611
      %3632 = vmatpush1.bf16.msra.mxu0 %v2610
      %3633 = vmatprep.subr.bf16.mxu0 %v2621
      %3634 = vmatpush1.bf16.msra.mxu0 %v2620
      %3635 = vmatprep.subr.bf16.mxu0 %v2631
      %3636 = vmatpush1.bf16.msra.mxu0 %v2630
      %3637 = vmatprep.subr.bf16.mxu0 %v2641
      %3638 = vmatpush1.bf16.msra.mxu0 %v2640
      %3639 = vmatprep.subr.bf16.mxu0 %v2651
      %3640 = vmatpush1.bf16.msra.mxu0 %v2650
      %3641 = vmatprep.subr.bf16.mxu0 %v2661
      %3642 = vmatpush1.bf16.msra.mxu0 %v2660
      %3643 = vmatprep.subr.bf16.mxu0 %v2671
      %3644 = vmatpush1.bf16.msra.mxu0 %v2670
      %3645 = vmatprep.subr.bf16.mxu0 %v2681
      %3646 = vmatpush1.bf16.msra.mxu0 %v2680
      %3647 = vmatprep.mubr.bf16.mxu0 %v757
      %3648 = vmatmul.mubr.bf16.gmra.mrb[0].mxu0 %v756
      %v3649 = vpop.f32.mrb[0].mxu0
      %v3650 = vadd.f32 %v3609, %v3649
      %v3651 = vpop.f32.mrb[0].mxu0
      %v3652 = vadd.f32 %v3611, %v3651
      %v3653 = vpop.f32.mrb[0].mxu0
      %v3654 = vpop.f32.mrb[0].mxu0
      %3655 = vdwg.mxu0
      %3656 = vmatprep.subr.bf16.mxu0 %v2213
      %3657 = vmatpush1.bf16.msra.mxu0 %v2212
      %3658 = vmatprep.subr.bf16.mxu0 %v2223
      %3659 = vmatpush1.bf16.msra.mxu0 %v2222
      %3660 = vmatprep.subr.bf16.mxu0 %v2233
      %3661 = vmatpush1.bf16.msra.mxu0 %v2232
      %3662 = vmatprep.subr.bf16.mxu0 %v2243
      %3663 = vmatpush1.bf16.msra.mxu0 %v2242
      %3664 = vmatprep.subr.bf16.mxu0 %v2253
      %3665 = vmatpush1.bf16.msra.mxu0 %v2252
      %3666 = vmatprep.subr.bf16.mxu0 %v2263
      %3667 = vmatpush1.bf16.msra.mxu0 %v2262
      %3668 = vmatprep.subr.bf16.mxu0 %v2273
      %3669 = vmatpush1.bf16.msra.mxu0 %v2272
      %3670 = vmatprep.subr.bf16.mxu0 %v2283
      %3671 = vmatpush1.bf16.msra.mxu0 %v2282
      %3672 = vmatprep.subr.bf16.mxu0 %v2293
      %3673 = vmatpush1.bf16.msra.mxu0 %v2292
      %3674 = vmatprep.subr.bf16.mxu0 %v2303
      %3675 = vmatpush1.bf16.msra.mxu0 %v2302
      %3676 = vmatprep.subr.bf16.mxu0 %v2313
      %3677 = vmatpush1.bf16.msra.mxu0 %v2312
      %3678 = vmatprep.subr.bf16.mxu0 %v2323
      %3679 = vmatpush1.bf16.msra.mxu0 %v2322
      %3680 = vmatprep.subr.bf16.mxu0 %v2333
      %3681 = vmatpush1.bf16.msra.mxu0 %v2332
      %3682 = vmatprep.subr.bf16.mxu0 %v2343
      %3683 = vmatpush1.bf16.msra.mxu0 %v2342
      %3684 = vmatprep.subr.bf16.mxu0 %v2353
      %3685 = vmatpush1.bf16.msra.mxu0 %v2352
      %3686 = vmatprep.subr.bf16.mxu0 %v2363
      %3687 = vmatpush1.bf16.msra.mxu0 %v2362
      %3688 = vmatprep.mubr.bf16.mxu0 %v748
      %3689 = vmatmul.mubr.bf16.gmra.mrb[0].mxu0 %v740
      %v3690 = vpop.f32.mrb[0].mxu0
      %v3691 = vadd.f32 %v716, %v3690
      %v3692 = vpop.f32.mrb[0].mxu0
      %v3693 = vadd.f32 %v720, %v3692
      %v3694 = vpop.f32.mrb[0].mxu0
      %v3695 = vpop.f32.mrb[0].mxu0
      %3696 = vdwg.mxu0
      %3697 = vmatprep.subr.bf16.mxu0 %v2373
      %3698 = vmatpush1.bf16.msra.mxu0 %v2372
      %3699 = vmatprep.subr.bf16.mxu0 %v2383
      %3700 = vmatpush1.bf16.msra.mxu0 %v2382
      %3701 = vmatprep.subr.bf16.mxu0 %v2393
      %3702 = vmatpush1.bf16.msra.mxu0 %v2392
      %3703 = vmatprep.subr.bf16.mxu0 %v2403
      %3704 = vmatpush1.bf16.msra.mxu0 %v2402
      %3705 = vmatprep.subr.bf16.mxu0 %v2413
      %3706 = vmatpush1.bf16.msra.mxu0 %v2412
      %3707 = vmatprep.subr.bf16.mxu0 %v2423
      %3708 = vmatpush1.bf16.msra.mxu0 %v2422
      %3709 = vmatprep.subr.bf16.mxu0 %v2433
      %3710 = vmatpush1.bf16.msra.mxu0 %v2432
      %3711 = vmatprep.subr.bf16.mxu0 %v2443
      %3712 = vmatpush1.bf16.msra.mxu0 %v2442
      %3713 = vmatprep.subr.bf16.mxu0 %v2453
      %3714 = vmatpush1.bf16.msra.mxu0 %v2452
      %3715 = vmatprep.subr.bf16.mxu0 %v2463
      %3716 = vmatpush1.bf16.msra.mxu0 %v2462
      %3717 = vmatprep.subr.bf16.mxu0 %v2473
      %3718 = vmatpush1.bf16.msra.mxu0 %v2472
      %3719 = vmatprep.subr.bf16.mxu0 %v2483
      %3720 = vmatpush1.bf16.msra.mxu0 %v2482
      %3721 = vmatprep.subr.bf16.mxu0 %v2493
      %3722 = vmatpush1.bf16.msra.mxu0 %v2492
      %3723 = vmatprep.subr.bf16.mxu0 %v2503
      %3724 = vmatpush1.bf16.msra.mxu0 %v2502
      %3725 = vmatprep.subr.bf16.mxu0 %v2513
      %3726 = vmatpush1.bf16.msra.mxu0 %v2512
      %3727 = vmatprep.subr.bf16.mxu0 %v2523
      %3728 = vmatpush1.bf16.msra.mxu0 %v2522
      %3729 = vmatprep.mubr.bf16.mxu0 %v749
      %3730 = vmatmul.mubr.bf16.gmra.mrb[0].mxu0 %v747
      %v3731 = vpop.f32.mrb[0].mxu0
      %v3732 = vadd.f32 %v3691, %v3731
      %v3733 = vpop.f32.mrb[0].mxu0
      %v3734 = vadd.f32 %v3693, %v3733
      %v3735 = vpop.f32.mrb[0].mxu0
      %v3736 = vpop.f32.mrb[0].mxu0
      %3737 = vdwg.mxu0
      %3738 = vmatprep.subr.bf16.mxu0 %v2533
      %3739 = vmatpush1.bf16.msra.mxu0 %v2532
      %3740 = vmatprep.subr.bf16.mxu0 %v2543
      %3741 = vmatpush1.bf16.msra.mxu0 %v2542
      %3742 = vmatprep.subr.bf16.mxu0 %v2553
      %3743 = vmatpush1.bf16.msra.mxu0 %v2552
      %3744 = vmatprep.subr.bf16.mxu0 %v2563
      %3745 = vmatpush1.bf16.msra.mxu0 %v2562
      %3746 = vmatprep.subr.bf16.mxu0 %v2573
      %3747 = vmatpush1.bf16.msra.mxu0 %v2572
      %3748 = vmatprep.subr.bf16.mxu0 %v2583
      %3749 = vmatpush1.bf16.msra.mxu0 %v2582
      %3750 = vmatprep.subr.bf16.mxu0 %v2593
      %3751 = vmatpush1.bf16.msra.mxu0 %v2592
      %3752 = vmatprep.subr.bf16.mxu0 %v2603
      %3753 = vmatpush1.bf16.msra.mxu0 %v2602
      %3754 = vmatprep.subr.bf16.mxu0 %v2613
      %3755 = vmatpush1.bf16.msra.mxu0 %v2612
      %3756 = vmatprep.subr.bf16.mxu0 %v2623
      %3757 = vmatpush1.bf16.msra.mxu0 %v2622
      %3758 = vmatprep.subr.bf16.mxu0 %v2633
      %3759 = vmatpush1.bf16.msra.mxu0 %v2632
      %3760 = vmatprep.subr.bf16.mxu0 %v2643
      %3761 = vmatpush1.bf16.msra.mxu0 %v2642
      %3762 = vmatprep.subr.bf16.mxu0 %v2653
      %3763 = vmatpush1.bf16.msra.mxu0 %v2652
      %3764 = vmatprep.subr.bf16.mxu0 %v2663
      %3765 = vmatpush1.bf16.msra.mxu0 %v2662
      %3766 = vmatprep.subr.bf16.mxu0 %v2673
      %3767 = vmatpush1.bf16.msra.mxu0 %v2672
      %3768 = vmatprep.subr.bf16.mxu0 %v2683
      %3769 = vmatpush1.bf16.msra.mxu0 %v2682
      %3770 = vmatprep.mubr.bf16.mxu0 %v757
      %3771 = vmatmul.mubr.bf16.gmra.mrb[0].mxu0 %v756
      %v3772 = vpop.f32.mrb[0].mxu0
      %v3773 = vadd.f32 %v3732, %v3772
      %v3774 = vpop.f32.mrb[0].mxu0
      %v3775 = vadd.f32 %v3734, %v3774
      %v3776 = vpop.f32.mrb[0].mxu0
      %v3777 = vpop.f32.mrb[0].mxu0
      %3778 = vdwg.mxu0
      %v3779 = vmax.f32 %v3281, 0.0
      %v3780 = vmax.f32 %v3283, 0.0
      %v3781 = vmax.f32 %v3404, 0.0
      %v3782 = vmax.f32 %v3406, 0.0
      %v3783 = vmax.f32 %v3527, 0.0
      %v3784 = vmax.f32 %v3529, 0.0
      %v3785 = vmax.f32 %v3650, 0.0
      %v3786 = vmax.f32 %v3652, 0.0
      %v3787 = vmax.f32 %v3773, 0.0
      %v3788 = vmax.f32 %v3775, 0.0
      %vm3789 = vcmask 1043456
      %v3790 = vsel %vm3789, %v3779, 0.0
      %v3791 = vrot.slane %v3790, 4
      %v3792 = vadd.f32 %v3790, %v3791
      %v3793 = vrot.slane %v3792, 2
      %v3794 = vadd.f32 %v3792, %v3793
      %v3795 = vrot.slane %v3794, 1
      %v3796 = vadd.f32 %v3794, %v3795
      %v3797 = vsel %vm3789, %v3780, 0.0
      %v3798 = vrot.slane %v3797, 4
      %v3799 = vadd.f32 %v3797, %v3798
      %v3800 = vrot.slane %v3799, 2
      %v3801 = vadd.f32 %v3799, %v3800
      %v3802 = vrot.slane %v3801, 1
      %v3803 = vadd.f32 %v3801, %v3802
      %v3804 = vsel %vm3789, %v3781, 0.0
      %v3805 = vrot.slane %v3804, 4
      %v3806 = vadd.f32 %v3804, %v3805
      %v3807 = vrot.slane %v3806, 2
      %v3808 = vadd.f32 %v3806, %v3807
      %v3809 = vrot.slane %v3808, 1
      %v3810 = vadd.f32 %v3808, %v3809
      %v3811 = vsel %vm3789, %v3782, 0.0
      %v3812 = vrot.slane %v3811, 4
      %v3813 = vadd.f32 %v3811, %v3812
      %v3814 = vrot.slane %v3813, 2
      %v3815 = vadd.f32 %v3813, %v3814
      %v3816 = vrot.slane %v3815, 1
      %v3817 = vadd.f32 %v3815, %v3816
      %v3818 = vsel %vm3789, %v3783, 0.0
      %v3819 = vrot.slane %v3818, 4
      %v3820 = vadd.f32 %v3818, %v3819
      %v3821 = vrot.slane %v3820, 2
      %v3822 = vadd.f32 %v3820, %v3821
      %v3823 = vrot.slane %v3822, 1
      %v3824 = vadd.f32 %v3822, %v3823
      %v3825 = vsel %vm3789, %v3784, 0.0
      %v3826 = vrot.slane %v3825, 4
      %v3827 = vadd.f32 %v3825, %v3826
      %v3828 = vrot.slane %v3827, 2
      %v3829 = vadd.f32 %v3827, %v3828
      %v3830 = vrot.slane %v3829, 1
      %v3831 = vadd.f32 %v3829, %v3830
      %v3832 = vsel %vm3789, %v3785, 0.0
      %v3833 = vrot.slane %v3832, 4
      %v3834 = vadd.f32 %v3832, %v3833
      %v3835 = vrot.slane %v3834, 2
      %v3836 = vadd.f32 %v3834, %v3835
      %v3837 = vrot.slane %v3836, 1
      %v3838 = vadd.f32 %v3836, %v3837
      %v3839 = vsel %vm3789, %v3786, 0.0
      %v3840 = vrot.slane %v3839, 4
      %v3841 = vadd.f32 %v3839, %v3840
      %v3842 = vrot.slane %v3841, 2
      %v3843 = vadd.f32 %v3841, %v3842
      %v3844 = vrot.slane %v3843, 1
      %v3845 = vadd.f32 %v3843, %v3844
      %v3846 = vsel %vm3789, %v3787, 0.0
      %v3847 = vrot.slane %v3846, 4
      %v3848 = vadd.f32 %v3846, %v3847
      %v3849 = vrot.slane %v3848, 2
      %v3850 = vadd.f32 %v3848, %v3849
      %v3851 = vrot.slane %v3850, 1
      %v3852 = vadd.f32 %v3850, %v3851
      %v3853 = vsel %vm3789, %v3788, 0.0
      %v3854 = vrot.slane %v3853, 4
      %v3855 = vadd.f32 %v3853, %v3854
      %v3856 = vrot.slane %v3855, 2
      %v3857 = vadd.f32 %v3855, %v3856
      %v3858 = vrot.slane %v3857, 1
      %v3859 = vadd.f32 %v3857, %v3858
      %p3860 = scmp.eq.s32.totalorder %s19, 0
      // Predicated region
      $region33: #{multi_branch_forward.3} parent=31 // pred_check
        %p3861 = pneg %p3860
      $region34: #{multi_branch_forward.3} parent=31 // pred_check_branch
        %3863 = sbr.rel (%p3861) target = $region36
      $region35: #{multi_branch_forward.3} parent=31 // pred_region
        %3864 = vst [vmem:[%s194] sm:$0xff] 0.0
        %v3865 = vlaneseq
        %vm3866 = vcmp.ge.s32.totalorder %v3865, 0
        %vm3867 = vcmp.lt.s32.totalorder %v3865, 256
        %vm3868 = vmand %vm3866, %vm3867
        %3869 = vst.msk [vmem:[%s194 + $0x8] sm:$0x3] %vm3868, 0.0
      $region36: #{multi_branch_forward.3} parent=31 // pred_fallthru
        _
      %v3870 = vld [vmem:[%s194] sm:$0xff]
      %v3871 = vld [vmem:[%s194 + $0x8] sm:$0x3]
      %v3882 = vcombine.low %v3796, %v3803
      %v3883 = vcombine.low %v3810, %v3817
      %v3884 = vcombine.low %v3824, %v3831
      %v3885 = vcombine.low %v3838, %v3845
      %v3887 = vunpack.c.l.s4 1966171168
      %v3888 = vunpack.c.0.s8 %v3887
      %v3889 = vlaneseq
      %v3890 = vshrl.u32 %v3889, 7
      %v3891 = vsub.s32 %v3888, %v3890
      %v3892 = vrot.slane %v3882, %v3891
      %v3894 = vunpack.c.l.s4 1966171168
      %v3895 = vunpack.c.0.s8 %v3894
      %v3896 = vlaneseq
      %v3897 = vshrl.u32 %v3896, 7
      %v3898 = vsub.s32 %v3895, %v3897
      %v3899 = vrot.slane %v3883, %v3898
      %v3901 = vunpack.c.l.s4 1966171168
      %v3902 = vunpack.c.0.s8 %v3901
      %v3903 = vlaneseq
      %v3904 = vshrl.u32 %v3903, 7
      %v3905 = vsub.s32 %v3902, %v3904
      %v3906 = vrot.slane %v3884, %v3905
      %v3908 = vunpack.c.l.s4 1966171168
      %v3909 = vunpack.c.0.s8 %v3908
      %v3910 = vlaneseq
      %v3911 = vshrl.u32 %v3910, 7
      %v3912 = vsub.s32 %v3909, %v3911
      %v3913 = vrot.slane %v3885, %v3912
      %v3914 = vcombine.low %v3892, %v3899
      %v3915 = vcombine.low %v3906, %v3913
      %v3917 = vunpack.c.l.s4 1966171168
      %v3918 = vunpack.c.0.s8 %v3917
      %v3919 = vlaneseq
      %v3920 = vshrl.u32 %v3919, 7
      %v3921 = vsub.s32 %v3918, %v3920
      %v3922 = vrot.slane %v3914, %v3921
      %v3924 = vunpack.c.l.s4 1966171168
      %v3925 = vunpack.c.0.s8 %v3924
      %v3926 = vlaneseq
      %v3927 = vshrl.u32 %v3926, 7
      %v3928 = vsub.s32 %v3925, %v3927
      %v3929 = vrot.slane %v3915, %v3928
      %v3930 = vcombine.low %v3922, %v3929
      %v3931 = vcombine.low %v3852, %v3859
      %v3933 = vunpack.c.l.s4 1966171168
      %v3934 = vunpack.c.0.s8 %v3933
      %v3935 = vlaneseq
      %v3936 = vshrl.u32 %v3935, 7
      %v3937 = vsub.s32 %v3934, %v3936
      %v3938 = vrot.slane %v3931, %v3937
      %v3940 = vunpack.c.l.s4 1966171168
      %v3941 = vunpack.c.0.s8 %v3940
      %v3942 = vlaneseq
      %v3943 = vshrl.u32 %v3942, 7
      %v3944 = vsub.s32 %v3941, %v3943
      %v3945 = vrot.slane %v3938, %v3944
      %v3948 = vadd.f32 %v3870, %v3930
      %v3949 = vadd.f32 %v3871, %v3945
      %3950 = vst [vmem:[%s194] sm:$0xff] %v3948
      %v3951 = vlaneseq
      %vm3952 = vcmp.ge.s32.totalorder %v3951, 0
      %vm3953 = vcmp.lt.s32.totalorder %v3951, 256
      %vm3954 = vmand %vm3952, %vm3953
      %3955 = vst.msk [vmem:[%s194 + $0x8] sm:$0x3] %vm3954, %v3949
      // Predicated region
      $region37: #{multi_branch_forward.3} parent=31 // pred_check
        %p3956 = pneg %p3860
      $region38: #{multi_branch_forward.3} parent=31 // pred_check_branch
        %3958 = sbr.rel (%p3956) target = $region40
      $region39: #{multi_branch_forward.3} parent=31 // pred_region
        %v3959 = vld [vmem:[%s194] sm:$0xff]
        %v3960 = vld [vmem:[%s194 + $0x8] sm:$0x3]
        %v3961 = vmul.f32 %v3959, 0.25
        %v3962 = vmul.f32 %v3960, 0.25
        %3963 = vst [vmem:[%s194] sm:$0xff] %v3961
        %3964 = vst.msk [vmem:[%s194 + $0x8] sm:$0x3] %vm3954, %v3962
      $region40: #{multi_branch_forward.3} parent=31 // pred_fallthru
        _
      %p3965 = scmp.lt.s32.totalorder %s18, 1
      %s3966 = scalar_select %p3965, %s18, 1
      %s3967 = smul.addr %s3966, 10
      %s3968 = scalar_lea.vmem %s3, %s3967
      // Predicated region
      $region41: #{multi_branch_forward.3} parent=31 // pred_check
        %p3969 = pneg %p114
      $region42: #{multi_branch_forward.3} parent=31 // pred_check_branch
        %3971 = sbr.rel (%p3969) target = $region44
      $region43: #{multi_branch_forward.3} parent=31 // pred_region
        _
      $region44: #{multi_branch_forward.3} parent=31 // pred_fallthru
        _
    $region32: #{multi_branch_forward.3} parent=5 // pred_fallthru
      _
    %p3972 = scmp.le.s32.totalorder 2, %s9
    // Predicated region
    $region45: #{multi_branch_forward.3} parent=5 // pred_check
      %p3973 = pneg %p3972
    $region46: #{multi_branch_forward.3} parent=5 // pred_check_branch
      %3975 = sbr.rel (%p3973) target = $region48
    $region47: #{multi_branch_forward.3} parent=5 // pred_region
      %s3976 = ssub.s32 %s9, 2
      // Predicated region
      $region49: #{multi_branch_forward.3} parent=47 // pred_check
        %p3977 = pneg %p120
      $region50: #{multi_branch_forward.3} parent=47 // pred_check_branch
        %3979 = sbr.rel (%p3977) target = $region52
      $region51: #{multi_branch_forward.3} parent=47 // pred_region
        %p3980 = scmp.lt.s32.totalorder %s20, 1
        %s3981 = scalar_select %p3980, %s20, 1
        %s3982 = smul.addr %s3981, 10
        %s3983 = scalar_lea.vmem %s3, %s3982
      $region52: #{multi_branch_forward.3} parent=47 // pred_fallthru
        _
    $region48: #{multi_branch_forward.3} parent=5 // pred_fallthru
      _
  $region6: #{multi_branch_forward.3} parent=0 // loop_footer
    %s13 = sadd.s32 1, %s9
  $region7: #{multi_branch_forward.3} parent=0 // loop_footer_branch
    %8 = sbr.rel target = $region3
  $region8: #{multi_branch_forward.3} parent=0 // loop_exit
    _

// kernel: multi_branch_forward.4
$region0: #{multi_branch_forward.4}
  #allocation0 [shape = 'u32[]', space=smem, size = 0x4, offset = 0x4, fixed_abs, tag = 'smem constant byte address 0x4 - core index']
  #allocation1 [shape = 'u32[144,128]{1,0:T(1,128)}', space=vmem, size = 0x12000, scoped, tag = 'internal scratch']
  %s0 = inlined_call_operand.vmem [shape: bf16[2,4,384], index: 0, kind: input, shape index: {}]
  %s1 = inlined_call_operand.vmem [shape: bf16[384,1280], index: 1, kind: input, shape index: {}]
  %s2 = inlined_call_operand.vmem [shape: f32[1,1280], index: 2, kind: input, shape index: {}]
  %s3 = inlined_call_operand.vmem [shape: f32[2,1,1280], index: 3, kind: output, shape index: {}]
  %s4 = sld [smem:[#allocation0]]
  $region53: #{multi_branch_forward.4} parent=0
    _
  %s6 = ssub.s32 1, %s4
  %s7 = scalar_select 0, %s6, %s4
  loop: start=0, step=1, limit=4
  $region2: #{multi_branch_forward.4} parent=0 // loop_pre_header
    _
  $region3: #{multi_branch_forward.4} parent=0 // loop_header
    %s9 = sphi 0, %s13
    %p10 = scmp.ge.s32.totalorder %s9, 4
    %s16 = sphi 0, %s28
    %s17 = sphi 0, %s24
    %s18 = sphi 0, %s16
    %s19 = sphi 0, %s17
    %s20 = sphi 0, %s18
    %s21 = sphi 0, %s19
    %s33 = sphi 0, %s35
    %s36 = sphi 0, %s33
    %s37 = sphi 0, %s36
    %s53 = sphi 0, %s37
    %s57 = sphi 0, %s57
    %s59 = sphi 0, %s57
    %s60 = sphi 0, %s59
    %s74 = sphi 0, %s60
    %s78 = sphi 0, %s78
    %s80 = sphi 0, %s78
    %s81 = sphi 0, %s80
    %s95 = sphi 0, %s81
    %s101 = sphi 0, %s103
    %s104 = sphi 0, %s101
    %s105 = sphi 0, %s104
    %s121 = sphi 0, %s105
  $region4: #{multi_branch_forward.4} parent=0 // loop_header_branch
    %12 = sbr.rel (%p10) target = $region8
  $region5: #{multi_branch_forward.4} parent=0 // loop_body
    %s14 = ssub.s32 %s9, 1
    %s15 = ssub.s32 %s9, 2
    %s22 = sadd.s32 1, %s17
    %p23 = scmp.ge.s32.totalorder %s22, 1
    %s24 = scalar_select %p23, 0, %s22
    %s25 = sadd.s32 1, %s16
    %s26 = scalar_select %p23, %s25, %s16
    %p27 = scmp.ge.s32.totalorder %s26, 2
    %s28 = scalar_select %p27, 0, %s26
    %s29 = ssub.s32 %s16, %s28
    %s30 = ssub.s32 %s17, %s24
    %s31 = sor.u32 %s29, %s30
    %p32 = scmp.eq.s32.totalorder %s31, 0
    %s34 = sadd.s32 %s33, 1
    %s35 = scalar_select %p32, %s33, %s34
    %p38 = pneg %p32
    %p39 = scmp.eq.s32.totalorder %s9, 1
    %p40 = por %p38, %p39
    %p41 = scmp.ne.s32.totalorder %s33, %s36
    %p42 = scmp.eq.s32.totalorder %s9, 0
    %p43 = por %p41, %p42
    %p44 = scmp.ne.s32.totalorder %s33, %s36
    %p45 = scmp.eq.s32.totalorder %s14, 1
    %p46 = por %p44, %p45
    %p47 = scmp.ne.s32.totalorder %s36, %s37
    %p48 = scmp.eq.s32.totalorder %s14, 0
    %p49 = por %p47, %p48
    %p50 = scmp.ne.s32.totalorder %s36, %s37
    %p51 = scmp.eq.s32.totalorder %s15, 1
    %p52 = por %p50, %p51
    %p54 = scmp.ne.s32.totalorder %s37, %s53
    %p55 = scmp.eq.s32.totalorder %s15, 0
    %p56 = por %p54, %p55
    %s58 = sadd.s32 %s57, 1
    %p61 = scmp.eq.s32.totalorder %s9, 1
    %p62 = scmp.ne.s32.totalorder %s57, %s59
    %p63 = scmp.eq.s32.totalorder %s9, 0
    %p64 = por %p62, %p63
    %p65 = scmp.ne.s32.totalorder %s57, %s59
    %p66 = scmp.eq.s32.totalorder %s14, 1
    %p67 = por %p65, %p66
    %p68 = scmp.ne.s32.totalorder %s59, %s60
    %p69 = scmp.eq.s32.totalorder %s14, 0
    %p70 = por %p68, %p69
    %p71 = scmp.ne.s32.totalorder %s59, %s60
    %p72 = scmp.eq.s32.totalorder %s15, 1
    %p73 = por %p71, %p72
    %p75 = scmp.ne.s32.totalorder %s60, %s74
    %p76 = scmp.eq.s32.totalorder %s15, 0
    %p77 = por %p75, %p76
    %s79 = sadd.s32 %s78, 1
    %p82 = scmp.eq.s32.totalorder %s9, 1
    %p83 = scmp.ne.s32.totalorder %s78, %s80
    %p84 = scmp.eq.s32.totalorder %s9, 0
    %p85 = por %p83, %p84
    %p86 = scmp.ne.s32.totalorder %s78, %s80
    %p87 = scmp.eq.s32.totalorder %s14, 1
    %p88 = por %p86, %p87
    %p89 = scmp.ne.s32.totalorder %s80, %s81
    %p90 = scmp.eq.s32.totalorder %s14, 0
    %p91 = por %p89, %p90
    %p92 = scmp.ne.s32.totalorder %s80, %s81
    %p93 = scmp.eq.s32.totalorder %s15, 1
    %p94 = por %p92, %p93
    %p96 = scmp.ne.s32.totalorder %s81, %s95
    %p97 = scmp.eq.s32.totalorder %s15, 0
    %p98 = por %p96, %p97
    %s99 = ssub.s32 %s16, %s28
    %p100 = scmp.eq.s32.totalorder %s99, 0
    %s102 = sadd.s32 %s101, 1
    %s103 = scalar_select %p100, %s101, %s102
    %p106 = pneg %p100
    %p107 = scmp.eq.s32.totalorder %s9, 1
    %p108 = por %p106, %p107
    %p109 = scmp.ne.s32.totalorder %s101, %s104
    %p110 = scmp.eq.s32.totalorder %s9, 0
    %p111 = por %p109, %p110
    %p112 = scmp.ne.s32.totalorder %s101, %s104
    %p113 = scmp.eq.s32.totalorder %s14, 1
    %p114 = por %p112, %p113
    %p115 = scmp.ne.s32.totalorder %s104, %s105
    %p116 = scmp.eq.s32.totalorder %s14, 0
    %p117 = por %p115, %p116
    %p118 = scmp.ne.s32.totalorder %s104, %s105
    %p119 = scmp.eq.s32.totalorder %s15, 1
    %p120 = por %p118, %p119
    %p122 = scmp.ne.s32.totalorder %s105, %s121
    %p123 = scmp.eq.s32.totalorder %s15, 0
    %p124 = por %p122, %p123
    %p125 = scmp.le.s32.totalorder 1, %s9
    %p126 = scmp.lt.s32.totalorder %s9, 3
    %p127 = pnand %p125, %p126
    %p128 = pneg %p127
    // Predicated region
    $region9: #{multi_branch_forward.4} parent=5 // pred_check
      _
    $region10: #{multi_branch_forward.4} parent=5 // pred_check_branch
      %130 = sbr.rel (%p127) target = $region12
    $region11: #{multi_branch_forward.4} parent=5 // pred_region
      %s131 = ssub.s32 %s9, 1
      // Predicated region
      $region13: #{multi_branch_forward.4} parent=11 // pred_check
        %p132 = pneg %p70
      $region14: #{multi_branch_forward.4} parent=11 // pred_check_branch
        %134 = sbr.rel (%p132) target = $region16
      $region15: #{multi_branch_forward.4} parent=11 // pred_region
        _
      $region16: #{multi_branch_forward.4} parent=11 // pred_fallthru
        _
      // Predicated region
      $region17: #{multi_branch_forward.4} parent=11 // pred_check
        %p135 = pneg %p91
      $region18: #{multi_branch_forward.4} parent=11 // pred_check_branch
        %137 = sbr.rel (%p135) target = $region20
      $region19: #{multi_branch_forward.4} parent=11 // pred_region
        _
      $region20: #{multi_branch_forward.4} parent=11 // pred_fallthru
        _
    $region12: #{multi_branch_forward.4} parent=5 // pred_fallthru
      _
    %p138 = scmp.lt.s32.totalorder %s9, 2
    // Predicated region
    $region21: #{multi_branch_forward.4} parent=5 // pred_check
      %p139 = pneg %p138
    $region22: #{multi_branch_forward.4} parent=5 // pred_check_branch
      %141 = sbr.rel (%p139) target = $region24
    $region23: #{multi_branch_forward.4} parent=5 // pred_region
      // Predicated region
      $region25: #{multi_branch_forward.4} parent=23 // pred_check
        %p142 = pneg %p43
      $region26: #{multi_branch_forward.4} parent=23 // pred_check_branch
        %144 = sbr.rel (%p142) target = $region28
      $region27: #{multi_branch_forward.4} parent=23 // pred_region
        %p145 = scmp.lt.s32.totalorder %s16, 1
        %s146 = scalar_select %p145, %s16, 1
        %p147 = scmp.lt.s32.totalorder %s17, 0
        %s148 = scalar_select %p147, %s17, 0
        %s149 = smul.addr %s148, 3
        %s150 = smul.addr %s146, 3
        %s151 = sadd.s32 %s149, %s150
        %s152 = smul.addr %s151, 2
        %s153 = scalar_lea.vmem %s0, %s152
      $region28: #{multi_branch_forward.4} parent=23 // pred_fallthru
        _
    $region24: #{multi_branch_forward.4} parent=5 // pred_fallthru
      _
    %p154 = scmp.le.s32.totalorder 1, %s9
    %p155 = scmp.lt.s32.totalorder %s9, 3
    %p156 = pnand %p154, %p155
    %p157 = pneg %p156
    // Predicated region
    $region29: #{multi_branch_forward.4} parent=5 // pred_check
      _
    $region30: #{multi_branch_forward.4} parent=5 // pred_check_branch
      %159 = sbr.rel (%p156) target = $region32
    $region31: #{multi_branch_forward.4} parent=5 // pred_region
      %s160 = ssub.s32 %s9, 1
      %p161 = scmp.lt.s32.totalorder %s18, 1
      %s162 = scalar_select %p161, %s18, 1
      %p163 = scmp.lt.s32.totalorder %s19, 0
      %s164 = scalar_select %p163, %s19, 0
      %s165 = smul.addr %s164, 3
      %s166 = smul.addr %s162, 3
      %s167 = sadd.s32 %s165, %s166
      %s168 = smul.addr %s167, 2
      %s169 = scalar_lea.vmem %s0, %s168
      %p170 = pneg %p49
      %p171 = pneg %p46
      %p172 = pneg %p70
      %p173 = pneg %p67
      %p174 = pneg %p91
      %p175 = pneg %p88
      %p176 = pneg %p117
      %p177 = pneg %p114
      %p178 = scmp.lt.s32.totalorder %s18, 1
      %s179 = scalar_select %p178, %s18, 1
      %s180 = smul.addr %s179, 10
      %s181 = scalar_lea.vmem %s3, %s180
      %p182 = scmp.lt.s32.totalorder %s18, 1
      %s183 = scalar_select %p182, %s18, 1
      %p184 = scmp.lt.s32.totalorder %s19, 0
      %s185 = scalar_select %p184, %s19, 0
      %s186 = smul.addr %s185, 3
      %s187 = smul.addr %s183, 3
      %s188 = sadd.s32 %s186, %s187
      %s189 = smul.addr %s188, 2
      %s190 = scalar_lea.vmem %s0, %s189
      %p191 = scmp.lt.s32.totalorder %s18, 1
      %s192 = scalar_select %p191, %s18, 1
      %s193 = smul.addr %s192, 10
      %s194 = scalar_lea.vmem %s3, %s193
      %v196 = vld [vmem:[%s190] sm:$0x3f]
      %v197 = vld [vmem:[%s1] sm:$0xff]
      %v198 = vld [vmem:[%s1 + $0x8] sm:$0xff]
      %v199 = vld [vmem:[%s1 + $0x10] sm:$0xff]
      %v200 = vld [vmem:[%s1 + $0x18] sm:$0xff]
      %v201 = vld [vmem:[%s1 + $0x20] sm:$0xff]
      %v202 = vld [vmem:[%s1 + $0x28] sm:$0xff]
      %v203 = vld [vmem:[%s1 + $0x30] sm:$0xff]
      %v204 = vld [vmem:[%s1 + $0x38] sm:$0xff]
      %v205 = vld [vmem:[%s1 + $0x40] sm:$0xff]
      %v206 = vld [vmem:[%s1 + $0x48] sm:$0xff]
      %v207 = vld [vmem:[%s1 + $0x50] sm:$0xff]
      %v208 = vld [vmem:[%s1 + $0x58] sm:$0xff]
      %v209 = vld [vmem:[%s1 + $0x60] sm:$0xff]
      %v210 = vld [vmem:[%s1 + $0x68] sm:$0xff]
      %v211 = vld [vmem:[%s1 + $0x70] sm:$0xff]
      %v212 = vld [vmem:[%s1 + $0x78] sm:$0xff]
      %v213 = vld [vmem:[%s1 + $0x80] sm:$0xff]
      %v214 = vld [vmem:[%s1 + $0x88] sm:$0xff]
      %v215 = vld [vmem:[%s1 + $0x90] sm:$0xff]
      %v216 = vld [vmem:[%s1 + $0x98] sm:$0xff]
      %v217 = vld [vmem:[%s1 + $0xa0] sm:$0xff]
      %v218 = vld [vmem:[%s1 + $0xa8] sm:$0xff]
      %v219 = vld [vmem:[%s1 + $0xb0] sm:$0xff]
      %v220 = vld [vmem:[%s1 + $0xb8] sm:$0xff]
      %v221 = vld [vmem:[%s1 + $0xc0] sm:$0xff]
      %v222 = vld [vmem:[%s1 + $0xc8] sm:$0xff]
      %v223 = vld [vmem:[%s1 + $0xd0] sm:$0xff]
      %v224 = vld [vmem:[%s1 + $0xd8] sm:$0xff]
      %v225 = vld [vmem:[%s1 + $0xe0] sm:$0xff]
      %v226 = vld [vmem:[%s1 + $0xe8] sm:$0xff]
      %v227 = vld [vmem:[%s1 + $0xf0] sm:$0xff]
      %v228 = vld [vmem:[%s1 + $0xf8] sm:$0xff]
      %v229 = vld [vmem:[%s1 + $0x100] sm:$0xff]
      %v230 = vld [vmem:[%s1 + $0x108] sm:$0xff]
      %v231 = vld [vmem:[%s1 + $0x110] sm:$0xff]
      %v232 = vld [vmem:[%s1 + $0x118] sm:$0xff]
      %v233 = vld [vmem:[%s1 + $0x120] sm:$0xff]
      %v234 = vld [vmem:[%s1 + $0x128] sm:$0xff]
      %v235 = vld [vmem:[%s1 + $0x130] sm:$0xff]
      %v236 = vld [vmem:[%s1 + $0x138] sm:$0xff]
      %v237 = vld [vmem:[%s1 + $0x140] sm:$0xff]
      %v238 = vld [vmem:[%s1 + $0x148] sm:$0xff]
      %v239 = vld [vmem:[%s1 + $0x150] sm:$0xff]
      %v240 = vld [vmem:[%s1 + $0x158] sm:$0xff]
      %v241 = vld [vmem:[%s1 + $0x160] sm:$0xff]
      %v242 = vld [vmem:[%s1 + $0x168] sm:$0xff]
      %v243 = vld [vmem:[%s1 + $0x170] sm:$0xff]
      %v244 = vld [vmem:[%s1 + $0x178] sm:$0xff]
      %v245 = vld [vmem:[%s1 + $0x180] sm:$0xff]
      %v246 = vld [vmem:[%s1 + $0x188] sm:$0xff]
      %v247 = vld [vmem:[%s1 + $0x190] sm:$0xff]
      %v248 = vld [vmem:[%s1 + $0x198] sm:$0xff]
      %v249 = vld [vmem:[%s1 + $0x1a0] sm:$0xff]
      %v250 = vld [vmem:[%s1 + $0x1a8] sm:$0xff]
      %v251 = vld [vmem:[%s1 + $0x1b0] sm:$0xff]
      %v252 = vld [vmem:[%s1 + $0x1b8] sm:$0xff]
      %v253 = vld [vmem:[%s1 + $0x1c0] sm:$0xff]
      %v254 = vld [vmem:[%s1 + $0x1c8] sm:$0xff]
      %v255 = vld [vmem:[%s1 + $0x1d0] sm:$0xff]
      %v256 = vld [vmem:[%s1 + $0x1d8] sm:$0xff]
      %v257 = vld [vmem:[%s1 + $0x1e0] sm:$0xff]
      %v258 = vld [vmem:[%s1 + $0x1e8] sm:$0xff]
      %v259 = vld [vmem:[%s1 + $0x1f0] sm:$0xff]
      %v260 = vld [vmem:[%s1 + $0x1f8] sm:$0xff]
      %v261 = vld [vmem:[%s1 + $0x200] sm:$0xff]
      %v262 = vld [vmem:[%s1 + $0x208] sm:$0xff]
      %v263 = vld [vmem:[%s1 + $0x210] sm:$0xff]
      %v264 = vld [vmem:[%s1 + $0x218] sm:$0xff]
      %v265 = vld [vmem:[%s1 + $0x220] sm:$0xff]
      %v266 = vld [vmem:[%s1 + $0x228] sm:$0xff]
      %v267 = vld [vmem:[%s1 + $0x230] sm:$0xff]
      %v268 = vld [vmem:[%s1 + $0x238] sm:$0xff]
      %v269 = vld [vmem:[%s1 + $0x240] sm:$0xff]
      %v270 = vld [vmem:[%s1 + $0x248] sm:$0xff]
      %v271 = vld [vmem:[%s1 + $0x250] sm:$0xff]
      %v272 = vld [vmem:[%s1 + $0x258] sm:$0xff]
      %v273 = vld [vmem:[%s1 + $0x260] sm:$0xff]
      %v274 = vld [vmem:[%s1 + $0x268] sm:$0xff]
      %v275 = vld [vmem:[%s1 + $0x270] sm:$0xff]
      %v276 = vld [vmem:[%s1 + $0x278] sm:$0xff]
      %v277 = vld [vmem:[%s1 + $0x280] sm:$0xff]
      %v278 = vld [vmem:[%s1 + $0x288] sm:$0xff]
      %v279 = vld [vmem:[%s1 + $0x290] sm:$0xff]
      %v280 = vld [vmem:[%s1 + $0x298] sm:$0xff]
      %v281 = vld [vmem:[%s1 + $0x2a0] sm:$0xff]
      %v282 = vld [vmem:[%s1 + $0x2a8] sm:$0xff]
      %v283 = vld [vmem:[%s1 + $0x2b0] sm:$0xff]
      %v284 = vld [vmem:[%s1 + $0x2b8] sm:$0xff]
      %v285 = vld [vmem:[%s1 + $0x2c0] sm:$0xff]
      %v286 = vld [vmem:[%s1 + $0x2c8] sm:$0xff]
      %v287 = vld [vmem:[%s1 + $0x2d0] sm:$0xff]
      %v288 = vld [vmem:[%s1 + $0x2d8] sm:$0xff]
      %v289 = vld [vmem:[%s1 + $0x2e0] sm:$0xff]
      %v290 = vld [vmem:[%s1 + $0x2e8] sm:$0xff]
      %v291 = vld [vmem:[%s1 + $0x2f0] sm:$0xff]
      %v292 = vld [vmem:[%s1 + $0x2f8] sm:$0xff]
      %v293 = vld [vmem:[%s1 + $0x300] sm:$0xff]
      %v294 = vld [vmem:[%s1 + $0x308] sm:$0xff]
      %v295 = vld [vmem:[%s1 + $0x310] sm:$0xff]
      %v296 = vld [vmem:[%s1 + $0x318] sm:$0xff]
      %v297 = vld [vmem:[%s1 + $0x320] sm:$0xff]
      %v298 = vld [vmem:[%s1 + $0x328] sm:$0xff]
      %v299 = vld [vmem:[%s1 + $0x330] sm:$0xff]
      %v300 = vld [vmem:[%s1 + $0x338] sm:$0xff]
      %v301 = vld [vmem:[%s1 + $0x340] sm:$0xff]
      %v302 = vld [vmem:[%s1 + $0x348] sm:$0xff]
      %v303 = vld [vmem:[%s1 + $0x350] sm:$0xff]
      %v304 = vld [vmem:[%s1 + $0x358] sm:$0xff]
      %v305 = vld [vmem:[%s1 + $0x360] sm:$0xff]
      %v306 = vld [vmem:[%s1 + $0x368] sm:$0xff]
      %v307 = vld [vmem:[%s1 + $0x370] sm:$0xff]
      %v308 = vld [vmem:[%s1 + $0x378] sm:$0xff]
      %v309 = vld [vmem:[%s1 + $0x380] sm:$0xff]
      %v310 = vld [vmem:[%s1 + $0x388] sm:$0xff]
      %v311 = vld [vmem:[%s1 + $0x390] sm:$0xff]
      %v312 = vld [vmem:[%s1 + $0x398] sm:$0xff]
      %v313 = vld [vmem:[%s1 + $0x3a0] sm:$0xff]
      %v314 = vld [vmem:[%s1 + $0x3a8] sm:$0xff]
      %v315 = vld [vmem:[%s1 + $0x3b0] sm:$0xff]
      %v316 = vld [vmem:[%s1 + $0x3b8] sm:$0xff]
      %v317 = vld [vmem:[%s1 + $0x3c0] sm:$0xff]
      %v318 = vld [vmem:[%s1 + $0x3c8] sm:$0xff]
      %v319 = vld [vmem:[%s1 + $0x3d0] sm:$0xff]
      %v320 = vld [vmem:[%s1 + $0x3d8] sm:$0xff]
      %v321 = vld [vmem:[%s1 + $0x3e0] sm:$0xff]
      %v322 = vld [vmem:[%s1 + $0x3e8] sm:$0xff]
      %v323 = vld [vmem:[%s1 + $0x3f0] sm:$0xff]
      %v324 = vld [vmem:[%s1 + $0x3f8] sm:$0xff]
      %v325 = vld [vmem:[%s1 + $0x400] sm:$0xff]
      %v326 = vld [vmem:[%s1 + $0x408] sm:$0xff]
      %v327 = vld [vmem:[%s1 + $0x410] sm:$0xff]
      %v328 = vld [vmem:[%s1 + $0x418] sm:$0xff]
      %v329 = vld [vmem:[%s1 + $0x420] sm:$0xff]
      %v330 = vld [vmem:[%s1 + $0x428] sm:$0xff]
      %v331 = vld [vmem:[%s1 + $0x430] sm:$0xff]
      %v332 = vld [vmem:[%s1 + $0x438] sm:$0xff]
      %v333 = vld [vmem:[%s1 + $0x440] sm:$0xff]
      %v334 = vld [vmem:[%s1 + $0x448] sm:$0xff]
      %v335 = vld [vmem:[%s1 + $0x450] sm:$0xff]
      %v336 = vld [vmem:[%s1 + $0x458] sm:$0xff]
      %v337 = vld [vmem:[%s1 + $0x460] sm:$0xff]
      %v338 = vld [vmem:[%s1 + $0x468] sm:$0xff]
      %v339 = vld [vmem:[%s1 + $0x470] sm:$0xff]
      %v340 = vld [vmem:[%s1 + $0x478] sm:$0xff]
      %v341 = vld [vmem:[%s1 + $0x480] sm:$0xff]
      %v342 = vld [vmem:[%s1 + $0x488] sm:$0xff]
      %v343 = vld [vmem:[%s1 + $0x490] sm:$0xff]
      %v344 = vld [vmem:[%s1 + $0x498] sm:$0xff]
      %v345 = vld [vmem:[%s1 + $0x4a0] sm:$0xff]
      %v346 = vld [vmem:[%s1 + $0x4a8] sm:$0xff]
      %v347 = vld [vmem:[%s1 + $0x4b0] sm:$0xff]
      %v348 = vld [vmem:[%s1 + $0x4b8] sm:$0xff]
      %v349 = vld [vmem:[%s1 + $0x4c0] sm:$0xff]
      %v350 = vld [vmem:[%s1 + $0x4c8] sm:$0xff]
      %v351 = vld [vmem:[%s1 + $0x4d0] sm:$0xff]
      %v352 = vld [vmem:[%s1 + $0x4d8] sm:$0xff]
      %v353 = vld [vmem:[%s1 + $0x4e0] sm:$0xff]
      %v354 = vld [vmem:[%s1 + $0x4e8] sm:$0xff]
      %v355 = vld [vmem:[%s1 + $0x4f0] sm:$0xff]
      %v356 = vld [vmem:[%s1 + $0x4f8] sm:$0xff]
      %v357 = vld [vmem:[%s1 + $0x500] sm:$0xff]
      %v358 = vld [vmem:[%s1 + $0x508] sm:$0xff]
      %v359 = vld [vmem:[%s1 + $0x510] sm:$0xff]
      %v360 = vld [vmem:[%s1 + $0x518] sm:$0xff]
      %v361 = vld [vmem:[%s1 + $0x520] sm:$0xff]
      %v362 = vld [vmem:[%s1 + $0x528] sm:$0xff]
      %v363 = vld [vmem:[%s1 + $0x530] sm:$0xff]
      %v364 = vld [vmem:[%s1 + $0x538] sm:$0xff]
      %v365 = vld [vmem:[%s1 + $0x540] sm:$0xff]
      %v366 = vld [vmem:[%s1 + $0x548] sm:$0xff]
      %v367 = vld [vmem:[%s1 + $0x550] sm:$0xff]
      %v368 = vld [vmem:[%s1 + $0x558] sm:$0xff]
      %v369 = vld [vmem:[%s1 + $0x560] sm:$0xff]
      %v370 = vld [vmem:[%s1 + $0x568] sm:$0xff]
      %v371 = vld [vmem:[%s1 + $0x570] sm:$0xff]
      %v372 = vld [vmem:[%s1 + $0x578] sm:$0xff]
      %v373 = vld [vmem:[%s1 + $0x580] sm:$0xff]
      %v374 = vld [vmem:[%s1 + $0x588] sm:$0xff]
      %v375 = vld [vmem:[%s1 + $0x590] sm:$0xff]
      %v376 = vld [vmem:[%s1 + $0x598] sm:$0xff]
      %v377 = vld [vmem:[%s1 + $0x5a0] sm:$0xff]
      %v378 = vld [vmem:[%s1 + $0x5a8] sm:$0xff]
      %v379 = vld [vmem:[%s1 + $0x5b0] sm:$0xff]
      %v380 = vld [vmem:[%s1 + $0x5b8] sm:$0xff]
      %v381 = vld [vmem:[%s1 + $0x5c0] sm:$0xff]
      %v382 = vld [vmem:[%s1 + $0x5c8] sm:$0xff]
      %v383 = vld [vmem:[%s1 + $0x5d0] sm:$0xff]
      %v384 = vld [vmem:[%s1 + $0x5d8] sm:$0xff]
      %v385 = vld [vmem:[%s1 + $0x5e0] sm:$0xff]
      %v386 = vld [vmem:[%s1 + $0x5e8] sm:$0xff]
      %v387 = vld [vmem:[%s1 + $0x5f0] sm:$0xff]
      %v388 = vld [vmem:[%s1 + $0x5f8] sm:$0xff]
      %v389 = vld [vmem:[%s1 + $0x600] sm:$0xff]
      %v390 = vld [vmem:[%s1 + $0x608] sm:$0xff]
      %v391 = vld [vmem:[%s1 + $0x610] sm:$0xff]
      %v392 = vld [vmem:[%s1 + $0x618] sm:$0xff]
      %v393 = vld [vmem:[%s1 + $0x620] sm:$0xff]
      %v394 = vld [vmem:[%s1 + $0x628] sm:$0xff]
      %v395 = vld [vmem:[%s1 + $0x630] sm:$0xff]
      %v396 = vld [vmem:[%s1 + $0x638] sm:$0xff]
      %v397 = vld [vmem:[%s1 + $0x640] sm:$0xff]
      %v398 = vld [vmem:[%s1 + $0x648] sm:$0xff]
      %v399 = vld [vmem:[%s1 + $0x650] sm:$0xff]
      %v400 = vld [vmem:[%s1 + $0x658] sm:$0xff]
      %v401 = vld [vmem:[%s1 + $0x660] sm:$0xff]
      %v402 = vld [vmem:[%s1 + $0x668] sm:$0xff]
      %v403 = vld [vmem:[%s1 + $0x670] sm:$0xff]
      %v404 = vld [vmem:[%s1 + $0x678] sm:$0xff]
      %v405 = vld [vmem:[%s1 + $0x680] sm:$0xff]
      %v406 = vld [vmem:[%s1 + $0x688] sm:$0xff]
      %v407 = vld [vmem:[%s1 + $0x690] sm:$0xff]
      %v408 = vld [vmem:[%s1 + $0x698] sm:$0xff]
      %v409 = vld [vmem:[%s1 + $0x6a0] sm:$0xff]
      %v410 = vld [vmem:[%s1 + $0x6a8] sm:$0xff]
      %v411 = vld [vmem:[%s1 + $0x6b0] sm:$0xff]
      %v412 = vld [vmem:[%s1 + $0x6b8] sm:$0xff]
      %v413 = vld [vmem:[%s1 + $0x6c0] sm:$0xff]
      %v414 = vld [vmem:[%s1 + $0x6c8] sm:$0xff]
      %v415 = vld [vmem:[%s1 + $0x6d0] sm:$0xff]
      %v416 = vld [vmem:[%s1 + $0x6d8] sm:$0xff]
      %v417 = vld [vmem:[%s1 + $0x6e0] sm:$0xff]
      %v418 = vld [vmem:[%s1 + $0x6e8] sm:$0xff]
      %v419 = vld [vmem:[%s1 + $0x6f0] sm:$0xff]
      %v420 = vld [vmem:[%s1 + $0x6f8] sm:$0xff]
      %v421 = vld [vmem:[%s1 + $0x700] sm:$0xff]
      %v422 = vld [vmem:[%s1 + $0x708] sm:$0xff]
      %v423 = vld [vmem:[%s1 + $0x710] sm:$0xff]
      %v424 = vld [vmem:[%s1 + $0x718] sm:$0xff]
      %v425 = vld [vmem:[%s1 + $0x720] sm:$0xff]
      %v426 = vld [vmem:[%s1 + $0x728] sm:$0xff]
      %v427 = vld [vmem:[%s1 + $0x730] sm:$0xff]
      %v428 = vld [vmem:[%s1 + $0x738] sm:$0xff]
      %v429 = vld [vmem:[%s1 + $0x740] sm:$0xff]
      %v430 = vld [vmem:[%s1 + $0x748] sm:$0xff]
      %v431 = vld [vmem:[%s1 + $0x750] sm:$0xff]
      %v432 = vld [vmem:[%s1 + $0x758] sm:$0xff]
      %v433 = vld [vmem:[%s1 + $0x760] sm:$0xff]
      %v434 = vld [vmem:[%s1 + $0x768] sm:$0xff]
      %v435 = vld [vmem:[%s1 + $0x770] sm:$0xff]
      %v436 = vld [vmem:[%s1 + $0x778] sm:$0xff]
      %v437 = vld [vmem:[%s2] sm:$0xff]
      %v438 = vld [vmem:[%s2 + $0x8] sm:$0x3]
      %v441 = vlaneseq
      %v442 = vshrl.u32 %v441, 7
      %v443 = vsub.s32 0, %v442
      %v444 = vrot.slane %v437, %v443
      %v445 = vlaneseq
      %v446 = vshrl.u32 %v445, 7
      %v447 = vsub.s32 1, %v446
      %v448 = vrot.slane %v437, %v447
      %v449 = vlaneseq
      %v450 = vshrl.u32 %v449, 7
      %v451 = vsub.s32 2, %v450
      %v452 = vrot.slane %v437, %v451
      %v453 = vlaneseq
      %v454 = vshrl.u32 %v453, 7
      %v455 = vsub.s32 3, %v454
      %v456 = vrot.slane %v437, %v455
      %v457 = vlaneseq
      %v458 = vshrl.u32 %v457, 7
      %v459 = vsub.s32 4, %v458
      %v460 = vrot.slane %v437, %v459
      %v461 = vlaneseq
      %v462 = vshrl.u32 %v461, 7
      %v463 = vsub.s32 5, %v462
      %v464 = vrot.slane %v437, %v463
      %v465 = vlaneseq
      %v466 = vshrl.u32 %v465, 7
      %v467 = vsub.s32 6, %v466
      %v468 = vrot.slane %v437, %v467
      %v469 = vlaneseq
      %v470 = vshrl.u32 %v469, 7
      %v471 = vsub.s32 7, %v470
      %v472 = vrot.slane %v437, %v471
      %v473 = vlaneseq
      %v474 = vshrl.u32 %v473, 7
      %v475 = vsub.s32 0, %v474
      %v476 = vrot.slane %v438, %v475
      %v477 = vlaneseq
      %v478 = vshrl.u32 %v477, 7
      %v479 = vsub.s32 1, %v478
      %v480 = vrot.slane %v438, %v479
      %v492 = vcombine.high %v196, %v196
      %v494 = vunpack.c.l.s4 1983009808
      %v495 = vunpack.c.0.s8 %v494
      %v496 = vlaneseq
      %v497 = vshrl.u32 %v496, 7
      %v498 = vsub.s32 %v495, %v497
      %v499 = vrot.slane %v196, %v498
      %v501 = vunpack.c.l.s4 1983009808
      %v502 = vunpack.c.0.s8 %v501
      %v503 = vlaneseq
      %v504 = vshrl.u32 %v503, 7
      %v505 = vsub.s32 %v502, %v504
      %v506 = vrot.slane %v492, %v505
      %v507 = vcombine.high %v499, %v499
      %v751 = vunpack.c.l.b16 %v197
      %v752 = vunpack.c.h.b16 %v197
      %v753 = vunpack.c.l.b16 %v198
      %v754 = vunpack.c.h.b16 %v198
      %v755 = vunpack.c.l.b16 %v199
      %v756 = vunpack.c.h.b16 %v199
      %v757 = vunpack.c.l.b16 %v200
      %v758 = vunpack.c.h.b16 %v200
      %v759 = vunpack.c.l.b16 %v201
      %v760 = vunpack.c.h.b16 %v201
      %v761 = vunpack.c.l.b16 %v202
      %v762 = vunpack.c.h.b16 %v202
      %v763 = vunpack.c.l.b16 %v203
      %v764 = vunpack.c.h.b16 %v203
      %v765 = vunpack.c.l.b16 %v204
      %v766 = vunpack.c.h.b16 %v204
      %v767 = vunpack.c.l.b16 %v205
      %v768 = vunpack.c.h.b16 %v205
      %v769 = vunpack.c.l.b16 %v206
      %v770 = vunpack.c.h.b16 %v206
      %v771 = vunpack.c.l.b16 %v207
      %v772 = vunpack.c.h.b16 %v207
      %v773 = vunpack.c.l.b16 %v208
      %v774 = vunpack.c.h.b16 %v208
      %v775 = vunpack.c.l.b16 %v209
      %v776 = vunpack.c.h.b16 %v209
      %v777 = vunpack.c.l.b16 %v210
      %v778 = vunpack.c.h.b16 %v210
      %v779 = vunpack.c.l.b16 %v211
      %v780 = vunpack.c.h.b16 %v211
      %v781 = vunpack.c.l.b16 %v212
      %v782 = vunpack.c.h.b16 %v212
      %v783 = vunpack.c.l.b16 %v213
      %v784 = vunpack.c.h.b16 %v213
      %v785 = vunpack.c.l.b16 %v214
      %v786 = vunpack.c.h.b16 %v214
      %v787 = vunpack.c.l.b16 %v215
      %v788 = vunpack.c.h.b16 %v215
      %v789 = vunpack.c.l.b16 %v216
      %v790 = vunpack.c.h.b16 %v216
      %v791 = vunpack.c.l.b16 %v217
      %v792 = vunpack.c.h.b16 %v217
      %v793 = vunpack.c.l.b16 %v218
      %v794 = vunpack.c.h.b16 %v218
      %v795 = vunpack.c.l.b16 %v219
      %v796 = vunpack.c.h.b16 %v219
      %v797 = vunpack.c.l.b16 %v220
      %v798 = vunpack.c.h.b16 %v220
      %v799 = vunpack.c.l.b16 %v221
      %v800 = vunpack.c.h.b16 %v221
      %v801 = vunpack.c.l.b16 %v222
      %v802 = vunpack.c.h.b16 %v222
      %v803 = vunpack.c.l.b16 %v223
      %v804 = vunpack.c.h.b16 %v223
      %v805 = vunpack.c.l.b16 %v224
      %v806 = vunpack.c.h.b16 %v224
      %v807 = vunpack.c.l.b16 %v225
      %v808 = vunpack.c.h.b16 %v225
      %v809 = vunpack.c.l.b16 %v226
      %v810 = vunpack.c.h.b16 %v226
      %v811 = vunpack.c.l.b16 %v227
      %v812 = vunpack.c.h.b16 %v227
      %v813 = vunpack.c.l.b16 %v228
      %v814 = vunpack.c.h.b16 %v228
      %v815 = vunpack.c.l.b16 %v229
      %v816 = vunpack.c.h.b16 %v229
      %v817 = vunpack.c.l.b16 %v230
      %v818 = vunpack.c.h.b16 %v230
      %v819 = vunpack.c.l.b16 %v231
      %v820 = vunpack.c.h.b16 %v231
      %v821 = vunpack.c.l.b16 %v232
      %v822 = vunpack.c.h.b16 %v232
      %v823 = vunpack.c.l.b16 %v233
      %v824 = vunpack.c.h.b16 %v233
      %v825 = vunpack.c.l.b16 %v234
      %v826 = vunpack.c.h.b16 %v234
      %v827 = vunpack.c.l.b16 %v235
      %v828 = vunpack.c.h.b16 %v235
      %v829 = vunpack.c.l.b16 %v236
      %v830 = vunpack.c.h.b16 %v236
      %v831 = vunpack.c.l.b16 %v237
      %v832 = vunpack.c.h.b16 %v237
      %v833 = vunpack.c.l.b16 %v238
      %v834 = vunpack.c.h.b16 %v238
      %v835 = vunpack.c.l.b16 %v239
      %v836 = vunpack.c.h.b16 %v239
      %v837 = vunpack.c.l.b16 %v240
      %v838 = vunpack.c.h.b16 %v240
      %v839 = vunpack.c.l.b16 %v241
      %v840 = vunpack.c.h.b16 %v241
      %v841 = vunpack.c.l.b16 %v242
      %v842 = vunpack.c.h.b16 %v242
      %v843 = vunpack.c.l.b16 %v243
      %v844 = vunpack.c.h.b16 %v243
      %v845 = vunpack.c.l.b16 %v244
      %v846 = vunpack.c.h.b16 %v244
      %v847 = vunpack.c.l.b16 %v245
      %v848 = vunpack.c.h.b16 %v245
      %v849 = vunpack.c.l.b16 %v246
      %v850 = vunpack.c.h.b16 %v246
      %v851 = vunpack.c.l.b16 %v247
      %v852 = vunpack.c.h.b16 %v247
      %v853 = vunpack.c.l.b16 %v248
      %v854 = vunpack.c.h.b16 %v248
      %v855 = vunpack.c.l.b16 %v249
      %v856 = vunpack.c.h.b16 %v249
      %v857 = vunpack.c.l.b16 %v250
      %v858 = vunpack.c.h.b16 %v250
      %v859 = vunpack.c.l.b16 %v251
      %v860 = vunpack.c.h.b16 %v251
      %v861 = vunpack.c.l.b16 %v252
      %v862 = vunpack.c.h.b16 %v252
      %v863 = vunpack.c.l.b16 %v253
      %v864 = vunpack.c.h.b16 %v253
      %v865 = vunpack.c.l.b16 %v254
      %v866 = vunpack.c.h.b16 %v254
      %v867 = vunpack.c.l.b16 %v255
      %v868 = vunpack.c.h.b16 %v255
      %v869 = vunpack.c.l.b16 %v256
      %v870 = vunpack.c.h.b16 %v256
      %v871 = vunpack.c.l.b16 %v257
      %v872 = vunpack.c.h.b16 %v257
      %v873 = vunpack.c.l.b16 %v258
      %v874 = vunpack.c.h.b16 %v258
      %v875 = vunpack.c.l.b16 %v259
      %v876 = vunpack.c.h.b16 %v259
      %v877 = vunpack.c.l.b16 %v260
      %v878 = vunpack.c.h.b16 %v260
      %v879 = vunpack.c.l.b16 %v261
      %v880 = vunpack.c.h.b16 %v261
      %v881 = vunpack.c.l.b16 %v262
      %v882 = vunpack.c.h.b16 %v262
      %v883 = vunpack.c.l.b16 %v263
      %v884 = vunpack.c.h.b16 %v263
      %v885 = vunpack.c.l.b16 %v264
      %v886 = vunpack.c.h.b16 %v264
      %v887 = vunpack.c.l.b16 %v265
      %v888 = vunpack.c.h.b16 %v265
      %v889 = vunpack.c.l.b16 %v266
      %v890 = vunpack.c.h.b16 %v266
      %v891 = vunpack.c.l.b16 %v267
      %v892 = vunpack.c.h.b16 %v267
      %v893 = vunpack.c.l.b16 %v268
      %v894 = vunpack.c.h.b16 %v268
      %v895 = vunpack.c.l.b16 %v269
      %v896 = vunpack.c.h.b16 %v269
      %v897 = vunpack.c.l.b16 %v270
      %v898 = vunpack.c.h.b16 %v270
      %v899 = vunpack.c.l.b16 %v271
      %v900 = vunpack.c.h.b16 %v271
      %v901 = vunpack.c.l.b16 %v272
      %v902 = vunpack.c.h.b16 %v272
      %v903 = vunpack.c.l.b16 %v273
      %v904 = vunpack.c.h.b16 %v273
      %v905 = vunpack.c.l.b16 %v274
      %v906 = vunpack.c.h.b16 %v274
      %v907 = vunpack.c.l.b16 %v275
      %v908 = vunpack.c.h.b16 %v275
      %v909 = vunpack.c.l.b16 %v276
      %v910 = vunpack.c.h.b16 %v276
      %v911 = vunpack.c.l.b16 %v277
      %v912 = vunpack.c.h.b16 %v277
      %v913 = vunpack.c.l.b16 %v278
      %v914 = vunpack.c.h.b16 %v278
      %v915 = vunpack.c.l.b16 %v279
      %v916 = vunpack.c.h.b16 %v279
      %v917 = vunpack.c.l.b16 %v280
      %v918 = vunpack.c.h.b16 %v280
      %v919 = vunpack.c.l.b16 %v281
      %v920 = vunpack.c.h.b16 %v281
      %v921 = vunpack.c.l.b16 %v282
      %v922 = vunpack.c.h.b16 %v282
      %v923 = vunpack.c.l.b16 %v283
      %v924 = vunpack.c.h.b16 %v283
      %v925 = vunpack.c.l.b16 %v284
      %v926 = vunpack.c.h.b16 %v284
      %v927 = vunpack.c.l.b16 %v285
      %v928 = vunpack.c.h.b16 %v285
      %v929 = vunpack.c.l.b16 %v286
      %v930 = vunpack.c.h.b16 %v286
      %v931 = vunpack.c.l.b16 %v287
      %v932 = vunpack.c.h.b16 %v287
      %v933 = vunpack.c.l.b16 %v288
      %v934 = vunpack.c.h.b16 %v288
      %v935 = vunpack.c.l.b16 %v289
      %v936 = vunpack.c.h.b16 %v289
      %v937 = vunpack.c.l.b16 %v290
      %v938 = vunpack.c.h.b16 %v290
      %v939 = vunpack.c.l.b16 %v291
      %v940 = vunpack.c.h.b16 %v291
      %v941 = vunpack.c.l.b16 %v292
      %v942 = vunpack.c.h.b16 %v292
      %v943 = vunpack.c.l.b16 %v293
      %v944 = vunpack.c.h.b16 %v293
      %v945 = vunpack.c.l.b16 %v294
      %v946 = vunpack.c.h.b16 %v294
      %v947 = vunpack.c.l.b16 %v295
      %v948 = vunpack.c.h.b16 %v295
      %v949 = vunpack.c.l.b16 %v296
      %v950 = vunpack.c.h.b16 %v296
      %v951 = vunpack.c.l.b16 %v297
      %v952 = vunpack.c.h.b16 %v297
      %v953 = vunpack.c.l.b16 %v298
      %v954 = vunpack.c.h.b16 %v298
      %v955 = vunpack.c.l.b16 %v299
      %v956 = vunpack.c.h.b16 %v299
      %v957 = vunpack.c.l.b16 %v300
      %v958 = vunpack.c.h.b16 %v300
      %v959 = vunpack.c.l.b16 %v301
      %v960 = vunpack.c.h.b16 %v301
      %v961 = vunpack.c.l.b16 %v302
      %v962 = vunpack.c.h.b16 %v302
      %v963 = vunpack.c.l.b16 %v303
      %v964 = vunpack.c.h.b16 %v303
      %v965 = vunpack.c.l.b16 %v304
      %v966 = vunpack.c.h.b16 %v304
      %v967 = vunpack.c.l.b16 %v305
      %v968 = vunpack.c.h.b16 %v305
      %v969 = vunpack.c.l.b16 %v306
      %v970 = vunpack.c.h.b16 %v306
      %v971 = vunpack.c.l.b16 %v307
      %v972 = vunpack.c.h.b16 %v307
      %v973 = vunpack.c.l.b16 %v308
      %v974 = vunpack.c.h.b16 %v308
      %v975 = vunpack.c.l.b16 %v309
      %v976 = vunpack.c.h.b16 %v309
      %v977 = vunpack.c.l.b16 %v310
      %v978 = vunpack.c.h.b16 %v310
      %v979 = vunpack.c.l.b16 %v311
      %v980 = vunpack.c.h.b16 %v311
      %v981 = vunpack.c.l.b16 %v312
      %v982 = vunpack.c.h.b16 %v312
      %v983 = vunpack.c.l.b16 %v313
      %v984 = vunpack.c.h.b16 %v313
      %v985 = vunpack.c.l.b16 %v314
      %v986 = vunpack.c.h.b16 %v314
      %v987 = vunpack.c.l.b16 %v315
      %v988 = vunpack.c.h.b16 %v315
      %v989 = vunpack.c.l.b16 %v316
      %v990 = vunpack.c.h.b16 %v316
      %v991 = vunpack.c.l.b16 %v317
      %v992 = vunpack.c.h.b16 %v317
      %v993 = vunpack.c.l.b16 %v318
      %v994 = vunpack.c.h.b16 %v318
      %v995 = vunpack.c.l.b16 %v319
      %v996 = vunpack.c.h.b16 %v319
      %v997 = vunpack.c.l.b16 %v320
      %v998 = vunpack.c.h.b16 %v320
      %v999 = vunpack.c.l.b16 %v321
      %v1000 = vunpack.c.h.b16 %v321
      %v1001 = vunpack.c.l.b16 %v322
      %v1002 = vunpack.c.h.b16 %v322
      %v1003 = vunpack.c.l.b16 %v323
      %v1004 = vunpack.c.h.b16 %v323
      %v1005 = vunpack.c.l.b16 %v324
      %v1006 = vunpack.c.h.b16 %v324
      %v1007 = vunpack.c.l.b16 %v325
      %v1008 = vunpack.c.h.b16 %v325
      %v1009 = vunpack.c.l.b16 %v326
      %v1010 = vunpack.c.h.b16 %v326
      %v1011 = vunpack.c.l.b16 %v327
      %v1012 = vunpack.c.h.b16 %v327
      %v1013 = vunpack.c.l.b16 %v328
      %v1014 = vunpack.c.h.b16 %v328
      %v1015 = vunpack.c.l.b16 %v329
      %v1016 = vunpack.c.h.b16 %v329
      %v1017 = vunpack.c.l.b16 %v330
      %v1018 = vunpack.c.h.b16 %v330
      %v1019 = vunpack.c.l.b16 %v331
      %v1020 = vunpack.c.h.b16 %v331
      %v1021 = vunpack.c.l.b16 %v332
      %v1022 = vunpack.c.h.b16 %v332
      %v1023 = vunpack.c.l.b16 %v333
      %v1024 = vunpack.c.h.b16 %v333
      %v1025 = vunpack.c.l.b16 %v334
      %v1026 = vunpack.c.h.b16 %v334
      %v1027 = vunpack.c.l.b16 %v335
      %v1028 = vunpack.c.h.b16 %v335
      %v1029 = vunpack.c.l.b16 %v336
      %v1030 = vunpack.c.h.b16 %v336
      %v1031 = vunpack.c.l.b16 %v337
      %v1032 = vunpack.c.h.b16 %v337
      %v1033 = vunpack.c.l.b16 %v338
      %v1034 = vunpack.c.h.b16 %v338
      %v1035 = vunpack.c.l.b16 %v339
      %v1036 = vunpack.c.h.b16 %v339
      %v1037 = vunpack.c.l.b16 %v340
      %v1038 = vunpack.c.h.b16 %v340
      %v1039 = vunpack.c.l.b16 %v341
      %v1040 = vunpack.c.h.b16 %v341
      %v1041 = vunpack.c.l.b16 %v342
      %v1042 = vunpack.c.h.b16 %v342
      %v1043 = vunpack.c.l.b16 %v343
      %v1044 = vunpack.c.h.b16 %v343
      %v1045 = vunpack.c.l.b16 %v344
      %v1046 = vunpack.c.h.b16 %v344
      %v1047 = vunpack.c.l.b16 %v345
      %v1048 = vunpack.c.h.b16 %v345
      %v1049 = vunpack.c.l.b16 %v346
      %v1050 = vunpack.c.h.b16 %v346
      %v1051 = vunpack.c.l.b16 %v347
      %v1052 = vunpack.c.h.b16 %v347
      %v1053 = vunpack.c.l.b16 %v348
      %v1054 = vunpack.c.h.b16 %v348
      %v1055 = vunpack.c.l.b16 %v349
      %v1056 = vunpack.c.h.b16 %v349
      %v1057 = vunpack.c.l.b16 %v350
      %v1058 = vunpack.c.h.b16 %v350
      %v1059 = vunpack.c.l.b16 %v351
      %v1060 = vunpack.c.h.b16 %v351
      %v1061 = vunpack.c.l.b16 %v352
      %v1062 = vunpack.c.h.b16 %v352
      %v1063 = vunpack.c.l.b16 %v353
      %v1064 = vunpack.c.h.b16 %v353
      %v1065 = vunpack.c.l.b16 %v354
      %v1066 = vunpack.c.h.b16 %v354
      %v1067 = vunpack.c.l.b16 %v355
      %v1068 = vunpack.c.h.b16 %v355
      %v1069 = vunpack.c.l.b16 %v356
      %v1070 = vunpack.c.h.b16 %v356
      %v1071 = vunpack.c.l.b16 %v357
      %v1072 = vunpack.c.h.b16 %v357
      %v1073 = vunpack.c.l.b16 %v358
      %v1074 = vunpack.c.h.b16 %v358
      %v1075 = vunpack.c.l.b16 %v359
      %v1076 = vunpack.c.h.b16 %v359
      %v1077 = vunpack.c.l.b16 %v360
      %v1078 = vunpack.c.h.b16 %v360
      %v1079 = vunpack.c.l.b16 %v361
      %v1080 = vunpack.c.h.b16 %v361
      %v1081 = vunpack.c.l.b16 %v362
      %v1082 = vunpack.c.h.b16 %v362
      %v1083 = vunpack.c.l.b16 %v363
      %v1084 = vunpack.c.h.b16 %v363
      %v1085 = vunpack.c.l.b16 %v364
      %v1086 = vunpack.c.h.b16 %v364
      %v1087 = vunpack.c.l.b16 %v365
      %v1088 = vunpack.c.h.b16 %v365
      %v1089 = vunpack.c.l.b16 %v366
      %v1090 = vunpack.c.h.b16 %v366
      %v1091 = vunpack.c.l.b16 %v367
      %v1092 = vunpack.c.h.b16 %v367
      %v1093 = vunpack.c.l.b16 %v368
      %v1094 = vunpack.c.h.b16 %v368
      %v1095 = vunpack.c.l.b16 %v369
      %v1096 = vunpack.c.h.b16 %v369
      %v1097 = vunpack.c.l.b16 %v370
      %v1098 = vunpack.c.h.b16 %v370
      %v1099 = vunpack.c.l.b16 %v371
      %v1100 = vunpack.c.h.b16 %v371
      %v1101 = vunpack.c.l.b16 %v372
      %v1102 = vunpack.c.h.b16 %v372
      %v1103 = vunpack.c.l.b16 %v373
      %v1104 = vunpack.c.h.b16 %v373
      %v1105 = vunpack.c.l.b16 %v374
      %v1106 = vunpack.c.h.b16 %v374
      %v1107 = vunpack.c.l.b16 %v375
      %v1108 = vunpack.c.h.b16 %v375
      %v1109 = vunpack.c.l.b16 %v376
      %v1110 = vunpack.c.h.b16 %v376
      %v1111 = vunpack.c.l.b16 %v377
      %v1112 = vunpack.c.h.b16 %v377
      %v1113 = vunpack.c.l.b16 %v378
      %v1114 = vunpack.c.h.b16 %v378
      %v1115 = vunpack.c.l.b16 %v379
      %v1116 = vunpack.c.h.b16 %v379
      %v1117 = vunpack.c.l.b16 %v380
      %v1118 = vunpack.c.h.b16 %v380
      %v1119 = vunpack.c.l.b16 %v381
      %v1120 = vunpack.c.h.b16 %v381
      %v1121 = vunpack.c.l.b16 %v382
      %v1122 = vunpack.c.h.b16 %v382
      %v1123 = vunpack.c.l.b16 %v383
      %v1124 = vunpack.c.h.b16 %v383
      %v1125 = vunpack.c.l.b16 %v384
      %v1126 = vunpack.c.h.b16 %v384
      %v1127 = vunpack.c.l.b16 %v385
      %v1128 = vunpack.c.h.b16 %v385
      %v1129 = vunpack.c.l.b16 %v386
      %v1130 = vunpack.c.h.b16 %v386
      %v1131 = vunpack.c.l.b16 %v387
      %v1132 = vunpack.c.h.b16 %v387
      %v1133 = vunpack.c.l.b16 %v388
      %v1134 = vunpack.c.h.b16 %v388
      %v1135 = vunpack.c.l.b16 %v389
      %v1136 = vunpack.c.h.b16 %v389
      %v1137 = vunpack.c.l.b16 %v390
      %v1138 = vunpack.c.h.b16 %v390
      %v1139 = vunpack.c.l.b16 %v391
      %v1140 = vunpack.c.h.b16 %v391
      %v1141 = vunpack.c.l.b16 %v392
      %v1142 = vunpack.c.h.b16 %v392
      %v1143 = vunpack.c.l.b16 %v393
      %v1144 = vunpack.c.h.b16 %v393
      %v1145 = vunpack.c.l.b16 %v394
      %v1146 = vunpack.c.h.b16 %v394
      %v1147 = vunpack.c.l.b16 %v395
      %v1148 = vunpack.c.h.b16 %v395
      %v1149 = vunpack.c.l.b16 %v396
      %v1150 = vunpack.c.h.b16 %v396
      %v1151 = vunpack.c.l.b16 %v397
      %v1152 = vunpack.c.h.b16 %v397
      %v1153 = vunpack.c.l.b16 %v398
      %v1154 = vunpack.c.h.b16 %v398
      %v1155 = vunpack.c.l.b16 %v399
      %v1156 = vunpack.c.h.b16 %v399
      %v1157 = vunpack.c.l.b16 %v400
      %v1158 = vunpack.c.h.b16 %v400
      %v1159 = vunpack.c.l.b16 %v401
      %v1160 = vunpack.c.h.b16 %v401
      %v1161 = vunpack.c.l.b16 %v402
      %v1162 = vunpack.c.h.b16 %v402
      %v1163 = vunpack.c.l.b16 %v403
      %v1164 = vunpack.c.h.b16 %v403
      %v1165 = vunpack.c.l.b16 %v404
      %v1166 = vunpack.c.h.b16 %v404
      %v1167 = vunpack.c.l.b16 %v405
      %v1168 = vunpack.c.h.b16 %v405
      %v1169 = vunpack.c.l.b16 %v406
      %v1170 = vunpack.c.h.b16 %v406
      %v1171 = vunpack.c.l.b16 %v407
      %v1172 = vunpack.c.h.b16 %v407
      %v1173 = vunpack.c.l.b16 %v408
      %v1174 = vunpack.c.h.b16 %v408
      %v1175 = vunpack.c.l.b16 %v409
      %v1176 = vunpack.c.h.b16 %v409
      %v1177 = vunpack.c.l.b16 %v410
      %v1178 = vunpack.c.h.b16 %v410
      %v1179 = vunpack.c.l.b16 %v411
      %v1180 = vunpack.c.h.b16 %v411
      %v1181 = vunpack.c.l.b16 %v412
      %v1182 = vunpack.c.h.b16 %v412
      %v1183 = vunpack.c.l.b16 %v413
      %v1184 = vunpack.c.h.b16 %v413
      %v1185 = vunpack.c.l.b16 %v414
      %v1186 = vunpack.c.h.b16 %v414
      %v1187 = vunpack.c.l.b16 %v415
      %v1188 = vunpack.c.h.b16 %v415
      %v1189 = vunpack.c.l.b16 %v416
      %v1190 = vunpack.c.h.b16 %v416
      %v1191 = vunpack.c.l.b16 %v417
      %v1192 = vunpack.c.h.b16 %v417
      %v1193 = vunpack.c.l.b16 %v418
      %v1194 = vunpack.c.h.b16 %v418
      %v1195 = vunpack.c.l.b16 %v419
      %v1196 = vunpack.c.h.b16 %v419
      %v1197 = vunpack.c.l.b16 %v420
      %v1198 = vunpack.c.h.b16 %v420
      %v1199 = vunpack.c.l.b16 %v421
      %v1200 = vunpack.c.h.b16 %v421
      %v1201 = vunpack.c.l.b16 %v422
      %v1202 = vunpack.c.h.b16 %v422
      %v1203 = vunpack.c.l.b16 %v423
      %v1204 = vunpack.c.h.b16 %v423
      %v1205 = vunpack.c.l.b16 %v424
      %v1206 = vunpack.c.h.b16 %v424
      %v1207 = vunpack.c.l.b16 %v425
      %v1208 = vunpack.c.h.b16 %v425
      %v1209 = vunpack.c.l.b16 %v426
      %v1210 = vunpack.c.h.b16 %v426
      %v1211 = vunpack.c.l.b16 %v427
      %v1212 = vunpack.c.h.b16 %v427
      %v1213 = vunpack.c.l.b16 %v428
      %v1214 = vunpack.c.h.b16 %v428
      %v1215 = vunpack.c.l.b16 %v429
      %v1216 = vunpack.c.h.b16 %v429
      %v1217 = vunpack.c.l.b16 %v430
      %v1218 = vunpack.c.h.b16 %v430
      %v1219 = vunpack.c.l.b16 %v431
      %v1220 = vunpack.c.h.b16 %v431
      %v1221 = vunpack.c.l.b16 %v432
      %v1222 = vunpack.c.h.b16 %v432
      %v1223 = vunpack.c.l.b16 %v433
      %v1224 = vunpack.c.h.b16 %v433
      %v1225 = vunpack.c.l.b16 %v434
      %v1226 = vunpack.c.h.b16 %v434
      %v1227 = vunpack.c.l.b16 %v435
      %v1228 = vunpack.c.h.b16 %v435
      %v1229 = vunpack.c.l.b16 %v436
      %v1230 = vunpack.c.h.b16 %v436
      %v1231 = vpack.c.b16 %v761, %v751
      %v1232 = vpack.c.b16 %v762, %v752
      %v1233 = vpack.c.b16 %v763, %v753
      %v1234 = vpack.c.b16 %v764, %v754
      %v1235 = vpack.c.b16 %v765, %v755
      %v1236 = vpack.c.b16 %v766, %v756
      %v1237 = vpack.c.b16 %v767, %v757
      %v1238 = vpack.c.b16 %v768, %v758
      %v1239 = vpack.c.b16 %v769, %v759
      %v1240 = vpack.c.b16 %v770, %v760
      %v1241 = vpack.c.b16 %v781, %v771
      %v1242 = vpack.c.b16 %v782, %v772
      %v1243 = vpack.c.b16 %v783, %v773
      %v1244 = vpack.c.b16 %v784, %v774
      %v1245 = vpack.c.b16 %v785, %v775
      %v1246 = vpack.c.b16 %v786, %v776
      %v1247 = vpack.c.b16 %v787, %v777
      %v1248 = vpack.c.b16 %v788, %v778
      %v1249 = vpack.c.b16 %v789, %v779
      %v1250 = vpack.c.b16 %v790, %v780
      %v1251 = vpack.c.b16 %v801, %v791
      %v1252 = vpack.c.b16 %v802, %v792
      %v1253 = vpack.c.b16 %v803, %v793
      %v1254 = vpack.c.b16 %v804, %v794
      %v1255 = vpack.c.b16 %v805, %v795
      %v1256 = vpack.c.b16 %v806, %v796
      %v1257 = vpack.c.b16 %v807, %v797
      %v1258 = vpack.c.b16 %v808, %v798
      %v1259 = vpack.c.b16 %v809, %v799
      %v1260 = vpack.c.b16 %v810, %v800
      %v1261 = vpack.c.b16 %v821, %v811
      %v1262 = vpack.c.b16 %v822, %v812
      %v1263 = vpack.c.b16 %v823, %v813
      %v1264 = vpack.c.b16 %v824, %v814
      %v1265 = vpack.c.b16 %v825, %v815
      %v1266 = vpack.c.b16 %v826, %v816
      %v1267 = vpack.c.b16 %v827, %v817
      %v1268 = vpack.c.b16 %v828, %v818
      %v1269 = vpack.c.b16 %v829, %v819
      %v1270 = vpack.c.b16 %v830, %v820
      %v1271 = vpack.c.b16 %v841, %v831
      %v1272 = vpack.c.b16 %v842, %v832
      %v1273 = vpack.c.b16 %v843, %v833
      %v1274 = vpack.c.b16 %v844, %v834
      %v1275 = vpack.c.b16 %v845, %v835
      %v1276 = vpack.c.b16 %v846, %v836
      %v1277 = vpack.c.b16 %v847, %v837
      %v1278 = vpack.c.b16 %v848, %v838
      %v1279 = vpack.c.b16 %v849, %v839
      %v1280 = vpack.c.b16 %v850, %v840
      %v1281 = vpack.c.b16 %v861, %v851
      %v1282 = vpack.c.b16 %v862, %v852
      %v1283 = vpack.c.b16 %v863, %v853
      %v1284 = vpack.c.b16 %v864, %v854
      %v1285 = vpack.c.b16 %v865, %v855
      %v1286 = vpack.c.b16 %v866, %v856
      %v1287 = vpack.c.b16 %v867, %v857
      %v1288 = vpack.c.b16 %v868, %v858
      %v1289 = vpack.c.b16 %v869, %v859
      %v1290 = vpack.c.b16 %v870, %v860
      %v1291 = vpack.c.b16 %v881, %v871
      %v1292 = vpack.c.b16 %v882, %v872
      %v1293 = vpack.c.b16 %v883, %v873
      %v1294 = vpack.c.b16 %v884, %v874
      %v1295 = vpack.c.b16 %v885, %v875
      %v1296 = vpack.c.b16 %v886, %v876
      %v1297 = vpack.c.b16 %v887, %v877
      %v1298 = vpack.c.b16 %v888, %v878
      %v1299 = vpack.c.b16 %v889, %v879
      %v1300 = vpack.c.b16 %v890, %v880
      %v1301 = vpack.c.b16 %v901, %v891
      %v1302 = vpack.c.b16 %v902, %v892
      %v1303 = vpack.c.b16 %v903, %v893
      %v1304 = vpack.c.b16 %v904, %v894
      %v1305 = vpack.c.b16 %v905, %v895
      %v1306 = vpack.c.b16 %v906, %v896
      %v1307 = vpack.c.b16 %v907, %v897
      %v1308 = vpack.c.b16 %v908, %v898
      %v1309 = vpack.c.b16 %v909, %v899
      %v1310 = vpack.c.b16 %v910, %v900
      %v1311 = vpack.c.b16 %v921, %v911
      %v1312 = vpack.c.b16 %v922, %v912
      %v1313 = vpack.c.b16 %v923, %v913
      %v1314 = vpack.c.b16 %v924, %v914
      %v1315 = vpack.c.b16 %v925, %v915
      %v1316 = vpack.c.b16 %v926, %v916
      %v1317 = vpack.c.b16 %v927, %v917
      %v1318 = vpack.c.b16 %v928, %v918
      %v1319 = vpack.c.b16 %v929, %v919
      %v1320 = vpack.c.b16 %v930, %v920
      %v1321 = vpack.c.b16 %v941, %v931
      %v1322 = vpack.c.b16 %v942, %v932
      %v1323 = vpack.c.b16 %v943, %v933
      %v1324 = vpack.c.b16 %v944, %v934
      %v1325 = vpack.c.b16 %v945, %v935
      %v1326 = vpack.c.b16 %v946, %v936
      %v1327 = vpack.c.b16 %v947, %v937
      %v1328 = vpack.c.b16 %v948, %v938
      %v1329 = vpack.c.b16 %v949, %v939
      %v1330 = vpack.c.b16 %v950, %v940
      %v1331 = vpack.c.b16 %v961, %v951
      %v1332 = vpack.c.b16 %v962, %v952
      %v1333 = vpack.c.b16 %v963, %v953
      %v1334 = vpack.c.b16 %v964, %v954
      %v1335 = vpack.c.b16 %v965, %v955
      %v1336 = vpack.c.b16 %v966, %v956
      %v1337 = vpack.c.b16 %v967, %v957
      %v1338 = vpack.c.b16 %v968, %v958
      %v1339 = vpack.c.b16 %v969, %v959
      %v1340 = vpack.c.b16 %v970, %v960
      %v1341 = vpack.c.b16 %v981, %v971
      %v1342 = vpack.c.b16 %v982, %v972
      %v1343 = vpack.c.b16 %v983, %v973
      %v1344 = vpack.c.b16 %v984, %v974
      %v1345 = vpack.c.b16 %v985, %v975
      %v1346 = vpack.c.b16 %v986, %v976
      %v1347 = vpack.c.b16 %v987, %v977
      %v1348 = vpack.c.b16 %v988, %v978
      %v1349 = vpack.c.b16 %v989, %v979
      %v1350 = vpack.c.b16 %v990, %v980
      %v1351 = vpack.c.b16 %v1001, %v991
      %v1352 = vpack.c.b16 %v1002, %v992
      %v1353 = vpack.c.b16 %v1003, %v993
      %v1354 = vpack.c.b16 %v1004, %v994
      %v1355 = vpack.c.b16 %v1005, %v995
      %v1356 = vpack.c.b16 %v1006, %v996
      %v1357 = vpack.c.b16 %v1007, %v997
      %v1358 = vpack.c.b16 %v1008, %v998
      %v1359 = vpack.c.b16 %v1009, %v999
      %v1360 = vpack.c.b16 %v1010, %v1000
      %v1361 = vpack.c.b16 %v1021, %v1011
      %v1362 = vpack.c.b16 %v1022, %v1012
      %v1363 = vpack.c.b16 %v1023, %v1013
      %v1364 = vpack.c.b16 %v1024, %v1014
      %v1365 = vpack.c.b16 %v1025, %v1015
      %v1366 = vpack.c.b16 %v1026, %v1016
      %v1367 = vpack.c.b16 %v1027, %v1017
      %v1368 = vpack.c.b16 %v1028, %v1018
      %v1369 = vpack.c.b16 %v1029, %v1019
      %v1370 = vpack.c.b16 %v1030, %v1020
      %v1371 = vpack.c.b16 %v1041, %v1031
      %v1372 = vpack.c.b16 %v1042, %v1032
      %v1373 = vpack.c.b16 %v1043, %v1033
      %v1374 = vpack.c.b16 %v1044, %v1034
      %v1375 = vpack.c.b16 %v1045, %v1035
      %v1376 = vpack.c.b16 %v1046, %v1036
      %v1377 = vpack.c.b16 %v1047, %v1037
      %v1378 = vpack.c.b16 %v1048, %v1038
      %v1379 = vpack.c.b16 %v1049, %v1039
      %v1380 = vpack.c.b16 %v1050, %v1040
      %v1381 = vpack.c.b16 %v1061, %v1051
      %v1382 = vpack.c.b16 %v1062, %v1052
      %v1383 = vpack.c.b16 %v1063, %v1053
      %v1384 = vpack.c.b16 %v1064, %v1054
      %v1385 = vpack.c.b16 %v1065, %v1055
      %v1386 = vpack.c.b16 %v1066, %v1056
      %v1387 = vpack.c.b16 %v1067, %v1057
      %v1388 = vpack.c.b16 %v1068, %v1058
      %v1389 = vpack.c.b16 %v1069, %v1059
      %v1390 = vpack.c.b16 %v1070, %v1060
      %v1391 = vpack.c.b16 %v1081, %v1071
      %v1392 = vpack.c.b16 %v1082, %v1072
      %v1393 = vpack.c.b16 %v1083, %v1073
      %v1394 = vpack.c.b16 %v1084, %v1074
      %v1395 = vpack.c.b16 %v1085, %v1075
      %v1396 = vpack.c.b16 %v1086, %v1076
      %v1397 = vpack.c.b16 %v1087, %v1077
      %v1398 = vpack.c.b16 %v1088, %v1078
      %v1399 = vpack.c.b16 %v1089, %v1079
      %v1400 = vpack.c.b16 %v1090, %v1080
      %v1401 = vpack.c.b16 %v1101, %v1091
      %v1402 = vpack.c.b16 %v1102, %v1092
      %v1403 = vpack.c.b16 %v1103, %v1093
      %v1404 = vpack.c.b16 %v1104, %v1094
      %v1405 = vpack.c.b16 %v1105, %v1095
      %v1406 = vpack.c.b16 %v1106, %v1096
      %v1407 = vpack.c.b16 %v1107, %v1097
      %v1408 = vpack.c.b16 %v1108, %v1098
      %v1409 = vpack.c.b16 %v1109, %v1099
      %v1410 = vpack.c.b16 %v1110, %v1100
      %v1411 = vpack.c.b16 %v1121, %v1111
      %v1412 = vpack.c.b16 %v1122, %v1112
      %v1413 = vpack.c.b16 %v1123, %v1113
      %v1414 = vpack.c.b16 %v1124, %v1114
      %v1415 = vpack.c.b16 %v1125, %v1115
      %v1416 = vpack.c.b16 %v1126, %v1116
      %v1417 = vpack.c.b16 %v1127, %v1117
      %v1418 = vpack.c.b16 %v1128, %v1118
      %v1419 = vpack.c.b16 %v1129, %v1119
      %v1420 = vpack.c.b16 %v1130, %v1120
      %v1421 = vpack.c.b16 %v1141, %v1131
      %v1422 = vpack.c.b16 %v1142, %v1132
      %v1423 = vpack.c.b16 %v1143, %v1133
      %v1424 = vpack.c.b16 %v1144, %v1134
      %v1425 = vpack.c.b16 %v1145, %v1135
      %v1426 = vpack.c.b16 %v1146, %v1136
      %v1427 = vpack.c.b16 %v1147, %v1137
      %v1428 = vpack.c.b16 %v1148, %v1138
      %v1429 = vpack.c.b16 %v1149, %v1139
      %v1430 = vpack.c.b16 %v1150, %v1140
      %v1431 = vpack.c.b16 %v1161, %v1151
      %v1432 = vpack.c.b16 %v1162, %v1152
      %v1433 = vpack.c.b16 %v1163, %v1153
      %v1434 = vpack.c.b16 %v1164, %v1154
      %v1435 = vpack.c.b16 %v1165, %v1155
      %v1436 = vpack.c.b16 %v1166, %v1156
      %v1437 = vpack.c.b16 %v1167, %v1157
      %v1438 = vpack.c.b16 %v1168, %v1158
      %v1439 = vpack.c.b16 %v1169, %v1159
      %v1440 = vpack.c.b16 %v1170, %v1160
      %v1441 = vpack.c.b16 %v1181, %v1171
      %v1442 = vpack.c.b16 %v1182, %v1172
      %v1443 = vpack.c.b16 %v1183, %v1173
      %v1444 = vpack.c.b16 %v1184, %v1174
      %v1445 = vpack.c.b16 %v1185, %v1175
      %v1446 = vpack.c.b16 %v1186, %v1176
      %v1447 = vpack.c.b16 %v1187, %v1177
      %v1448 = vpack.c.b16 %v1188, %v1178
      %v1449 = vpack.c.b16 %v1189, %v1179
      %v1450 = vpack.c.b16 %v1190, %v1180
      %v1451 = vpack.c.b16 %v1201, %v1191
      %v1452 = vpack.c.b16 %v1202, %v1192
      %v1453 = vpack.c.b16 %v1203, %v1193
      %v1454 = vpack.c.b16 %v1204, %v1194
      %v1455 = vpack.c.b16 %v1205, %v1195
      %v1456 = vpack.c.b16 %v1206, %v1196
      %v1457 = vpack.c.b16 %v1207, %v1197
      %v1458 = vpack.c.b16 %v1208, %v1198
      %v1459 = vpack.c.b16 %v1209, %v1199
      %v1460 = vpack.c.b16 %v1210, %v1200
      %v1461 = vpack.c.b16 %v1221, %v1211
      %v1462 = vpack.c.b16 %v1222, %v1212
      %v1463 = vpack.c.b16 %v1223, %v1213
      %v1464 = vpack.c.b16 %v1224, %v1214
      %v1465 = vpack.c.b16 %v1225, %v1215
      %v1466 = vpack.c.b16 %v1226, %v1216
      %v1467 = vpack.c.b16 %v1227, %v1217
      %v1468 = vpack.c.b16 %v1228, %v1218
      %v1469 = vpack.c.b16 %v1229, %v1219
      %v1470 = vpack.c.b16 %v1230, %v1220
      %1711 = vmatprep.subr.bf16.mxu0 %v1232
      %1712 = vmatpush1.bf16.msra.mxu0 %v1231
      %1713 = vmatprep.subr.bf16.mxu0 %v1242
      %1714 = vmatpush1.bf16.msra.mxu0 %v1241
      %1715 = vmatprep.subr.bf16.mxu0 %v1252
      %1716 = vmatpush1.bf16.msra.mxu0 %v1251
      %1717 = vmatprep.subr.bf16.mxu0 %v1262
      %1718 = vmatpush1.bf16.msra.mxu0 %v1261
      %1719 = vmatprep.subr.bf16.mxu0 %v1272
      %1720 = vmatpush1.bf16.msra.mxu0 %v1271
      %1721 = vmatprep.subr.bf16.mxu0 %v1282
      %1722 = vmatpush1.bf16.msra.mxu0 %v1281
      %1723 = vmatprep.subr.bf16.mxu0 %v1292
      %1724 = vmatpush1.bf16.msra.mxu0 %v1291
      %1725 = vmatprep.subr.bf16.mxu0 %v1302
      %1726 = vmatpush1.bf16.msra.mxu0 %v1301
      %1727 = vmatprep.subr.bf16.mxu0 %v1312
      %1728 = vmatpush1.bf16.msra.mxu0 %v1311
      %1729 = vmatprep.subr.bf16.mxu0 %v1322
      %1730 = vmatpush1.bf16.msra.mxu0 %v1321
      %1731 = vmatprep.subr.bf16.mxu0 %v1332
      %1732 = vmatpush1.bf16.msra.mxu0 %v1331
      %1733 = vmatprep.subr.bf16.mxu0 %v1342
      %1734 = vmatpush1.bf16.msra.mxu0 %v1341
      %1735 = vmatprep.subr.bf16.mxu0 %v1352
      %1736 = vmatpush1.bf16.msra.mxu0 %v1351
      %1737 = vmatprep.subr.bf16.mxu0 %v1362
      %1738 = vmatpush1.bf16.msra.mxu0 %v1361
      %1739 = vmatprep.subr.bf16.mxu0 %v1372
      %1740 = vmatpush1.bf16.msra.mxu0 %v1371
      %1741 = vmatprep.subr.bf16.mxu0 %v1382
      %1742 = vmatpush1.bf16.msra.mxu0 %v1381
      %1743 = vmatprep.mubr.bf16.mxu0 %v507
      %1744 = vmatmul.mubr.bf16.gmra.mrb[0].mxu0 %v499
      %v1745 = vpop.f32.mrb[0].mxu0
      %v1746 = vadd.f32 %v444, %v1745
      %v1747 = vpop.f32.mrb[0].mxu0
      %v1748 = vadd.f32 %v448, %v1747
      %v1749 = vpop.f32.mrb[0].mxu0
      %v1750 = vpop.f32.mrb[0].mxu0
      %1751 = vdwg.mxu0
      %1752 = vmatprep.subr.bf16.mxu0 %v1392
      %1753 = vmatpush1.bf16.msra.mxu0 %v1391
      %1754 = vmatprep.subr.bf16.mxu0 %v1402
      %1755 = vmatpush1.bf16.msra.mxu0 %v1401
      %1756 = vmatprep.subr.bf16.mxu0 %v1412
      %1757 = vmatpush1.bf16.msra.mxu0 %v1411
      %1758 = vmatprep.subr.bf16.mxu0 %v1422
      %1759 = vmatpush1.bf16.msra.mxu0 %v1421
      %1760 = vmatprep.subr.bf16.mxu0 %v1432
      %1761 = vmatpush1.bf16.msra.mxu0 %v1431
      %1762 = vmatprep.subr.bf16.mxu0 %v1442
      %1763 = vmatpush1.bf16.msra.mxu0 %v1441
      %1764 = vmatprep.subr.bf16.mxu0 %v1452
      %1765 = vmatpush1.bf16.msra.mxu0 %v1451
      %1766 = vmatprep.subr.bf16.mxu0 %v1462
      %1767 = vmatpush1.bf16.msra.mxu0 %v1461
      %1768 = vmatprep.subr.bf16.mxu0 0
      %1769 = vmatpush1.bf16.msra.mxu0 0
      %1770 = vmatprep.subr.bf16.mxu0 0
      %1771 = vmatpush1.bf16.msra.mxu0 0
      %1772 = vmatprep.subr.bf16.mxu0 0
      %1773 = vmatpush1.bf16.msra.mxu0 0
      %1774 = vmatprep.subr.bf16.mxu0 0
      %1775 = vmatpush1.bf16.msra.mxu0 0
      %1776 = vmatprep.subr.bf16.mxu0 0
      %1777 = vmatpush1.bf16.msra.mxu0 0
      %1778 = vmatprep.subr.bf16.mxu0 0
      %1779 = vmatpush1.bf16.msra.mxu0 0
      %1780 = vmatprep.subr.bf16.mxu0 0
      %1781 = vmatpush1.bf16.msra.mxu0 0
      %1782 = vmatprep.subr.bf16.mxu0 0
      %1783 = vmatpush1.bf16.msra.mxu0 0
      %1784 = vmatprep.mubr.bf16.mxu0 0
      %1785 = vmatmul.mubr.bf16.gmra.mrb[0].mxu0 %v506
      %v1786 = vpop.f32.mrb[0].mxu0
      %v1787 = vadd.f32 %v1746, %v1786
      %v1788 = vpop.f32.mrb[0].mxu0
      %v1789 = vadd.f32 %v1748, %v1788
      %v1790 = vpop.f32.mrb[0].mxu0
      %v1791 = vpop.f32.mrb[0].mxu0
      %1792 = vdwg.mxu0
      %1793 = vmatprep.subr.bf16.mxu0 %v1234
      %1794 = vmatpush1.bf16.msra.mxu0 %v1233
      %1795 = vmatprep.subr.bf16.mxu0 %v1244
      %1796 = vmatpush1.bf16.msra.mxu0 %v1243
      %1797 = vmatprep.subr.bf16.mxu0 %v1254
      %1798 = vmatpush1.bf16.msra.mxu0 %v1253
      %1799 = vmatprep.subr.bf16.mxu0 %v1264
      %1800 = vmatpush1.bf16.msra.mxu0 %v1263
      %1801 = vmatprep.subr.bf16.mxu0 %v1274
      %1802 = vmatpush1.bf16.msra.mxu0 %v1273
      %1803 = vmatprep.subr.bf16.mxu0 %v1284
      %1804 = vmatpush1.bf16.msra.mxu0 %v1283
      %1805 = vmatprep.subr.bf16.mxu0 %v1294
      %1806 = vmatpush1.bf16.msra.mxu0 %v1293
      %1807 = vmatprep.subr.bf16.mxu0 %v1304
      %1808 = vmatpush1.bf16.msra.mxu0 %v1303
      %1809 = vmatprep.subr.bf16.mxu0 %v1314
      %1810 = vmatpush1.bf16.msra.mxu0 %v1313
      %1811 = vmatprep.subr.bf16.mxu0 %v1324
      %1812 = vmatpush1.bf16.msra.mxu0 %v1323
      %1813 = vmatprep.subr.bf16.mxu0 %v1334
      %1814 = vmatpush1.bf16.msra.mxu0 %v1333
      %1815 = vmatprep.subr.bf16.mxu0 %v1344
      %1816 = vmatpush1.bf16.msra.mxu0 %v1343
      %1817 = vmatprep.subr.bf16.mxu0 %v1354
      %1818 = vmatpush1.bf16.msra.mxu0 %v1353
      %1819 = vmatprep.subr.bf16.mxu0 %v1364
      %1820 = vmatpush1.bf16.msra.mxu0 %v1363
      %1821 = vmatprep.subr.bf16.mxu0 %v1374
      %1822 = vmatpush1.bf16.msra.mxu0 %v1373
      %1823 = vmatprep.subr.bf16.mxu0 %v1384
      %1824 = vmatpush1.bf16.msra.mxu0 %v1383
      %1825 = vmatprep.mubr.bf16.mxu0 %v507
      %1826 = vmatmul.mubr.bf16.gmra.mrb[0].mxu0 %v499
      %v1827 = vpop.f32.mrb[0].mxu0
      %v1828 = vadd.f32 %v452, %v1827
      %v1829 = vpop.f32.mrb[0].mxu0
      %v1830 = vadd.f32 %v456, %v1829
      %v1831 = vpop.f32.mrb[0].mxu0
      %v1832 = vpop.f32.mrb[0].mxu0
      %1833 = vdwg.mxu0
      %1834 = vmatprep.subr.bf16.mxu0 %v1394
      %1835 = vmatpush1.bf16.msra.mxu0 %v1393
      %1836 = vmatprep.subr.bf16.mxu0 %v1404
      %1837 = vmatpush1.bf16.msra.mxu0 %v1403
      %1838 = vmatprep.subr.bf16.mxu0 %v1414
      %1839 = vmatpush1.bf16.msra.mxu0 %v1413
      %1840 = vmatprep.subr.bf16.mxu0 %v1424
      %1841 = vmatpush1.bf16.msra.mxu0 %v1423
      %1842 = vmatprep.subr.bf16.mxu0 %v1434
      %1843 = vmatpush1.bf16.msra.mxu0 %v1433
      %1844 = vmatprep.subr.bf16.mxu0 %v1444
      %1845 = vmatpush1.bf16.msra.mxu0 %v1443
      %1846 = vmatprep.subr.bf16.mxu0 %v1454
      %1847 = vmatpush1.bf16.msra.mxu0 %v1453
      %1848 = vmatprep.subr.bf16.mxu0 %v1464
      %1849 = vmatpush1.bf16.msra.mxu0 %v1463
      %1850 = vmatprep.subr.bf16.mxu0 0
      %1851 = vmatpush1.bf16.msra.mxu0 0
      %1852 = vmatprep.subr.bf16.mxu0 0
      %1853 = vmatpush1.bf16.msra.mxu0 0
      %1854 = vmatprep.subr.bf16.mxu0 0
      %1855 = vmatpush1.bf16.msra.mxu0 0
      %1856 = vmatprep.subr.bf16.mxu0 0
      %1857 = vmatpush1.bf16.msra.mxu0 0
      %1858 = vmatprep.subr.bf16.mxu0 0
      %1859 = vmatpush1.bf16.msra.mxu0 0
      %1860 = vmatprep.subr.bf16.mxu0 0
      %1861 = vmatpush1.bf16.msra.mxu0 0
      %1862 = vmatprep.subr.bf16.mxu0 0
      %1863 = vmatpush1.bf16.msra.mxu0 0
      %1864 = vmatprep.subr.bf16.mxu0 0
      %1865 = vmatpush1.bf16.msra.mxu0 0
      %1866 = vmatprep.mubr.bf16.mxu0 0
      %1867 = vmatmul.mubr.bf16.gmra.mrb[0].mxu0 %v506
      %v1868 = vpop.f32.mrb[0].mxu0
      %v1869 = vadd.f32 %v1828, %v1868
      %v1870 = vpop.f32.mrb[0].mxu0
      %v1871 = vadd.f32 %v1830, %v1870
      %v1872 = vpop.f32.mrb[0].mxu0
      %v1873 = vpop.f32.mrb[0].mxu0
      %1874 = vdwg.mxu0
      %1875 = vmatprep.subr.bf16.mxu0 %v1236
      %1876 = vmatpush1.bf16.msra.mxu0 %v1235
      %1877 = vmatprep.subr.bf16.mxu0 %v1246
      %1878 = vmatpush1.bf16.msra.mxu0 %v1245
      %1879 = vmatprep.subr.bf16.mxu0 %v1256
      %1880 = vmatpush1.bf16.msra.mxu0 %v1255
      %1881 = vmatprep.subr.bf16.mxu0 %v1266
      %1882 = vmatpush1.bf16.msra.mxu0 %v1265
      %1883 = vmatprep.subr.bf16.mxu0 %v1276
      %1884 = vmatpush1.bf16.msra.mxu0 %v1275
      %1885 = vmatprep.subr.bf16.mxu0 %v1286
      %1886 = vmatpush1.bf16.msra.mxu0 %v1285
      %1887 = vmatprep.subr.bf16.mxu0 %v1296
      %1888 = vmatpush1.bf16.msra.mxu0 %v1295
      %1889 = vmatprep.subr.bf16.mxu0 %v1306
      %1890 = vmatpush1.bf16.msra.mxu0 %v1305
      %1891 = vmatprep.subr.bf16.mxu0 %v1316
      %1892 = vmatpush1.bf16.msra.mxu0 %v1315
      %1893 = vmatprep.subr.bf16.mxu0 %v1326
      %1894 = vmatpush1.bf16.msra.mxu0 %v1325
      %1895 = vmatprep.subr.bf16.mxu0 %v1336
      %1896 = vmatpush1.bf16.msra.mxu0 %v1335
      %1897 = vmatprep.subr.bf16.mxu0 %v1346
      %1898 = vmatpush1.bf16.msra.mxu0 %v1345
      %1899 = vmatprep.subr.bf16.mxu0 %v1356
      %1900 = vmatpush1.bf16.msra.mxu0 %v1355
      %1901 = vmatprep.subr.bf16.mxu0 %v1366
      %1902 = vmatpush1.bf16.msra.mxu0 %v1365
      %1903 = vmatprep.subr.bf16.mxu0 %v1376
      %1904 = vmatpush1.bf16.msra.mxu0 %v1375
      %1905 = vmatprep.subr.bf16.mxu0 %v1386
      %1906 = vmatpush1.bf16.msra.mxu0 %v1385
      %1907 = vmatprep.mubr.bf16.mxu0 %v507
      %1908 = vmatmul.mubr.bf16.gmra.mrb[0].mxu0 %v499
      %v1909 = vpop.f32.mrb[0].mxu0
      %v1910 = vadd.f32 %v460, %v1909
      %v1911 = vpop.f32.mrb[0].mxu0
      %v1912 = vadd.f32 %v464, %v1911
      %v1913 = vpop.f32.mrb[0].mxu0
      %v1914 = vpop.f32.mrb[0].mxu0
      %1915 = vdwg.mxu0
      %1916 = vmatprep.subr.bf16.mxu0 %v1396
      %1917 = vmatpush1.bf16.msra.mxu0 %v1395
      %1918 = vmatprep.subr.bf16.mxu0 %v1406
      %1919 = vmatpush1.bf16.msra.mxu0 %v1405
      %1920 = vmatprep.subr.bf16.mxu0 %v1416
      %1921 = vmatpush1.bf16.msra.mxu0 %v1415
      %1922 = vmatprep.subr.bf16.mxu0 %v1426
      %1923 = vmatpush1.bf16.msra.mxu0 %v1425
      %1924 = vmatprep.subr.bf16.mxu0 %v1436
      %1925 = vmatpush1.bf16.msra.mxu0 %v1435
      %1926 = vmatprep.subr.bf16.mxu0 %v1446
      %1927 = vmatpush1.bf16.msra.mxu0 %v1445
      %1928 = vmatprep.subr.bf16.mxu0 %v1456
      %1929 = vmatpush1.bf16.msra.mxu0 %v1455
      %1930 = vmatprep.subr.bf16.mxu0 %v1466
      %1931 = vmatpush1.bf16.msra.mxu0 %v1465
      %1932 = vmatprep.subr.bf16.mxu0 0
      %1933 = vmatpush1.bf16.msra.mxu0 0
      %1934 = vmatprep.subr.bf16.mxu0 0
      %1935 = vmatpush1.bf16.msra.mxu0 0
      %1936 = vmatprep.subr.bf16.mxu0 0
      %1937 = vmatpush1.bf16.msra.mxu0 0
      %1938 = vmatprep.subr.bf16.mxu0 0
      %1939 = vmatpush1.bf16.msra.mxu0 0
      %1940 = vmatprep.subr.bf16.mxu0 0
      %1941 = vmatpush1.bf16.msra.mxu0 0
      %1942 = vmatprep.subr.bf16.mxu0 0
      %1943 = vmatpush1.bf16.msra.mxu0 0
      %1944 = vmatprep.subr.bf16.mxu0 0
      %1945 = vmatpush1.bf16.msra.mxu0 0
      %1946 = vmatprep.subr.bf16.mxu0 0
      %1947 = vmatpush1.bf16.msra.mxu0 0
      %1948 = vmatprep.mubr.bf16.mxu0 0
      %1949 = vmatmul.mubr.bf16.gmra.mrb[0].mxu0 %v506
      %v1950 = vpop.f32.mrb[0].mxu0
      %v1951 = vadd.f32 %v1910, %v1950
      %v1952 = vpop.f32.mrb[0].mxu0
      %v1953 = vadd.f32 %v1912, %v1952
      %v1954 = vpop.f32.mrb[0].mxu0
      %v1955 = vpop.f32.mrb[0].mxu0
      %1956 = vdwg.mxu0
      %1957 = vmatprep.subr.bf16.mxu0 %v1238
      %1958 = vmatpush1.bf16.msra.mxu0 %v1237
      %1959 = vmatprep.subr.bf16.mxu0 %v1248
      %1960 = vmatpush1.bf16.msra.mxu0 %v1247
      %1961 = vmatprep.subr.bf16.mxu0 %v1258
      %1962 = vmatpush1.bf16.msra.mxu0 %v1257
      %1963 = vmatprep.subr.bf16.mxu0 %v1268
      %1964 = vmatpush1.bf16.msra.mxu0 %v1267
      %1965 = vmatprep.subr.bf16.mxu0 %v1278
      %1966 = vmatpush1.bf16.msra.mxu0 %v1277
      %1967 = vmatprep.subr.bf16.mxu0 %v1288
      %1968 = vmatpush1.bf16.msra.mxu0 %v1287
      %1969 = vmatprep.subr.bf16.mxu0 %v1298
      %1970 = vmatpush1.bf16.msra.mxu0 %v1297
      %1971 = vmatprep.subr.bf16.mxu0 %v1308
      %1972 = vmatpush1.bf16.msra.mxu0 %v1307
      %1973 = vmatprep.subr.bf16.mxu0 %v1318
      %1974 = vmatpush1.bf16.msra.mxu0 %v1317
      %1975 = vmatprep.subr.bf16.mxu0 %v1328
      %1976 = vmatpush1.bf16.msra.mxu0 %v1327
      %1977 = vmatprep.subr.bf16.mxu0 %v1338
      %1978 = vmatpush1.bf16.msra.mxu0 %v1337
      %1979 = vmatprep.subr.bf16.mxu0 %v1348
      %1980 = vmatpush1.bf16.msra.mxu0 %v1347
      %1981 = vmatprep.subr.bf16.mxu0 %v1358
      %1982 = vmatpush1.bf16.msra.mxu0 %v1357
      %1983 = vmatprep.subr.bf16.mxu0 %v1368
      %1984 = vmatpush1.bf16.msra.mxu0 %v1367
      %1985 = vmatprep.subr.bf16.mxu0 %v1378
      %1986 = vmatpush1.bf16.msra.mxu0 %v1377
      %1987 = vmatprep.subr.bf16.mxu0 %v1388
      %1988 = vmatpush1.bf16.msra.mxu0 %v1387
      %1989 = vmatprep.mubr.bf16.mxu0 %v507
      %1990 = vmatmul.mubr.bf16.gmra.mrb[0].mxu0 %v499
      %v1991 = vpop.f32.mrb[0].mxu0
      %v1992 = vadd.f32 %v468, %v1991
      %v1993 = vpop.f32.mrb[0].mxu0
      %v1994 = vadd.f32 %v472, %v1993
      %v1995 = vpop.f32.mrb[0].mxu0
      %v1996 = vpop.f32.mrb[0].mxu0
      %1997 = vdwg.mxu0
      %1998 = vmatprep.subr.bf16.mxu0 %v1398
      %1999 = vmatpush1.bf16.msra.mxu0 %v1397
      %2000 = vmatprep.subr.bf16.mxu0 %v1408
      %2001 = vmatpush1.bf16.msra.mxu0 %v1407
      %2002 = vmatprep.subr.bf16.mxu0 %v1418
      %2003 = vmatpush1.bf16.msra.mxu0 %v1417
      %2004 = vmatprep.subr.bf16.mxu0 %v1428
      %2005 = vmatpush1.bf16.msra.mxu0 %v1427
      %2006 = vmatprep.subr.bf16.mxu0 %v1438
      %2007 = vmatpush1.bf16.msra.mxu0 %v1437
      %2008 = vmatprep.subr.bf16.mxu0 %v1448
      %2009 = vmatpush1.bf16.msra.mxu0 %v1447
      %2010 = vmatprep.subr.bf16.mxu0 %v1458
      %2011 = vmatpush1.bf16.msra.mxu0 %v1457
      %2012 = vmatprep.subr.bf16.mxu0 %v1468
      %2013 = vmatpush1.bf16.msra.mxu0 %v1467
      %2014 = vmatprep.subr.bf16.mxu0 0
      %2015 = vmatpush1.bf16.msra.mxu0 0
      %2016 = vmatprep.subr.bf16.mxu0 0
      %2017 = vmatpush1.bf16.msra.mxu0 0
      %2018 = vmatprep.subr.bf16.mxu0 0
      %2019 = vmatpush1.bf16.msra.mxu0 0
      %2020 = vmatprep.subr.bf16.mxu0 0
      %2021 = vmatpush1.bf16.msra.mxu0 0
      %2022 = vmatprep.subr.bf16.mxu0 0
      %2023 = vmatpush1.bf16.msra.mxu0 0
      %2024 = vmatprep.subr.bf16.mxu0 0
      %2025 = vmatpush1.bf16.msra.mxu0 0
      %2026 = vmatprep.subr.bf16.mxu0 0
      %2027 = vmatpush1.bf16.msra.mxu0 0
      %2028 = vmatprep.subr.bf16.mxu0 0
      %2029 = vmatpush1.bf16.msra.mxu0 0
      %2030 = vmatprep.mubr.bf16.mxu0 0
      %2031 = vmatmul.mubr.bf16.gmra.mrb[0].mxu0 %v506
      %v2032 = vpop.f32.mrb[0].mxu0
      %v2033 = vadd.f32 %v1992, %v2032
      %v2034 = vpop.f32.mrb[0].mxu0
      %v2035 = vadd.f32 %v1994, %v2034
      %v2036 = vpop.f32.mrb[0].mxu0
      %v2037 = vpop.f32.mrb[0].mxu0
      %2038 = vdwg.mxu0
      %2039 = vmatprep.subr.bf16.mxu0 %v1240
      %2040 = vmatpush1.bf16.msra.mxu0 %v1239
      %2041 = vmatprep.subr.bf16.mxu0 %v1250
      %2042 = vmatpush1.bf16.msra.mxu0 %v1249
      %2043 = vmatprep.subr.bf16.mxu0 %v1260
      %2044 = vmatpush1.bf16.msra.mxu0 %v1259
      %2045 = vmatprep.subr.bf16.mxu0 %v1270
      %2046 = vmatpush1.bf16.msra.mxu0 %v1269
      %2047 = vmatprep.subr.bf16.mxu0 %v1280
      %2048 = vmatpush1.bf16.msra.mxu0 %v1279
      %2049 = vmatprep.subr.bf16.mxu0 %v1290
      %2050 = vmatpush1.bf16.msra.mxu0 %v1289
      %2051 = vmatprep.subr.bf16.mxu0 %v1300
      %2052 = vmatpush1.bf16.msra.mxu0 %v1299
      %2053 = vmatprep.subr.bf16.mxu0 %v1310
      %2054 = vmatpush1.bf16.msra.mxu0 %v1309
      %2055 = vmatprep.subr.bf16.mxu0 %v1320
      %2056 = vmatpush1.bf16.msra.mxu0 %v1319
      %2057 = vmatprep.subr.bf16.mxu0 %v1330
      %2058 = vmatpush1.bf16.msra.mxu0 %v1329
      %2059 = vmatprep.subr.bf16.mxu0 %v1340
      %2060 = vmatpush1.bf16.msra.mxu0 %v1339
      %2061 = vmatprep.subr.bf16.mxu0 %v1350
      %2062 = vmatpush1.bf16.msra.mxu0 %v1349
      %2063 = vmatprep.subr.bf16.mxu0 %v1360
      %2064 = vmatpush1.bf16.msra.mxu0 %v1359
      %2065 = vmatprep.subr.bf16.mxu0 %v1370
      %2066 = vmatpush1.bf16.msra.mxu0 %v1369
      %2067 = vmatprep.subr.bf16.mxu0 %v1380
      %2068 = vmatpush1.bf16.msra.mxu0 %v1379
      %2069 = vmatprep.subr.bf16.mxu0 %v1390
      %2070 = vmatpush1.bf16.msra.mxu0 %v1389
      %2071 = vmatprep.mubr.bf16.mxu0 %v507
      %2072 = vmatmul.mubr.bf16.gmra.mrb[0].mxu0 %v499
      %v2073 = vpop.f32.mrb[0].mxu0
      %v2074 = vadd.f32 %v476, %v2073
      %v2075 = vpop.f32.mrb[0].mxu0
      %v2076 = vadd.f32 %v480, %v2075
      %v2077 = vpop.f32.mrb[0].mxu0
      %v2078 = vpop.f32.mrb[0].mxu0
      %2079 = vdwg.mxu0
      %2080 = vmatprep.subr.bf16.mxu0 %v1400
      %2081 = vmatpush1.bf16.msra.mxu0 %v1399
      %2082 = vmatprep.subr.bf16.mxu0 %v1410
      %2083 = vmatpush1.bf16.msra.mxu0 %v1409
      %2084 = vmatprep.subr.bf16.mxu0 %v1420
      %2085 = vmatpush1.bf16.msra.mxu0 %v1419
      %2086 = vmatprep.subr.bf16.mxu0 %v1430
      %2087 = vmatpush1.bf16.msra.mxu0 %v1429
      %2088 = vmatprep.subr.bf16.mxu0 %v1440
      %2089 = vmatpush1.bf16.msra.mxu0 %v1439
      %2090 = vmatprep.subr.bf16.mxu0 %v1450
      %2091 = vmatpush1.bf16.msra.mxu0 %v1449
      %2092 = vmatprep.subr.bf16.mxu0 %v1460
      %2093 = vmatpush1.bf16.msra.mxu0 %v1459
      %2094 = vmatprep.subr.bf16.mxu0 %v1470
      %2095 = vmatpush1.bf16.msra.mxu0 %v1469
      %2096 = vmatprep.subr.bf16.mxu0 0
      %2097 = vmatpush1.bf16.msra.mxu0 0
      %2098 = vmatprep.subr.bf16.mxu0 0
      %2099 = vmatpush1.bf16.msra.mxu0 0
      %2100 = vmatprep.subr.bf16.mxu0 0
      %2101 = vmatpush1.bf16.msra.mxu0 0
      %2102 = vmatprep.subr.bf16.mxu0 0
      %2103 = vmatpush1.bf16.msra.mxu0 0
      %2104 = vmatprep.subr.bf16.mxu0 0
      %2105 = vmatpush1.bf16.msra.mxu0 0
      %2106 = vmatprep.subr.bf16.mxu0 0
      %2107 = vmatpush1.bf16.msra.mxu0 0
      %2108 = vmatprep.subr.bf16.mxu0 0
      %2109 = vmatpush1.bf16.msra.mxu0 0
      %2110 = vmatprep.subr.bf16.mxu0 0
      %2111 = vmatpush1.bf16.msra.mxu0 0
      %2112 = vmatprep.mubr.bf16.mxu0 0
      %2113 = vmatmul.mubr.bf16.gmra.mrb[0].mxu0 %v506
      %v2114 = vpop.f32.mrb[0].mxu0
      %v2115 = vadd.f32 %v2074, %v2114
      %v2116 = vpop.f32.mrb[0].mxu0
      %v2117 = vadd.f32 %v2076, %v2116
      %v2118 = vpop.f32.mrb[0].mxu0
      %v2119 = vpop.f32.mrb[0].mxu0
      %2120 = vdwg.mxu0
      %v2121 = vmax.f32 %v1787, 0.0
      %v2122 = vmax.f32 %v1789, 0.0
      %v2123 = vmax.f32 %v1869, 0.0
      %v2124 = vmax.f32 %v1871, 0.0
      %v2125 = vmax.f32 %v1951, 0.0
      %v2126 = vmax.f32 %v1953, 0.0
      %v2127 = vmax.f32 %v2033, 0.0
      %v2128 = vmax.f32 %v2035, 0.0
      %v2129 = vmax.f32 %v2115, 0.0
      %v2130 = vmax.f32 %v2117, 0.0
      %vm2131 = vcmask 1043456
      %v2132 = vsel %vm2131, %v2121, 0.0
      %v2133 = vrot.slane %v2132, 4
      %v2134 = vadd.f32 %v2132, %v2133
      %v2135 = vrot.slane %v2134, 2
      %v2136 = vadd.f32 %v2134, %v2135
      %v2137 = vrot.slane %v2136, 1
      %v2138 = vadd.f32 %v2136, %v2137
      %v2139 = vsel %vm2131, %v2122, 0.0
      %v2140 = vrot.slane %v2139, 4
      %v2141 = vadd.f32 %v2139, %v2140
      %v2142 = vrot.slane %v2141, 2
      %v2143 = vadd.f32 %v2141, %v2142
      %v2144 = vrot.slane %v2143, 1
      %v2145 = vadd.f32 %v2143, %v2144
      %v2146 = vsel %vm2131, %v2123, 0.0
      %v2147 = vrot.slane %v2146, 4
      %v2148 = vadd.f32 %v2146, %v2147
      %v2149 = vrot.slane %v2148, 2
      %v2150 = vadd.f32 %v2148, %v2149
      %v2151 = vrot.slane %v2150, 1
      %v2152 = vadd.f32 %v2150, %v2151
      %v2153 = vsel %vm2131, %v2124, 0.0
      %v2154 = vrot.slane %v2153, 4
      %v2155 = vadd.f32 %v2153, %v2154
      %v2156 = vrot.slane %v2155, 2
      %v2157 = vadd.f32 %v2155, %v2156
      %v2158 = vrot.slane %v2157, 1
      %v2159 = vadd.f32 %v2157, %v2158
      %v2160 = vsel %vm2131, %v2125, 0.0
      %v2161 = vrot.slane %v2160, 4
      %v2162 = vadd.f32 %v2160, %v2161
      %v2163 = vrot.slane %v2162, 2
      %v2164 = vadd.f32 %v2162, %v2163
      %v2165 = vrot.slane %v2164, 1
      %v2166 = vadd.f32 %v2164, %v2165
      %v2167 = vsel %vm2131, %v2126, 0.0
      %v2168 = vrot.slane %v2167, 4
      %v2169 = vadd.f32 %v2167, %v2168
      %v2170 = vrot.slane %v2169, 2
      %v2171 = vadd.f32 %v2169, %v2170
      %v2172 = vrot.slane %v2171, 1
      %v2173 = vadd.f32 %v2171, %v2172
      %v2174 = vsel %vm2131, %v2127, 0.0
      %v2175 = vrot.slane %v2174, 4
      %v2176 = vadd.f32 %v2174, %v2175
      %v2177 = vrot.slane %v2176, 2
      %v2178 = vadd.f32 %v2176, %v2177
      %v2179 = vrot.slane %v2178, 1
      %v2180 = vadd.f32 %v2178, %v2179
      %v2181 = vsel %vm2131, %v2128, 0.0
      %v2182 = vrot.slane %v2181, 4
      %v2183 = vadd.f32 %v2181, %v2182
      %v2184 = vrot.slane %v2183, 2
      %v2185 = vadd.f32 %v2183, %v2184
      %v2186 = vrot.slane %v2185, 1
      %v2187 = vadd.f32 %v2185, %v2186
      %v2188 = vsel %vm2131, %v2129, 0.0
      %v2189 = vrot.slane %v2188, 4
      %v2190 = vadd.f32 %v2188, %v2189
      %v2191 = vrot.slane %v2190, 2
      %v2192 = vadd.f32 %v2190, %v2191
      %v2193 = vrot.slane %v2192, 1
      %v2194 = vadd.f32 %v2192, %v2193
      %v2195 = vsel %vm2131, %v2130, 0.0
      %v2196 = vrot.slane %v2195, 4
      %v2197 = vadd.f32 %v2195, %v2196
      %v2198 = vrot.slane %v2197, 2
      %v2199 = vadd.f32 %v2197, %v2198
      %v2200 = vrot.slane %v2199, 1
      %v2201 = vadd.f32 %v2199, %v2200
      %p2202 = scmp.eq.s32.totalorder %s19, 0
      // Predicated region
      $region33: #{multi_branch_forward.4} parent=31 // pred_check
        %p2203 = pneg %p2202
      $region34: #{multi_branch_forward.4} parent=31 // pred_check_branch
        %2205 = sbr.rel (%p2203) target = $region36
      $region35: #{multi_branch_forward.4} parent=31 // pred_region
        %2206 = vst [vmem:[%s194] sm:$0xff] 0.0
        %v2207 = vlaneseq
        %vm2208 = vcmp.ge.s32.totalorder %v2207, 0
        %vm2209 = vcmp.lt.s32.totalorder %v2207, 256
        %vm2210 = vmand %vm2208, %vm2209
        %2211 = vst.msk [vmem:[%s194 + $0x8] sm:$0x3] %vm2210, 0.0
      $region36: #{multi_branch_forward.4} parent=31 // pred_fallthru
        _
      %v2212 = vld [vmem:[%s194] sm:$0xff]
      %v2213 = vld [vmem:[%s194 + $0x8] sm:$0x3]
      %v2224 = vcombine.low %v2138, %v2145
      %v2225 = vcombine.low %v2152, %v2159
      %v2226 = vcombine.low %v2166, %v2173
      %v2227 = vcombine.low %v2180, %v2187
      %v2229 = vunpack.c.l.s4 1966171168
      %v2230 = vunpack.c.0.s8 %v2229
      %v2231 = vlaneseq
      %v2232 = vshrl.u32 %v2231, 7
      %v2233 = vsub.s32 %v2230, %v2232
      %v2234 = vrot.slane %v2224, %v2233
      %v2236 = vunpack.c.l.s4 1966171168
      %v2237 = vunpack.c.0.s8 %v2236
      %v2238 = vlaneseq
      %v2239 = vshrl.u32 %v2238, 7
      %v2240 = vsub.s32 %v2237, %v2239
      %v2241 = vrot.slane %v2225, %v2240
      %v2243 = vunpack.c.l.s4 1966171168
      %v2244 = vunpack.c.0.s8 %v2243
      %v2245 = vlaneseq
      %v2246 = vshrl.u32 %v2245, 7
      %v2247 = vsub.s32 %v2244, %v2246
      %v2248 = vrot.slane %v2226, %v2247
      %v2250 = vunpack.c.l.s4 1966171168
      %v2251 = vunpack.c.0.s8 %v2250
      %v2252 = vlaneseq
      %v2253 = vshrl.u32 %v2252, 7
      %v2254 = vsub.s32 %v2251, %v2253
      %v2255 = vrot.slane %v2227, %v2254
      %v2256 = vcombine.low %v2234, %v2241
      %v2257 = vcombine.low %v2248, %v2255
      %v2259 = vunpack.c.l.s4 1966171168
      %v2260 = vunpack.c.0.s8 %v2259
      %v2261 = vlaneseq
      %v2262 = vshrl.u32 %v2261, 7
      %v2263 = vsub.s32 %v2260, %v2262
      %v2264 = vrot.slane %v2256, %v2263
      %v2266 = vunpack.c.l.s4 1966171168
      %v2267 = vunpack.c.0.s8 %v2266
      %v2268 = vlaneseq
      %v2269 = vshrl.u32 %v2268, 7
      %v2270 = vsub.s32 %v2267, %v2269
      %v2271 = vrot.slane %v2257, %v2270
      %v2272 = vcombine.low %v2264, %v2271
      %v2273 = vcombine.low %v2194, %v2201
      %v2275 = vunpack.c.l.s4 1966171168
      %v2276 = vunpack.c.0.s8 %v2275
      %v2277 = vlaneseq
      %v2278 = vshrl.u32 %v2277, 7
      %v2279 = vsub.s32 %v2276, %v2278
      %v2280 = vrot.slane %v2273, %v2279
      %v2282 = vunpack.c.l.s4 1966171168
      %v2283 = vunpack.c.0.s8 %v2282
      %v2284 = vlaneseq
      %v2285 = vshrl.u32 %v2284, 7
      %v2286 = vsub.s32 %v2283, %v2285
      %v2287 = vrot.slane %v2280, %v2286
      %v2290 = vadd.f32 %v2212, %v2272
      %v2291 = vadd.f32 %v2213, %v2287
      %2292 = vst [vmem:[%s194] sm:$0xff] %v2290
      %v2293 = vlaneseq
      %vm2294 = vcmp.ge.s32.totalorder %v2293, 0
      %vm2295 = vcmp.lt.s32.totalorder %v2293, 256
      %vm2296 = vmand %vm2294, %vm2295
      %2297 = vst.msk [vmem:[%s194 + $0x8] sm:$0x3] %vm2296, %v2291
      // Predicated region
      $region37: #{multi_branch_forward.4} parent=31 // pred_check
        %p2298 = pneg %p2202
      $region38: #{multi_branch_forward.4} parent=31 // pred_check_branch
        %2300 = sbr.rel (%p2298) target = $region40
      $region39: #{multi_branch_forward.4} parent=31 // pred_region
        %v2301 = vld [vmem:[%s194] sm:$0xff]
        %v2302 = vld [vmem:[%s194 + $0x8] sm:$0x3]
        %v2303 = vmul.f32 %v2301, 0.25
        %v2304 = vmul.f32 %v2302, 0.25
        %2305 = vst [vmem:[%s194] sm:$0xff] %v2303
        %2306 = vst.msk [vmem:[%s194 + $0x8] sm:$0x3] %vm2296, %v2304
      $region40: #{multi_branch_forward.4} parent=31 // pred_fallthru
        _
      %p2307 = scmp.lt.s32.totalorder %s18, 1
      %s2308 = scalar_select %p2307, %s18, 1
      %s2309 = smul.addr %s2308, 10
      %s2310 = scalar_lea.vmem %s3, %s2309
      // Predicated region
      $region41: #{multi_branch_forward.4} parent=31 // pred_check
        %p2311 = pneg %p114
      $region42: #{multi_branch_forward.4} parent=31 // pred_check_branch
        %2313 = sbr.rel (%p2311) target = $region44
      $region43: #{multi_branch_forward.4} parent=31 // pred_region
        _
      $region44: #{multi_branch_forward.4} parent=31 // pred_fallthru
        _
    $region32: #{multi_branch_forward.4} parent=5 // pred_fallthru
      _
    %p2314 = scmp.le.s32.totalorder 2, %s9
    // Predicated region
    $region45: #{multi_branch_forward.4} parent=5 // pred_check
      %p2315 = pneg %p2314
    $region46: #{multi_branch_forward.4} parent=5 // pred_check_branch
      %2317 = sbr.rel (%p2315) target = $region48
    $region47: #{multi_branch_forward.4} parent=5 // pred_region
      %s2318 = ssub.s32 %s9, 2
      // Predicated region
      $region49: #{multi_branch_forward.4} parent=47 // pred_check
        %p2319 = pneg %p120
      $region50: #{multi_branch_forward.4} parent=47 // pred_check_branch
        %2321 = sbr.rel (%p2319) target = $region52
      $region51: #{multi_branch_forward.4} parent=47 // pred_region
        %p2322 = scmp.lt.s32.totalorder %s20, 1
        %s2323 = scalar_select %p2322, %s20, 1
        %s2324 = smul.addr %s2323, 10
        %s2325 = scalar_lea.vmem %s3, %s2324
      $region52: #{multi_branch_forward.4} parent=47 // pred_fallthru
        _
    $region48: #{multi_branch_forward.4} parent=5 // pred_fallthru
      _
  $region6: #{multi_branch_forward.4} parent=0 // loop_footer
    %s13 = sadd.s32 1, %s9
  $region7: #{multi_branch_forward.4} parent=0 // loop_footer_branch
    %8 = sbr.rel target = $region3
  $region8: #{multi_branch_forward.4} parent=0 // loop_exit
    _

// kernel: multi_branch_forward.5
$region0: #{multi_branch_forward.5}
  #allocation0 [shape = 'u32[]', space=smem, size = 0x4, offset = 0x4, fixed_abs, tag = 'smem constant byte address 0x4 - core index']
  #allocation1 [shape = 'u32[144,128]{1,0:T(1,128)}', space=vmem, size = 0x12000, scoped, tag = 'internal scratch']
  #allocation2 [shape = 'f32[1,1]{1,0:T(1,128)S(1)}', space=vmem, size = 0x200, scoped, tag = 'scoped memory for multi_branch_forward.5']
  %s0 = inlined_call_operand.vmem [shape: f32[2,1280], index: 0, kind: input, shape index: {}]
  %s1 = inlined_call_operand.vmem [shape: f32[2,1280], index: 1, kind: input, shape index: {}]
  %s2 = inlined_call_operand.vmem [shape: f32[1280,256], index: 2, kind: input, shape index: {}]
  %s3 = inlined_call_operand.vmem [shape: f32[1,256], index: 3, kind: input, shape index: {}]
  %s4 = inlined_call_operand.vmem [shape: f32[256,1280], index: 4, kind: input, shape index: {}]
  %s5 = inlined_call_operand.vmem [shape: f32[1,1280], index: 5, kind: input, shape index: {}]
  %s6 = inlined_call_operand.vmem [shape: f32[1280,256], index: 6, kind: input, shape index: {}]
  %s7 = inlined_call_operand.vmem [shape: f32[1,256], index: 7, kind: input, shape index: {}]
  %s8 = inlined_call_operand.vmem [shape: f32[256,1280], index: 8, kind: input, shape index: {}]
  %s9 = inlined_call_operand.vmem [shape: f32[1,1280], index: 9, kind: input, shape index: {}]
  %s10 = inlined_call_operand.vmem [shape: f32[1280,256], index: 10, kind: input, shape index: {}]
  %s11 = inlined_call_operand.vmem [shape: f32[1280,256], index: 11, kind: input, shape index: {}]
  %s12 = inlined_call_operand.vmem [shape: f32[1,256], index: 12, kind: input, shape index: {}]
  %s13 = inlined_call_operand.vmem [shape: f32[256,1], index: 13, kind: input, shape index: {}]
  %s14 = inlined_call_operand.<no memory space> [shape: f32[1,1], index: 14, kind: input, shape index: {}]
  %s15 = inlined_call_operand.vmem [shape: f32[2,1], index: 15, kind: output, shape index: {}]
  %s16 = sld [smem:[#allocation0]]
  $region70: #{multi_branch_forward.5} parent=0
    _
  %s18 = ssub.s32 1, %s16
  %s19 = scalar_select 0, %s18, %s16
  %v20 = vstv %s14
  %21 = vst [vmem:[#allocation2] sm:$0x1] %v20
  // Predicated region
  $region2: #{multi_branch_forward.5} parent=0 // pred_check
    _
  $region3: #{multi_branch_forward.5} parent=0 // pred_check_branch
    %23 = sbr.rel (0) target = $region5
  $region4: #{multi_branch_forward.5} parent=0 // pred_region
    _
  $region5: #{multi_branch_forward.5} parent=0 // pred_fallthru
    _
  // Predicated region
  $region6: #{multi_branch_forward.5} parent=0 // pred_check
    _
  $region7: #{multi_branch_forward.5} parent=0 // pred_check_branch
    %25 = sbr.rel (0) target = $region9
  $region8: #{multi_branch_forward.5} parent=0 // pred_region
    _
  $region9: #{multi_branch_forward.5} parent=0 // pred_fallthru
    _
  // Predicated region
  $region10: #{multi_branch_forward.5} parent=0 // pred_check
    _
  $region11: #{multi_branch_forward.5} parent=0 // pred_check_branch
    %27 = sbr.rel (0) target = $region13
  $region12: #{multi_branch_forward.5} parent=0 // pred_region
    _
  $region13: #{multi_branch_forward.5} parent=0 // pred_fallthru
    _
  // Predicated region
  $region14: #{multi_branch_forward.5} parent=0 // pred_check
    _
  $region15: #{multi_branch_forward.5} parent=0 // pred_check_branch
    %29 = sbr.rel (0) target = $region17
  $region16: #{multi_branch_forward.5} parent=0 // pred_region
    _
  $region17: #{multi_branch_forward.5} parent=0 // pred_fallthru
    _
  // Predicated region
  $region18: #{multi_branch_forward.5} parent=0 // pred_check
    _
  $region19: #{multi_branch_forward.5} parent=0 // pred_check_branch
    %31 = sbr.rel (0) target = $region21
  $region20: #{multi_branch_forward.5} parent=0 // pred_region
    _
  $region21: #{multi_branch_forward.5} parent=0 // pred_fallthru
    _
  // Predicated region
  $region22: #{multi_branch_forward.5} parent=0 // pred_check
    _
  $region23: #{multi_branch_forward.5} parent=0 // pred_check_branch
    %33 = sbr.rel (0) target = $region25
  $region24: #{multi_branch_forward.5} parent=0 // pred_region
    _
  $region25: #{multi_branch_forward.5} parent=0 // pred_fallthru
    _
  // Predicated region
  $region26: #{multi_branch_forward.5} parent=0 // pred_check
    _
  $region27: #{multi_branch_forward.5} parent=0 // pred_check_branch
    %35 = sbr.rel (0) target = $region29
  $region28: #{multi_branch_forward.5} parent=0 // pred_region
    _
  $region29: #{multi_branch_forward.5} parent=0 // pred_fallthru
    _
  // Predicated region
  $region30: #{multi_branch_forward.5} parent=0 // pred_check
    _
  $region31: #{multi_branch_forward.5} parent=0 // pred_check_branch
    %37 = sbr.rel (0) target = $region33
  $region32: #{multi_branch_forward.5} parent=0 // pred_region
    _
  $region33: #{multi_branch_forward.5} parent=0 // pred_fallthru
    _
  // Predicated region
  $region34: #{multi_branch_forward.5} parent=0 // pred_check
    _
  $region35: #{multi_branch_forward.5} parent=0 // pred_check_branch
    %39 = sbr.rel (0) target = $region37
  $region36: #{multi_branch_forward.5} parent=0 // pred_region
    _
  $region37: #{multi_branch_forward.5} parent=0 // pred_fallthru
    _
  // Predicated region
  $region38: #{multi_branch_forward.5} parent=0 // pred_check
    _
  $region39: #{multi_branch_forward.5} parent=0 // pred_check_branch
    %41 = sbr.rel (0) target = $region41
  $region40: #{multi_branch_forward.5} parent=0 // pred_region
    _
  $region41: #{multi_branch_forward.5} parent=0 // pred_fallthru
    _
  // Predicated region
  $region42: #{multi_branch_forward.5} parent=0 // pred_check
    _
  $region43: #{multi_branch_forward.5} parent=0 // pred_check_branch
    %43 = sbr.rel (0) target = $region45
  $region44: #{multi_branch_forward.5} parent=0 // pred_region
    _
  $region45: #{multi_branch_forward.5} parent=0 // pred_fallthru
    _
  // Predicated region
  $region46: #{multi_branch_forward.5} parent=0 // pred_check
    _
  $region47: #{multi_branch_forward.5} parent=0 // pred_check_branch
    %45 = sbr.rel (0) target = $region49
  $region48: #{multi_branch_forward.5} parent=0 // pred_region
    _
  $region49: #{multi_branch_forward.5} parent=0 // pred_fallthru
    _
  // Predicated region
  $region50: #{multi_branch_forward.5} parent=0 // pred_check
    _
  $region51: #{multi_branch_forward.5} parent=0 // pred_check_branch
    %47 = sbr.rel (0) target = $region53
  $region52: #{multi_branch_forward.5} parent=0 // pred_region
    _
  $region53: #{multi_branch_forward.5} parent=0 // pred_fallthru
    _
  // Predicated region
  $region54: #{multi_branch_forward.5} parent=0 // pred_check
    _
  $region55: #{multi_branch_forward.5} parent=0 // pred_check_branch
    %49 = sbr.rel (0) target = $region57
  $region56: #{multi_branch_forward.5} parent=0 // pred_region
    _
  $region57: #{multi_branch_forward.5} parent=0 // pred_fallthru
    _
  // Predicated region
  $region58: #{multi_branch_forward.5} parent=0 // pred_check
    _
  $region59: #{multi_branch_forward.5} parent=0 // pred_check_branch
    %51 = sbr.rel (0) target = $region61
  $region60: #{multi_branch_forward.5} parent=0 // pred_region
    _
  $region61: #{multi_branch_forward.5} parent=0 // pred_fallthru
    _
  %v52 = vld [vmem:[%s0] sm:$0xff]
  %v53 = vld [vmem:[%s0 + $0x8] sm:$0xff]
  %v54 = vld [vmem:[%s0 + $0x10] sm:$0xf]
  %v55 = vld [vmem:[%s2] sm:$0xff]
  %v56 = vld [vmem:[%s2 + $0x8] sm:$0xff]
  %v57 = vld [vmem:[%s2 + $0x10] sm:$0xff]
  %v58 = vld [vmem:[%s2 + $0x18] sm:$0xff]
  %v59 = vld [vmem:[%s2 + $0x20] sm:$0xff]
  %v60 = vld [vmem:[%s2 + $0x28] sm:$0xff]
  %v61 = vld [vmem:[%s2 + $0x30] sm:$0xff]
  %v62 = vld [vmem:[%s2 + $0x38] sm:$0xff]
  %v63 = vld [vmem:[%s2 + $0x40] sm:$0xff]
  %v64 = vld [vmem:[%s2 + $0x48] sm:$0xff]
  %v65 = vld [vmem:[%s2 + $0x50] sm:$0xff]
  %v66 = vld [vmem:[%s2 + $0x58] sm:$0xff]
  %v67 = vld [vmem:[%s2 + $0x60] sm:$0xff]
  %v68 = vld [vmem:[%s2 + $0x68] sm:$0xff]
  %v69 = vld [vmem:[%s2 + $0x70] sm:$0xff]
  %v70 = vld [vmem:[%s2 + $0x78] sm:$0xff]
  %v71 = vld [vmem:[%s2 + $0x80] sm:$0xff]
  %v72 = vld [vmem:[%s2 + $0x88] sm:$0xff]
  %v73 = vld [vmem:[%s2 + $0x90] sm:$0xff]
  %v74 = vld [vmem:[%s2 + $0x98] sm:$0xff]
  %v75 = vld [vmem:[%s2 + $0xa0] sm:$0xff]
  %v76 = vld [vmem:[%s2 + $0xa8] sm:$0xff]
  %v77 = vld [vmem:[%s2 + $0xb0] sm:$0xff]
  %v78 = vld [vmem:[%s2 + $0xb8] sm:$0xff]
  %v79 = vld [vmem:[%s2 + $0xc0] sm:$0xff]
  %v80 = vld [vmem:[%s2 + $0xc8] sm:$0xff]
  %v81 = vld [vmem:[%s2 + $0xd0] sm:$0xff]
  %v82 = vld [vmem:[%s2 + $0xd8] sm:$0xff]
  %v83 = vld [vmem:[%s2 + $0xe0] sm:$0xff]
  %v84 = vld [vmem:[%s2 + $0xe8] sm:$0xff]
  %v85 = vld [vmem:[%s2 + $0xf0] sm:$0xff]
  %v86 = vld [vmem:[%s2 + $0xf8] sm:$0xff]
  %v87 = vld [vmem:[%s2 + $0x100] sm:$0xff]
  %v88 = vld [vmem:[%s2 + $0x108] sm:$0xff]
  %v89 = vld [vmem:[%s2 + $0x110] sm:$0xff]
  %v90 = vld [vmem:[%s2 + $0x118] sm:$0xff]
  %v91 = vld [vmem:[%s2 + $0x120] sm:$0xff]
  %v92 = vld [vmem:[%s2 + $0x128] sm:$0xff]
  %v93 = vld [vmem:[%s2 + $0x130] sm:$0xff]
  %v94 = vld [vmem:[%s2 + $0x138] sm:$0xff]
  %v95 = vld [vmem:[%s2 + $0x140] sm:$0xff]
  %v96 = vld [vmem:[%s2 + $0x148] sm:$0xff]
  %v97 = vld [vmem:[%s2 + $0x150] sm:$0xff]
  %v98 = vld [vmem:[%s2 + $0x158] sm:$0xff]
  %v99 = vld [vmem:[%s2 + $0x160] sm:$0xff]
  %v100 = vld [vmem:[%s2 + $0x168] sm:$0xff]
  %v101 = vld [vmem:[%s2 + $0x170] sm:$0xff]
  %v102 = vld [vmem:[%s2 + $0x178] sm:$0xff]
  %v103 = vld [vmem:[%s2 + $0x180] sm:$0xff]
  %v104 = vld [vmem:[%s2 + $0x188] sm:$0xff]
  %v105 = vld [vmem:[%s2 + $0x190] sm:$0xff]
  %v106 = vld [vmem:[%s2 + $0x198] sm:$0xff]
  %v107 = vld [vmem:[%s2 + $0x1a0] sm:$0xff]
  %v108 = vld [vmem:[%s2 + $0x1a8] sm:$0xff]
  %v109 = vld [vmem:[%s2 + $0x1b0] sm:$0xff]
  %v110 = vld [vmem:[%s2 + $0x1b8] sm:$0xff]
  %v111 = vld [vmem:[%s2 + $0x1c0] sm:$0xff]
  %v112 = vld [vmem:[%s2 + $0x1c8] sm:$0xff]
  %v113 = vld [vmem:[%s2 + $0x1d0] sm:$0xff]
  %v114 = vld [vmem:[%s2 + $0x1d8] sm:$0xff]
  %v115 = vld [vmem:[%s2 + $0x1e0] sm:$0xff]
  %v116 = vld [vmem:[%s2 + $0x1e8] sm:$0xff]
  %v117 = vld [vmem:[%s2 + $0x1f0] sm:$0xff]
  %v118 = vld [vmem:[%s2 + $0x1f8] sm:$0xff]
  %v119 = vld [vmem:[%s2 + $0x200] sm:$0xff]
  %v120 = vld [vmem:[%s2 + $0x208] sm:$0xff]
  %v121 = vld [vmem:[%s2 + $0x210] sm:$0xff]
  %v122 = vld [vmem:[%s2 + $0x218] sm:$0xff]
  %v123 = vld [vmem:[%s2 + $0x220] sm:$0xff]
  %v124 = vld [vmem:[%s2 + $0x228] sm:$0xff]
  %v125 = vld [vmem:[%s2 + $0x230] sm:$0xff]
  %v126 = vld [vmem:[%s2 + $0x238] sm:$0xff]
  %v127 = vld [vmem:[%s2 + $0x240] sm:$0xff]
  %v128 = vld [vmem:[%s2 + $0x248] sm:$0xff]
  %v129 = vld [vmem:[%s2 + $0x250] sm:$0xff]
  %v130 = vld [vmem:[%s2 + $0x258] sm:$0xff]
  %v131 = vld [vmem:[%s2 + $0x260] sm:$0xff]
  %v132 = vld [vmem:[%s2 + $0x268] sm:$0xff]
  %v133 = vld [vmem:[%s2 + $0x270] sm:$0xff]
  %v134 = vld [vmem:[%s2 + $0x278] sm:$0xff]
  %v135 = vld [vmem:[%s2 + $0x280] sm:$0xff]
  %v136 = vld [vmem:[%s2 + $0x288] sm:$0xff]
  %v137 = vld [vmem:[%s2 + $0x290] sm:$0xff]
  %v138 = vld [vmem:[%s2 + $0x298] sm:$0xff]
  %v139 = vld [vmem:[%s2 + $0x2a0] sm:$0xff]
  %v140 = vld [vmem:[%s2 + $0x2a8] sm:$0xff]
  %v141 = vld [vmem:[%s2 + $0x2b0] sm:$0xff]
  %v142 = vld [vmem:[%s2 + $0x2b8] sm:$0xff]
  %v143 = vld [vmem:[%s2 + $0x2c0] sm:$0xff]
  %v144 = vld [vmem:[%s2 + $0x2c8] sm:$0xff]
  %v145 = vld [vmem:[%s2 + $0x2d0] sm:$0xff]
  %v146 = vld [vmem:[%s2 + $0x2d8] sm:$0xff]
  %v147 = vld [vmem:[%s2 + $0x2e0] sm:$0xff]
  %v148 = vld [vmem:[%s2 + $0x2e8] sm:$0xff]
  %v149 = vld [vmem:[%s2 + $0x2f0] sm:$0xff]
  %v150 = vld [vmem:[%s2 + $0x2f8] sm:$0xff]
  %v151 = vld [vmem:[%s2 + $0x300] sm:$0xff]
  %v152 = vld [vmem:[%s2 + $0x308] sm:$0xff]
  %v153 = vld [vmem:[%s2 + $0x310] sm:$0xff]
  %v154 = vld [vmem:[%s2 + $0x318] sm:$0xff]
  %v155 = vld [vmem:[%s2 + $0x320] sm:$0xff]
  %v156 = vld [vmem:[%s2 + $0x328] sm:$0xff]
  %v157 = vld [vmem:[%s2 + $0x330] sm:$0xff]
  %v158 = vld [vmem:[%s2 + $0x338] sm:$0xff]
  %v159 = vld [vmem:[%s2 + $0x340] sm:$0xff]
  %v160 = vld [vmem:[%s2 + $0x348] sm:$0xff]
  %v161 = vld [vmem:[%s2 + $0x350] sm:$0xff]
  %v162 = vld [vmem:[%s2 + $0x358] sm:$0xff]
  %v163 = vld [vmem:[%s2 + $0x360] sm:$0xff]
  %v164 = vld [vmem:[%s2 + $0x368] sm:$0xff]
  %v165 = vld [vmem:[%s2 + $0x370] sm:$0xff]
  %v166 = vld [vmem:[%s2 + $0x378] sm:$0xff]
  %v167 = vld [vmem:[%s2 + $0x380] sm:$0xff]
  %v168 = vld [vmem:[%s2 + $0x388] sm:$0xff]
  %v169 = vld [vmem:[%s2 + $0x390] sm:$0xff]
  %v170 = vld [vmem:[%s2 + $0x398] sm:$0xff]
  %v171 = vld [vmem:[%s2 + $0x3a0] sm:$0xff]
  %v172 = vld [vmem:[%s2 + $0x3a8] sm:$0xff]
  %v173 = vld [vmem:[%s2 + $0x3b0] sm:$0xff]
  %v174 = vld [vmem:[%s2 + $0x3b8] sm:$0xff]
  %v175 = vld [vmem:[%s2 + $0x3c0] sm:$0xff]
  %v176 = vld [vmem:[%s2 + $0x3c8] sm:$0xff]
  %v177 = vld [vmem:[%s2 + $0x3d0] sm:$0xff]
  %v178 = vld [vmem:[%s2 + $0x3d8] sm:$0xff]
  %v179 = vld [vmem:[%s2 + $0x3e0] sm:$0xff]
  %v180 = vld [vmem:[%s2 + $0x3e8] sm:$0xff]
  %v181 = vld [vmem:[%s2 + $0x3f0] sm:$0xff]
  %v182 = vld [vmem:[%s2 + $0x3f8] sm:$0xff]
  %v183 = vld [vmem:[%s2 + $0x400] sm:$0xff]
  %v184 = vld [vmem:[%s2 + $0x408] sm:$0xff]
  %v185 = vld [vmem:[%s2 + $0x410] sm:$0xff]
  %v186 = vld [vmem:[%s2 + $0x418] sm:$0xff]
  %v187 = vld [vmem:[%s2 + $0x420] sm:$0xff]
  %v188 = vld [vmem:[%s2 + $0x428] sm:$0xff]
  %v189 = vld [vmem:[%s2 + $0x430] sm:$0xff]
  %v190 = vld [vmem:[%s2 + $0x438] sm:$0xff]
  %v191 = vld [vmem:[%s2 + $0x440] sm:$0xff]
  %v192 = vld [vmem:[%s2 + $0x448] sm:$0xff]
  %v193 = vld [vmem:[%s2 + $0x450] sm:$0xff]
  %v194 = vld [vmem:[%s2 + $0x458] sm:$0xff]
  %v195 = vld [vmem:[%s2 + $0x460] sm:$0xff]
  %v196 = vld [vmem:[%s2 + $0x468] sm:$0xff]
  %v197 = vld [vmem:[%s2 + $0x470] sm:$0xff]
  %v198 = vld [vmem:[%s2 + $0x478] sm:$0xff]
  %v199 = vld [vmem:[%s2 + $0x480] sm:$0xff]
  %v200 = vld [vmem:[%s2 + $0x488] sm:$0xff]
  %v201 = vld [vmem:[%s2 + $0x490] sm:$0xff]
  %v202 = vld [vmem:[%s2 + $0x498] sm:$0xff]
  %v203 = vld [vmem:[%s2 + $0x4a0] sm:$0xff]
  %v204 = vld [vmem:[%s2 + $0x4a8] sm:$0xff]
  %v205 = vld [vmem:[%s2 + $0x4b0] sm:$0xff]
  %v206 = vld [vmem:[%s2 + $0x4b8] sm:$0xff]
  %v207 = vld [vmem:[%s2 + $0x4c0] sm:$0xff]
  %v208 = vld [vmem:[%s2 + $0x4c8] sm:$0xff]
  %v209 = vld [vmem:[%s2 + $0x4d0] sm:$0xff]
  %v210 = vld [vmem:[%s2 + $0x4d8] sm:$0xff]
  %v211 = vld [vmem:[%s2 + $0x4e0] sm:$0xff]
  %v212 = vld [vmem:[%s2 + $0x4e8] sm:$0xff]
  %v213 = vld [vmem:[%s2 + $0x4f0] sm:$0xff]
  %v214 = vld [vmem:[%s2 + $0x4f8] sm:$0xff]
  %v215 = vld [vmem:[%s2 + $0x500] sm:$0xff]
  %v216 = vld [vmem:[%s2 + $0x508] sm:$0xff]
  %v217 = vld [vmem:[%s2 + $0x510] sm:$0xff]
  %v218 = vld [vmem:[%s2 + $0x518] sm:$0xff]
  %v219 = vld [vmem:[%s2 + $0x520] sm:$0xff]
  %v220 = vld [vmem:[%s2 + $0x528] sm:$0xff]
  %v221 = vld [vmem:[%s2 + $0x530] sm:$0xff]
  %v222 = vld [vmem:[%s2 + $0x538] sm:$0xff]
  %v223 = vld [vmem:[%s2 + $0x540] sm:$0xff]
  %v224 = vld [vmem:[%s2 + $0x548] sm:$0xff]
  %v225 = vld [vmem:[%s2 + $0x550] sm:$0xff]
  %v226 = vld [vmem:[%s2 + $0x558] sm:$0xff]
  %v227 = vld [vmem:[%s2 + $0x560] sm:$0xff]
  %v228 = vld [vmem:[%s2 + $0x568] sm:$0xff]
  %v229 = vld [vmem:[%s2 + $0x570] sm:$0xff]
  %v230 = vld [vmem:[%s2 + $0x578] sm:$0xff]
  %v231 = vld [vmem:[%s2 + $0x580] sm:$0xff]
  %v232 = vld [vmem:[%s2 + $0x588] sm:$0xff]
  %v233 = vld [vmem:[%s2 + $0x590] sm:$0xff]
  %v234 = vld [vmem:[%s2 + $0x598] sm:$0xff]
  %v235 = vld [vmem:[%s2 + $0x5a0] sm:$0xff]
  %v236 = vld [vmem:[%s2 + $0x5a8] sm:$0xff]
  %v237 = vld [vmem:[%s2 + $0x5b0] sm:$0xff]
  %v238 = vld [vmem:[%s2 + $0x5b8] sm:$0xff]
  %v239 = vld [vmem:[%s2 + $0x5c0] sm:$0xff]
  %v240 = vld [vmem:[%s2 + $0x5c8] sm:$0xff]
  %v241 = vld [vmem:[%s2 + $0x5d0] sm:$0xff]
  %v242 = vld [vmem:[%s2 + $0x5d8] sm:$0xff]
  %v243 = vld [vmem:[%s2 + $0x5e0] sm:$0xff]
  %v244 = vld [vmem:[%s2 + $0x5e8] sm:$0xff]
  %v245 = vld [vmem:[%s2 + $0x5f0] sm:$0xff]
  %v246 = vld [vmem:[%s2 + $0x5f8] sm:$0xff]
  %v247 = vld [vmem:[%s2 + $0x600] sm:$0xff]
  %v248 = vld [vmem:[%s2 + $0x608] sm:$0xff]
  %v249 = vld [vmem:[%s2 + $0x610] sm:$0xff]
  %v250 = vld [vmem:[%s2 + $0x618] sm:$0xff]
  %v251 = vld [vmem:[%s2 + $0x620] sm:$0xff]
  %v252 = vld [vmem:[%s2 + $0x628] sm:$0xff]
  %v253 = vld [vmem:[%s2 + $0x630] sm:$0xff]
  %v254 = vld [vmem:[%s2 + $0x638] sm:$0xff]
  %v255 = vld [vmem:[%s2 + $0x640] sm:$0xff]
  %v256 = vld [vmem:[%s2 + $0x648] sm:$0xff]
  %v257 = vld [vmem:[%s2 + $0x650] sm:$0xff]
  %v258 = vld [vmem:[%s2 + $0x658] sm:$0xff]
  %v259 = vld [vmem:[%s2 + $0x660] sm:$0xff]
  %v260 = vld [vmem:[%s2 + $0x668] sm:$0xff]
  %v261 = vld [vmem:[%s2 + $0x670] sm:$0xff]
  %v262 = vld [vmem:[%s2 + $0x678] sm:$0xff]
  %v263 = vld [vmem:[%s2 + $0x680] sm:$0xff]
  %v264 = vld [vmem:[%s2 + $0x688] sm:$0xff]
  %v265 = vld [vmem:[%s2 + $0x690] sm:$0xff]
  %v266 = vld [vmem:[%s2 + $0x698] sm:$0xff]
  %v267 = vld [vmem:[%s2 + $0x6a0] sm:$0xff]
  %v268 = vld [vmem:[%s2 + $0x6a8] sm:$0xff]
  %v269 = vld [vmem:[%s2 + $0x6b0] sm:$0xff]
  %v270 = vld [vmem:[%s2 + $0x6b8] sm:$0xff]
  %v271 = vld [vmem:[%s2 + $0x6c0] sm:$0xff]
  %v272 = vld [vmem:[%s2 + $0x6c8] sm:$0xff]
  %v273 = vld [vmem:[%s2 + $0x6d0] sm:$0xff]
  %v274 = vld [vmem:[%s2 + $0x6d8] sm:$0xff]
  %v275 = vld [vmem:[%s2 + $0x6e0] sm:$0xff]
  %v276 = vld [vmem:[%s2 + $0x6e8] sm:$0xff]
  %v277 = vld [vmem:[%s2 + $0x6f0] sm:$0xff]
  %v278 = vld [vmem:[%s2 + $0x6f8] sm:$0xff]
  %v279 = vld [vmem:[%s2 + $0x700] sm:$0xff]
  %v280 = vld [vmem:[%s2 + $0x708] sm:$0xff]
  %v281 = vld [vmem:[%s2 + $0x710] sm:$0xff]
  %v282 = vld [vmem:[%s2 + $0x718] sm:$0xff]
  %v283 = vld [vmem:[%s2 + $0x720] sm:$0xff]
  %v284 = vld [vmem:[%s2 + $0x728] sm:$0xff]
  %v285 = vld [vmem:[%s2 + $0x730] sm:$0xff]
  %v286 = vld [vmem:[%s2 + $0x738] sm:$0xff]
  %v287 = vld [vmem:[%s2 + $0x740] sm:$0xff]
  %v288 = vld [vmem:[%s2 + $0x748] sm:$0xff]
  %v289 = vld [vmem:[%s2 + $0x750] sm:$0xff]
  %v290 = vld [vmem:[%s2 + $0x758] sm:$0xff]
  %v291 = vld [vmem:[%s2 + $0x760] sm:$0xff]
  %v292 = vld [vmem:[%s2 + $0x768] sm:$0xff]
  %v293 = vld [vmem:[%s2 + $0x770] sm:$0xff]
  %v294 = vld [vmem:[%s2 + $0x778] sm:$0xff]
  %v295 = vld [vmem:[%s2 + $0x780] sm:$0xff]
  %v296 = vld [vmem:[%s2 + $0x788] sm:$0xff]
  %v297 = vld [vmem:[%s2 + $0x790] sm:$0xff]
  %v298 = vld [vmem:[%s2 + $0x798] sm:$0xff]
  %v299 = vld [vmem:[%s2 + $0x7a0] sm:$0xff]
  %v300 = vld [vmem:[%s2 + $0x7a8] sm:$0xff]
  %v301 = vld [vmem:[%s2 + $0x7b0] sm:$0xff]
  %v302 = vld [vmem:[%s2 + $0x7b8] sm:$0xff]
  %v303 = vld [vmem:[%s2 + $0x7c0] sm:$0xff]
  %v304 = vld [vmem:[%s2 + $0x7c8] sm:$0xff]
  %v305 = vld [vmem:[%s2 + $0x7d0] sm:$0xff]
  %v306 = vld [vmem:[%s2 + $0x7d8] sm:$0xff]
  %v307 = vld [vmem:[%s2 + $0x7e0] sm:$0xff]
  %v308 = vld [vmem:[%s2 + $0x7e8] sm:$0xff]
  %v309 = vld [vmem:[%s2 + $0x7f0] sm:$0xff]
  %v310 = vld [vmem:[%s2 + $0x7f8] sm:$0xff]
  %v311 = vld [vmem:[%s2 + $0x800] sm:$0xff]
  %v312 = vld [vmem:[%s2 + $0x808] sm:$0xff]
  %v313 = vld [vmem:[%s2 + $0x810] sm:$0xff]
  %v314 = vld [vmem:[%s2 + $0x818] sm:$0xff]
  %v315 = vld [vmem:[%s2 + $0x820] sm:$0xff]
  %v316 = vld [vmem:[%s2 + $0x828] sm:$0xff]
  %v317 = vld [vmem:[%s2 + $0x830] sm:$0xff]
  %v318 = vld [vmem:[%s2 + $0x838] sm:$0xff]
  %v319 = vld [vmem:[%s2 + $0x840] sm:$0xff]
  %v320 = vld [vmem:[%s2 + $0x848] sm:$0xff]
  %v321 = vld [vmem:[%s2 + $0x850] sm:$0xff]
  %v322 = vld [vmem:[%s2 + $0x858] sm:$0xff]
  %v323 = vld [vmem:[%s2 + $0x860] sm:$0xff]
  %v324 = vld [vmem:[%s2 + $0x868] sm:$0xff]
  %v325 = vld [vmem:[%s2 + $0x870] sm:$0xff]
  %v326 = vld [vmem:[%s2 + $0x878] sm:$0xff]
  %v327 = vld [vmem:[%s2 + $0x880] sm:$0xff]
  %v328 = vld [vmem:[%s2 + $0x888] sm:$0xff]
  %v329 = vld [vmem:[%s2 + $0x890] sm:$0xff]
  %v330 = vld [vmem:[%s2 + $0x898] sm:$0xff]
  %v331 = vld [vmem:[%s2 + $0x8a0] sm:$0xff]
  %v332 = vld [vmem:[%s2 + $0x8a8] sm:$0xff]
  %v333 = vld [vmem:[%s2 + $0x8b0] sm:$0xff]
  %v334 = vld [vmem:[%s2 + $0x8b8] sm:$0xff]
  %v335 = vld [vmem:[%s2 + $0x8c0] sm:$0xff]
  %v336 = vld [vmem:[%s2 + $0x8c8] sm:$0xff]
  %v337 = vld [vmem:[%s2 + $0x8d0] sm:$0xff]
  %v338 = vld [vmem:[%s2 + $0x8d8] sm:$0xff]
  %v339 = vld [vmem:[%s2 + $0x8e0] sm:$0xff]
  %v340 = vld [vmem:[%s2 + $0x8e8] sm:$0xff]
  %v341 = vld [vmem:[%s2 + $0x8f0] sm:$0xff]
  %v342 = vld [vmem:[%s2 + $0x8f8] sm:$0xff]
  %v343 = vld [vmem:[%s2 + $0x900] sm:$0xff]
  %v344 = vld [vmem:[%s2 + $0x908] sm:$0xff]
  %v345 = vld [vmem:[%s2 + $0x910] sm:$0xff]
  %v346 = vld [vmem:[%s2 + $0x918] sm:$0xff]
  %v347 = vld [vmem:[%s2 + $0x920] sm:$0xff]
  %v348 = vld [vmem:[%s2 + $0x928] sm:$0xff]
  %v349 = vld [vmem:[%s2 + $0x930] sm:$0xff]
  %v350 = vld [vmem:[%s2 + $0x938] sm:$0xff]
  %v351 = vld [vmem:[%s2 + $0x940] sm:$0xff]
  %v352 = vld [vmem:[%s2 + $0x948] sm:$0xff]
  %v353 = vld [vmem:[%s2 + $0x950] sm:$0xff]
  %v354 = vld [vmem:[%s2 + $0x958] sm:$0xff]
  %v355 = vld [vmem:[%s2 + $0x960] sm:$0xff]
  %v356 = vld [vmem:[%s2 + $0x968] sm:$0xff]
  %v357 = vld [vmem:[%s2 + $0x970] sm:$0xff]
  %v358 = vld [vmem:[%s2 + $0x978] sm:$0xff]
  %v359 = vld [vmem:[%s2 + $0x980] sm:$0xff]
  %v360 = vld [vmem:[%s2 + $0x988] sm:$0xff]
  %v361 = vld [vmem:[%s2 + $0x990] sm:$0xff]
  %v362 = vld [vmem:[%s2 + $0x998] sm:$0xff]
  %v363 = vld [vmem:[%s2 + $0x9a0] sm:$0xff]
  %v364 = vld [vmem:[%s2 + $0x9a8] sm:$0xff]
  %v365 = vld [vmem:[%s2 + $0x9b0] sm:$0xff]
  %v366 = vld [vmem:[%s2 + $0x9b8] sm:$0xff]
  %v367 = vld [vmem:[%s2 + $0x9c0] sm:$0xff]
  %v368 = vld [vmem:[%s2 + $0x9c8] sm:$0xff]
  %v369 = vld [vmem:[%s2 + $0x9d0] sm:$0xff]
  %v370 = vld [vmem:[%s2 + $0x9d8] sm:$0xff]
  %v371 = vld [vmem:[%s2 + $0x9e0] sm:$0xff]
  %v372 = vld [vmem:[%s2 + $0x9e8] sm:$0xff]
  %v373 = vld [vmem:[%s2 + $0x9f0] sm:$0xff]
  %v374 = vld [vmem:[%s2 + $0x9f8] sm:$0xff]
  %v375 = vld [vmem:[%s3] sm:$0x3]
  %v376 = vld [vmem:[%s4] sm:$0xff]
  %v377 = vld [vmem:[%s4 + $0x8] sm:$0xff]
  %v378 = vld [vmem:[%s4 + $0x10] sm:$0xff]
  %v379 = vld [vmem:[%s4 + $0x18] sm:$0xff]
  %v380 = vld [vmem:[%s4 + $0x20] sm:$0xff]
  %v381 = vld [vmem:[%s4 + $0x28] sm:$0xff]
  %v382 = vld [vmem:[%s4 + $0x30] sm:$0xff]
  %v383 = vld [vmem:[%s4 + $0x38] sm:$0xff]
  %v384 = vld [vmem:[%s4 + $0x40] sm:$0xff]
  %v385 = vld [vmem:[%s4 + $0x48] sm:$0xff]
  %v386 = vld [vmem:[%s4 + $0x50] sm:$0xff]
  %v387 = vld [vmem:[%s4 + $0x58] sm:$0xff]
  %v388 = vld [vmem:[%s4 + $0x60] sm:$0xff]
  %v389 = vld [vmem:[%s4 + $0x68] sm:$0xff]
  %v390 = vld [vmem:[%s4 + $0x70] sm:$0xff]
  %v391 = vld [vmem:[%s4 + $0x78] sm:$0xff]
  %v392 = vld [vmem:[%s4 + $0x80] sm:$0xff]
  %v393 = vld [vmem:[%s4 + $0x88] sm:$0xff]
  %v394 = vld [vmem:[%s4 + $0x90] sm:$0xff]
  %v395 = vld [vmem:[%s4 + $0x98] sm:$0xff]
  %v396 = vld [vmem:[%s4 + $0xa0] sm:$0xff]
  %v397 = vld [vmem:[%s4 + $0xa8] sm:$0xff]
  %v398 = vld [vmem:[%s4 + $0xb0] sm:$0xff]
  %v399 = vld [vmem:[%s4 + $0xb8] sm:$0xff]
  %v400 = vld [vmem:[%s4 + $0xc0] sm:$0xff]
  %v401 = vld [vmem:[%s4 + $0xc8] sm:$0xff]
  %v402 = vld [vmem:[%s4 + $0xd0] sm:$0xff]
  %v403 = vld [vmem:[%s4 + $0xd8] sm:$0xff]
  %v404 = vld [vmem:[%s4 + $0xe0] sm:$0xff]
  %v405 = vld [vmem:[%s4 + $0xe8] sm:$0xff]
  %v406 = vld [vmem:[%s4 + $0xf0] sm:$0xff]
  %v407 = vld [vmem:[%s4 + $0xf8] sm:$0xff]
  %v408 = vld [vmem:[%s4 + $0x100] sm:$0xff]
  %v409 = vld [vmem:[%s4 + $0x108] sm:$0xff]
  %v410 = vld [vmem:[%s4 + $0x110] sm:$0xff]
  %v411 = vld [vmem:[%s4 + $0x118] sm:$0xff]
  %v412 = vld [vmem:[%s4 + $0x120] sm:$0xff]
  %v413 = vld [vmem:[%s4 + $0x128] sm:$0xff]
  %v414 = vld [vmem:[%s4 + $0x130] sm:$0xff]
  %v415 = vld [vmem:[%s4 + $0x138] sm:$0xff]
  %v416 = vld [vmem:[%s4 + $0x140] sm:$0xff]
  %v417 = vld [vmem:[%s4 + $0x148] sm:$0xff]
  %v418 = vld [vmem:[%s4 + $0x150] sm:$0xff]
  %v419 = vld [vmem:[%s4 + $0x158] sm:$0xff]
  %v420 = vld [vmem:[%s4 + $0x160] sm:$0xff]
  %v421 = vld [vmem:[%s4 + $0x168] sm:$0xff]
  %v422 = vld [vmem:[%s4 + $0x170] sm:$0xff]
  %v423 = vld [vmem:[%s4 + $0x178] sm:$0xff]
  %v424 = vld [vmem:[%s4 + $0x180] sm:$0xff]
  %v425 = vld [vmem:[%s4 + $0x188] sm:$0xff]
  %v426 = vld [vmem:[%s4 + $0x190] sm:$0xff]
  %v427 = vld [vmem:[%s4 + $0x198] sm:$0xff]
  %v428 = vld [vmem:[%s4 + $0x1a0] sm:$0xff]
  %v429 = vld [vmem:[%s4 + $0x1a8] sm:$0xff]
  %v430 = vld [vmem:[%s4 + $0x1b0] sm:$0xff]
  %v431 = vld [vmem:[%s4 + $0x1b8] sm:$0xff]
  %v432 = vld [vmem:[%s4 + $0x1c0] sm:$0xff]
  %v433 = vld [vmem:[%s4 + $0x1c8] sm:$0xff]
  %v434 = vld [vmem:[%s4 + $0x1d0] sm:$0xff]
  %v435 = vld [vmem:[%s4 + $0x1d8] sm:$0xff]
  %v436 = vld [vmem:[%s4 + $0x1e0] sm:$0xff]
  %v437 = vld [vmem:[%s4 + $0x1e8] sm:$0xff]
  %v438 = vld [vmem:[%s4 + $0x1f0] sm:$0xff]
  %v439 = vld [vmem:[%s4 + $0x1f8] sm:$0xff]
  %v440 = vld [vmem:[%s4 + $0x200] sm:$0xff]
  %v441 = vld [vmem:[%s4 + $0x208] sm:$0xff]
  %v442 = vld [vmem:[%s4 + $0x210] sm:$0xff]
  %v443 = vld [vmem:[%s4 + $0x218] sm:$0xff]
  %v444 = vld [vmem:[%s4 + $0x220] sm:$0xff]
  %v445 = vld [vmem:[%s4 + $0x228] sm:$0xff]
  %v446 = vld [vmem:[%s4 + $0x230] sm:$0xff]
  %v447 = vld [vmem:[%s4 + $0x238] sm:$0xff]
  %v448 = vld [vmem:[%s4 + $0x240] sm:$0xff]
  %v449 = vld [vmem:[%s4 + $0x248] sm:$0xff]
  %v450 = vld [vmem:[%s4 + $0x250] sm:$0xff]
  %v451 = vld [vmem:[%s4 + $0x258] sm:$0xff]
  %v452 = vld [vmem:[%s4 + $0x260] sm:$0xff]
  %v453 = vld [vmem:[%s4 + $0x268] sm:$0xff]
  %v454 = vld [vmem:[%s4 + $0x270] sm:$0xff]
  %v455 = vld [vmem:[%s4 + $0x278] sm:$0xff]
  %v456 = vld [vmem:[%s4 + $0x280] sm:$0xff]
  %v457 = vld [vmem:[%s4 + $0x288] sm:$0xff]
  %v458 = vld [vmem:[%s4 + $0x290] sm:$0xff]
  %v459 = vld [vmem:[%s4 + $0x298] sm:$0xff]
  %v460 = vld [vmem:[%s4 + $0x2a0] sm:$0xff]
  %v461 = vld [vmem:[%s4 + $0x2a8] sm:$0xff]
  %v462 = vld [vmem:[%s4 + $0x2b0] sm:$0xff]
  %v463 = vld [vmem:[%s4 + $0x2b8] sm:$0xff]
  %v464 = vld [vmem:[%s4 + $0x2c0] sm:$0xff]
  %v465 = vld [vmem:[%s4 + $0x2c8] sm:$0xff]
  %v466 = vld [vmem:[%s4 + $0x2d0] sm:$0xff]
  %v467 = vld [vmem:[%s4 + $0x2d8] sm:$0xff]
  %v468 = vld [vmem:[%s4 + $0x2e0] sm:$0xff]
  %v469 = vld [vmem:[%s4 + $0x2e8] sm:$0xff]
  %v470 = vld [vmem:[%s4 + $0x2f0] sm:$0xff]
  %v471 = vld [vmem:[%s4 + $0x2f8] sm:$0xff]
  %v472 = vld [vmem:[%s4 + $0x300] sm:$0xff]
  %v473 = vld [vmem:[%s4 + $0x308] sm:$0xff]
  %v474 = vld [vmem:[%s4 + $0x310] sm:$0xff]
  %v475 = vld [vmem:[%s4 + $0x318] sm:$0xff]
  %v476 = vld [vmem:[%s4 + $0x320] sm:$0xff]
  %v477 = vld [vmem:[%s4 + $0x328] sm:$0xff]
  %v478 = vld [vmem:[%s4 + $0x330] sm:$0xff]
  %v479 = vld [vmem:[%s4 + $0x338] sm:$0xff]
  %v480 = vld [vmem:[%s4 + $0x340] sm:$0xff]
  %v481 = vld [vmem:[%s4 + $0x348] sm:$0xff]
  %v482 = vld [vmem:[%s4 + $0x350] sm:$0xff]
  %v483 = vld [vmem:[%s4 + $0x358] sm:$0xff]
  %v484 = vld [vmem:[%s4 + $0x360] sm:$0xff]
  %v485 = vld [vmem:[%s4 + $0x368] sm:$0xff]
  %v486 = vld [vmem:[%s4 + $0x370] sm:$0xff]
  %v487 = vld [vmem:[%s4 + $0x378] sm:$0xff]
  %v488 = vld [vmem:[%s4 + $0x380] sm:$0xff]
  %v489 = vld [vmem:[%s4 + $0x388] sm:$0xff]
  %v490 = vld [vmem:[%s4 + $0x390] sm:$0xff]
  %v491 = vld [vmem:[%s4 + $0x398] sm:$0xff]
  %v492 = vld [vmem:[%s4 + $0x3a0] sm:$0xff]
  %v493 = vld [vmem:[%s4 + $0x3a8] sm:$0xff]
  %v494 = vld [vmem:[%s4 + $0x3b0] sm:$0xff]
  %v495 = vld [vmem:[%s4 + $0x3b8] sm:$0xff]
  %v496 = vld [vmem:[%s4 + $0x3c0] sm:$0xff]
  %v497 = vld [vmem:[%s4 + $0x3c8] sm:$0xff]
  %v498 = vld [vmem:[%s4 + $0x3d0] sm:$0xff]
  %v499 = vld [vmem:[%s4 + $0x3d8] sm:$0xff]
  %v500 = vld [vmem:[%s4 + $0x3e0] sm:$0xff]
  %v501 = vld [vmem:[%s4 + $0x3e8] sm:$0xff]
  %v502 = vld [vmem:[%s4 + $0x3f0] sm:$0xff]
  %v503 = vld [vmem:[%s4 + $0x3f8] sm:$0xff]
  %v504 = vld [vmem:[%s4 + $0x400] sm:$0xff]
  %v505 = vld [vmem:[%s4 + $0x408] sm:$0xff]
  %v506 = vld [vmem:[%s4 + $0x410] sm:$0xff]
  %v507 = vld [vmem:[%s4 + $0x418] sm:$0xff]
  %v508 = vld [vmem:[%s4 + $0x420] sm:$0xff]
  %v509 = vld [vmem:[%s4 + $0x428] sm:$0xff]
  %v510 = vld [vmem:[%s4 + $0x430] sm:$0xff]
  %v511 = vld [vmem:[%s4 + $0x438] sm:$0xff]
  %v512 = vld [vmem:[%s4 + $0x440] sm:$0xff]
  %v513 = vld [vmem:[%s4 + $0x448] sm:$0xff]
  %v514 = vld [vmem:[%s4 + $0x450] sm:$0xff]
  %v515 = vld [vmem:[%s4 + $0x458] sm:$0xff]
  %v516 = vld [vmem:[%s4 + $0x460] sm:$0xff]
  %v517 = vld [vmem:[%s4 + $0x468] sm:$0xff]
  %v518 = vld [vmem:[%s4 + $0x470] sm:$0xff]
  %v519 = vld [vmem:[%s4 + $0x478] sm:$0xff]
  %v520 = vld [vmem:[%s4 + $0x480] sm:$0xff]
  %v521 = vld [vmem:[%s4 + $0x488] sm:$0xff]
  %v522 = vld [vmem:[%s4 + $0x490] sm:$0xff]
  %v523 = vld [vmem:[%s4 + $0x498] sm:$0xff]
  %v524 = vld [vmem:[%s4 + $0x4a0] sm:$0xff]
  %v525 = vld [vmem:[%s4 + $0x4a8] sm:$0xff]
  %v526 = vld [vmem:[%s4 + $0x4b0] sm:$0xff]
  %v527 = vld [vmem:[%s4 + $0x4b8] sm:$0xff]
  %v528 = vld [vmem:[%s4 + $0x4c0] sm:$0xff]
  %v529 = vld [vmem:[%s4 + $0x4c8] sm:$0xff]
  %v530 = vld [vmem:[%s4 + $0x4d0] sm:$0xff]
  %v531 = vld [vmem:[%s4 + $0x4d8] sm:$0xff]
  %v532 = vld [vmem:[%s4 + $0x4e0] sm:$0xff]
  %v533 = vld [vmem:[%s4 + $0x4e8] sm:$0xff]
  %v534 = vld [vmem:[%s4 + $0x4f0] sm:$0xff]
  %v535 = vld [vmem:[%s4 + $0x4f8] sm:$0xff]
  %v536 = vld [vmem:[%s4 + $0x500] sm:$0xff]
  %v537 = vld [vmem:[%s4 + $0x508] sm:$0xff]
  %v538 = vld [vmem:[%s4 + $0x510] sm:$0xff]
  %v539 = vld [vmem:[%s4 + $0x518] sm:$0xff]
  %v540 = vld [vmem:[%s4 + $0x520] sm:$0xff]
  %v541 = vld [vmem:[%s4 + $0x528] sm:$0xff]
  %v542 = vld [vmem:[%s4 + $0x530] sm:$0xff]
  %v543 = vld [vmem:[%s4 + $0x538] sm:$0xff]
  %v544 = vld [vmem:[%s4 + $0x540] sm:$0xff]
  %v545 = vld [vmem:[%s4 + $0x548] sm:$0xff]
  %v546 = vld [vmem:[%s4 + $0x550] sm:$0xff]
  %v547 = vld [vmem:[%s4 + $0x558] sm:$0xff]
  %v548 = vld [vmem:[%s4 + $0x560] sm:$0xff]
  %v549 = vld [vmem:[%s4 + $0x568] sm:$0xff]
  %v550 = vld [vmem:[%s4 + $0x570] sm:$0xff]
  %v551 = vld [vmem:[%s4 + $0x578] sm:$0xff]
  %v552 = vld [vmem:[%s4 + $0x580] sm:$0xff]
  %v553 = vld [vmem:[%s4 + $0x588] sm:$0xff]
  %v554 = vld [vmem:[%s4 + $0x590] sm:$0xff]
  %v555 = vld [vmem:[%s4 + $0x598] sm:$0xff]
  %v556 = vld [vmem:[%s4 + $0x5a0] sm:$0xff]
  %v557 = vld [vmem:[%s4 + $0x5a8] sm:$0xff]
  %v558 = vld [vmem:[%s4 + $0x5b0] sm:$0xff]
  %v559 = vld [vmem:[%s4 + $0x5b8] sm:$0xff]
  %v560 = vld [vmem:[%s4 + $0x5c0] sm:$0xff]
  %v561 = vld [vmem:[%s4 + $0x5c8] sm:$0xff]
  %v562 = vld [vmem:[%s4 + $0x5d0] sm:$0xff]
  %v563 = vld [vmem:[%s4 + $0x5d8] sm:$0xff]
  %v564 = vld [vmem:[%s4 + $0x5e0] sm:$0xff]
  %v565 = vld [vmem:[%s4 + $0x5e8] sm:$0xff]
  %v566 = vld [vmem:[%s4 + $0x5f0] sm:$0xff]
  %v567 = vld [vmem:[%s4 + $0x5f8] sm:$0xff]
  %v568 = vld [vmem:[%s4 + $0x600] sm:$0xff]
  %v569 = vld [vmem:[%s4 + $0x608] sm:$0xff]
  %v570 = vld [vmem:[%s4 + $0x610] sm:$0xff]
  %v571 = vld [vmem:[%s4 + $0x618] sm:$0xff]
  %v572 = vld [vmem:[%s4 + $0x620] sm:$0xff]
  %v573 = vld [vmem:[%s4 + $0x628] sm:$0xff]
  %v574 = vld [vmem:[%s4 + $0x630] sm:$0xff]
  %v575 = vld [vmem:[%s4 + $0x638] sm:$0xff]
  %v576 = vld [vmem:[%s4 + $0x640] sm:$0xff]
  %v577 = vld [vmem:[%s4 + $0x648] sm:$0xff]
  %v578 = vld [vmem:[%s4 + $0x650] sm:$0xff]
  %v579 = vld [vmem:[%s4 + $0x658] sm:$0xff]
  %v580 = vld [vmem:[%s4 + $0x660] sm:$0xff]
  %v581 = vld [vmem:[%s4 + $0x668] sm:$0xff]
  %v582 = vld [vmem:[%s4 + $0x670] sm:$0xff]
  %v583 = vld [vmem:[%s4 + $0x678] sm:$0xff]
  %v584 = vld [vmem:[%s4 + $0x680] sm:$0xff]
  %v585 = vld [vmem:[%s4 + $0x688] sm:$0xff]
  %v586 = vld [vmem:[%s4 + $0x690] sm:$0xff]
  %v587 = vld [vmem:[%s4 + $0x698] sm:$0xff]
  %v588 = vld [vmem:[%s4 + $0x6a0] sm:$0xff]
  %v589 = vld [vmem:[%s4 + $0x6a8] sm:$0xff]
  %v590 = vld [vmem:[%s4 + $0x6b0] sm:$0xff]
  %v591 = vld [vmem:[%s4 + $0x6b8] sm:$0xff]
  %v592 = vld [vmem:[%s4 + $0x6c0] sm:$0xff]
  %v593 = vld [vmem:[%s4 + $0x6c8] sm:$0xff]
  %v594 = vld [vmem:[%s4 + $0x6d0] sm:$0xff]
  %v595 = vld [vmem:[%s4 + $0x6d8] sm:$0xff]
  %v596 = vld [vmem:[%s4 + $0x6e0] sm:$0xff]
  %v597 = vld [vmem:[%s4 + $0x6e8] sm:$0xff]
  %v598 = vld [vmem:[%s4 + $0x6f0] sm:$0xff]
  %v599 = vld [vmem:[%s4 + $0x6f8] sm:$0xff]
  %v600 = vld [vmem:[%s4 + $0x700] sm:$0xff]
  %v601 = vld [vmem:[%s4 + $0x708] sm:$0xff]
  %v602 = vld [vmem:[%s4 + $0x710] sm:$0xff]
  %v603 = vld [vmem:[%s4 + $0x718] sm:$0xff]
  %v604 = vld [vmem:[%s4 + $0x720] sm:$0xff]
  %v605 = vld [vmem:[%s4 + $0x728] sm:$0xff]
  %v606 = vld [vmem:[%s4 + $0x730] sm:$0xff]
  %v607 = vld [vmem:[%s4 + $0x738] sm:$0xff]
  %v608 = vld [vmem:[%s4 + $0x740] sm:$0xff]
  %v609 = vld [vmem:[%s4 + $0x748] sm:$0xff]
  %v610 = vld [vmem:[%s4 + $0x750] sm:$0xff]
  %v611 = vld [vmem:[%s4 + $0x758] sm:$0xff]
  %v612 = vld [vmem:[%s4 + $0x760] sm:$0xff]
  %v613 = vld [vmem:[%s4 + $0x768] sm:$0xff]
  %v614 = vld [vmem:[%s4 + $0x770] sm:$0xff]
  %v615 = vld [vmem:[%s4 + $0x778] sm:$0xff]
  %v616 = vld [vmem:[%s4 + $0x780] sm:$0xff]
  %v617 = vld [vmem:[%s4 + $0x788] sm:$0xff]
  %v618 = vld [vmem:[%s4 + $0x790] sm:$0xff]
  %v619 = vld [vmem:[%s4 + $0x798] sm:$0xff]
  %v620 = vld [vmem:[%s4 + $0x7a0] sm:$0xff]
  %v621 = vld [vmem:[%s4 + $0x7a8] sm:$0xff]
  %v622 = vld [vmem:[%s4 + $0x7b0] sm:$0xff]
  %v623 = vld [vmem:[%s4 + $0x7b8] sm:$0xff]
  %v624 = vld [vmem:[%s4 + $0x7c0] sm:$0xff]
  %v625 = vld [vmem:[%s4 + $0x7c8] sm:$0xff]
  %v626 = vld [vmem:[%s4 + $0x7d0] sm:$0xff]
  %v627 = vld [vmem:[%s4 + $0x7d8] sm:$0xff]
  %v628 = vld [vmem:[%s4 + $0x7e0] sm:$0xff]
  %v629 = vld [vmem:[%s4 + $0x7e8] sm:$0xff]
  %v630 = vld [vmem:[%s4 + $0x7f0] sm:$0xff]
  %v631 = vld [vmem:[%s4 + $0x7f8] sm:$0xff]
  %v632 = vld [vmem:[%s4 + $0x800] sm:$0xff]
  %v633 = vld [vmem:[%s4 + $0x808] sm:$0xff]
  %v634 = vld [vmem:[%s4 + $0x810] sm:$0xff]
  %v635 = vld [vmem:[%s4 + $0x818] sm:$0xff]
  %v636 = vld [vmem:[%s4 + $0x820] sm:$0xff]
  %v637 = vld [vmem:[%s4 + $0x828] sm:$0xff]
  %v638 = vld [vmem:[%s4 + $0x830] sm:$0xff]
  %v639 = vld [vmem:[%s4 + $0x838] sm:$0xff]
  %v640 = vld [vmem:[%s4 + $0x840] sm:$0xff]
  %v641 = vld [vmem:[%s4 + $0x848] sm:$0xff]
  %v642 = vld [vmem:[%s4 + $0x850] sm:$0xff]
  %v643 = vld [vmem:[%s4 + $0x858] sm:$0xff]
  %v644 = vld [vmem:[%s4 + $0x860] sm:$0xff]
  %v645 = vld [vmem:[%s4 + $0x868] sm:$0xff]
  %v646 = vld [vmem:[%s4 + $0x870] sm:$0xff]
  %v647 = vld [vmem:[%s4 + $0x878] sm:$0xff]
  %v648 = vld [vmem:[%s4 + $0x880] sm:$0xff]
  %v649 = vld [vmem:[%s4 + $0x888] sm:$0xff]
  %v650 = vld [vmem:[%s4 + $0x890] sm:$0xff]
  %v651 = vld [vmem:[%s4 + $0x898] sm:$0xff]
  %v652 = vld [vmem:[%s4 + $0x8a0] sm:$0xff]
  %v653 = vld [vmem:[%s4 + $0x8a8] sm:$0xff]
  %v654 = vld [vmem:[%s4 + $0x8b0] sm:$0xff]
  %v655 = vld [vmem:[%s4 + $0x8b8] sm:$0xff]
  %v656 = vld [vmem:[%s4 + $0x8c0] sm:$0xff]
  %v657 = vld [vmem:[%s4 + $0x8c8] sm:$0xff]
  %v658 = vld [vmem:[%s4 + $0x8d0] sm:$0xff]
  %v659 = vld [vmem:[%s4 + $0x8d8] sm:$0xff]
  %v660 = vld [vmem:[%s4 + $0x8e0] sm:$0xff]
  %v661 = vld [vmem:[%s4 + $0x8e8] sm:$0xff]
  %v662 = vld [vmem:[%s4 + $0x8f0] sm:$0xff]
  %v663 = vld [vmem:[%s4 + $0x8f8] sm:$0xff]
  %v664 = vld [vmem:[%s4 + $0x900] sm:$0xff]
  %v665 = vld [vmem:[%s4 + $0x908] sm:$0xff]
  %v666 = vld [vmem:[%s4 + $0x910] sm:$0xff]
  %v667 = vld [vmem:[%s4 + $0x918] sm:$0xff]
  %v668 = vld [vmem:[%s4 + $0x920] sm:$0xff]
  %v669 = vld [vmem:[%s4 + $0x928] sm:$0xff]
  %v670 = vld [vmem:[%s4 + $0x930] sm:$0xff]
  %v671 = vld [vmem:[%s4 + $0x938] sm:$0xff]
  %v672 = vld [vmem:[%s4 + $0x940] sm:$0xff]
  %v673 = vld [vmem:[%s4 + $0x948] sm:$0xff]
  %v674 = vld [vmem:[%s4 + $0x950] sm:$0xff]
  %v675 = vld [vmem:[%s4 + $0x958] sm:$0xff]
  %v676 = vld [vmem:[%s4 + $0x960] sm:$0xff]
  %v677 = vld [vmem:[%s4 + $0x968] sm:$0xff]
  %v678 = vld [vmem:[%s4 + $0x970] sm:$0xff]
  %v679 = vld [vmem:[%s4 + $0x978] sm:$0xff]
  %v680 = vld [vmem:[%s4 + $0x980] sm:$0xff]
  %v681 = vld [vmem:[%s4 + $0x988] sm:$0xff]
  %v682 = vld [vmem:[%s4 + $0x990] sm:$0xff]
  %v683 = vld [vmem:[%s4 + $0x998] sm:$0xff]
  %v684 = vld [vmem:[%s4 + $0x9a0] sm:$0xff]
  %v685 = vld [vmem:[%s4 + $0x9a8] sm:$0xff]
  %v686 = vld [vmem:[%s4 + $0x9b0] sm:$0xff]
  %v687 = vld [vmem:[%s4 + $0x9b8] sm:$0xff]
  %v688 = vld [vmem:[%s4 + $0x9c0] sm:$0xff]
  %v689 = vld [vmem:[%s4 + $0x9c8] sm:$0xff]
  %v690 = vld [vmem:[%s4 + $0x9d0] sm:$0xff]
  %v691 = vld [vmem:[%s4 + $0x9d8] sm:$0xff]
  %v692 = vld [vmem:[%s4 + $0x9e0] sm:$0xff]
  %v693 = vld [vmem:[%s4 + $0x9e8] sm:$0xff]
  %v694 = vld [vmem:[%s4 + $0x9f0] sm:$0xff]
  %v695 = vld [vmem:[%s4 + $0x9f8] sm:$0xff]
  %v696 = vld [vmem:[%s5] sm:$0xff]
  %v697 = vld [vmem:[%s5 + $0x8] sm:$0x3]
  %v699 = vlaneseq
  %v700 = vshrl.u32 %v699, 7
  %v701 = vsub.s32 0, %v700
  %v702 = vrot.slane %v375, %v701
  %v703 = vlaneseq
  %v704 = vshrl.u32 %v703, 7
  %v705 = vsub.s32 1, %v704
  %v706 = vrot.slane %v375, %v705
  %v712 = vcombine.high %v52, %v52
  %v714 = vunpack.c.l.s4 1983009808
  %v715 = vunpack.c.0.s8 %v714
  %v716 = vlaneseq
  %v717 = vshrl.u32 %v716, 7
  %v718 = vsub.s32 %v715, %v717
  %v719 = vrot.slane %v52, %v718
  %v721 = vunpack.c.l.s4 1983009808
  %v722 = vunpack.c.0.s8 %v721
  %v723 = vlaneseq
  %v724 = vshrl.u32 %v723, 7
  %v725 = vsub.s32 %v722, %v724
  %v726 = vrot.slane %v712, %v725
  %v727 = vcombine.high %v719, %v719
  %v728 = vcombine.high %v726, %v726
  %v729 = vcombine.high %v53, %v53
  %v731 = vunpack.c.l.s4 1983009808
  %v732 = vunpack.c.0.s8 %v731
  %v733 = vlaneseq
  %v734 = vshrl.u32 %v733, 7
  %v735 = vsub.s32 %v732, %v734
  %v736 = vrot.slane %v53, %v735
  %v738 = vunpack.c.l.s4 1983009808
  %v739 = vunpack.c.0.s8 %v738
  %v740 = vlaneseq
  %v741 = vshrl.u32 %v740, 7
  %v742 = vsub.s32 %v739, %v741
  %v743 = vrot.slane %v729, %v742
  %v744 = vcombine.high %v736, %v736
  %v745 = vcombine.high %v743, %v743
  %v747 = vunpack.c.l.s4 1983009808
  %v748 = vunpack.c.0.s8 %v747
  %v749 = vlaneseq
  %v750 = vshrl.u32 %v749, 7
  %v751 = vsub.s32 %v748, %v750
  %v752 = vrot.slane %v54, %v751
  %v753 = vcombine.high %v752, %v752
  %764 = vmatprep.subr.mxu0 %v56
  %765 = vmatpush1.msra.mxu0 %v55
  %766 = vmatprep.subr.mxu0 %v58
  %767 = vmatpush1.msra.mxu0 %v57
  %768 = vmatprep.subr.mxu0 %v60
  %769 = vmatpush1.msra.mxu0 %v59
  %770 = vmatprep.subr.mxu0 %v62
  %771 = vmatpush1.msra.mxu0 %v61
  %772 = vmatprep.subr.mxu0 %v64
  %773 = vmatpush1.msra.mxu0 %v63
  %774 = vmatprep.subr.mxu0 %v66
  %775 = vmatpush1.msra.mxu0 %v65
  %776 = vmatprep.subr.mxu0 %v68
  %777 = vmatpush1.msra.mxu0 %v67
  %778 = vmatprep.subr.mxu0 %v70
  %779 = vmatpush1.msra.mxu0 %v69
  %780 = vmatprep.subr.mxu0 %v72
  %781 = vmatpush1.msra.mxu0 %v71
  %782 = vmatprep.subr.mxu0 %v74
  %783 = vmatpush1.msra.mxu0 %v73
  %784 = vmatprep.subr.mxu0 %v76
  %785 = vmatpush1.msra.mxu0 %v75
  %786 = vmatprep.subr.mxu0 %v78
  %787 = vmatpush1.msra.mxu0 %v77
  %788 = vmatprep.subr.mxu0 %v80
  %789 = vmatpush1.msra.mxu0 %v79
  %790 = vmatprep.subr.mxu0 %v82
  %791 = vmatpush1.msra.mxu0 %v81
  %792 = vmatprep.subr.mxu0 %v84
  %793 = vmatpush1.msra.mxu0 %v83
  %794 = vmatprep.subr.mxu0 %v86
  %795 = vmatpush1.msra.mxu0 %v85
  %796 = vmatprep.subr.mxu0 %v88
  %797 = vmatpush1.msra.mxu0 %v87
  %798 = vmatprep.subr.mxu0 %v90
  %799 = vmatpush1.msra.mxu0 %v89
  %800 = vmatprep.subr.mxu0 %v92
  %801 = vmatpush1.msra.mxu0 %v91
  %802 = vmatprep.subr.mxu0 %v94
  %803 = vmatpush1.msra.mxu0 %v93
  %804 = vmatprep.subr.mxu0 %v96
  %805 = vmatpush1.msra.mxu0 %v95
  %806 = vmatprep.subr.mxu0 %v98
  %807 = vmatpush1.msra.mxu0 %v97
  %808 = vmatprep.subr.mxu0 %v100
  %809 = vmatpush1.msra.mxu0 %v99
  %810 = vmatprep.subr.mxu0 %v102
  %811 = vmatpush1.msra.mxu0 %v101
  %812 = vmatprep.subr.mxu0 %v104
  %813 = vmatpush1.msra.mxu0 %v103
  %814 = vmatprep.subr.mxu0 %v106
  %815 = vmatpush1.msra.mxu0 %v105
  %816 = vmatprep.subr.mxu0 %v108
  %817 = vmatpush1.msra.mxu0 %v107
  %818 = vmatprep.subr.mxu0 %v110
  %819 = vmatpush1.msra.mxu0 %v109
  %820 = vmatprep.subr.mxu0 %v112
  %821 = vmatpush1.msra.mxu0 %v111
  %822 = vmatprep.subr.mxu0 %v114
  %823 = vmatpush1.msra.mxu0 %v113
  %824 = vmatprep.subr.mxu0 %v116
  %825 = vmatpush1.msra.mxu0 %v115
  %826 = vmatprep.subr.mxu0 %v118
  %827 = vmatpush1.msra.mxu0 %v117
  %828 = vmatprep.mubr.f32.mxu0 %v727
  %829 = vmatmul.mubr.f32.gmra.mrb[0].mxu0 %v719
  %v830 = vpop.f32.mrb[0].mxu0
  %v831 = vadd.f32 %v702, %v830
  %v832 = vpop.f32.mrb[0].mxu0
  %v833 = vadd.f32 %v706, %v832
  %834 = vdwg.mxu0
  %835 = vmatprep.subr.mxu0 %v120
  %836 = vmatpush1.msra.mxu0 %v119
  %837 = vmatprep.subr.mxu0 %v122
  %838 = vmatpush1.msra.mxu0 %v121
  %839 = vmatprep.subr.mxu0 %v124
  %840 = vmatpush1.msra.mxu0 %v123
  %841 = vmatprep.subr.mxu0 %v126
  %842 = vmatpush1.msra.mxu0 %v125
  %843 = vmatprep.subr.mxu0 %v128
  %844 = vmatpush1.msra.mxu0 %v127
  %845 = vmatprep.subr.mxu0 %v130
  %846 = vmatpush1.msra.mxu0 %v129
  %847 = vmatprep.subr.mxu0 %v132
  %848 = vmatpush1.msra.mxu0 %v131
  %849 = vmatprep.subr.mxu0 %v134
  %850 = vmatpush1.msra.mxu0 %v133
  %851 = vmatprep.subr.mxu0 %v136
  %852 = vmatpush1.msra.mxu0 %v135
  %853 = vmatprep.subr.mxu0 %v138
  %854 = vmatpush1.msra.mxu0 %v137
  %855 = vmatprep.subr.mxu0 %v140
  %856 = vmatpush1.msra.mxu0 %v139
  %857 = vmatprep.subr.mxu0 %v142
  %858 = vmatpush1.msra.mxu0 %v141
  %859 = vmatprep.subr.mxu0 %v144
  %860 = vmatpush1.msra.mxu0 %v143
  %861 = vmatprep.subr.mxu0 %v146
  %862 = vmatpush1.msra.mxu0 %v145
  %863 = vmatprep.subr.mxu0 %v148
  %864 = vmatpush1.msra.mxu0 %v147
  %865 = vmatprep.subr.mxu0 %v150
  %866 = vmatpush1.msra.mxu0 %v149
  %867 = vmatprep.subr.mxu0 %v152
  %868 = vmatpush1.msra.mxu0 %v151
  %869 = vmatprep.subr.mxu0 %v154
  %870 = vmatpush1.msra.mxu0 %v153
  %871 = vmatprep.subr.mxu0 %v156
  %872 = vmatpush1.msra.mxu0 %v155
  %873 = vmatprep.subr.mxu0 %v158
  %874 = vmatpush1.msra.mxu0 %v157
  %875 = vmatprep.subr.mxu0 %v160
  %876 = vmatpush1.msra.mxu0 %v159
  %877 = vmatprep.subr.mxu0 %v162
  %878 = vmatpush1.msra.mxu0 %v161
  %879 = vmatprep.subr.mxu0 %v164
  %880 = vmatpush1.msra.mxu0 %v163
  %881 = vmatprep.subr.mxu0 %v166
  %882 = vmatpush1.msra.mxu0 %v165
  %883 = vmatprep.subr.mxu0 %v168
  %884 = vmatpush1.msra.mxu0 %v167
  %885 = vmatprep.subr.mxu0 %v170
  %886 = vmatpush1.msra.mxu0 %v169
  %887 = vmatprep.subr.mxu0 %v172
  %888 = vmatpush1.msra.mxu0 %v171
  %889 = vmatprep.subr.mxu0 %v174
  %890 = vmatpush1.msra.mxu0 %v173
  %891 = vmatprep.subr.mxu0 %v176
  %892 = vmatpush1.msra.mxu0 %v175
  %893 = vmatprep.subr.mxu0 %v178
  %894 = vmatpush1.msra.mxu0 %v177
  %895 = vmatprep.subr.mxu0 %v180
  %896 = vmatpush1.msra.mxu0 %v179
  %897 = vmatprep.subr.mxu0 %v182
  %898 = vmatpush1.msra.mxu0 %v181
  %899 = vmatprep.mubr.f32.mxu0 %v728
  %900 = vmatmul.mubr.f32.gmra.mrb[0].mxu0 %v726
  %v901 = vpop.f32.mrb[0].mxu0
  %v902 = vadd.f32 %v831, %v901
  %v903 = vpop.f32.mrb[0].mxu0
  %v904 = vadd.f32 %v833, %v903
  %905 = vdwg.mxu0
  %906 = vmatprep.subr.mxu0 %v184
  %907 = vmatpush1.msra.mxu0 %v183
  %908 = vmatprep.subr.mxu0 %v186
  %909 = vmatpush1.msra.mxu0 %v185
  %910 = vmatprep.subr.mxu0 %v188
  %911 = vmatpush1.msra.mxu0 %v187
  %912 = vmatprep.subr.mxu0 %v190
  %913 = vmatpush1.msra.mxu0 %v189
  %914 = vmatprep.subr.mxu0 %v192
  %915 = vmatpush1.msra.mxu0 %v191
  %916 = vmatprep.subr.mxu0 %v194
  %917 = vmatpush1.msra.mxu0 %v193
  %918 = vmatprep.subr.mxu0 %v196
  %919 = vmatpush1.msra.mxu0 %v195
  %920 = vmatprep.subr.mxu0 %v198
  %921 = vmatpush1.msra.mxu0 %v197
  %922 = vmatprep.subr.mxu0 %v200
  %923 = vmatpush1.msra.mxu0 %v199
  %924 = vmatprep.subr.mxu0 %v202
  %925 = vmatpush1.msra.mxu0 %v201
  %926 = vmatprep.subr.mxu0 %v204
  %927 = vmatpush1.msra.mxu0 %v203
  %928 = vmatprep.subr.mxu0 %v206
  %929 = vmatpush1.msra.mxu0 %v205
  %930 = vmatprep.subr.mxu0 %v208
  %931 = vmatpush1.msra.mxu0 %v207
  %932 = vmatprep.subr.mxu0 %v210
  %933 = vmatpush1.msra.mxu0 %v209
  %934 = vmatprep.subr.mxu0 %v212
  %935 = vmatpush1.msra.mxu0 %v211
  %936 = vmatprep.subr.mxu0 %v214
  %937 = vmatpush1.msra.mxu0 %v213
  %938 = vmatprep.subr.mxu0 %v216
  %939 = vmatpush1.msra.mxu0 %v215
  %940 = vmatprep.subr.mxu0 %v218
  %941 = vmatpush1.msra.mxu0 %v217
  %942 = vmatprep.subr.mxu0 %v220
  %943 = vmatpush1.msra.mxu0 %v219
  %944 = vmatprep.subr.mxu0 %v222
  %945 = vmatpush1.msra.mxu0 %v221
  %946 = vmatprep.subr.mxu0 %v224
  %947 = vmatpush1.msra.mxu0 %v223
  %948 = vmatprep.subr.mxu0 %v226
  %949 = vmatpush1.msra.mxu0 %v225
  %950 = vmatprep.subr.mxu0 %v228
  %951 = vmatpush1.msra.mxu0 %v227
  %952 = vmatprep.subr.mxu0 %v230
  %953 = vmatpush1.msra.mxu0 %v229
  %954 = vmatprep.subr.mxu0 %v232
  %955 = vmatpush1.msra.mxu0 %v231
  %956 = vmatprep.subr.mxu0 %v234
  %957 = vmatpush1.msra.mxu0 %v233
  %958 = vmatprep.subr.mxu0 %v236
  %959 = vmatpush1.msra.mxu0 %v235
  %960 = vmatprep.subr.mxu0 %v238
  %961 = vmatpush1.msra.mxu0 %v237
  %962 = vmatprep.subr.mxu0 %v240
  %963 = vmatpush1.msra.mxu0 %v239
  %964 = vmatprep.subr.mxu0 %v242
  %965 = vmatpush1.msra.mxu0 %v241
  %966 = vmatprep.subr.mxu0 %v244
  %967 = vmatpush1.msra.mxu0 %v243
  %968 = vmatprep.subr.mxu0 %v246
  %969 = vmatpush1.msra.mxu0 %v245
  %970 = vmatprep.mubr.f32.mxu0 %v744
  %971 = vmatmul.mubr.f32.gmra.mrb[0].mxu0 %v736
  %v972 = vpop.f32.mrb[0].mxu0
  %v973 = vadd.f32 %v902, %v972
  %v974 = vpop.f32.mrb[0].mxu0
  %v975 = vadd.f32 %v904, %v974
  %976 = vdwg.mxu0
  %977 = vmatprep.subr.mxu0 %v248
  %978 = vmatpush1.msra.mxu0 %v247
  %979 = vmatprep.subr.mxu0 %v250
  %980 = vmatpush1.msra.mxu0 %v249
  %981 = vmatprep.subr.mxu0 %v252
  %982 = vmatpush1.msra.mxu0 %v251
  %983 = vmatprep.subr.mxu0 %v254
  %984 = vmatpush1.msra.mxu0 %v253
  %985 = vmatprep.subr.mxu0 %v256
  %986 = vmatpush1.msra.mxu0 %v255
  %987 = vmatprep.subr.mxu0 %v258
  %988 = vmatpush1.msra.mxu0 %v257
  %989 = vmatprep.subr.mxu0 %v260
  %990 = vmatpush1.msra.mxu0 %v259
  %991 = vmatprep.subr.mxu0 %v262
  %992 = vmatpush1.msra.mxu0 %v261
  %993 = vmatprep.subr.mxu0 %v264
  %994 = vmatpush1.msra.mxu0 %v263
  %995 = vmatprep.subr.mxu0 %v266
  %996 = vmatpush1.msra.mxu0 %v265
  %997 = vmatprep.subr.mxu0 %v268
  %998 = vmatpush1.msra.mxu0 %v267
  %999 = vmatprep.subr.mxu0 %v270
  %1000 = vmatpush1.msra.mxu0 %v269
  %1001 = vmatprep.subr.mxu0 %v272
  %1002 = vmatpush1.msra.mxu0 %v271
  %1003 = vmatprep.subr.mxu0 %v274
  %1004 = vmatpush1.msra.mxu0 %v273
  %1005 = vmatprep.subr.mxu0 %v276
  %1006 = vmatpush1.msra.mxu0 %v275
  %1007 = vmatprep.subr.mxu0 %v278
  %1008 = vmatpush1.msra.mxu0 %v277
  %1009 = vmatprep.subr.mxu0 %v280
  %1010 = vmatpush1.msra.mxu0 %v279
  %1011 = vmatprep.subr.mxu0 %v282
  %1012 = vmatpush1.msra.mxu0 %v281
  %1013 = vmatprep.subr.mxu0 %v284
  %1014 = vmatpush1.msra.mxu0 %v283
  %1015 = vmatprep.subr.mxu0 %v286
  %1016 = vmatpush1.msra.mxu0 %v285
  %1017 = vmatprep.subr.mxu0 %v288
  %1018 = vmatpush1.msra.mxu0 %v287
  %1019 = vmatprep.subr.mxu0 %v290
  %1020 = vmatpush1.msra.mxu0 %v289
  %1021 = vmatprep.subr.mxu0 %v292
  %1022 = vmatpush1.msra.mxu0 %v291
  %1023 = vmatprep.subr.mxu0 %v294
  %1024 = vmatpush1.msra.mxu0 %v293
  %1025 = vmatprep.subr.mxu0 %v296
  %1026 = vmatpush1.msra.mxu0 %v295
  %1027 = vmatprep.subr.mxu0 %v298
  %1028 = vmatpush1.msra.mxu0 %v297
  %1029 = vmatprep.subr.mxu0 %v300
  %1030 = vmatpush1.msra.mxu0 %v299
  %1031 = vmatprep.subr.mxu0 %v302
  %1032 = vmatpush1.msra.mxu0 %v301
  %1033 = vmatprep.subr.mxu0 %v304
  %1034 = vmatpush1.msra.mxu0 %v303
  %1035 = vmatprep.subr.mxu0 %v306
  %1036 = vmatpush1.msra.mxu0 %v305
  %1037 = vmatprep.subr.mxu0 %v308
  %1038 = vmatpush1.msra.mxu0 %v307
  %1039 = vmatprep.subr.mxu0 %v310
  %1040 = vmatpush1.msra.mxu0 %v309
  %1041 = vmatprep.mubr.f32.mxu0 %v745
  %1042 = vmatmul.mubr.f32.gmra.mrb[0].mxu0 %v743
  %v1043 = vpop.f32.mrb[0].mxu0
  %v1044 = vadd.f32 %v973, %v1043
  %v1045 = vpop.f32.mrb[0].mxu0
  %v1046 = vadd.f32 %v975, %v1045
  %1047 = vdwg.mxu0
  %1048 = vmatprep.subr.mxu0 %v312
  %1049 = vmatpush1.msra.mxu0 %v311
  %1050 = vmatprep.subr.mxu0 %v314
  %1051 = vmatpush1.msra.mxu0 %v313
  %1052 = vmatprep.subr.mxu0 %v316
  %1053 = vmatpush1.msra.mxu0 %v315
  %1054 = vmatprep.subr.mxu0 %v318
  %1055 = vmatpush1.msra.mxu0 %v317
  %1056 = vmatprep.subr.mxu0 %v320
  %1057 = vmatpush1.msra.mxu0 %v319
  %1058 = vmatprep.subr.mxu0 %v322
  %1059 = vmatpush1.msra.mxu0 %v321
  %1060 = vmatprep.subr.mxu0 %v324
  %1061 = vmatpush1.msra.mxu0 %v323
  %1062 = vmatprep.subr.mxu0 %v326
  %1063 = vmatpush1.msra.mxu0 %v325
  %1064 = vmatprep.subr.mxu0 %v328
  %1065 = vmatpush1.msra.mxu0 %v327
  %1066 = vmatprep.subr.mxu0 %v330
  %1067 = vmatpush1.msra.mxu0 %v329
  %1068 = vmatprep.subr.mxu0 %v332
  %1069 = vmatpush1.msra.mxu0 %v331
  %1070 = vmatprep.subr.mxu0 %v334
  %1071 = vmatpush1.msra.mxu0 %v333
  %1072 = vmatprep.subr.mxu0 %v336
  %1073 = vmatpush1.msra.mxu0 %v335
  %1074 = vmatprep.subr.mxu0 %v338
  %1075 = vmatpush1.msra.mxu0 %v337
  %1076 = vmatprep.subr.mxu0 %v340
  %1077 = vmatpush1.msra.mxu0 %v339
  %1078 = vmatprep.subr.mxu0 %v342
  %1079 = vmatpush1.msra.mxu0 %v341
  %1080 = vmatprep.subr.mxu0 %v344
  %1081 = vmatpush1.msra.mxu0 %v343
  %1082 = vmatprep.subr.mxu0 %v346
  %1083 = vmatpush1.msra.mxu0 %v345
  %1084 = vmatprep.subr.mxu0 %v348
  %1085 = vmatpush1.msra.mxu0 %v347
  %1086 = vmatprep.subr.mxu0 %v350
  %1087 = vmatpush1.msra.mxu0 %v349
  %1088 = vmatprep.subr.mxu0 %v352
  %1089 = vmatpush1.msra.mxu0 %v351
  %1090 = vmatprep.subr.mxu0 %v354
  %1091 = vmatpush1.msra.mxu0 %v353
  %1092 = vmatprep.subr.mxu0 %v356
  %1093 = vmatpush1.msra.mxu0 %v355
  %1094 = vmatprep.subr.mxu0 %v358
  %1095 = vmatpush1.msra.mxu0 %v357
  %1096 = vmatprep.subr.mxu0 %v360
  %1097 = vmatpush1.msra.mxu0 %v359
  %1098 = vmatprep.subr.mxu0 %v362
  %1099 = vmatpush1.msra.mxu0 %v361
  %1100 = vmatprep.subr.mxu0 %v364
  %1101 = vmatpush1.msra.mxu0 %v363
  %1102 = vmatprep.subr.mxu0 %v366
  %1103 = vmatpush1.msra.mxu0 %v365
  %1104 = vmatprep.subr.mxu0 %v368
  %1105 = vmatpush1.msra.mxu0 %v367
  %1106 = vmatprep.subr.mxu0 %v370
  %1107 = vmatpush1.msra.mxu0 %v369
  %1108 = vmatprep.subr.mxu0 %v372
  %1109 = vmatpush1.msra.mxu0 %v371
  %1110 = vmatprep.subr.mxu0 %v374
  %1111 = vmatpush1.msra.mxu0 %v373
  %1112 = vmatprep.mubr.f32.mxu0 %v753
  %1113 = vmatmul.mubr.f32.gmra.mrb[0].mxu0 %v752
  %v1114 = vpop.f32.mrb[0].mxu0
  %v1115 = vadd.f32 %v1044, %v1114
  %v1116 = vpop.f32.mrb[0].mxu0
  %v1117 = vadd.f32 %v1046, %v1116
  %1118 = vdwg.mxu0
  %v1119 = vmax.f32 %v1115, 0.0
  %v1120 = vmax.f32 %v1117, 0.0
  %v1123 = vlaneseq
  %v1124 = vshrl.u32 %v1123, 7
  %v1125 = vsub.s32 0, %v1124
  %v1126 = vrot.slane %v696, %v1125
  %v1127 = vlaneseq
  %v1128 = vshrl.u32 %v1127, 7
  %v1129 = vsub.s32 1, %v1128
  %v1130 = vrot.slane %v696, %v1129
  %v1131 = vlaneseq
  %v1132 = vshrl.u32 %v1131, 7
  %v1133 = vsub.s32 2, %v1132
  %v1134 = vrot.slane %v696, %v1133
  %v1135 = vlaneseq
  %v1136 = vshrl.u32 %v1135, 7
  %v1137 = vsub.s32 3, %v1136
  %v1138 = vrot.slane %v696, %v1137
  %v1139 = vlaneseq
  %v1140 = vshrl.u32 %v1139, 7
  %v1141 = vsub.s32 4, %v1140
  %v1142 = vrot.slane %v696, %v1141
  %v1143 = vlaneseq
  %v1144 = vshrl.u32 %v1143, 7
  %v1145 = vsub.s32 5, %v1144
  %v1146 = vrot.slane %v696, %v1145
  %v1147 = vlaneseq
  %v1148 = vshrl.u32 %v1147, 7
  %v1149 = vsub.s32 6, %v1148
  %v1150 = vrot.slane %v696, %v1149
  %v1151 = vlaneseq
  %v1152 = vshrl.u32 %v1151, 7
  %v1153 = vsub.s32 7, %v1152
  %v1154 = vrot.slane %v696, %v1153
  %v1155 = vlaneseq
  %v1156 = vshrl.u32 %v1155, 7
  %v1157 = vsub.s32 0, %v1156
  %v1158 = vrot.slane %v697, %v1157
  %v1159 = vlaneseq
  %v1160 = vshrl.u32 %v1159, 7
  %v1161 = vsub.s32 1, %v1160
  %v1162 = vrot.slane %v697, %v1161
  %1173 = vmatprep.subr.mxu0 %v377
  %1174 = vmatpush1.msra.mxu0 %v376
  %1175 = vmatprep.subr.mxu0 %v387
  %1176 = vmatpush1.msra.mxu0 %v386
  %1177 = vmatprep.subr.mxu0 %v397
  %1178 = vmatpush1.msra.mxu0 %v396
  %1179 = vmatprep.subr.mxu0 %v407
  %1180 = vmatpush1.msra.mxu0 %v406
  %1181 = vmatprep.subr.mxu0 %v417
  %1182 = vmatpush1.msra.mxu0 %v416
  %1183 = vmatprep.subr.mxu0 %v427
  %1184 = vmatpush1.msra.mxu0 %v426
  %1185 = vmatprep.subr.mxu0 %v437
  %1186 = vmatpush1.msra.mxu0 %v436
  %1187 = vmatprep.subr.mxu0 %v447
  %1188 = vmatpush1.msra.mxu0 %v446
  %1189 = vmatprep.subr.mxu0 %v457
  %1190 = vmatpush1.msra.mxu0 %v456
  %1191 = vmatprep.subr.mxu0 %v467
  %1192 = vmatpush1.msra.mxu0 %v466
  %1193 = vmatprep.subr.mxu0 %v477
  %1194 = vmatpush1.msra.mxu0 %v476
  %1195 = vmatprep.subr.mxu0 %v487
  %1196 = vmatpush1.msra.mxu0 %v486
  %1197 = vmatprep.subr.mxu0 %v497
  %1198 = vmatpush1.msra.mxu0 %v496
  %1199 = vmatprep.subr.mxu0 %v507
  %1200 = vmatpush1.msra.mxu0 %v506
  %1201 = vmatprep.subr.mxu0 %v517
  %1202 = vmatpush1.msra.mxu0 %v516
  %1203 = vmatprep.subr.mxu0 %v527
  %1204 = vmatpush1.msra.mxu0 %v526
  %1205 = vmatprep.subr.mxu0 %v537
  %1206 = vmatpush1.msra.mxu0 %v536
  %1207 = vmatprep.subr.mxu0 %v547
  %1208 = vmatpush1.msra.mxu0 %v546
  %1209 = vmatprep.subr.mxu0 %v557
  %1210 = vmatpush1.msra.mxu0 %v556
  %1211 = vmatprep.subr.mxu0 %v567
  %1212 = vmatpush1.msra.mxu0 %v566
  %1213 = vmatprep.subr.mxu0 %v577
  %1214 = vmatpush1.msra.mxu0 %v576
  %1215 = vmatprep.subr.mxu0 %v587
  %1216 = vmatpush1.msra.mxu0 %v586
  %1217 = vmatprep.subr.mxu0 %v597
  %1218 = vmatpush1.msra.mxu0 %v596
  %1219 = vmatprep.subr.mxu0 %v607
  %1220 = vmatpush1.msra.mxu0 %v606
  %1221 = vmatprep.subr.mxu0 %v617
  %1222 = vmatpush1.msra.mxu0 %v616
  %1223 = vmatprep.subr.mxu0 %v627
  %1224 = vmatpush1.msra.mxu0 %v626
  %1225 = vmatprep.subr.mxu0 %v637
  %1226 = vmatpush1.msra.mxu0 %v636
  %1227 = vmatprep.subr.mxu0 %v647
  %1228 = vmatpush1.msra.mxu0 %v646
  %1229 = vmatprep.subr.mxu0 %v657
  %1230 = vmatpush1.msra.mxu0 %v656
  %1231 = vmatprep.subr.mxu0 %v667
  %1232 = vmatpush1.msra.mxu0 %v666
  %1233 = vmatprep.subr.mxu0 %v677
  %1234 = vmatpush1.msra.mxu0 %v676
  %1235 = vmatprep.subr.mxu0 %v687
  %1236 = vmatpush1.msra.mxu0 %v686
  %1237 = vmatprep.mubr.f32.mxu0 %v1120
  %1238 = vmatmul.mubr.f32.gmra.mrb[0].mxu0 %v1119
  %v1239 = vpop.f32.mrb[0].mxu0
  %v1240 = vadd.f32 %v1126, %v1239
  %v1241 = vpop.f32.mrb[0].mxu0
  %v1242 = vadd.f32 %v1130, %v1241
  %1243 = vdwg.mxu0
  %1244 = vmatprep.subr.mxu0 %v379
  %1245 = vmatpush1.msra.mxu0 %v378
  %1246 = vmatprep.subr.mxu0 %v389
  %1247 = vmatpush1.msra.mxu0 %v388
  %1248 = vmatprep.subr.mxu0 %v399
  %1249 = vmatpush1.msra.mxu0 %v398
  %1250 = vmatprep.subr.mxu0 %v409
  %1251 = vmatpush1.msra.mxu0 %v408
  %1252 = vmatprep.subr.mxu0 %v419
  %1253 = vmatpush1.msra.mxu0 %v418
  %1254 = vmatprep.subr.mxu0 %v429
  %1255 = vmatpush1.msra.mxu0 %v428
  %1256 = vmatprep.subr.mxu0 %v439
  %1257 = vmatpush1.msra.mxu0 %v438
  %1258 = vmatprep.subr.mxu0 %v449
  %1259 = vmatpush1.msra.mxu0 %v448
  %1260 = vmatprep.subr.mxu0 %v459
  %1261 = vmatpush1.msra.mxu0 %v458
  %1262 = vmatprep.subr.mxu0 %v469
  %1263 = vmatpush1.msra.mxu0 %v468
  %1264 = vmatprep.subr.mxu0 %v479
  %1265 = vmatpush1.msra.mxu0 %v478
  %1266 = vmatprep.subr.mxu0 %v489
  %1267 = vmatpush1.msra.mxu0 %v488
  %1268 = vmatprep.subr.mxu0 %v499
  %1269 = vmatpush1.msra.mxu0 %v498
  %1270 = vmatprep.subr.mxu0 %v509
  %1271 = vmatpush1.msra.mxu0 %v508
  %1272 = vmatprep.subr.mxu0 %v519
  %1273 = vmatpush1.msra.mxu0 %v518
  %1274 = vmatprep.subr.mxu0 %v529
  %1275 = vmatpush1.msra.mxu0 %v528
  %1276 = vmatprep.subr.mxu0 %v539
  %1277 = vmatpush1.msra.mxu0 %v538
  %1278 = vmatprep.subr.mxu0 %v549
  %1279 = vmatpush1.msra.mxu0 %v548
  %1280 = vmatprep.subr.mxu0 %v559
  %1281 = vmatpush1.msra.mxu0 %v558
  %1282 = vmatprep.subr.mxu0 %v569
  %1283 = vmatpush1.msra.mxu0 %v568
  %1284 = vmatprep.subr.mxu0 %v579
  %1285 = vmatpush1.msra.mxu0 %v578
  %1286 = vmatprep.subr.mxu0 %v589
  %1287 = vmatpush1.msra.mxu0 %v588
  %1288 = vmatprep.subr.mxu0 %v599
  %1289 = vmatpush1.msra.mxu0 %v598
  %1290 = vmatprep.subr.mxu0 %v609
  %1291 = vmatpush1.msra.mxu0 %v608
  %1292 = vmatprep.subr.mxu0 %v619
  %1293 = vmatpush1.msra.mxu0 %v618
  %1294 = vmatprep.subr.mxu0 %v629
  %1295 = vmatpush1.msra.mxu0 %v628
  %1296 = vmatprep.subr.mxu0 %v639
  %1297 = vmatpush1.msra.mxu0 %v638
  %1298 = vmatprep.subr.mxu0 %v649
  %1299 = vmatpush1.msra.mxu0 %v648
  %1300 = vmatprep.subr.mxu0 %v659
  %1301 = vmatpush1.msra.mxu0 %v658
  %1302 = vmatprep.subr.mxu0 %v669
  %1303 = vmatpush1.msra.mxu0 %v668
  %1304 = vmatprep.subr.mxu0 %v679
  %1305 = vmatpush1.msra.mxu0 %v678
  %1306 = vmatprep.subr.mxu0 %v689
  %1307 = vmatpush1.msra.mxu0 %v688
  %1308 = vmatprep.mubr.f32.mxu0 %v1120
  %1309 = vmatmul.mubr.f32.gmra.mrb[0].mxu0 %v1119
  %v1310 = vpop.f32.mrb[0].mxu0
  %v1311 = vadd.f32 %v1134, %v1310
  %v1312 = vpop.f32.mrb[0].mxu0
  %v1313 = vadd.f32 %v1138, %v1312
  %1314 = vdwg.mxu0
  %1315 = vmatprep.subr.mxu0 %v381
  %1316 = vmatpush1.msra.mxu0 %v380
  %1317 = vmatprep.subr.mxu0 %v391
  %1318 = vmatpush1.msra.mxu0 %v390
  %1319 = vmatprep.subr.mxu0 %v401
  %1320 = vmatpush1.msra.mxu0 %v400
  %1321 = vmatprep.subr.mxu0 %v411
  %1322 = vmatpush1.msra.mxu0 %v410
  %1323 = vmatprep.subr.mxu0 %v421
  %1324 = vmatpush1.msra.mxu0 %v420
  %1325 = vmatprep.subr.mxu0 %v431
  %1326 = vmatpush1.msra.mxu0 %v430
  %1327 = vmatprep.subr.mxu0 %v441
  %1328 = vmatpush1.msra.mxu0 %v440
  %1329 = vmatprep.subr.mxu0 %v451
  %1330 = vmatpush1.msra.mxu0 %v450
  %1331 = vmatprep.subr.mxu0 %v461
  %1332 = vmatpush1.msra.mxu0 %v460
  %1333 = vmatprep.subr.mxu0 %v471
  %1334 = vmatpush1.msra.mxu0 %v470
  %1335 = vmatprep.subr.mxu0 %v481
  %1336 = vmatpush1.msra.mxu0 %v480
  %1337 = vmatprep.subr.mxu0 %v491
  %1338 = vmatpush1.msra.mxu0 %v490
  %1339 = vmatprep.subr.mxu0 %v501
  %1340 = vmatpush1.msra.mxu0 %v500
  %1341 = vmatprep.subr.mxu0 %v511
  %1342 = vmatpush1.msra.mxu0 %v510
  %1343 = vmatprep.subr.mxu0 %v521
  %1344 = vmatpush1.msra.mxu0 %v520
  %1345 = vmatprep.subr.mxu0 %v531
  %1346 = vmatpush1.msra.mxu0 %v530
  %1347 = vmatprep.subr.mxu0 %v541
  %1348 = vmatpush1.msra.mxu0 %v540
  %1349 = vmatprep.subr.mxu0 %v551
  %1350 = vmatpush1.msra.mxu0 %v550
  %1351 = vmatprep.subr.mxu0 %v561
  %1352 = vmatpush1.msra.mxu0 %v560
  %1353 = vmatprep.subr.mxu0 %v571
  %1354 = vmatpush1.msra.mxu0 %v570
  %1355 = vmatprep.subr.mxu0 %v581
  %1356 = vmatpush1.msra.mxu0 %v580
  %1357 = vmatprep.subr.mxu0 %v591
  %1358 = vmatpush1.msra.mxu0 %v590
  %1359 = vmatprep.subr.mxu0 %v601
  %1360 = vmatpush1.msra.mxu0 %v600
  %1361 = vmatprep.subr.mxu0 %v611
  %1362 = vmatpush1.msra.mxu0 %v610
  %1363 = vmatprep.subr.mxu0 %v621
  %1364 = vmatpush1.msra.mxu0 %v620
  %1365 = vmatprep.subr.mxu0 %v631
  %1366 = vmatpush1.msra.mxu0 %v630
  %1367 = vmatprep.subr.mxu0 %v641
  %1368 = vmatpush1.msra.mxu0 %v640
  %1369 = vmatprep.subr.mxu0 %v651
  %1370 = vmatpush1.msra.mxu0 %v650
  %1371 = vmatprep.subr.mxu0 %v661
  %1372 = vmatpush1.msra.mxu0 %v660
  %1373 = vmatprep.subr.mxu0 %v671
  %1374 = vmatpush1.msra.mxu0 %v670
  %1375 = vmatprep.subr.mxu0 %v681
  %1376 = vmatpush1.msra.mxu0 %v680
  %1377 = vmatprep.subr.mxu0 %v691
  %1378 = vmatpush1.msra.mxu0 %v690
  %1379 = vmatprep.mubr.f32.mxu0 %v1120
  %1380 = vmatmul.mubr.f32.gmra.mrb[0].mxu0 %v1119
  %v1381 = vpop.f32.mrb[0].mxu0
  %v1382 = vadd.f32 %v1142, %v1381
  %v1383 = vpop.f32.mrb[0].mxu0
  %v1384 = vadd.f32 %v1146, %v1383
  %1385 = vdwg.mxu0
  %1386 = vmatprep.subr.mxu0 %v383
  %1387 = vmatpush1.msra.mxu0 %v382
  %1388 = vmatprep.subr.mxu0 %v393
  %1389 = vmatpush1.msra.mxu0 %v392
  %1390 = vmatprep.subr.mxu0 %v403
  %1391 = vmatpush1.msra.mxu0 %v402
  %1392 = vmatprep.subr.mxu0 %v413
  %1393 = vmatpush1.msra.mxu0 %v412
  %1394 = vmatprep.subr.mxu0 %v423
  %1395 = vmatpush1.msra.mxu0 %v422
  %1396 = vmatprep.subr.mxu0 %v433
  %1397 = vmatpush1.msra.mxu0 %v432
  %1398 = vmatprep.subr.mxu0 %v443
  %1399 = vmatpush1.msra.mxu0 %v442
  %1400 = vmatprep.subr.mxu0 %v453
  %1401 = vmatpush1.msra.mxu0 %v452
  %1402 = vmatprep.subr.mxu0 %v463
  %1403 = vmatpush1.msra.mxu0 %v462
  %1404 = vmatprep.subr.mxu0 %v473
  %1405 = vmatpush1.msra.mxu0 %v472
  %1406 = vmatprep.subr.mxu0 %v483
  %1407 = vmatpush1.msra.mxu0 %v482
  %1408 = vmatprep.subr.mxu0 %v493
  %1409 = vmatpush1.msra.mxu0 %v492
  %1410 = vmatprep.subr.mxu0 %v503
  %1411 = vmatpush1.msra.mxu0 %v502
  %1412 = vmatprep.subr.mxu0 %v513
  %1413 = vmatpush1.msra.mxu0 %v512
  %1414 = vmatprep.subr.mxu0 %v523
  %1415 = vmatpush1.msra.mxu0 %v522
  %1416 = vmatprep.subr.mxu0 %v533
  %1417 = vmatpush1.msra.mxu0 %v532
  %1418 = vmatprep.subr.mxu0 %v543
  %1419 = vmatpush1.msra.mxu0 %v542
  %1420 = vmatprep.subr.mxu0 %v553
  %1421 = vmatpush1.msra.mxu0 %v552
  %1422 = vmatprep.subr.mxu0 %v563
  %1423 = vmatpush1.msra.mxu0 %v562
  %1424 = vmatprep.subr.mxu0 %v573
  %1425 = vmatpush1.msra.mxu0 %v572
  %1426 = vmatprep.subr.mxu0 %v583
  %1427 = vmatpush1.msra.mxu0 %v582
  %1428 = vmatprep.subr.mxu0 %v593
  %1429 = vmatpush1.msra.mxu0 %v592
  %1430 = vmatprep.subr.mxu0 %v603
  %1431 = vmatpush1.msra.mxu0 %v602
  %1432 = vmatprep.subr.mxu0 %v613
  %1433 = vmatpush1.msra.mxu0 %v612
  %1434 = vmatprep.subr.mxu0 %v623
  %1435 = vmatpush1.msra.mxu0 %v622
  %1436 = vmatprep.subr.mxu0 %v633
  %1437 = vmatpush1.msra.mxu0 %v632
  %1438 = vmatprep.subr.mxu0 %v643
  %1439 = vmatpush1.msra.mxu0 %v642
  %1440 = vmatprep.subr.mxu0 %v653
  %1441 = vmatpush1.msra.mxu0 %v652
  %1442 = vmatprep.subr.mxu0 %v663
  %1443 = vmatpush1.msra.mxu0 %v662
  %1444 = vmatprep.subr.mxu0 %v673
  %1445 = vmatpush1.msra.mxu0 %v672
  %1446 = vmatprep.subr.mxu0 %v683
  %1447 = vmatpush1.msra.mxu0 %v682
  %1448 = vmatprep.subr.mxu0 %v693
  %1449 = vmatpush1.msra.mxu0 %v692
  %1450 = vmatprep.mubr.f32.mxu0 %v1120
  %1451 = vmatmul.mubr.f32.gmra.mrb[0].mxu0 %v1119
  %v1452 = vpop.f32.mrb[0].mxu0
  %v1453 = vadd.f32 %v1150, %v1452
  %v1454 = vpop.f32.mrb[0].mxu0
  %v1455 = vadd.f32 %v1154, %v1454
  %1456 = vdwg.mxu0
  %1457 = vmatprep.subr.mxu0 %v385
  %1458 = vmatpush1.msra.mxu0 %v384
  %1459 = vmatprep.subr.mxu0 %v395
  %1460 = vmatpush1.msra.mxu0 %v394
  %1461 = vmatprep.subr.mxu0 %v405
  %1462 = vmatpush1.msra.mxu0 %v404
  %1463 = vmatprep.subr.mxu0 %v415
  %1464 = vmatpush1.msra.mxu0 %v414
  %1465 = vmatprep.subr.mxu0 %v425
  %1466 = vmatpush1.msra.mxu0 %v424
  %1467 = vmatprep.subr.mxu0 %v435
  %1468 = vmatpush1.msra.mxu0 %v434
  %1469 = vmatprep.subr.mxu0 %v445
  %1470 = vmatpush1.msra.mxu0 %v444
  %1471 = vmatprep.subr.mxu0 %v455
  %1472 = vmatpush1.msra.mxu0 %v454
  %1473 = vmatprep.subr.mxu0 %v465
  %1474 = vmatpush1.msra.mxu0 %v464
  %1475 = vmatprep.subr.mxu0 %v475
  %1476 = vmatpush1.msra.mxu0 %v474
  %1477 = vmatprep.subr.mxu0 %v485
  %1478 = vmatpush1.msra.mxu0 %v484
  %1479 = vmatprep.subr.mxu0 %v495
  %1480 = vmatpush1.msra.mxu0 %v494
  %1481 = vmatprep.subr.mxu0 %v505
  %1482 = vmatpush1.msra.mxu0 %v504
  %1483 = vmatprep.subr.mxu0 %v515
  %1484 = vmatpush1.msra.mxu0 %v514
  %1485 = vmatprep.subr.mxu0 %v525
  %1486 = vmatpush1.msra.mxu0 %v524
  %1487 = vmatprep.subr.mxu0 %v535
  %1488 = vmatpush1.msra.mxu0 %v534
  %1489 = vmatprep.subr.mxu0 %v545
  %1490 = vmatpush1.msra.mxu0 %v544
  %1491 = vmatprep.subr.mxu0 %v555
  %1492 = vmatpush1.msra.mxu0 %v554
  %1493 = vmatprep.subr.mxu0 %v565
  %1494 = vmatpush1.msra.mxu0 %v564
  %1495 = vmatprep.subr.mxu0 %v575
  %1496 = vmatpush1.msra.mxu0 %v574
  %1497 = vmatprep.subr.mxu0 %v585
  %1498 = vmatpush1.msra.mxu0 %v584
  %1499 = vmatprep.subr.mxu0 %v595
  %1500 = vmatpush1.msra.mxu0 %v594
  %1501 = vmatprep.subr.mxu0 %v605
  %1502 = vmatpush1.msra.mxu0 %v604
  %1503 = vmatprep.subr.mxu0 %v615
  %1504 = vmatpush1.msra.mxu0 %v614
  %1505 = vmatprep.subr.mxu0 %v625
  %1506 = vmatpush1.msra.mxu0 %v624
  %1507 = vmatprep.subr.mxu0 %v635
  %1508 = vmatpush1.msra.mxu0 %v634
  %1509 = vmatprep.subr.mxu0 %v645
  %1510 = vmatpush1.msra.mxu0 %v644
  %1511 = vmatprep.subr.mxu0 %v655
  %1512 = vmatpush1.msra.mxu0 %v654
  %1513 = vmatprep.subr.mxu0 %v665
  %1514 = vmatpush1.msra.mxu0 %v664
  %1515 = vmatprep.subr.mxu0 %v675
  %1516 = vmatpush1.msra.mxu0 %v674
  %1517 = vmatprep.subr.mxu0 %v685
  %1518 = vmatpush1.msra.mxu0 %v684
  %1519 = vmatprep.subr.mxu0 %v695
  %1520 = vmatpush1.msra.mxu0 %v694
  %1521 = vmatprep.mubr.f32.mxu0 %v1120
  %1522 = vmatmul.mubr.f32.gmra.mrb[0].mxu0 %v1119
  %v1523 = vpop.f32.mrb[0].mxu0
  %v1524 = vadd.f32 %v1158, %v1523
  %v1525 = vpop.f32.mrb[0].mxu0
  %v1526 = vadd.f32 %v1162, %v1525
  %1527 = vdwg.mxu0
  %v1528 = vxor.u32 %v1240, 2147483648
  %v1529 = vxor.u32 %v1242, 2147483648
  %v1530 = vxor.u32 %v1311, 2147483648
  %v1531 = vxor.u32 %v1313, 2147483648
  %v1532 = vxor.u32 %v1382, 2147483648
  %v1533 = vxor.u32 %v1384, 2147483648
  %v1534 = vxor.u32 %v1453, 2147483648
  %v1535 = vxor.u32 %v1455, 2147483648
  %v1536 = vxor.u32 %v1524, 2147483648
  %v1537 = vxor.u32 %v1526, 2147483648
  %v1538 = vmul.f32 %v1528, 1.442695
  %v1539 = vpow.pop %v1538
  %v1540 = vmul.f32 %v1529, 1.442695
  %v1541 = vpow.pop %v1540
  %v1542 = vmul.f32 %v1530, 1.442695
  %v1543 = vpow.pop %v1542
  %v1544 = vmul.f32 %v1531, 1.442695
  %v1545 = vpow.pop %v1544
  %v1546 = vmul.f32 %v1532, 1.442695
  %v1547 = vpow.pop %v1546
  %v1548 = vmul.f32 %v1533, 1.442695
  %v1549 = vpow.pop %v1548
  %v1550 = vmul.f32 %v1534, 1.442695
  %v1551 = vpow.pop %v1550
  %v1552 = vmul.f32 %v1535, 1.442695
  %v1553 = vpow.pop %v1552
  %v1554 = vmul.f32 %v1536, 1.442695
  %v1555 = vpow.pop %v1554
  %v1556 = vmul.f32 %v1537, 1.442695
  %v1557 = vpow.pop %v1556
  %v1558 = vadd.f32 %v1539, 1.0
  %v1559 = vadd.f32 %v1541, 1.0
  %v1560 = vadd.f32 %v1543, 1.0
  %v1561 = vadd.f32 %v1545, 1.0
  %v1562 = vadd.f32 %v1547, 1.0
  %v1563 = vadd.f32 %v1549, 1.0
  %v1564 = vadd.f32 %v1551, 1.0
  %v1565 = vadd.f32 %v1553, 1.0
  %v1566 = vadd.f32 %v1555, 1.0
  %v1567 = vadd.f32 %v1557, 1.0
  %v1568 = vrcp.pop %v1558
  %v1569 = vmul.f32 1.0, %v1568
  %v1570 = vrcp.pop %v1559
  %v1571 = vmul.f32 1.0, %v1570
  %v1572 = vrcp.pop %v1560
  %v1573 = vmul.f32 1.0, %v1572
  %v1574 = vrcp.pop %v1561
  %v1575 = vmul.f32 1.0, %v1574
  %v1576 = vrcp.pop %v1562
  %v1577 = vmul.f32 1.0, %v1576
  %v1578 = vrcp.pop %v1563
  %v1579 = vmul.f32 1.0, %v1578
  %v1580 = vrcp.pop %v1564
  %v1581 = vmul.f32 1.0, %v1580
  %v1582 = vrcp.pop %v1565
  %v1583 = vmul.f32 1.0, %v1582
  %v1584 = vrcp.pop %v1566
  %v1585 = vmul.f32 1.0, %v1584
  %v1586 = vrcp.pop %v1567
  %v1587 = vmul.f32 1.0, %v1586
  %v1598 = vcombine.low %v1569, %v1571
  %v1599 = vcombine.low %v1573, %v1575
  %v1601 = vunpack.c.l.s4 1983009808
  %v1602 = vunpack.c.0.s8 %v1601
  %v1603 = vlaneseq
  %v1604 = vshrl.u32 %v1603, 7
  %v1605 = vsub.s32 %v1602, %v1604
  %v1606 = vrot.slane %v1598, %v1605
  %v1608 = vunpack.c.l.s4 1983009808
  %v1609 = vunpack.c.0.s8 %v1608
  %v1610 = vlaneseq
  %v1611 = vshrl.u32 %v1610, 7
  %v1612 = vsub.s32 %v1609, %v1611
  %v1613 = vrot.slane %v1599, %v1612
  %v1614 = vcombine.low %v1606, %v1613
  %v1615 = vcombine.low %v1577, %v1579
  %v1616 = vcombine.low %v1581, %v1583
  %v1618 = vunpack.c.l.s4 1983009808
  %v1619 = vunpack.c.0.s8 %v1618
  %v1620 = vlaneseq
  %v1621 = vshrl.u32 %v1620, 7
  %v1622 = vsub.s32 %v1619, %v1621
  %v1623 = vrot.slane %v1615, %v1622
  %v1625 = vunpack.c.l.s4 1983009808
  %v1626 = vunpack.c.0.s8 %v1625
  %v1627 = vlaneseq
  %v1628 = vshrl.u32 %v1627, 7
  %v1629 = vsub.s32 %v1626, %v1628
  %v1630 = vrot.slane %v1616, %v1629
  %v1631 = vcombine.low %v1623, %v1630
  %v1632 = vcombine.low %v1585, %v1587
  %v1634 = vunpack.c.l.s4 1983009808
  %v1635 = vunpack.c.0.s8 %v1634
  %v1636 = vlaneseq
  %v1637 = vshrl.u32 %v1636, 7
  %v1638 = vsub.s32 %v1635, %v1637
  %v1639 = vrot.slane %v1632, %v1638
  %v1643 = vmul.f32 %v52, %v1614
  %v1644 = vmul.f32 %v53, %v1631
  %v1645 = vmul.f32 %v54, %v1639
  %v1646 = vld [vmem:[%s1] sm:$0xff]
  %v1647 = vld [vmem:[%s1 + $0x8] sm:$0xff]
  %v1648 = vld [vmem:[%s1 + $0x10] sm:$0xf]
  %v1649 = vld [vmem:[%s6] sm:$0xff]
  %v1650 = vld [vmem:[%s6 + $0x8] sm:$0xff]
  %v1651 = vld [vmem:[%s6 + $0x10] sm:$0xff]
  %v1652 = vld [vmem:[%s6 + $0x18] sm:$0xff]
  %v1653 = vld [vmem:[%s6 + $0x20] sm:$0xff]
  %v1654 = vld [vmem:[%s6 + $0x28] sm:$0xff]
  %v1655 = vld [vmem:[%s6 + $0x30] sm:$0xff]
  %v1656 = vld [vmem:[%s6 + $0x38] sm:$0xff]
  %v1657 = vld [vmem:[%s6 + $0x40] sm:$0xff]
  %v1658 = vld [vmem:[%s6 + $0x48] sm:$0xff]
  %v1659 = vld [vmem:[%s6 + $0x50] sm:$0xff]
  %v1660 = vld [vmem:[%s6 + $0x58] sm:$0xff]
  %v1661 = vld [vmem:[%s6 + $0x60] sm:$0xff]
  %v1662 = vld [vmem:[%s6 + $0x68] sm:$0xff]
  %v1663 = vld [vmem:[%s6 + $0x70] sm:$0xff]
  %v1664 = vld [vmem:[%s6 + $0x78] sm:$0xff]
  %v1665 = vld [vmem:[%s6 + $0x80] sm:$0xff]
  %v1666 = vld [vmem:[%s6 + $0x88] sm:$0xff]
  %v1667 = vld [vmem:[%s6 + $0x90] sm:$0xff]
  %v1668 = vld [vmem:[%s6 + $0x98] sm:$0xff]
  %v1669 = vld [vmem:[%s6 + $0xa0] sm:$0xff]
  %v1670 = vld [vmem:[%s6 + $0xa8] sm:$0xff]
  %v1671 = vld [vmem:[%s6 + $0xb0] sm:$0xff]
  %v1672 = vld [vmem:[%s6 + $0xb8] sm:$0xff]
  %v1673 = vld [vmem:[%s6 + $0xc0] sm:$0xff]
  %v1674 = vld [vmem:[%s6 + $0xc8] sm:$0xff]
  %v1675 = vld [vmem:[%s6 + $0xd0] sm:$0xff]
  %v1676 = vld [vmem:[%s6 + $0xd8] sm:$0xff]
  %v1677 = vld [vmem:[%s6 + $0xe0] sm:$0xff]
  %v1678 = vld [vmem:[%s6 + $0xe8] sm:$0xff]
  %v1679 = vld [vmem:[%s6 + $0xf0] sm:$0xff]
  %v1680 = vld [vmem:[%s6 + $0xf8] sm:$0xff]
  %v1681 = vld [vmem:[%s6 + $0x100] sm:$0xff]
  %v1682 = vld [vmem:[%s6 + $0x108] sm:$0xff]
  %v1683 = vld [vmem:[%s6 + $0x110] sm:$0xff]
  %v1684 = vld [vmem:[%s6 + $0x118] sm:$0xff]
  %v1685 = vld [vmem:[%s6 + $0x120] sm:$0xff]
  %v1686 = vld [vmem:[%s6 + $0x128] sm:$0xff]
  %v1687 = vld [vmem:[%s6 + $0x130] sm:$0xff]
  %v1688 = vld [vmem:[%s6 + $0x138] sm:$0xff]
  %v1689 = vld [vmem:[%s6 + $0x140] sm:$0xff]
  %v1690 = vld [vmem:[%s6 + $0x148] sm:$0xff]
  %v1691 = vld [vmem:[%s6 + $0x150] sm:$0xff]
  %v1692 = vld [vmem:[%s6 + $0x158] sm:$0xff]
  %v1693 = vld [vmem:[%s6 + $0x160] sm:$0xff]
  %v1694 = vld [vmem:[%s6 + $0x168] sm:$0xff]
  %v1695 = vld [vmem:[%s6 + $0x170] sm:$0xff]
  %v1696 = vld [vmem:[%s6 + $0x178] sm:$0xff]
  %v1697 = vld [vmem:[%s6 + $0x180] sm:$0xff]
  %v1698 = vld [vmem:[%s6 + $0x188] sm:$0xff]
  %v1699 = vld [vmem:[%s6 + $0x190] sm:$0xff]
  %v1700 = vld [vmem:[%s6 + $0x198] sm:$0xff]
  %v1701 = vld [vmem:[%s6 + $0x1a0] sm:$0xff]
  %v1702 = vld [vmem:[%s6 + $0x1a8] sm:$0xff]
  %v1703 = vld [vmem:[%s6 + $0x1b0] sm:$0xff]
  %v1704 = vld [vmem:[%s6 + $0x1b8] sm:$0xff]
  %v1705 = vld [vmem:[%s6 + $0x1c0] sm:$0xff]
  %v1706 = vld [vmem:[%s6 + $0x1c8] sm:$0xff]
  %v1707 = vld [vmem:[%s6 + $0x1d0] sm:$0xff]
  %v1708 = vld [vmem:[%s6 + $0x1d8] sm:$0xff]
  %v1709 = vld [vmem:[%s6 + $0x1e0] sm:$0xff]
  %v1710 = vld [vmem:[%s6 + $0x1e8] sm:$0xff]
  %v1711 = vld [vmem:[%s6 + $0x1f0] sm:$0xff]
  %v1712 = vld [vmem:[%s6 + $0x1f8] sm:$0xff]
  %v1713 = vld [vmem:[%s6 + $0x200] sm:$0xff]
  %v1714 = vld [vmem:[%s6 + $0x208] sm:$0xff]
  %v1715 = vld [vmem:[%s6 + $0x210] sm:$0xff]
  %v1716 = vld [vmem:[%s6 + $0x218] sm:$0xff]
  %v1717 = vld [vmem:[%s6 + $0x220] sm:$0xff]
  %v1718 = vld [vmem:[%s6 + $0x228] sm:$0xff]
  %v1719 = vld [vmem:[%s6 + $0x230] sm:$0xff]
  %v1720 = vld [vmem:[%s6 + $0x238] sm:$0xff]
  %v1721 = vld [vmem:[%s6 + $0x240] sm:$0xff]
  %v1722 = vld [vmem:[%s6 + $0x248] sm:$0xff]
  %v1723 = vld [vmem:[%s6 + $0x250] sm:$0xff]
  %v1724 = vld [vmem:[%s6 + $0x258] sm:$0xff]
  %v1725 = vld [vmem:[%s6 + $0x260] sm:$0xff]
  %v1726 = vld [vmem:[%s6 + $0x268] sm:$0xff]
  %v1727 = vld [vmem:[%s6 + $0x270] sm:$0xff]
  %v1728 = vld [vmem:[%s6 + $0x278] sm:$0xff]
  %v1729 = vld [vmem:[%s6 + $0x280] sm:$0xff]
  %v1730 = vld [vmem:[%s6 + $0x288] sm:$0xff]
  %v1731 = vld [vmem:[%s6 + $0x290] sm:$0xff]
  %v1732 = vld [vmem:[%s6 + $0x298] sm:$0xff]
  %v1733 = vld [vmem:[%s6 + $0x2a0] sm:$0xff]
  %v1734 = vld [vmem:[%s6 + $0x2a8] sm:$0xff]
  %v1735 = vld [vmem:[%s6 + $0x2b0] sm:$0xff]
  %v1736 = vld [vmem:[%s6 + $0x2b8] sm:$0xff]
  %v1737 = vld [vmem:[%s6 + $0x2c0] sm:$0xff]
  %v1738 = vld [vmem:[%s6 + $0x2c8] sm:$0xff]
  %v1739 = vld [vmem:[%s6 + $0x2d0] sm:$0xff]
  %v1740 = vld [vmem:[%s6 + $0x2d8] sm:$0xff]
  %v1741 = vld [vmem:[%s6 + $0x2e0] sm:$0xff]
  %v1742 = vld [vmem:[%s6 + $0x2e8] sm:$0xff]
  %v1743 = vld [vmem:[%s6 + $0x2f0] sm:$0xff]
  %v1744 = vld [vmem:[%s6 + $0x2f8] sm:$0xff]
  %v1745 = vld [vmem:[%s6 + $0x300] sm:$0xff]
  %v1746 = vld [vmem:[%s6 + $0x308] sm:$0xff]
  %v1747 = vld [vmem:[%s6 + $0x310] sm:$0xff]
  %v1748 = vld [vmem:[%s6 + $0x318] sm:$0xff]
  %v1749 = vld [vmem:[%s6 + $0x320] sm:$0xff]
  %v1750 = vld [vmem:[%s6 + $0x328] sm:$0xff]
  %v1751 = vld [vmem:[%s6 + $0x330] sm:$0xff]
  %v1752 = vld [vmem:[%s6 + $0x338] sm:$0xff]
  %v1753 = vld [vmem:[%s6 + $0x340] sm:$0xff]
  %v1754 = vld [vmem:[%s6 + $0x348] sm:$0xff]
  %v1755 = vld [vmem:[%s6 + $0x350] sm:$0xff]
  %v1756 = vld [vmem:[%s6 + $0x358] sm:$0xff]
  %v1757 = vld [vmem:[%s6 + $0x360] sm:$0xff]
  %v1758 = vld [vmem:[%s6 + $0x368] sm:$0xff]
  %v1759 = vld [vmem:[%s6 + $0x370] sm:$0xff]
  %v1760 = vld [vmem:[%s6 + $0x378] sm:$0xff]
  %v1761 = vld [vmem:[%s6 + $0x380] sm:$0xff]
  %v1762 = vld [vmem:[%s6 + $0x388] sm:$0xff]
  %v1763 = vld [vmem:[%s6 + $0x390] sm:$0xff]
  %v1764 = vld [vmem:[%s6 + $0x398] sm:$0xff]
  %v1765 = vld [vmem:[%s6 + $0x3a0] sm:$0xff]
  %v1766 = vld [vmem:[%s6 + $0x3a8] sm:$0xff]
  %v1767 = vld [vmem:[%s6 + $0x3b0] sm:$0xff]
  %v1768 = vld [vmem:[%s6 + $0x3b8] sm:$0xff]
  %v1769 = vld [vmem:[%s6 + $0x3c0] sm:$0xff]
  %v1770 = vld [vmem:[%s6 + $0x3c8] sm:$0xff]
  %v1771 = vld [vmem:[%s6 + $0x3d0] sm:$0xff]
  %v1772 = vld [vmem:[%s6 + $0x3d8] sm:$0xff]
  %v1773 = vld [vmem:[%s6 + $0x3e0] sm:$0xff]
  %v1774 = vld [vmem:[%s6 + $0x3e8] sm:$0xff]
  %v1775 = vld [vmem:[%s6 + $0x3f0] sm:$0xff]
  %v1776 = vld [vmem:[%s6 + $0x3f8] sm:$0xff]
  %v1777 = vld [vmem:[%s6 + $0x400] sm:$0xff]
  %v1778 = vld [vmem:[%s6 + $0x408] sm:$0xff]
  %v1779 = vld [vmem:[%s6 + $0x410] sm:$0xff]
  %v1780 = vld [vmem:[%s6 + $0x418] sm:$0xff]
  %v1781 = vld [vmem:[%s6 + $0x420] sm:$0xff]
  %v1782 = vld [vmem:[%s6 + $0x428] sm:$0xff]
  %v1783 = vld [vmem:[%s6 + $0x430] sm:$0xff]
  %v1784 = vld [vmem:[%s6 + $0x438] sm:$0xff]
  %v1785 = vld [vmem:[%s6 + $0x440] sm:$0xff]
  %v1786 = vld [vmem:[%s6 + $0x448] sm:$0xff]
  %v1787 = vld [vmem:[%s6 + $0x450] sm:$0xff]
  %v1788 = vld [vmem:[%s6 + $0x458] sm:$0xff]
  %v1789 = vld [vmem:[%s6 + $0x460] sm:$0xff]
  %v1790 = vld [vmem:[%s6 + $0x468] sm:$0xff]
  %v1791 = vld [vmem:[%s6 + $0x470] sm:$0xff]
  %v1792 = vld [vmem:[%s6 + $0x478] sm:$0xff]
  %v1793 = vld [vmem:[%s6 + $0x480] sm:$0xff]
  %v1794 = vld [vmem:[%s6 + $0x488] sm:$0xff]
  %v1795 = vld [vmem:[%s6 + $0x490] sm:$0xff]
  %v1796 = vld [vmem:[%s6 + $0x498] sm:$0xff]
  %v1797 = vld [vmem:[%s6 + $0x4a0] sm:$0xff]
  %v1798 = vld [vmem:[%s6 + $0x4a8] sm:$0xff]
  %v1799 = vld [vmem:[%s6 + $0x4b0] sm:$0xff]
  %v1800 = vld [vmem:[%s6 + $0x4b8] sm:$0xff]
  %v1801 = vld [vmem:[%s6 + $0x4c0] sm:$0xff]
  %v1802 = vld [vmem:[%s6 + $0x4c8] sm:$0xff]
  %v1803 = vld [vmem:[%s6 + $0x4d0] sm:$0xff]
  %v1804 = vld [vmem:[%s6 + $0x4d8] sm:$0xff]
  %v1805 = vld [vmem:[%s6 + $0x4e0] sm:$0xff]
  %v1806 = vld [vmem:[%s6 + $0x4e8] sm:$0xff]
  %v1807 = vld [vmem:[%s6 + $0x4f0] sm:$0xff]
  %v1808 = vld [vmem:[%s6 + $0x4f8] sm:$0xff]
  %v1809 = vld [vmem:[%s6 + $0x500] sm:$0xff]
  %v1810 = vld [vmem:[%s6 + $0x508] sm:$0xff]
  %v1811 = vld [vmem:[%s6 + $0x510] sm:$0xff]
  %v1812 = vld [vmem:[%s6 + $0x518] sm:$0xff]
  %v1813 = vld [vmem:[%s6 + $0x520] sm:$0xff]
  %v1814 = vld [vmem:[%s6 + $0x528] sm:$0xff]
  %v1815 = vld [vmem:[%s6 + $0x530] sm:$0xff]
  %v1816 = vld [vmem:[%s6 + $0x538] sm:$0xff]
  %v1817 = vld [vmem:[%s6 + $0x540] sm:$0xff]
  %v1818 = vld [vmem:[%s6 + $0x548] sm:$0xff]
  %v1819 = vld [vmem:[%s6 + $0x550] sm:$0xff]
  %v1820 = vld [vmem:[%s6 + $0x558] sm:$0xff]
  %v1821 = vld [vmem:[%s6 + $0x560] sm:$0xff]
  %v1822 = vld [vmem:[%s6 + $0x568] sm:$0xff]
  %v1823 = vld [vmem:[%s6 + $0x570] sm:$0xff]
  %v1824 = vld [vmem:[%s6 + $0x578] sm:$0xff]
  %v1825 = vld [vmem:[%s6 + $0x580] sm:$0xff]
  %v1826 = vld [vmem:[%s6 + $0x588] sm:$0xff]
  %v1827 = vld [vmem:[%s6 + $0x590] sm:$0xff]
  %v1828 = vld [vmem:[%s6 + $0x598] sm:$0xff]
  %v1829 = vld [vmem:[%s6 + $0x5a0] sm:$0xff]
  %v1830 = vld [vmem:[%s6 + $0x5a8] sm:$0xff]
  %v1831 = vld [vmem:[%s6 + $0x5b0] sm:$0xff]
  %v1832 = vld [vmem:[%s6 + $0x5b8] sm:$0xff]
  %v1833 = vld [vmem:[%s6 + $0x5c0] sm:$0xff]
  %v1834 = vld [vmem:[%s6 + $0x5c8] sm:$0xff]
  %v1835 = vld [vmem:[%s6 + $0x5d0] sm:$0xff]
  %v1836 = vld [vmem:[%s6 + $0x5d8] sm:$0xff]
  %v1837 = vld [vmem:[%s6 + $0x5e0] sm:$0xff]
  %v1838 = vld [vmem:[%s6 + $0x5e8] sm:$0xff]
  %v1839 = vld [vmem:[%s6 + $0x5f0] sm:$0xff]
  %v1840 = vld [vmem:[%s6 + $0x5f8] sm:$0xff]
  %v1841 = vld [vmem:[%s6 + $0x600] sm:$0xff]
  %v1842 = vld [vmem:[%s6 + $0x608] sm:$0xff]
  %v1843 = vld [vmem:[%s6 + $0x610] sm:$0xff]
  %v1844 = vld [vmem:[%s6 + $0x618] sm:$0xff]
  %v1845 = vld [vmem:[%s6 + $0x620] sm:$0xff]
  %v1846 = vld [vmem:[%s6 + $0x628] sm:$0xff]
  %v1847 = vld [vmem:[%s6 + $0x630] sm:$0xff]
  %v1848 = vld [vmem:[%s6 + $0x638] sm:$0xff]
  %v1849 = vld [vmem:[%s6 + $0x640] sm:$0xff]
  %v1850 = vld [vmem:[%s6 + $0x648] sm:$0xff]
  %v1851 = vld [vmem:[%s6 + $0x650] sm:$0xff]
  %v1852 = vld [vmem:[%s6 + $0x658] sm:$0xff]
  %v1853 = vld [vmem:[%s6 + $0x660] sm:$0xff]
  %v1854 = vld [vmem:[%s6 + $0x668] sm:$0xff]
  %v1855 = vld [vmem:[%s6 + $0x670] sm:$0xff]
  %v1856 = vld [vmem:[%s6 + $0x678] sm:$0xff]
  %v1857 = vld [vmem:[%s6 + $0x680] sm:$0xff]
  %v1858 = vld [vmem:[%s6 + $0x688] sm:$0xff]
  %v1859 = vld [vmem:[%s6 + $0x690] sm:$0xff]
  %v1860 = vld [vmem:[%s6 + $0x698] sm:$0xff]
  %v1861 = vld [vmem:[%s6 + $0x6a0] sm:$0xff]
  %v1862 = vld [vmem:[%s6 + $0x6a8] sm:$0xff]
  %v1863 = vld [vmem:[%s6 + $0x6b0] sm:$0xff]
  %v1864 = vld [vmem:[%s6 + $0x6b8] sm:$0xff]
  %v1865 = vld [vmem:[%s6 + $0x6c0] sm:$0xff]
  %v1866 = vld [vmem:[%s6 + $0x6c8] sm:$0xff]
  %v1867 = vld [vmem:[%s6 + $0x6d0] sm:$0xff]
  %v1868 = vld [vmem:[%s6 + $0x6d8] sm:$0xff]
  %v1869 = vld [vmem:[%s6 + $0x6e0] sm:$0xff]
  %v1870 = vld [vmem:[%s6 + $0x6e8] sm:$0xff]
  %v1871 = vld [vmem:[%s6 + $0x6f0] sm:$0xff]
  %v1872 = vld [vmem:[%s6 + $0x6f8] sm:$0xff]
  %v1873 = vld [vmem:[%s6 + $0x700] sm:$0xff]
  %v1874 = vld [vmem:[%s6 + $0x708] sm:$0xff]
  %v1875 = vld [vmem:[%s6 + $0x710] sm:$0xff]
  %v1876 = vld [vmem:[%s6 + $0x718] sm:$0xff]
  %v1877 = vld [vmem:[%s6 + $0x720] sm:$0xff]
  %v1878 = vld [vmem:[%s6 + $0x728] sm:$0xff]
  %v1879 = vld [vmem:[%s6 + $0x730] sm:$0xff]
  %v1880 = vld [vmem:[%s6 + $0x738] sm:$0xff]
  %v1881 = vld [vmem:[%s6 + $0x740] sm:$0xff]
  %v1882 = vld [vmem:[%s6 + $0x748] sm:$0xff]
  %v1883 = vld [vmem:[%s6 + $0x750] sm:$0xff]
  %v1884 = vld [vmem:[%s6 + $0x758] sm:$0xff]
  %v1885 = vld [vmem:[%s6 + $0x760] sm:$0xff]
  %v1886 = vld [vmem:[%s6 + $0x768] sm:$0xff]
  %v1887 = vld [vmem:[%s6 + $0x770] sm:$0xff]
  %v1888 = vld [vmem:[%s6 + $0x778] sm:$0xff]
  %v1889 = vld [vmem:[%s6 + $0x780] sm:$0xff]
  %v1890 = vld [vmem:[%s6 + $0x788] sm:$0xff]
  %v1891 = vld [vmem:[%s6 + $0x790] sm:$0xff]
  %v1892 = vld [vmem:[%s6 + $0x798] sm:$0xff]
  %v1893 = vld [vmem:[%s6 + $0x7a0] sm:$0xff]
  %v1894 = vld [vmem:[%s6 + $0x7a8] sm:$0xff]
  %v1895 = vld [vmem:[%s6 + $0x7b0] sm:$0xff]
  %v1896 = vld [vmem:[%s6 + $0x7b8] sm:$0xff]
  %v1897 = vld [vmem:[%s6 + $0x7c0] sm:$0xff]
  %v1898 = vld [vmem:[%s6 + $0x7c8] sm:$0xff]
  %v1899 = vld [vmem:[%s6 + $0x7d0] sm:$0xff]
  %v1900 = vld [vmem:[%s6 + $0x7d8] sm:$0xff]
  %v1901 = vld [vmem:[%s6 + $0x7e0] sm:$0xff]
  %v1902 = vld [vmem:[%s6 + $0x7e8] sm:$0xff]
  %v1903 = vld [vmem:[%s6 + $0x7f0] sm:$0xff]
  %v1904 = vld [vmem:[%s6 + $0x7f8] sm:$0xff]
  %v1905 = vld [vmem:[%s6 + $0x800] sm:$0xff]
  %v1906 = vld [vmem:[%s6 + $0x808] sm:$0xff]
  %v1907 = vld [vmem:[%s6 + $0x810] sm:$0xff]
  %v1908 = vld [vmem:[%s6 + $0x818] sm:$0xff]
  %v1909 = vld [vmem:[%s6 + $0x820] sm:$0xff]
  %v1910 = vld [vmem:[%s6 + $0x828] sm:$0xff]
  %v1911 = vld [vmem:[%s6 + $0x830] sm:$0xff]
  %v1912 = vld [vmem:[%s6 + $0x838] sm:$0xff]
  %v1913 = vld [vmem:[%s6 + $0x840] sm:$0xff]
  %v1914 = vld [vmem:[%s6 + $0x848] sm:$0xff]
  %v1915 = vld [vmem:[%s6 + $0x850] sm:$0xff]
  %v1916 = vld [vmem:[%s6 + $0x858] sm:$0xff]
  %v1917 = vld [vmem:[%s6 + $0x860] sm:$0xff]
  %v1918 = vld [vmem:[%s6 + $0x868] sm:$0xff]
  %v1919 = vld [vmem:[%s6 + $0x870] sm:$0xff]
  %v1920 = vld [vmem:[%s6 + $0x878] sm:$0xff]
  %v1921 = vld [vmem:[%s6 + $0x880] sm:$0xff]
  %v1922 = vld [vmem:[%s6 + $0x888] sm:$0xff]
  %v1923 = vld [vmem:[%s6 + $0x890] sm:$0xff]
  %v1924 = vld [vmem:[%s6 + $0x898] sm:$0xff]
  %v1925 = vld [vmem:[%s6 + $0x8a0] sm:$0xff]
  %v1926 = vld [vmem:[%s6 + $0x8a8] sm:$0xff]
  %v1927 = vld [vmem:[%s6 + $0x8b0] sm:$0xff]
  %v1928 = vld [vmem:[%s6 + $0x8b8] sm:$0xff]
  %v1929 = vld [vmem:[%s6 + $0x8c0] sm:$0xff]
  %v1930 = vld [vmem:[%s6 + $0x8c8] sm:$0xff]
  %v1931 = vld [vmem:[%s6 + $0x8d0] sm:$0xff]
  %v1932 = vld [vmem:[%s6 + $0x8d8] sm:$0xff]
  %v1933 = vld [vmem:[%s6 + $0x8e0] sm:$0xff]
  %v1934 = vld [vmem:[%s6 + $0x8e8] sm:$0xff]
  %v1935 = vld [vmem:[%s6 + $0x8f0] sm:$0xff]
  %v1936 = vld [vmem:[%s6 + $0x8f8] sm:$0xff]
  %v1937 = vld [vmem:[%s6 + $0x900] sm:$0xff]
  %v1938 = vld [vmem:[%s6 + $0x908] sm:$0xff]
  %v1939 = vld [vmem:[%s6 + $0x910] sm:$0xff]
  %v1940 = vld [vmem:[%s6 + $0x918] sm:$0xff]
  %v1941 = vld [vmem:[%s6 + $0x920] sm:$0xff]
  %v1942 = vld [vmem:[%s6 + $0x928] sm:$0xff]
  %v1943 = vld [vmem:[%s6 + $0x930] sm:$0xff]
  %v1944 = vld [vmem:[%s6 + $0x938] sm:$0xff]
  %v1945 = vld [vmem:[%s6 + $0x940] sm:$0xff]
  %v1946 = vld [vmem:[%s6 + $0x948] sm:$0xff]
  %v1947 = vld [vmem:[%s6 + $0x950] sm:$0xff]
  %v1948 = vld [vmem:[%s6 + $0x958] sm:$0xff]
  %v1949 = vld [vmem:[%s6 + $0x960] sm:$0xff]
  %v1950 = vld [vmem:[%s6 + $0x968] sm:$0xff]
  %v1951 = vld [vmem:[%s6 + $0x970] sm:$0xff]
  %v1952 = vld [vmem:[%s6 + $0x978] sm:$0xff]
  %v1953 = vld [vmem:[%s6 + $0x980] sm:$0xff]
  %v1954 = vld [vmem:[%s6 + $0x988] sm:$0xff]
  %v1955 = vld [vmem:[%s6 + $0x990] sm:$0xff]
  %v1956 = vld [vmem:[%s6 + $0x998] sm:$0xff]
  %v1957 = vld [vmem:[%s6 + $0x9a0] sm:$0xff]
  %v1958 = vld [vmem:[%s6 + $0x9a8] sm:$0xff]
  %v1959 = vld [vmem:[%s6 + $0x9b0] sm:$0xff]
  %v1960 = vld [vmem:[%s6 + $0x9b8] sm:$0xff]
  %v1961 = vld [vmem:[%s6 + $0x9c0] sm:$0xff]
  %v1962 = vld [vmem:[%s6 + $0x9c8] sm:$0xff]
  %v1963 = vld [vmem:[%s6 + $0x9d0] sm:$0xff]
  %v1964 = vld [vmem:[%s6 + $0x9d8] sm:$0xff]
  %v1965 = vld [vmem:[%s6 + $0x9e0] sm:$0xff]
  %v1966 = vld [vmem:[%s6 + $0x9e8] sm:$0xff]
  %v1967 = vld [vmem:[%s6 + $0x9f0] sm:$0xff]
  %v1968 = vld [vmem:[%s6 + $0x9f8] sm:$0xff]
  %v1969 = vld [vmem:[%s7] sm:$0x3]
  %v1970 = vld [vmem:[%s8] sm:$0xff]
  %v1971 = vld [vmem:[%s8 + $0x8] sm:$0xff]
  %v1972 = vld [vmem:[%s8 + $0x10] sm:$0xff]
  %v1973 = vld [vmem:[%s8 + $0x18] sm:$0xff]
  %v1974 = vld [vmem:[%s8 + $0x20] sm:$0xff]
  %v1975 = vld [vmem:[%s8 + $0x28] sm:$0xff]
  %v1976 = vld [vmem:[%s8 + $0x30] sm:$0xff]
  %v1977 = vld [vmem:[%s8 + $0x38] sm:$0xff]
  %v1978 = vld [vmem:[%s8 + $0x40] sm:$0xff]
  %v1979 = vld [vmem:[%s8 + $0x48] sm:$0xff]
  %v1980 = vld [vmem:[%s8 + $0x50] sm:$0xff]
  %v1981 = vld [vmem:[%s8 + $0x58] sm:$0xff]
  %v1982 = vld [vmem:[%s8 + $0x60] sm:$0xff]
  %v1983 = vld [vmem:[%s8 + $0x68] sm:$0xff]
  %v1984 = vld [vmem:[%s8 + $0x70] sm:$0xff]
  %v1985 = vld [vmem:[%s8 + $0x78] sm:$0xff]
  %v1986 = vld [vmem:[%s8 + $0x80] sm:$0xff]
  %v1987 = vld [vmem:[%s8 + $0x88] sm:$0xff]
  %v1988 = vld [vmem:[%s8 + $0x90] sm:$0xff]
  %v1989 = vld [vmem:[%s8 + $0x98] sm:$0xff]
  %v1990 = vld [vmem:[%s8 + $0xa0] sm:$0xff]
  %v1991 = vld [vmem:[%s8 + $0xa8] sm:$0xff]
  %v1992 = vld [vmem:[%s8 + $0xb0] sm:$0xff]
  %v1993 = vld [vmem:[%s8 + $0xb8] sm:$0xff]
  %v1994 = vld [vmem:[%s8 + $0xc0] sm:$0xff]
  %v1995 = vld [vmem:[%s8 + $0xc8] sm:$0xff]
  %v1996 = vld [vmem:[%s8 + $0xd0] sm:$0xff]
  %v1997 = vld [vmem:[%s8 + $0xd8] sm:$0xff]
  %v1998 = vld [vmem:[%s8 + $0xe0] sm:$0xff]
  %v1999 = vld [vmem:[%s8 + $0xe8] sm:$0xff]
  %v2000 = vld [vmem:[%s8 + $0xf0] sm:$0xff]
  %v2001 = vld [vmem:[%s8 + $0xf8] sm:$0xff]
  %v2002 = vld [vmem:[%s8 + $0x100] sm:$0xff]
  %v2003 = vld [vmem:[%s8 + $0x108] sm:$0xff]
  %v2004 = vld [vmem:[%s8 + $0x110] sm:$0xff]
  %v2005 = vld [vmem:[%s8 + $0x118] sm:$0xff]
  %v2006 = vld [vmem:[%s8 + $0x120] sm:$0xff]
  %v2007 = vld [vmem:[%s8 + $0x128] sm:$0xff]
  %v2008 = vld [vmem:[%s8 + $0x130] sm:$0xff]
  %v2009 = vld [vmem:[%s8 + $0x138] sm:$0xff]
  %v2010 = vld [vmem:[%s8 + $0x140] sm:$0xff]
  %v2011 = vld [vmem:[%s8 + $0x148] sm:$0xff]
  %v2012 = vld [vmem:[%s8 + $0x150] sm:$0xff]
  %v2013 = vld [vmem:[%s8 + $0x158] sm:$0xff]
  %v2014 = vld [vmem:[%s8 + $0x160] sm:$0xff]
  %v2015 = vld [vmem:[%s8 + $0x168] sm:$0xff]
  %v2016 = vld [vmem:[%s8 + $0x170] sm:$0xff]
  %v2017 = vld [vmem:[%s8 + $0x178] sm:$0xff]
  %v2018 = vld [vmem:[%s8 + $0x180] sm:$0xff]
  %v2019 = vld [vmem:[%s8 + $0x188] sm:$0xff]
  %v2020 = vld [vmem:[%s8 + $0x190] sm:$0xff]
  %v2021 = vld [vmem:[%s8 + $0x198] sm:$0xff]
  %v2022 = vld [vmem:[%s8 + $0x1a0] sm:$0xff]
  %v2023 = vld [vmem:[%s8 + $0x1a8] sm:$0xff]
  %v2024 = vld [vmem:[%s8 + $0x1b0] sm:$0xff]
  %v2025 = vld [vmem:[%s8 + $0x1b8] sm:$0xff]
  %v2026 = vld [vmem:[%s8 + $0x1c0] sm:$0xff]
  %v2027 = vld [vmem:[%s8 + $0x1c8] sm:$0xff]
  %v2028 = vld [vmem:[%s8 + $0x1d0] sm:$0xff]
  %v2029 = vld [vmem:[%s8 + $0x1d8] sm:$0xff]
  %v2030 = vld [vmem:[%s8 + $0x1e0] sm:$0xff]
  %v2031 = vld [vmem:[%s8 + $0x1e8] sm:$0xff]
  %v2032 = vld [vmem:[%s8 + $0x1f0] sm:$0xff]
  %v2033 = vld [vmem:[%s8 + $0x1f8] sm:$0xff]
  %v2034 = vld [vmem:[%s8 + $0x200] sm:$0xff]
  %v2035 = vld [vmem:[%s8 + $0x208] sm:$0xff]
  %v2036 = vld [vmem:[%s8 + $0x210] sm:$0xff]
  %v2037 = vld [vmem:[%s8 + $0x218] sm:$0xff]
  %v2038 = vld [vmem:[%s8 + $0x220] sm:$0xff]
  %v2039 = vld [vmem:[%s8 + $0x228] sm:$0xff]
  %v2040 = vld [vmem:[%s8 + $0x230] sm:$0xff]
  %v2041 = vld [vmem:[%s8 + $0x238] sm:$0xff]
  %v2042 = vld [vmem:[%s8 + $0x240] sm:$0xff]
  %v2043 = vld [vmem:[%s8 + $0x248] sm:$0xff]
  %v2044 = vld [vmem:[%s8 + $0x250] sm:$0xff]
  %v2045 = vld [vmem:[%s8 + $0x258] sm:$0xff]
  %v2046 = vld [vmem:[%s8 + $0x260] sm:$0xff]
  %v2047 = vld [vmem:[%s8 + $0x268] sm:$0xff]
  %v2048 = vld [vmem:[%s8 + $0x270] sm:$0xff]
  %v2049 = vld [vmem:[%s8 + $0x278] sm:$0xff]
  %v2050 = vld [vmem:[%s8 + $0x280] sm:$0xff]
  %v2051 = vld [vmem:[%s8 + $0x288] sm:$0xff]
  %v2052 = vld [vmem:[%s8 + $0x290] sm:$0xff]
  %v2053 = vld [vmem:[%s8 + $0x298] sm:$0xff]
  %v2054 = vld [vmem:[%s8 + $0x2a0] sm:$0xff]
  %v2055 = vld [vmem:[%s8 + $0x2a8] sm:$0xff]
  %v2056 = vld [vmem:[%s8 + $0x2b0] sm:$0xff]
  %v2057 = vld [vmem:[%s8 + $0x2b8] sm:$0xff]
  %v2058 = vld [vmem:[%s8 + $0x2c0] sm:$0xff]
  %v2059 = vld [vmem:[%s8 + $0x2c8] sm:$0xff]
  %v2060 = vld [vmem:[%s8 + $0x2d0] sm:$0xff]
  %v2061 = vld [vmem:[%s8 + $0x2d8] sm:$0xff]
  %v2062 = vld [vmem:[%s8 + $0x2e0] sm:$0xff]
  %v2063 = vld [vmem:[%s8 + $0x2e8] sm:$0xff]
  %v2064 = vld [vmem:[%s8 + $0x2f0] sm:$0xff]
  %v2065 = vld [vmem:[%s8 + $0x2f8] sm:$0xff]
  %v2066 = vld [vmem:[%s8 + $0x300] sm:$0xff]
  %v2067 = vld [vmem:[%s8 + $0x308] sm:$0xff]
  %v2068 = vld [vmem:[%s8 + $0x310] sm:$0xff]
  %v2069 = vld [vmem:[%s8 + $0x318] sm:$0xff]
  %v2070 = vld [vmem:[%s8 + $0x320] sm:$0xff]
  %v2071 = vld [vmem:[%s8 + $0x328] sm:$0xff]
  %v2072 = vld [vmem:[%s8 + $0x330] sm:$0xff]
  %v2073 = vld [vmem:[%s8 + $0x338] sm:$0xff]
  %v2074 = vld [vmem:[%s8 + $0x340] sm:$0xff]
  %v2075 = vld [vmem:[%s8 + $0x348] sm:$0xff]
  %v2076 = vld [vmem:[%s8 + $0x350] sm:$0xff]
  %v2077 = vld [vmem:[%s8 + $0x358] sm:$0xff]
  %v2078 = vld [vmem:[%s8 + $0x360] sm:$0xff]
  %v2079 = vld [vmem:[%s8 + $0x368] sm:$0xff]
  %v2080 = vld [vmem:[%s8 + $0x370] sm:$0xff]
  %v2081 = vld [vmem:[%s8 + $0x378] sm:$0xff]
  %v2082 = vld [vmem:[%s8 + $0x380] sm:$0xff]
  %v2083 = vld [vmem:[%s8 + $0x388] sm:$0xff]
  %v2084 = vld [vmem:[%s8 + $0x390] sm:$0xff]
  %v2085 = vld [vmem:[%s8 + $0x398] sm:$0xff]
  %v2086 = vld [vmem:[%s8 + $0x3a0] sm:$0xff]
  %v2087 = vld [vmem:[%s8 + $0x3a8] sm:$0xff]
  %v2088 = vld [vmem:[%s8 + $0x3b0] sm:$0xff]
  %v2089 = vld [vmem:[%s8 + $0x3b8] sm:$0xff]
  %v2090 = vld [vmem:[%s8 + $0x3c0] sm:$0xff]
  %v2091 = vld [vmem:[%s8 + $0x3c8] sm:$0xff]
  %v2092 = vld [vmem:[%s8 + $0x3d0] sm:$0xff]
  %v2093 = vld [vmem:[%s8 + $0x3d8] sm:$0xff]
  %v2094 = vld [vmem:[%s8 + $0x3e0] sm:$0xff]
  %v2095 = vld [vmem:[%s8 + $0x3e8] sm:$0xff]
  %v2096 = vld [vmem:[%s8 + $0x3f0] sm:$0xff]
  %v2097 = vld [vmem:[%s8 + $0x3f8] sm:$0xff]
  %v2098 = vld [vmem:[%s8 + $0x400] sm:$0xff]
  %v2099 = vld [vmem:[%s8 + $0x408] sm:$0xff]
  %v2100 = vld [vmem:[%s8 + $0x410] sm:$0xff]
  %v2101 = vld [vmem:[%s8 + $0x418] sm:$0xff]
  %v2102 = vld [vmem:[%s8 + $0x420] sm:$0xff]
  %v2103 = vld [vmem:[%s8 + $0x428] sm:$0xff]
  %v2104 = vld [vmem:[%s8 + $0x430] sm:$0xff]
  %v2105 = vld [vmem:[%s8 + $0x438] sm:$0xff]
  %v2106 = vld [vmem:[%s8 + $0x440] sm:$0xff]
  %v2107 = vld [vmem:[%s8 + $0x448] sm:$0xff]
  %v2108 = vld [vmem:[%s8 + $0x450] sm:$0xff]
  %v2109 = vld [vmem:[%s8 + $0x458] sm:$0xff]
  %v2110 = vld [vmem:[%s8 + $0x460] sm:$0xff]
  %v2111 = vld [vmem:[%s8 + $0x468] sm:$0xff]
  %v2112 = vld [vmem:[%s8 + $0x470] sm:$0xff]
  %v2113 = vld [vmem:[%s8 + $0x478] sm:$0xff]
  %v2114 = vld [vmem:[%s8 + $0x480] sm:$0xff]
  %v2115 = vld [vmem:[%s8 + $0x488] sm:$0xff]
  %v2116 = vld [vmem:[%s8 + $0x490] sm:$0xff]
  %v2117 = vld [vmem:[%s8 + $0x498] sm:$0xff]
  %v2118 = vld [vmem:[%s8 + $0x4a0] sm:$0xff]
  %v2119 = vld [vmem:[%s8 + $0x4a8] sm:$0xff]
  %v2120 = vld [vmem:[%s8 + $0x4b0] sm:$0xff]
  %v2121 = vld [vmem:[%s8 + $0x4b8] sm:$0xff]
  %v2122 = vld [vmem:[%s8 + $0x4c0] sm:$0xff]
  %v2123 = vld [vmem:[%s8 + $0x4c8] sm:$0xff]
  %v2124 = vld [vmem:[%s8 + $0x4d0] sm:$0xff]
  %v2125 = vld [vmem:[%s8 + $0x4d8] sm:$0xff]
  %v2126 = vld [vmem:[%s8 + $0x4e0] sm:$0xff]
  %v2127 = vld [vmem:[%s8 + $0x4e8] sm:$0xff]
  %v2128 = vld [vmem:[%s8 + $0x4f0] sm:$0xff]
  %v2129 = vld [vmem:[%s8 + $0x4f8] sm:$0xff]
  %v2130 = vld [vmem:[%s8 + $0x500] sm:$0xff]
  %v2131 = vld [vmem:[%s8 + $0x508] sm:$0xff]
  %v2132 = vld [vmem:[%s8 + $0x510] sm:$0xff]
  %v2133 = vld [vmem:[%s8 + $0x518] sm:$0xff]
  %v2134 = vld [vmem:[%s8 + $0x520] sm:$0xff]
  %v2135 = vld [vmem:[%s8 + $0x528] sm:$0xff]
  %v2136 = vld [vmem:[%s8 + $0x530] sm:$0xff]
  %v2137 = vld [vmem:[%s8 + $0x538] sm:$0xff]
  %v2138 = vld [vmem:[%s8 + $0x540] sm:$0xff]
  %v2139 = vld [vmem:[%s8 + $0x548] sm:$0xff]
  %v2140 = vld [vmem:[%s8 + $0x550] sm:$0xff]
  %v2141 = vld [vmem:[%s8 + $0x558] sm:$0xff]
  %v2142 = vld [vmem:[%s8 + $0x560] sm:$0xff]
  %v2143 = vld [vmem:[%s8 + $0x568] sm:$0xff]
  %v2144 = vld [vmem:[%s8 + $0x570] sm:$0xff]
  %v2145 = vld [vmem:[%s8 + $0x578] sm:$0xff]
  %v2146 = vld [vmem:[%s8 + $0x580] sm:$0xff]
  %v2147 = vld [vmem:[%s8 + $0x588] sm:$0xff]
  %v2148 = vld [vmem:[%s8 + $0x590] sm:$0xff]
  %v2149 = vld [vmem:[%s8 + $0x598] sm:$0xff]
  %v2150 = vld [vmem:[%s8 + $0x5a0] sm:$0xff]
  %v2151 = vld [vmem:[%s8 + $0x5a8] sm:$0xff]
  %v2152 = vld [vmem:[%s8 + $0x5b0] sm:$0xff]
  %v2153 = vld [vmem:[%s8 + $0x5b8] sm:$0xff]
  %v2154 = vld [vmem:[%s8 + $0x5c0] sm:$0xff]
  %v2155 = vld [vmem:[%s8 + $0x5c8] sm:$0xff]
  %v2156 = vld [vmem:[%s8 + $0x5d0] sm:$0xff]
  %v2157 = vld [vmem:[%s8 + $0x5d8] sm:$0xff]
  %v2158 = vld [vmem:[%s8 + $0x5e0] sm:$0xff]
  %v2159 = vld [vmem:[%s8 + $0x5e8] sm:$0xff]
  %v2160 = vld [vmem:[%s8 + $0x5f0] sm:$0xff]
  %v2161 = vld [vmem:[%s8 + $0x5f8] sm:$0xff]
  %v2162 = vld [vmem:[%s8 + $0x600] sm:$0xff]
  %v2163 = vld [vmem:[%s8 + $0x608] sm:$0xff]
  %v2164 = vld [vmem:[%s8 + $0x610] sm:$0xff]
  %v2165 = vld [vmem:[%s8 + $0x618] sm:$0xff]
  %v2166 = vld [vmem:[%s8 + $0x620] sm:$0xff]
  %v2167 = vld [vmem:[%s8 + $0x628] sm:$0xff]
  %v2168 = vld [vmem:[%s8 + $0x630] sm:$0xff]
  %v2169 = vld [vmem:[%s8 + $0x638] sm:$0xff]
  %v2170 = vld [vmem:[%s8 + $0x640] sm:$0xff]
  %v2171 = vld [vmem:[%s8 + $0x648] sm:$0xff]
  %v2172 = vld [vmem:[%s8 + $0x650] sm:$0xff]
  %v2173 = vld [vmem:[%s8 + $0x658] sm:$0xff]
  %v2174 = vld [vmem:[%s8 + $0x660] sm:$0xff]
  %v2175 = vld [vmem:[%s8 + $0x668] sm:$0xff]
  %v2176 = vld [vmem:[%s8 + $0x670] sm:$0xff]
  %v2177 = vld [vmem:[%s8 + $0x678] sm:$0xff]
  %v2178 = vld [vmem:[%s8 + $0x680] sm:$0xff]
  %v2179 = vld [vmem:[%s8 + $0x688] sm:$0xff]
  %v2180 = vld [vmem:[%s8 + $0x690] sm:$0xff]
  %v2181 = vld [vmem:[%s8 + $0x698] sm:$0xff]
  %v2182 = vld [vmem:[%s8 + $0x6a0] sm:$0xff]
  %v2183 = vld [vmem:[%s8 + $0x6a8] sm:$0xff]
  %v2184 = vld [vmem:[%s8 + $0x6b0] sm:$0xff]
  %v2185 = vld [vmem:[%s8 + $0x6b8] sm:$0xff]
  %v2186 = vld [vmem:[%s8 + $0x6c0] sm:$0xff]
  %v2187 = vld [vmem:[%s8 + $0x6c8] sm:$0xff]
  %v2188 = vld [vmem:[%s8 + $0x6d0] sm:$0xff]
  %v2189 = vld [vmem:[%s8 + $0x6d8] sm:$0xff]
  %v2190 = vld [vmem:[%s8 + $0x6e0] sm:$0xff]
  %v2191 = vld [vmem:[%s8 + $0x6e8] sm:$0xff]
  %v2192 = vld [vmem:[%s8 + $0x6f0] sm:$0xff]
  %v2193 = vld [vmem:[%s8 + $0x6f8] sm:$0xff]
  %v2194 = vld [vmem:[%s8 + $0x700] sm:$0xff]
  %v2195 = vld [vmem:[%s8 + $0x708] sm:$0xff]
  %v2196 = vld [vmem:[%s8 + $0x710] sm:$0xff]
  %v2197 = vld [vmem:[%s8 + $0x718] sm:$0xff]
  %v2198 = vld [vmem:[%s8 + $0x720] sm:$0xff]
  %v2199 = vld [vmem:[%s8 + $0x728] sm:$0xff]
  %v2200 = vld [vmem:[%s8 + $0x730] sm:$0xff]
  %v2201 = vld [vmem:[%s8 + $0x738] sm:$0xff]
  %v2202 = vld [vmem:[%s8 + $0x740] sm:$0xff]
  %v2203 = vld [vmem:[%s8 + $0x748] sm:$0xff]
  %v2204 = vld [vmem:[%s8 + $0x750] sm:$0xff]
  %v2205 = vld [vmem:[%s8 + $0x758] sm:$0xff]
  %v2206 = vld [vmem:[%s8 + $0x760] sm:$0xff]
  %v2207 = vld [vmem:[%s8 + $0x768] sm:$0xff]
  %v2208 = vld [vmem:[%s8 + $0x770] sm:$0xff]
  %v2209 = vld [vmem:[%s8 + $0x778] sm:$0xff]
  %v2210 = vld [vmem:[%s8 + $0x780] sm:$0xff]
  %v2211 = vld [vmem:[%s8 + $0x788] sm:$0xff]
  %v2212 = vld [vmem:[%s8 + $0x790] sm:$0xff]
  %v2213 = vld [vmem:[%s8 + $0x798] sm:$0xff]
  %v2214 = vld [vmem:[%s8 + $0x7a0] sm:$0xff]
  %v2215 = vld [vmem:[%s8 + $0x7a8] sm:$0xff]
  %v2216 = vld [vmem:[%s8 + $0x7b0] sm:$0xff]
  %v2217 = vld [vmem:[%s8 + $0x7b8] sm:$0xff]
  %v2218 = vld [vmem:[%s8 + $0x7c0] sm:$0xff]
  %v2219 = vld [vmem:[%s8 + $0x7c8] sm:$0xff]
  %v2220 = vld [vmem:[%s8 + $0x7d0] sm:$0xff]
  %v2221 = vld [vmem:[%s8 + $0x7d8] sm:$0xff]
  %v2222 = vld [vmem:[%s8 + $0x7e0] sm:$0xff]
  %v2223 = vld [vmem:[%s8 + $0x7e8] sm:$0xff]
  %v2224 = vld [vmem:[%s8 + $0x7f0] sm:$0xff]
  %v2225 = vld [vmem:[%s8 + $0x7f8] sm:$0xff]
  %v2226 = vld [vmem:[%s8 + $0x800] sm:$0xff]
  %v2227 = vld [vmem:[%s8 + $0x808] sm:$0xff]
  %v2228 = vld [vmem:[%s8 + $0x810] sm:$0xff]
  %v2229 = vld [vmem:[%s8 + $0x818] sm:$0xff]
  %v2230 = vld [vmem:[%s8 + $0x820] sm:$0xff]
  %v2231 = vld [vmem:[%s8 + $0x828] sm:$0xff]
  %v2232 = vld [vmem:[%s8 + $0x830] sm:$0xff]
  %v2233 = vld [vmem:[%s8 + $0x838] sm:$0xff]
  %v2234 = vld [vmem:[%s8 + $0x840] sm:$0xff]
  %v2235 = vld [vmem:[%s8 + $0x848] sm:$0xff]
  %v2236 = vld [vmem:[%s8 + $0x850] sm:$0xff]
  %v2237 = vld [vmem:[%s8 + $0x858] sm:$0xff]
  %v2238 = vld [vmem:[%s8 + $0x860] sm:$0xff]
  %v2239 = vld [vmem:[%s8 + $0x868] sm:$0xff]
  %v2240 = vld [vmem:[%s8 + $0x870] sm:$0xff]
  %v2241 = vld [vmem:[%s8 + $0x878] sm:$0xff]
  %v2242 = vld [vmem:[%s8 + $0x880] sm:$0xff]
  %v2243 = vld [vmem:[%s8 + $0x888] sm:$0xff]
  %v2244 = vld [vmem:[%s8 + $0x890] sm:$0xff]
  %v2245 = vld [vmem:[%s8 + $0x898] sm:$0xff]
  %v2246 = vld [vmem:[%s8 + $0x8a0] sm:$0xff]
  %v2247 = vld [vmem:[%s8 + $0x8a8] sm:$0xff]
  %v2248 = vld [vmem:[%s8 + $0x8b0] sm:$0xff]
  %v2249 = vld [vmem:[%s8 + $0x8b8] sm:$0xff]
  %v2250 = vld [vmem:[%s8 + $0x8c0] sm:$0xff]
  %v2251 = vld [vmem:[%s8 + $0x8c8] sm:$0xff]
  %v2252 = vld [vmem:[%s8 + $0x8d0] sm:$0xff]
  %v2253 = vld [vmem:[%s8 + $0x8d8] sm:$0xff]
  %v2254 = vld [vmem:[%s8 + $0x8e0] sm:$0xff]
  %v2255 = vld [vmem:[%s8 + $0x8e8] sm:$0xff]
  %v2256 = vld [vmem:[%s8 + $0x8f0] sm:$0xff]
  %v2257 = vld [vmem:[%s8 + $0x8f8] sm:$0xff]
  %v2258 = vld [vmem:[%s8 + $0x900] sm:$0xff]
  %v2259 = vld [vmem:[%s8 + $0x908] sm:$0xff]
  %v2260 = vld [vmem:[%s8 + $0x910] sm:$0xff]
  %v2261 = vld [vmem:[%s8 + $0x918] sm:$0xff]
  %v2262 = vld [vmem:[%s8 + $0x920] sm:$0xff]
  %v2263 = vld [vmem:[%s8 + $0x928] sm:$0xff]
  %v2264 = vld [vmem:[%s8 + $0x930] sm:$0xff]
  %v2265 = vld [vmem:[%s8 + $0x938] sm:$0xff]
  %v2266 = vld [vmem:[%s8 + $0x940] sm:$0xff]
  %v2267 = vld [vmem:[%s8 + $0x948] sm:$0xff]
  %v2268 = vld [vmem:[%s8 + $0x950] sm:$0xff]
  %v2269 = vld [vmem:[%s8 + $0x958] sm:$0xff]
  %v2270 = vld [vmem:[%s8 + $0x960] sm:$0xff]
  %v2271 = vld [vmem:[%s8 + $0x968] sm:$0xff]
  %v2272 = vld [vmem:[%s8 + $0x970] sm:$0xff]
  %v2273 = vld [vmem:[%s8 + $0x978] sm:$0xff]
  %v2274 = vld [vmem:[%s8 + $0x980] sm:$0xff]
  %v2275 = vld [vmem:[%s8 + $0x988] sm:$0xff]
  %v2276 = vld [vmem:[%s8 + $0x990] sm:$0xff]
  %v2277 = vld [vmem:[%s8 + $0x998] sm:$0xff]
  %v2278 = vld [vmem:[%s8 + $0x9a0] sm:$0xff]
  %v2279 = vld [vmem:[%s8 + $0x9a8] sm:$0xff]
  %v2280 = vld [vmem:[%s8 + $0x9b0] sm:$0xff]
  %v2281 = vld [vmem:[%s8 + $0x9b8] sm:$0xff]
  %v2282 = vld [vmem:[%s8 + $0x9c0] sm:$0xff]
  %v2283 = vld [vmem:[%s8 + $0x9c8] sm:$0xff]
  %v2284 = vld [vmem:[%s8 + $0x9d0] sm:$0xff]
  %v2285 = vld [vmem:[%s8 + $0x9d8] sm:$0xff]
  %v2286 = vld [vmem:[%s8 + $0x9e0] sm:$0xff]
  %v2287 = vld [vmem:[%s8 + $0x9e8] sm:$0xff]
  %v2288 = vld [vmem:[%s8 + $0x9f0] sm:$0xff]
  %v2289 = vld [vmem:[%s8 + $0x9f8] sm:$0xff]
  %v2290 = vld [vmem:[%s9] sm:$0xff]
  %v2291 = vld [vmem:[%s9 + $0x8] sm:$0x3]
  %v2293 = vlaneseq
  %v2294 = vshrl.u32 %v2293, 7
  %v2295 = vsub.s32 0, %v2294
  %v2296 = vrot.slane %v1969, %v2295
  %v2297 = vlaneseq
  %v2298 = vshrl.u32 %v2297, 7
  %v2299 = vsub.s32 1, %v2298
  %v2300 = vrot.slane %v1969, %v2299
  %v2306 = vcombine.high %v1646, %v1646
  %v2308 = vunpack.c.l.s4 1983009808
  %v2309 = vunpack.c.0.s8 %v2308
  %v2310 = vlaneseq
  %v2311 = vshrl.u32 %v2310, 7
  %v2312 = vsub.s32 %v2309, %v2311
  %v2313 = vrot.slane %v1646, %v2312
  %v2315 = vunpack.c.l.s4 1983009808
  %v2316 = vunpack.c.0.s8 %v2315
  %v2317 = vlaneseq
  %v2318 = vshrl.u32 %v2317, 7
  %v2319 = vsub.s32 %v2316, %v2318
  %v2320 = vrot.slane %v2306, %v2319
  %v2321 = vcombine.high %v2313, %v2313
  %v2322 = vcombine.high %v2320, %v2320
  %v2323 = vcombine.high %v1647, %v1647
  %v2325 = vunpack.c.l.s4 1983009808
  %v2326 = vunpack.c.0.s8 %v2325
  %v2327 = vlaneseq
  %v2328 = vshrl.u32 %v2327, 7
  %v2329 = vsub.s32 %v2326, %v2328
  %v2330 = vrot.slane %v1647, %v2329
  %v2332 = vunpack.c.l.s4 1983009808
  %v2333 = vunpack.c.0.s8 %v2332
  %v2334 = vlaneseq
  %v2335 = vshrl.u32 %v2334, 7
  %v2336 = vsub.s32 %v2333, %v2335
  %v2337 = vrot.slane %v2323, %v2336
  %v2338 = vcombine.high %v2330, %v2330
  %v2339 = vcombine.high %v2337, %v2337
  %v2341 = vunpack.c.l.s4 1983009808
  %v2342 = vunpack.c.0.s8 %v2341
  %v2343 = vlaneseq
  %v2344 = vshrl.u32 %v2343, 7
  %v2345 = vsub.s32 %v2342, %v2344
  %v2346 = vrot.slane %v1648, %v2345
  %v2347 = vcombine.high %v2346, %v2346
  %2358 = vmatprep.subr.mxu0 %v1650
  %2359 = vmatpush1.msra.mxu0 %v1649
  %2360 = vmatprep.subr.mxu0 %v1652
  %2361 = vmatpush1.msra.mxu0 %v1651
  %2362 = vmatprep.subr.mxu0 %v1654
  %2363 = vmatpush1.msra.mxu0 %v1653
  %2364 = vmatprep.subr.mxu0 %v1656
  %2365 = vmatpush1.msra.mxu0 %v1655
  %2366 = vmatprep.subr.mxu0 %v1658
  %2367 = vmatpush1.msra.mxu0 %v1657
  %2368 = vmatprep.subr.mxu0 %v1660
  %2369 = vmatpush1.msra.mxu0 %v1659
  %2370 = vmatprep.subr.mxu0 %v1662
  %2371 = vmatpush1.msra.mxu0 %v1661
  %2372 = vmatprep.subr.mxu0 %v1664
  %2373 = vmatpush1.msra.mxu0 %v1663
  %2374 = vmatprep.subr.mxu0 %v1666
  %2375 = vmatpush1.msra.mxu0 %v1665
  %2376 = vmatprep.subr.mxu0 %v1668
  %2377 = vmatpush1.msra.mxu0 %v1667
  %2378 = vmatprep.subr.mxu0 %v1670
  %2379 = vmatpush1.msra.mxu0 %v1669
  %2380 = vmatprep.subr.mxu0 %v1672
  %2381 = vmatpush1.msra.mxu0 %v1671
  %2382 = vmatprep.subr.mxu0 %v1674
  %2383 = vmatpush1.msra.mxu0 %v1673
  %2384 = vmatprep.subr.mxu0 %v1676
  %2385 = vmatpush1.msra.mxu0 %v1675
  %2386 = vmatprep.subr.mxu0 %v1678
  %2387 = vmatpush1.msra.mxu0 %v1677
  %2388 = vmatprep.subr.mxu0 %v1680
  %2389 = vmatpush1.msra.mxu0 %v1679
  %2390 = vmatprep.subr.mxu0 %v1682
  %2391 = vmatpush1.msra.mxu0 %v1681
  %2392 = vmatprep.subr.mxu0 %v1684
  %2393 = vmatpush1.msra.mxu0 %v1683
  %2394 = vmatprep.subr.mxu0 %v1686
  %2395 = vmatpush1.msra.mxu0 %v1685
  %2396 = vmatprep.subr.mxu0 %v1688
  %2397 = vmatpush1.msra.mxu0 %v1687
  %2398 = vmatprep.subr.mxu0 %v1690
  %2399 = vmatpush1.msra.mxu0 %v1689
  %2400 = vmatprep.subr.mxu0 %v1692
  %2401 = vmatpush1.msra.mxu0 %v1691
  %2402 = vmatprep.subr.mxu0 %v1694
  %2403 = vmatpush1.msra.mxu0 %v1693
  %2404 = vmatprep.subr.mxu0 %v1696
  %2405 = vmatpush1.msra.mxu0 %v1695
  %2406 = vmatprep.subr.mxu0 %v1698
  %2407 = vmatpush1.msra.mxu0 %v1697
  %2408 = vmatprep.subr.mxu0 %v1700
  %2409 = vmatpush1.msra.mxu0 %v1699
  %2410 = vmatprep.subr.mxu0 %v1702
  %2411 = vmatpush1.msra.mxu0 %v1701
  %2412 = vmatprep.subr.mxu0 %v1704
  %2413 = vmatpush1.msra.mxu0 %v1703
  %2414 = vmatprep.subr.mxu0 %v1706
  %2415 = vmatpush1.msra.mxu0 %v1705
  %2416 = vmatprep.subr.mxu0 %v1708
  %2417 = vmatpush1.msra.mxu0 %v1707
  %2418 = vmatprep.subr.mxu0 %v1710
  %2419 = vmatpush1.msra.mxu0 %v1709
  %2420 = vmatprep.subr.mxu0 %v1712
  %2421 = vmatpush1.msra.mxu0 %v1711
  %2422 = vmatprep.mubr.f32.mxu0 %v2321
  %2423 = vmatmul.mubr.f32.gmra.mrb[0].mxu0 %v2313
  %v2424 = vpop.f32.mrb[0].mxu0
  %v2425 = vadd.f32 %v2296, %v2424
  %v2426 = vpop.f32.mrb[0].mxu0
  %v2427 = vadd.f32 %v2300, %v2426
  %2428 = vdwg.mxu0
  %2429 = vmatprep.subr.mxu0 %v1714
  %2430 = vmatpush1.msra.mxu0 %v1713
  %2431 = vmatprep.subr.mxu0 %v1716
  %2432 = vmatpush1.msra.mxu0 %v1715
  %2433 = vmatprep.subr.mxu0 %v1718
  %2434 = vmatpush1.msra.mxu0 %v1717
  %2435 = vmatprep.subr.mxu0 %v1720
  %2436 = vmatpush1.msra.mxu0 %v1719
  %2437 = vmatprep.subr.mxu0 %v1722
  %2438 = vmatpush1.msra.mxu0 %v1721
  %2439 = vmatprep.subr.mxu0 %v1724
  %2440 = vmatpush1.msra.mxu0 %v1723
  %2441 = vmatprep.subr.mxu0 %v1726
  %2442 = vmatpush1.msra.mxu0 %v1725
  %2443 = vmatprep.subr.mxu0 %v1728
  %2444 = vmatpush1.msra.mxu0 %v1727
  %2445 = vmatprep.subr.mxu0 %v1730
  %2446 = vmatpush1.msra.mxu0 %v1729
  %2447 = vmatprep.subr.mxu0 %v1732
  %2448 = vmatpush1.msra.mxu0 %v1731
  %2449 = vmatprep.subr.mxu0 %v1734
  %2450 = vmatpush1.msra.mxu0 %v1733
  %2451 = vmatprep.subr.mxu0 %v1736
  %2452 = vmatpush1.msra.mxu0 %v1735
  %2453 = vmatprep.subr.mxu0 %v1738
  %2454 = vmatpush1.msra.mxu0 %v1737
  %2455 = vmatprep.subr.mxu0 %v1740
  %2456 = vmatpush1.msra.mxu0 %v1739
  %2457 = vmatprep.subr.mxu0 %v1742
  %2458 = vmatpush1.msra.mxu0 %v1741
  %2459 = vmatprep.subr.mxu0 %v1744
  %2460 = vmatpush1.msra.mxu0 %v1743
  %2461 = vmatprep.subr.mxu0 %v1746
  %2462 = vmatpush1.msra.mxu0 %v1745
  %2463 = vmatprep.subr.mxu0 %v1748
  %2464 = vmatpush1.msra.mxu0 %v1747
  %2465 = vmatprep.subr.mxu0 %v1750
  %2466 = vmatpush1.msra.mxu0 %v1749
  %2467 = vmatprep.subr.mxu0 %v1752
  %2468 = vmatpush1.msra.mxu0 %v1751
  %2469 = vmatprep.subr.mxu0 %v1754
  %2470 = vmatpush1.msra.mxu0 %v1753
  %2471 = vmatprep.subr.mxu0 %v1756
  %2472 = vmatpush1.msra.mxu0 %v1755
  %2473 = vmatprep.subr.mxu0 %v1758
  %2474 = vmatpush1.msra.mxu0 %v1757
  %2475 = vmatprep.subr.mxu0 %v1760
  %2476 = vmatpush1.msra.mxu0 %v1759
  %2477 = vmatprep.subr.mxu0 %v1762
  %2478 = vmatpush1.msra.mxu0 %v1761
  %2479 = vmatprep.subr.mxu0 %v1764
  %2480 = vmatpush1.msra.mxu0 %v1763
  %2481 = vmatprep.subr.mxu0 %v1766
  %2482 = vmatpush1.msra.mxu0 %v1765
  %2483 = vmatprep.subr.mxu0 %v1768
  %2484 = vmatpush1.msra.mxu0 %v1767
  %2485 = vmatprep.subr.mxu0 %v1770
  %2486 = vmatpush1.msra.mxu0 %v1769
  %2487 = vmatprep.subr.mxu0 %v1772
  %2488 = vmatpush1.msra.mxu0 %v1771
  %2489 = vmatprep.subr.mxu0 %v1774
  %2490 = vmatpush1.msra.mxu0 %v1773
  %2491 = vmatprep.subr.mxu0 %v1776
  %2492 = vmatpush1.msra.mxu0 %v1775
  %2493 = vmatprep.mubr.f32.mxu0 %v2322
  %2494 = vmatmul.mubr.f32.gmra.mrb[0].mxu0 %v2320
  %v2495 = vpop.f32.mrb[0].mxu0
  %v2496 = vadd.f32 %v2425, %v2495
  %v2497 = vpop.f32.mrb[0].mxu0
  %v2498 = vadd.f32 %v2427, %v2497
  %2499 = vdwg.mxu0
  %2500 = vmatprep.subr.mxu0 %v1778
  %2501 = vmatpush1.msra.mxu0 %v1777
  %2502 = vmatprep.subr.mxu0 %v1780
  %2503 = vmatpush1.msra.mxu0 %v1779
  %2504 = vmatprep.subr.mxu0 %v1782
  %2505 = vmatpush1.msra.mxu0 %v1781
  %2506 = vmatprep.subr.mxu0 %v1784
  %2507 = vmatpush1.msra.mxu0 %v1783
  %2508 = vmatprep.subr.mxu0 %v1786
  %2509 = vmatpush1.msra.mxu0 %v1785
  %2510 = vmatprep.subr.mxu0 %v1788
  %2511 = vmatpush1.msra.mxu0 %v1787
  %2512 = vmatprep.subr.mxu0 %v1790
  %2513 = vmatpush1.msra.mxu0 %v1789
  %2514 = vmatprep.subr.mxu0 %v1792
  %2515 = vmatpush1.msra.mxu0 %v1791
  %2516 = vmatprep.subr.mxu0 %v1794
  %2517 = vmatpush1.msra.mxu0 %v1793
  %2518 = vmatprep.subr.mxu0 %v1796
  %2519 = vmatpush1.msra.mxu0 %v1795
  %2520 = vmatprep.subr.mxu0 %v1798
  %2521 = vmatpush1.msra.mxu0 %v1797
  %2522 = vmatprep.subr.mxu0 %v1800
  %2523 = vmatpush1.msra.mxu0 %v1799
  %2524 = vmatprep.subr.mxu0 %v1802
  %2525 = vmatpush1.msra.mxu0 %v1801
  %2526 = vmatprep.subr.mxu0 %v1804
  %2527 = vmatpush1.msra.mxu0 %v1803
  %2528 = vmatprep.subr.mxu0 %v1806
  %2529 = vmatpush1.msra.mxu0 %v1805
  %2530 = vmatprep.subr.mxu0 %v1808
  %2531 = vmatpush1.msra.mxu0 %v1807
  %2532 = vmatprep.subr.mxu0 %v1810
  %2533 = vmatpush1.msra.mxu0 %v1809
  %2534 = vmatprep.subr.mxu0 %v1812
  %2535 = vmatpush1.msra.mxu0 %v1811
  %2536 = vmatprep.subr.mxu0 %v1814
  %2537 = vmatpush1.msra.mxu0 %v1813
  %2538 = vmatprep.subr.mxu0 %v1816
  %2539 = vmatpush1.msra.mxu0 %v1815
  %2540 = vmatprep.subr.mxu0 %v1818
  %2541 = vmatpush1.msra.mxu0 %v1817
  %2542 = vmatprep.subr.mxu0 %v1820
  %2543 = vmatpush1.msra.mxu0 %v1819
  %2544 = vmatprep.subr.mxu0 %v1822
  %2545 = vmatpush1.msra.mxu0 %v1821
  %2546 = vmatprep.subr.mxu0 %v1824
  %2547 = vmatpush1.msra.mxu0 %v1823
  %2548 = vmatprep.subr.mxu0 %v1826
  %2549 = vmatpush1.msra.mxu0 %v1825
  %2550 = vmatprep.subr.mxu0 %v1828
  %2551 = vmatpush1.msra.mxu0 %v1827
  %2552 = vmatprep.subr.mxu0 %v1830
  %2553 = vmatpush1.msra.mxu0 %v1829
  %2554 = vmatprep.subr.mxu0 %v1832
  %2555 = vmatpush1.msra.mxu0 %v1831
  %2556 = vmatprep.subr.mxu0 %v1834
  %2557 = vmatpush1.msra.mxu0 %v1833
  %2558 = vmatprep.subr.mxu0 %v1836
  %2559 = vmatpush1.msra.mxu0 %v1835
  %2560 = vmatprep.subr.mxu0 %v1838
  %2561 = vmatpush1.msra.mxu0 %v1837
  %2562 = vmatprep.subr.mxu0 %v1840
  %2563 = vmatpush1.msra.mxu0 %v1839
  %2564 = vmatprep.mubr.f32.mxu0 %v2338
  %2565 = vmatmul.mubr.f32.gmra.mrb[0].mxu0 %v2330
  %v2566 = vpop.f32.mrb[0].mxu0
  %v2567 = vadd.f32 %v2496, %v2566
  %v2568 = vpop.f32.mrb[0].mxu0
  %v2569 = vadd.f32 %v2498, %v2568
  %2570 = vdwg.mxu0
  %2571 = vmatprep.subr.mxu0 %v1842
  %2572 = vmatpush1.msra.mxu0 %v1841
  %2573 = vmatprep.subr.mxu0 %v1844
  %2574 = vmatpush1.msra.mxu0 %v1843
  %2575 = vmatprep.subr.mxu0 %v1846
  %2576 = vmatpush1.msra.mxu0 %v1845
  %2577 = vmatprep.subr.mxu0 %v1848
  %2578 = vmatpush1.msra.mxu0 %v1847
  %2579 = vmatprep.subr.mxu0 %v1850
  %2580 = vmatpush1.msra.mxu0 %v1849
  %2581 = vmatprep.subr.mxu0 %v1852
  %2582 = vmatpush1.msra.mxu0 %v1851
  %2583 = vmatprep.subr.mxu0 %v1854
  %2584 = vmatpush1.msra.mxu0 %v1853
  %2585 = vmatprep.subr.mxu0 %v1856
  %2586 = vmatpush1.msra.mxu0 %v1855
  %2587 = vmatprep.subr.mxu0 %v1858
  %2588 = vmatpush1.msra.mxu0 %v1857
  %2589 = vmatprep.subr.mxu0 %v1860
  %2590 = vmatpush1.msra.mxu0 %v1859
  %2591 = vmatprep.subr.mxu0 %v1862
  %2592 = vmatpush1.msra.mxu0 %v1861
  %2593 = vmatprep.subr.mxu0 %v1864
  %2594 = vmatpush1.msra.mxu0 %v1863
  %2595 = vmatprep.subr.mxu0 %v1866
  %2596 = vmatpush1.msra.mxu0 %v1865
  %2597 = vmatprep.subr.mxu0 %v1868
  %2598 = vmatpush1.msra.mxu0 %v1867
  %2599 = vmatprep.subr.mxu0 %v1870
  %2600 = vmatpush1.msra.mxu0 %v1869
  %2601 = vmatprep.subr.mxu0 %v1872
  %2602 = vmatpush1.msra.mxu0 %v1871
  %2603 = vmatprep.subr.mxu0 %v1874
  %2604 = vmatpush1.msra.mxu0 %v1873
  %2605 = vmatprep.subr.mxu0 %v1876
  %2606 = vmatpush1.msra.mxu0 %v1875
  %2607 = vmatprep.subr.mxu0 %v1878
  %2608 = vmatpush1.msra.mxu0 %v1877
  %2609 = vmatprep.subr.mxu0 %v1880
  %2610 = vmatpush1.msra.mxu0 %v1879
  %2611 = vmatprep.subr.mxu0 %v1882
  %2612 = vmatpush1.msra.mxu0 %v1881
  %2613 = vmatprep.subr.mxu0 %v1884
  %2614 = vmatpush1.msra.mxu0 %v1883
  %2615 = vmatprep.subr.mxu0 %v1886
  %2616 = vmatpush1.msra.mxu0 %v1885
  %2617 = vmatprep.subr.mxu0 %v1888
  %2618 = vmatpush1.msra.mxu0 %v1887
  %2619 = vmatprep.subr.mxu0 %v1890
  %2620 = vmatpush1.msra.mxu0 %v1889
  %2621 = vmatprep.subr.mxu0 %v1892
  %2622 = vmatpush1.msra.mxu0 %v1891
  %2623 = vmatprep.subr.mxu0 %v1894
  %2624 = vmatpush1.msra.mxu0 %v1893
  %2625 = vmatprep.subr.mxu0 %v1896
  %2626 = vmatpush1.msra.mxu0 %v1895
  %2627 = vmatprep.subr.mxu0 %v1898
  %2628 = vmatpush1.msra.mxu0 %v1897
  %2629 = vmatprep.subr.mxu0 %v1900
  %2630 = vmatpush1.msra.mxu0 %v1899
  %2631 = vmatprep.subr.mxu0 %v1902
  %2632 = vmatpush1.msra.mxu0 %v1901
  %2633 = vmatprep.subr.mxu0 %v1904
  %2634 = vmatpush1.msra.mxu0 %v1903
  %2635 = vmatprep.mubr.f32.mxu0 %v2339
  %2636 = vmatmul.mubr.f32.gmra.mrb[0].mxu0 %v2337
  %v2637 = vpop.f32.mrb[0].mxu0
  %v2638 = vadd.f32 %v2567, %v2637
  %v2639 = vpop.f32.mrb[0].mxu0
  %v2640 = vadd.f32 %v2569, %v2639
  %2641 = vdwg.mxu0
  %2642 = vmatprep.subr.mxu0 %v1906
  %2643 = vmatpush1.msra.mxu0 %v1905
  %2644 = vmatprep.subr.mxu0 %v1908
  %2645 = vmatpush1.msra.mxu0 %v1907
  %2646 = vmatprep.subr.mxu0 %v1910
  %2647 = vmatpush1.msra.mxu0 %v1909
  %2648 = vmatprep.subr.mxu0 %v1912
  %2649 = vmatpush1.msra.mxu0 %v1911
  %2650 = vmatprep.subr.mxu0 %v1914
  %2651 = vmatpush1.msra.mxu0 %v1913
  %2652 = vmatprep.subr.mxu0 %v1916
  %2653 = vmatpush1.msra.mxu0 %v1915
  %2654 = vmatprep.subr.mxu0 %v1918
  %2655 = vmatpush1.msra.mxu0 %v1917
  %2656 = vmatprep.subr.mxu0 %v1920
  %2657 = vmatpush1.msra.mxu0 %v1919
  %2658 = vmatprep.subr.mxu0 %v1922
  %2659 = vmatpush1.msra.mxu0 %v1921
  %2660 = vmatprep.subr.mxu0 %v1924
  %2661 = vmatpush1.msra.mxu0 %v1923
  %2662 = vmatprep.subr.mxu0 %v1926
  %2663 = vmatpush1.msra.mxu0 %v1925
  %2664 = vmatprep.subr.mxu0 %v1928
  %2665 = vmatpush1.msra.mxu0 %v1927
  %2666 = vmatprep.subr.mxu0 %v1930
  %2667 = vmatpush1.msra.mxu0 %v1929
  %2668 = vmatprep.subr.mxu0 %v1932
  %2669 = vmatpush1.msra.mxu0 %v1931
  %2670 = vmatprep.subr.mxu0 %v1934
  %2671 = vmatpush1.msra.mxu0 %v1933
  %2672 = vmatprep.subr.mxu0 %v1936
  %2673 = vmatpush1.msra.mxu0 %v1935
  %2674 = vmatprep.subr.mxu0 %v1938
  %2675 = vmatpush1.msra.mxu0 %v1937
  %2676 = vmatprep.subr.mxu0 %v1940
  %2677 = vmatpush1.msra.mxu0 %v1939
  %2678 = vmatprep.subr.mxu0 %v1942
  %2679 = vmatpush1.msra.mxu0 %v1941
  %2680 = vmatprep.subr.mxu0 %v1944
  %2681 = vmatpush1.msra.mxu0 %v1943
  %2682 = vmatprep.subr.mxu0 %v1946
  %2683 = vmatpush1.msra.mxu0 %v1945
  %2684 = vmatprep.subr.mxu0 %v1948
  %2685 = vmatpush1.msra.mxu0 %v1947
  %2686 = vmatprep.subr.mxu0 %v1950
  %2687 = vmatpush1.msra.mxu0 %v1949
  %2688 = vmatprep.subr.mxu0 %v1952
  %2689 = vmatpush1.msra.mxu0 %v1951
  %2690 = vmatprep.subr.mxu0 %v1954
  %2691 = vmatpush1.msra.mxu0 %v1953
  %2692 = vmatprep.subr.mxu0 %v1956
  %2693 = vmatpush1.msra.mxu0 %v1955
  %2694 = vmatprep.subr.mxu0 %v1958
  %2695 = vmatpush1.msra.mxu0 %v1957
  %2696 = vmatprep.subr.mxu0 %v1960
  %2697 = vmatpush1.msra.mxu0 %v1959
  %2698 = vmatprep.subr.mxu0 %v1962
  %2699 = vmatpush1.msra.mxu0 %v1961
  %2700 = vmatprep.subr.mxu0 %v1964
  %2701 = vmatpush1.msra.mxu0 %v1963
  %2702 = vmatprep.subr.mxu0 %v1966
  %2703 = vmatpush1.msra.mxu0 %v1965
  %2704 = vmatprep.subr.mxu0 %v1968
  %2705 = vmatpush1.msra.mxu0 %v1967
  %2706 = vmatprep.mubr.f32.mxu0 %v2347
  %2707 = vmatmul.mubr.f32.gmra.mrb[0].mxu0 %v2346
  %v2708 = vpop.f32.mrb[0].mxu0
  %v2709 = vadd.f32 %v2638, %v2708
  %v2710 = vpop.f32.mrb[0].mxu0
  %v2711 = vadd.f32 %v2640, %v2710
  %2712 = vdwg.mxu0
  %v2713 = vmax.f32 %v2709, 0.0
  %v2714 = vmax.f32 %v2711, 0.0
  %v2717 = vlaneseq
  %v2718 = vshrl.u32 %v2717, 7
  %v2719 = vsub.s32 0, %v2718
  %v2720 = vrot.slane %v2290, %v2719
  %v2721 = vlaneseq
  %v2722 = vshrl.u32 %v2721, 7
  %v2723 = vsub.s32 1, %v2722
  %v2724 = vrot.slane %v2290, %v2723
  %v2725 = vlaneseq
  %v2726 = vshrl.u32 %v2725, 7
  %v2727 = vsub.s32 2, %v2726
  %v2728 = vrot.slane %v2290, %v2727
  %v2729 = vlaneseq
  %v2730 = vshrl.u32 %v2729, 7
  %v2731 = vsub.s32 3, %v2730
  %v2732 = vrot.slane %v2290, %v2731
  %v2733 = vlaneseq
  %v2734 = vshrl.u32 %v2733, 7
  %v2735 = vsub.s32 4, %v2734
  %v2736 = vrot.slane %v2290, %v2735
  %v2737 = vlaneseq
  %v2738 = vshrl.u32 %v2737, 7
  %v2739 = vsub.s32 5, %v2738
  %v2740 = vrot.slane %v2290, %v2739
  %v2741 = vlaneseq
  %v2742 = vshrl.u32 %v2741, 7
  %v2743 = vsub.s32 6, %v2742
  %v2744 = vrot.slane %v2290, %v2743
  %v2745 = vlaneseq
  %v2746 = vshrl.u32 %v2745, 7
  %v2747 = vsub.s32 7, %v2746
  %v2748 = vrot.slane %v2290, %v2747
  %v2749 = vlaneseq
  %v2750 = vshrl.u32 %v2749, 7
  %v2751 = vsub.s32 0, %v2750
  %v2752 = vrot.slane %v2291, %v2751
  %v2753 = vlaneseq
  %v2754 = vshrl.u32 %v2753, 7
  %v2755 = vsub.s32 1, %v2754
  %v2756 = vrot.slane %v2291, %v2755
  %2767 = vmatprep.subr.mxu0 %v1971
  %2768 = vmatpush1.msra.mxu0 %v1970
  %2769 = vmatprep.subr.mxu0 %v1981
  %2770 = vmatpush1.msra.mxu0 %v1980
  %2771 = vmatprep.subr.mxu0 %v1991
  %2772 = vmatpush1.msra.mxu0 %v1990
  %2773 = vmatprep.subr.mxu0 %v2001
  %2774 = vmatpush1.msra.mxu0 %v2000
  %2775 = vmatprep.subr.mxu0 %v2011
  %2776 = vmatpush1.msra.mxu0 %v2010
  %2777 = vmatprep.subr.mxu0 %v2021
  %2778 = vmatpush1.msra.mxu0 %v2020
  %2779 = vmatprep.subr.mxu0 %v2031
  %2780 = vmatpush1.msra.mxu0 %v2030
  %2781 = vmatprep.subr.mxu0 %v2041
  %2782 = vmatpush1.msra.mxu0 %v2040
  %2783 = vmatprep.subr.mxu0 %v2051
  %2784 = vmatpush1.msra.mxu0 %v2050
  %2785 = vmatprep.subr.mxu0 %v2061
  %2786 = vmatpush1.msra.mxu0 %v2060
  %2787 = vmatprep.subr.mxu0 %v2071
  %2788 = vmatpush1.msra.mxu0 %v2070
  %2789 = vmatprep.subr.mxu0 %v2081
  %2790 = vmatpush1.msra.mxu0 %v2080
  %2791 = vmatprep.subr.mxu0 %v2091
  %2792 = vmatpush1.msra.mxu0 %v2090
  %2793 = vmatprep.subr.mxu0 %v2101
  %2794 = vmatpush1.msra.mxu0 %v2100
  %2795 = vmatprep.subr.mxu0 %v2111
  %2796 = vmatpush1.msra.mxu0 %v2110
  %2797 = vmatprep.subr.mxu0 %v2121
  %2798 = vmatpush1.msra.mxu0 %v2120
  %2799 = vmatprep.subr.mxu0 %v2131
  %2800 = vmatpush1.msra.mxu0 %v2130
  %2801 = vmatprep.subr.mxu0 %v2141
  %2802 = vmatpush1.msra.mxu0 %v2140
  %2803 = vmatprep.subr.mxu0 %v2151
  %2804 = vmatpush1.msra.mxu0 %v2150
  %2805 = vmatprep.subr.mxu0 %v2161
  %2806 = vmatpush1.msra.mxu0 %v2160
  %2807 = vmatprep.subr.mxu0 %v2171
  %2808 = vmatpush1.msra.mxu0 %v2170
  %2809 = vmatprep.subr.mxu0 %v2181
  %2810 = vmatpush1.msra.mxu0 %v2180
  %2811 = vmatprep.subr.mxu0 %v2191
  %2812 = vmatpush1.msra.mxu0 %v2190
  %2813 = vmatprep.subr.mxu0 %v2201
  %2814 = vmatpush1.msra.mxu0 %v2200
  %2815 = vmatprep.subr.mxu0 %v2211
  %2816 = vmatpush1.msra.mxu0 %v2210
  %2817 = vmatprep.subr.mxu0 %v2221
  %2818 = vmatpush1.msra.mxu0 %v2220
  %2819 = vmatprep.subr.mxu0 %v2231
  %2820 = vmatpush1.msra.mxu0 %v2230
  %2821 = vmatprep.subr.mxu0 %v2241
  %2822 = vmatpush1.msra.mxu0 %v2240
  %2823 = vmatprep.subr.mxu0 %v2251
  %2824 = vmatpush1.msra.mxu0 %v2250
  %2825 = vmatprep.subr.mxu0 %v2261
  %2826 = vmatpush1.msra.mxu0 %v2260
  %2827 = vmatprep.subr.mxu0 %v2271
  %2828 = vmatpush1.msra.mxu0 %v2270
  %2829 = vmatprep.subr.mxu0 %v2281
  %2830 = vmatpush1.msra.mxu0 %v2280
  %2831 = vmatprep.mubr.f32.mxu0 %v2714
  %2832 = vmatmul.mubr.f32.gmra.mrb[0].mxu0 %v2713
  %v2833 = vpop.f32.mrb[0].mxu0
  %v2834 = vadd.f32 %v2720, %v2833
  %v2835 = vpop.f32.mrb[0].mxu0
  %v2836 = vadd.f32 %v2724, %v2835
  %2837 = vdwg.mxu0
  %2838 = vmatprep.subr.mxu0 %v1973
  %2839 = vmatpush1.msra.mxu0 %v1972
  %2840 = vmatprep.subr.mxu0 %v1983
  %2841 = vmatpush1.msra.mxu0 %v1982
  %2842 = vmatprep.subr.mxu0 %v1993
  %2843 = vmatpush1.msra.mxu0 %v1992
  %2844 = vmatprep.subr.mxu0 %v2003
  %2845 = vmatpush1.msra.mxu0 %v2002
  %2846 = vmatprep.subr.mxu0 %v2013
  %2847 = vmatpush1.msra.mxu0 %v2012
  %2848 = vmatprep.subr.mxu0 %v2023
  %2849 = vmatpush1.msra.mxu0 %v2022
  %2850 = vmatprep.subr.mxu0 %v2033
  %2851 = vmatpush1.msra.mxu0 %v2032
  %2852 = vmatprep.subr.mxu0 %v2043
  %2853 = vmatpush1.msra.mxu0 %v2042
  %2854 = vmatprep.subr.mxu0 %v2053
  %2855 = vmatpush1.msra.mxu0 %v2052
  %2856 = vmatprep.subr.mxu0 %v2063
  %2857 = vmatpush1.msra.mxu0 %v2062
  %2858 = vmatprep.subr.mxu0 %v2073
  %2859 = vmatpush1.msra.mxu0 %v2072
  %2860 = vmatprep.subr.mxu0 %v2083
  %2861 = vmatpush1.msra.mxu0 %v2082
  %2862 = vmatprep.subr.mxu0 %v2093
  %2863 = vmatpush1.msra.mxu0 %v2092
  %2864 = vmatprep.subr.mxu0 %v2103
  %2865 = vmatpush1.msra.mxu0 %v2102
  %2866 = vmatprep.subr.mxu0 %v2113
  %2867 = vmatpush1.msra.mxu0 %v2112
  %2868 = vmatprep.subr.mxu0 %v2123
  %2869 = vmatpush1.msra.mxu0 %v2122
  %2870 = vmatprep.subr.mxu0 %v2133
  %2871 = vmatpush1.msra.mxu0 %v2132
  %2872 = vmatprep.subr.mxu0 %v2143
  %2873 = vmatpush1.msra.mxu0 %v2142
  %2874 = vmatprep.subr.mxu0 %v2153
  %2875 = vmatpush1.msra.mxu0 %v2152
  %2876 = vmatprep.subr.mxu0 %v2163
  %2877 = vmatpush1.msra.mxu0 %v2162
  %2878 = vmatprep.subr.mxu0 %v2173
  %2879 = vmatpush1.msra.mxu0 %v2172
  %2880 = vmatprep.subr.mxu0 %v2183
  %2881 = vmatpush1.msra.mxu0 %v2182
  %2882 = vmatprep.subr.mxu0 %v2193
  %2883 = vmatpush1.msra.mxu0 %v2192
  %2884 = vmatprep.subr.mxu0 %v2203
  %2885 = vmatpush1.msra.mxu0 %v2202
  %2886 = vmatprep.subr.mxu0 %v2213
  %2887 = vmatpush1.msra.mxu0 %v2212
  %2888 = vmatprep.subr.mxu0 %v2223
  %2889 = vmatpush1.msra.mxu0 %v2222
  %2890 = vmatprep.subr.mxu0 %v2233
  %2891 = vmatpush1.msra.mxu0 %v2232
  %2892 = vmatprep.subr.mxu0 %v2243
  %2893 = vmatpush1.msra.mxu0 %v2242
  %2894 = vmatprep.subr.mxu0 %v2253
  %2895 = vmatpush1.msra.mxu0 %v2252
  %2896 = vmatprep.subr.mxu0 %v2263
  %2897 = vmatpush1.msra.mxu0 %v2262
  %2898 = vmatprep.subr.mxu0 %v2273
  %2899 = vmatpush1.msra.mxu0 %v2272
  %2900 = vmatprep.subr.mxu0 %v2283
  %2901 = vmatpush1.msra.mxu0 %v2282
  %2902 = vmatprep.mubr.f32.mxu0 %v2714
  %2903 = vmatmul.mubr.f32.gmra.mrb[0].mxu0 %v2713
  %v2904 = vpop.f32.mrb[0].mxu0
  %v2905 = vadd.f32 %v2728, %v2904
  %v2906 = vpop.f32.mrb[0].mxu0
  %v2907 = vadd.f32 %v2732, %v2906
  %2908 = vdwg.mxu0
  %2909 = vmatprep.subr.mxu0 %v1975
  %2910 = vmatpush1.msra.mxu0 %v1974
  %2911 = vmatprep.subr.mxu0 %v1985
  %2912 = vmatpush1.msra.mxu0 %v1984
  %2913 = vmatprep.subr.mxu0 %v1995
  %2914 = vmatpush1.msra.mxu0 %v1994
  %2915 = vmatprep.subr.mxu0 %v2005
  %2916 = vmatpush1.msra.mxu0 %v2004
  %2917 = vmatprep.subr.mxu0 %v2015
  %2918 = vmatpush1.msra.mxu0 %v2014
  %2919 = vmatprep.subr.mxu0 %v2025
  %2920 = vmatpush1.msra.mxu0 %v2024
  %2921 = vmatprep.subr.mxu0 %v2035
  %2922 = vmatpush1.msra.mxu0 %v2034
  %2923 = vmatprep.subr.mxu0 %v2045
  %2924 = vmatpush1.msra.mxu0 %v2044
  %2925 = vmatprep.subr.mxu0 %v2055
  %2926 = vmatpush1.msra.mxu0 %v2054
  %2927 = vmatprep.subr.mxu0 %v2065
  %2928 = vmatpush1.msra.mxu0 %v2064
  %2929 = vmatprep.subr.mxu0 %v2075
  %2930 = vmatpush1.msra.mxu0 %v2074
  %2931 = vmatprep.subr.mxu0 %v2085
  %2932 = vmatpush1.msra.mxu0 %v2084
  %2933 = vmatprep.subr.mxu0 %v2095
  %2934 = vmatpush1.msra.mxu0 %v2094
  %2935 = vmatprep.subr.mxu0 %v2105
  %2936 = vmatpush1.msra.mxu0 %v2104
  %2937 = vmatprep.subr.mxu0 %v2115
  %2938 = vmatpush1.msra.mxu0 %v2114
  %2939 = vmatprep.subr.mxu0 %v2125
  %2940 = vmatpush1.msra.mxu0 %v2124
  %2941 = vmatprep.subr.mxu0 %v2135
  %2942 = vmatpush1.msra.mxu0 %v2134
  %2943 = vmatprep.subr.mxu0 %v2145
  %2944 = vmatpush1.msra.mxu0 %v2144
  %2945 = vmatprep.subr.mxu0 %v2155
  %2946 = vmatpush1.msra.mxu0 %v2154
  %2947 = vmatprep.subr.mxu0 %v2165
  %2948 = vmatpush1.msra.mxu0 %v2164
  %2949 = vmatprep.subr.mxu0 %v2175
  %2950 = vmatpush1.msra.mxu0 %v2174
  %2951 = vmatprep.subr.mxu0 %v2185
  %2952 = vmatpush1.msra.mxu0 %v2184
  %2953 = vmatprep.subr.mxu0 %v2195
  %2954 = vmatpush1.msra.mxu0 %v2194
  %2955 = vmatprep.subr.mxu0 %v2205
  %2956 = vmatpush1.msra.mxu0 %v2204
  %2957 = vmatprep.subr.mxu0 %v2215
  %2958 = vmatpush1.msra.mxu0 %v2214
  %2959 = vmatprep.subr.mxu0 %v2225
  %2960 = vmatpush1.msra.mxu0 %v2224
  %2961 = vmatprep.subr.mxu0 %v2235
  %2962 = vmatpush1.msra.mxu0 %v2234
  %2963 = vmatprep.subr.mxu0 %v2245
  %2964 = vmatpush1.msra.mxu0 %v2244
  %2965 = vmatprep.subr.mxu0 %v2255
  %2966 = vmatpush1.msra.mxu0 %v2254
  %2967 = vmatprep.subr.mxu0 %v2265
  %2968 = vmatpush1.msra.mxu0 %v2264
  %2969 = vmatprep.subr.mxu0 %v2275
  %2970 = vmatpush1.msra.mxu0 %v2274
  %2971 = vmatprep.subr.mxu0 %v2285
  %2972 = vmatpush1.msra.mxu0 %v2284
  %2973 = vmatprep.mubr.f32.mxu0 %v2714
  %2974 = vmatmul.mubr.f32.gmra.mrb[0].mxu0 %v2713
  %v2975 = vpop.f32.mrb[0].mxu0
  %v2976 = vadd.f32 %v2736, %v2975
  %v2977 = vpop.f32.mrb[0].mxu0
  %v2978 = vadd.f32 %v2740, %v2977
  %2979 = vdwg.mxu0
  %2980 = vmatprep.subr.mxu0 %v1977
  %2981 = vmatpush1.msra.mxu0 %v1976
  %2982 = vmatprep.subr.mxu0 %v1987
  %2983 = vmatpush1.msra.mxu0 %v1986
  %2984 = vmatprep.subr.mxu0 %v1997
  %2985 = vmatpush1.msra.mxu0 %v1996
  %2986 = vmatprep.subr.mxu0 %v2007
  %2987 = vmatpush1.msra.mxu0 %v2006
  %2988 = vmatprep.subr.mxu0 %v2017
  %2989 = vmatpush1.msra.mxu0 %v2016
  %2990 = vmatprep.subr.mxu0 %v2027
  %2991 = vmatpush1.msra.mxu0 %v2026
  %2992 = vmatprep.subr.mxu0 %v2037
  %2993 = vmatpush1.msra.mxu0 %v2036
  %2994 = vmatprep.subr.mxu0 %v2047
  %2995 = vmatpush1.msra.mxu0 %v2046
  %2996 = vmatprep.subr.mxu0 %v2057
  %2997 = vmatpush1.msra.mxu0 %v2056
  %2998 = vmatprep.subr.mxu0 %v2067
  %2999 = vmatpush1.msra.mxu0 %v2066
  %3000 = vmatprep.subr.mxu0 %v2077
  %3001 = vmatpush1.msra.mxu0 %v2076
  %3002 = vmatprep.subr.mxu0 %v2087
  %3003 = vmatpush1.msra.mxu0 %v2086
  %3004 = vmatprep.subr.mxu0 %v2097
  %3005 = vmatpush1.msra.mxu0 %v2096
  %3006 = vmatprep.subr.mxu0 %v2107
  %3007 = vmatpush1.msra.mxu0 %v2106
  %3008 = vmatprep.subr.mxu0 %v2117
  %3009 = vmatpush1.msra.mxu0 %v2116
  %3010 = vmatprep.subr.mxu0 %v2127
  %3011 = vmatpush1.msra.mxu0 %v2126
  %3012 = vmatprep.subr.mxu0 %v2137
  %3013 = vmatpush1.msra.mxu0 %v2136
  %3014 = vmatprep.subr.mxu0 %v2147
  %3015 = vmatpush1.msra.mxu0 %v2146
  %3016 = vmatprep.subr.mxu0 %v2157
  %3017 = vmatpush1.msra.mxu0 %v2156
  %3018 = vmatprep.subr.mxu0 %v2167
  %3019 = vmatpush1.msra.mxu0 %v2166
  %3020 = vmatprep.subr.mxu0 %v2177
  %3021 = vmatpush1.msra.mxu0 %v2176
  %3022 = vmatprep.subr.mxu0 %v2187
  %3023 = vmatpush1.msra.mxu0 %v2186
  %3024 = vmatprep.subr.mxu0 %v2197
  %3025 = vmatpush1.msra.mxu0 %v2196
  %3026 = vmatprep.subr.mxu0 %v2207
  %3027 = vmatpush1.msra.mxu0 %v2206
  %3028 = vmatprep.subr.mxu0 %v2217
  %3029 = vmatpush1.msra.mxu0 %v2216
  %3030 = vmatprep.subr.mxu0 %v2227
  %3031 = vmatpush1.msra.mxu0 %v2226
  %3032 = vmatprep.subr.mxu0 %v2237
  %3033 = vmatpush1.msra.mxu0 %v2236
  %3034 = vmatprep.subr.mxu0 %v2247
  %3035 = vmatpush1.msra.mxu0 %v2246
  %3036 = vmatprep.subr.mxu0 %v2257
  %3037 = vmatpush1.msra.mxu0 %v2256
  %3038 = vmatprep.subr.mxu0 %v2267
  %3039 = vmatpush1.msra.mxu0 %v2266
  %3040 = vmatprep.subr.mxu0 %v2277
  %3041 = vmatpush1.msra.mxu0 %v2276
  %3042 = vmatprep.subr.mxu0 %v2287
  %3043 = vmatpush1.msra.mxu0 %v2286
  %3044 = vmatprep.mubr.f32.mxu0 %v2714
  %3045 = vmatmul.mubr.f32.gmra.mrb[0].mxu0 %v2713
  %v3046 = vpop.f32.mrb[0].mxu0
  %v3047 = vadd.f32 %v2744, %v3046
  %v3048 = vpop.f32.mrb[0].mxu0
  %v3049 = vadd.f32 %v2748, %v3048
  %3050 = vdwg.mxu0
  %3051 = vmatprep.subr.mxu0 %v1979
  %3052 = vmatpush1.msra.mxu0 %v1978
  %3053 = vmatprep.subr.mxu0 %v1989
  %3054 = vmatpush1.msra.mxu0 %v1988
  %3055 = vmatprep.subr.mxu0 %v1999
  %3056 = vmatpush1.msra.mxu0 %v1998
  %3057 = vmatprep.subr.mxu0 %v2009
  %3058 = vmatpush1.msra.mxu0 %v2008
  %3059 = vmatprep.subr.mxu0 %v2019
  %3060 = vmatpush1.msra.mxu0 %v2018
  %3061 = vmatprep.subr.mxu0 %v2029
  %3062 = vmatpush1.msra.mxu0 %v2028
  %3063 = vmatprep.subr.mxu0 %v2039
  %3064 = vmatpush1.msra.mxu0 %v2038
  %3065 = vmatprep.subr.mxu0 %v2049
  %3066 = vmatpush1.msra.mxu0 %v2048
  %3067 = vmatprep.subr.mxu0 %v2059
  %3068 = vmatpush1.msra.mxu0 %v2058
  %3069 = vmatprep.subr.mxu0 %v2069
  %3070 = vmatpush1.msra.mxu0 %v2068
  %3071 = vmatprep.subr.mxu0 %v2079
  %3072 = vmatpush1.msra.mxu0 %v2078
  %3073 = vmatprep.subr.mxu0 %v2089
  %3074 = vmatpush1.msra.mxu0 %v2088
  %3075 = vmatprep.subr.mxu0 %v2099
  %3076 = vmatpush1.msra.mxu0 %v2098
  %3077 = vmatprep.subr.mxu0 %v2109
  %3078 = vmatpush1.msra.mxu0 %v2108
  %3079 = vmatprep.subr.mxu0 %v2119
  %3080 = vmatpush1.msra.mxu0 %v2118
  %3081 = vmatprep.subr.mxu0 %v2129
  %3082 = vmatpush1.msra.mxu0 %v2128
  %3083 = vmatprep.subr.mxu0 %v2139
  %3084 = vmatpush1.msra.mxu0 %v2138
  %3085 = vmatprep.subr.mxu0 %v2149
  %3086 = vmatpush1.msra.mxu0 %v2148
  %3087 = vmatprep.subr.mxu0 %v2159
  %3088 = vmatpush1.msra.mxu0 %v2158
  %3089 = vmatprep.subr.mxu0 %v2169
  %3090 = vmatpush1.msra.mxu0 %v2168
  %3091 = vmatprep.subr.mxu0 %v2179
  %3092 = vmatpush1.msra.mxu0 %v2178
  %3093 = vmatprep.subr.mxu0 %v2189
  %3094 = vmatpush1.msra.mxu0 %v2188
  %3095 = vmatprep.subr.mxu0 %v2199
  %3096 = vmatpush1.msra.mxu0 %v2198
  %3097 = vmatprep.subr.mxu0 %v2209
  %3098 = vmatpush1.msra.mxu0 %v2208
  %3099 = vmatprep.subr.mxu0 %v2219
  %3100 = vmatpush1.msra.mxu0 %v2218
  %3101 = vmatprep.subr.mxu0 %v2229
  %3102 = vmatpush1.msra.mxu0 %v2228
  %3103 = vmatprep.subr.mxu0 %v2239
  %3104 = vmatpush1.msra.mxu0 %v2238
  %3105 = vmatprep.subr.mxu0 %v2249
  %3106 = vmatpush1.msra.mxu0 %v2248
  %3107 = vmatprep.subr.mxu0 %v2259
  %3108 = vmatpush1.msra.mxu0 %v2258
  %3109 = vmatprep.subr.mxu0 %v2269
  %3110 = vmatpush1.msra.mxu0 %v2268
  %3111 = vmatprep.subr.mxu0 %v2279
  %3112 = vmatpush1.msra.mxu0 %v2278
  %3113 = vmatprep.subr.mxu0 %v2289
  %3114 = vmatpush1.msra.mxu0 %v2288
  %3115 = vmatprep.mubr.f32.mxu0 %v2714
  %3116 = vmatmul.mubr.f32.gmra.mrb[0].mxu0 %v2713
  %v3117 = vpop.f32.mrb[0].mxu0
  %v3118 = vadd.f32 %v2752, %v3117
  %v3119 = vpop.f32.mrb[0].mxu0
  %v3120 = vadd.f32 %v2756, %v3119
  %3121 = vdwg.mxu0
  %v3122 = vxor.u32 %v2834, 2147483648
  %v3123 = vxor.u32 %v2836, 2147483648
  %v3124 = vxor.u32 %v2905, 2147483648
  %v3125 = vxor.u32 %v2907, 2147483648
  %v3126 = vxor.u32 %v2976, 2147483648
  %v3127 = vxor.u32 %v2978, 2147483648
  %v3128 = vxor.u32 %v3047, 2147483648
  %v3129 = vxor.u32 %v3049, 2147483648
  %v3130 = vxor.u32 %v3118, 2147483648
  %v3131 = vxor.u32 %v3120, 2147483648
  %v3132 = vmul.f32 %v3122, 1.442695
  %v3133 = vpow.pop %v3132
  %v3134 = vmul.f32 %v3123, 1.442695
  %v3135 = vpow.pop %v3134
  %v3136 = vmul.f32 %v3124, 1.442695
  %v3137 = vpow.pop %v3136
  %v3138 = vmul.f32 %v3125, 1.442695
  %v3139 = vpow.pop %v3138
  %v3140 = vmul.f32 %v3126, 1.442695
  %v3141 = vpow.pop %v3140
  %v3142 = vmul.f32 %v3127, 1.442695
  %v3143 = vpow.pop %v3142
  %v3144 = vmul.f32 %v3128, 1.442695
  %v3145 = vpow.pop %v3144
  %v3146 = vmul.f32 %v3129, 1.442695
  %v3147 = vpow.pop %v3146
  %v3148 = vmul.f32 %v3130, 1.442695
  %v3149 = vpow.pop %v3148
  %v3150 = vmul.f32 %v3131, 1.442695
  %v3151 = vpow.pop %v3150
  %v3152 = vadd.f32 %v3133, 1.0
  %v3153 = vadd.f32 %v3135, 1.0
  %v3154 = vadd.f32 %v3137, 1.0
  %v3155 = vadd.f32 %v3139, 1.0
  %v3156 = vadd.f32 %v3141, 1.0
  %v3157 = vadd.f32 %v3143, 1.0
  %v3158 = vadd.f32 %v3145, 1.0
  %v3159 = vadd.f32 %v3147, 1.0
  %v3160 = vadd.f32 %v3149, 1.0
  %v3161 = vadd.f32 %v3151, 1.0
  %v3162 = vrcp.pop %v3152
  %v3163 = vmul.f32 1.0, %v3162
  %v3164 = vrcp.pop %v3153
  %v3165 = vmul.f32 1.0, %v3164
  %v3166 = vrcp.pop %v3154
  %v3167 = vmul.f32 1.0, %v3166
  %v3168 = vrcp.pop %v3155
  %v3169 = vmul.f32 1.0, %v3168
  %v3170 = vrcp.pop %v3156
  %v3171 = vmul.f32 1.0, %v3170
  %v3172 = vrcp.pop %v3157
  %v3173 = vmul.f32 1.0, %v3172
  %v3174 = vrcp.pop %v3158
  %v3175 = vmul.f32 1.0, %v3174
  %v3176 = vrcp.pop %v3159
  %v3177 = vmul.f32 1.0, %v3176
  %v3178 = vrcp.pop %v3160
  %v3179 = vmul.f32 1.0, %v3178
  %v3180 = vrcp.pop %v3161
  %v3181 = vmul.f32 1.0, %v3180
  %v3192 = vcombine.low %v3163, %v3165
  %v3193 = vcombine.low %v3167, %v3169
  %v3195 = vunpack.c.l.s4 1983009808
  %v3196 = vunpack.c.0.s8 %v3195
  %v3197 = vlaneseq
  %v3198 = vshrl.u32 %v3197, 7
  %v3199 = vsub.s32 %v3196, %v3198
  %v3200 = vrot.slane %v3192, %v3199
  %v3202 = vunpack.c.l.s4 1983009808
  %v3203 = vunpack.c.0.s8 %v3202
  %v3204 = vlaneseq
  %v3205 = vshrl.u32 %v3204, 7
  %v3206 = vsub.s32 %v3203, %v3205
  %v3207 = vrot.slane %v3193, %v3206
  %v3208 = vcombine.low %v3200, %v3207
  %v3209 = vcombine.low %v3171, %v3173
  %v3210 = vcombine.low %v3175, %v3177
  %v3212 = vunpack.c.l.s4 1983009808
  %v3213 = vunpack.c.0.s8 %v3212
  %v3214 = vlaneseq
  %v3215 = vshrl.u32 %v3214, 7
  %v3216 = vsub.s32 %v3213, %v3215
  %v3217 = vrot.slane %v3209, %v3216
  %v3219 = vunpack.c.l.s4 1983009808
  %v3220 = vunpack.c.0.s8 %v3219
  %v3221 = vlaneseq
  %v3222 = vshrl.u32 %v3221, 7
  %v3223 = vsub.s32 %v3220, %v3222
  %v3224 = vrot.slane %v3210, %v3223
  %v3225 = vcombine.low %v3217, %v3224
  %v3226 = vcombine.low %v3179, %v3181
  %v3228 = vunpack.c.l.s4 1983009808
  %v3229 = vunpack.c.0.s8 %v3228
  %v3230 = vlaneseq
  %v3231 = vshrl.u32 %v3230, 7
  %v3232 = vsub.s32 %v3229, %v3231
  %v3233 = vrot.slane %v3226, %v3232
  %v3237 = vmul.f32 %v1646, %v3208
  %v3238 = vmul.f32 %v1647, %v3225
  %v3239 = vmul.f32 %v1648, %v3233
  %v3240 = vld [vmem:[%s10] sm:$0xff]
  %v3241 = vld [vmem:[%s10 + $0x8] sm:$0xff]
  %v3242 = vld [vmem:[%s10 + $0x10] sm:$0xff]
  %v3243 = vld [vmem:[%s10 + $0x18] sm:$0xff]
  %v3244 = vld [vmem:[%s10 + $0x20] sm:$0xff]
  %v3245 = vld [vmem:[%s10 + $0x28] sm:$0xff]
  %v3246 = vld [vmem:[%s10 + $0x30] sm:$0xff]
  %v3247 = vld [vmem:[%s10 + $0x38] sm:$0xff]
  %v3248 = vld [vmem:[%s10 + $0x40] sm:$0xff]
  %v3249 = vld [vmem:[%s10 + $0x48] sm:$0xff]
  %v3250 = vld [vmem:[%s10 + $0x50] sm:$0xff]
  %v3251 = vld [vmem:[%s10 + $0x58] sm:$0xff]
  %v3252 = vld [vmem:[%s10 + $0x60] sm:$0xff]
  %v3253 = vld [vmem:[%s10 + $0x68] sm:$0xff]
  %v3254 = vld [vmem:[%s10 + $0x70] sm:$0xff]
  %v3255 = vld [vmem:[%s10 + $0x78] sm:$0xff]
  %v3256 = vld [vmem:[%s10 + $0x80] sm:$0xff]
  %v3257 = vld [vmem:[%s10 + $0x88] sm:$0xff]
  %v3258 = vld [vmem:[%s10 + $0x90] sm:$0xff]
  %v3259 = vld [vmem:[%s10 + $0x98] sm:$0xff]
  %v3260 = vld [vmem:[%s10 + $0xa0] sm:$0xff]
  %v3261 = vld [vmem:[%s10 + $0xa8] sm:$0xff]
  %v3262 = vld [vmem:[%s10 + $0xb0] sm:$0xff]
  %v3263 = vld [vmem:[%s10 + $0xb8] sm:$0xff]
  %v3264 = vld [vmem:[%s10 + $0xc0] sm:$0xff]
  %v3265 = vld [vmem:[%s10 + $0xc8] sm:$0xff]
  %v3266 = vld [vmem:[%s10 + $0xd0] sm:$0xff]
  %v3267 = vld [vmem:[%s10 + $0xd8] sm:$0xff]
  %v3268 = vld [vmem:[%s10 + $0xe0] sm:$0xff]
  %v3269 = vld [vmem:[%s10 + $0xe8] sm:$0xff]
  %v3270 = vld [vmem:[%s10 + $0xf0] sm:$0xff]
  %v3271 = vld [vmem:[%s10 + $0xf8] sm:$0xff]
  %v3272 = vld [vmem:[%s10 + $0x100] sm:$0xff]
  %v3273 = vld [vmem:[%s10 + $0x108] sm:$0xff]
  %v3274 = vld [vmem:[%s10 + $0x110] sm:$0xff]
  %v3275 = vld [vmem:[%s10 + $0x118] sm:$0xff]
  %v3276 = vld [vmem:[%s10 + $0x120] sm:$0xff]
  %v3277 = vld [vmem:[%s10 + $0x128] sm:$0xff]
  %v3278 = vld [vmem:[%s10 + $0x130] sm:$0xff]
  %v3279 = vld [vmem:[%s10 + $0x138] sm:$0xff]
  %v3280 = vld [vmem:[%s10 + $0x140] sm:$0xff]
  %v3281 = vld [vmem:[%s10 + $0x148] sm:$0xff]
  %v3282 = vld [vmem:[%s10 + $0x150] sm:$0xff]
  %v3283 = vld [vmem:[%s10 + $0x158] sm:$0xff]
  %v3284 = vld [vmem:[%s10 + $0x160] sm:$0xff]
  %v3285 = vld [vmem:[%s10 + $0x168] sm:$0xff]
  %v3286 = vld [vmem:[%s10 + $0x170] sm:$0xff]
  %v3287 = vld [vmem:[%s10 + $0x178] sm:$0xff]
  %v3288 = vld [vmem:[%s10 + $0x180] sm:$0xff]
  %v3289 = vld [vmem:[%s10 + $0x188] sm:$0xff]
  %v3290 = vld [vmem:[%s10 + $0x190] sm:$0xff]
  %v3291 = vld [vmem:[%s10 + $0x198] sm:$0xff]
  %v3292 = vld [vmem:[%s10 + $0x1a0] sm:$0xff]
  %v3293 = vld [vmem:[%s10 + $0x1a8] sm:$0xff]
  %v3294 = vld [vmem:[%s10 + $0x1b0] sm:$0xff]
  %v3295 = vld [vmem:[%s10 + $0x1b8] sm:$0xff]
  %v3296 = vld [vmem:[%s10 + $0x1c0] sm:$0xff]
  %v3297 = vld [vmem:[%s10 + $0x1c8] sm:$0xff]
  %v3298 = vld [vmem:[%s10 + $0x1d0] sm:$0xff]
  %v3299 = vld [vmem:[%s10 + $0x1d8] sm:$0xff]
  %v3300 = vld [vmem:[%s10 + $0x1e0] sm:$0xff]
  %v3301 = vld [vmem:[%s10 + $0x1e8] sm:$0xff]
  %v3302 = vld [vmem:[%s10 + $0x1f0] sm:$0xff]
  %v3303 = vld [vmem:[%s10 + $0x1f8] sm:$0xff]
  %v3304 = vld [vmem:[%s10 + $0x200] sm:$0xff]
  %v3305 = vld [vmem:[%s10 + $0x208] sm:$0xff]
  %v3306 = vld [vmem:[%s10 + $0x210] sm:$0xff]
  %v3307 = vld [vmem:[%s10 + $0x218] sm:$0xff]
  %v3308 = vld [vmem:[%s10 + $0x220] sm:$0xff]
  %v3309 = vld [vmem:[%s10 + $0x228] sm:$0xff]
  %v3310 = vld [vmem:[%s10 + $0x230] sm:$0xff]
  %v3311 = vld [vmem:[%s10 + $0x238] sm:$0xff]
  %v3312 = vld [vmem:[%s10 + $0x240] sm:$0xff]
  %v3313 = vld [vmem:[%s10 + $0x248] sm:$0xff]
  %v3314 = vld [vmem:[%s10 + $0x250] sm:$0xff]
  %v3315 = vld [vmem:[%s10 + $0x258] sm:$0xff]
  %v3316 = vld [vmem:[%s10 + $0x260] sm:$0xff]
  %v3317 = vld [vmem:[%s10 + $0x268] sm:$0xff]
  %v3318 = vld [vmem:[%s10 + $0x270] sm:$0xff]
  %v3319 = vld [vmem:[%s10 + $0x278] sm:$0xff]
  %v3320 = vld [vmem:[%s10 + $0x280] sm:$0xff]
  %v3321 = vld [vmem:[%s10 + $0x288] sm:$0xff]
  %v3322 = vld [vmem:[%s10 + $0x290] sm:$0xff]
  %v3323 = vld [vmem:[%s10 + $0x298] sm:$0xff]
  %v3324 = vld [vmem:[%s10 + $0x2a0] sm:$0xff]
  %v3325 = vld [vmem:[%s10 + $0x2a8] sm:$0xff]
  %v3326 = vld [vmem:[%s10 + $0x2b0] sm:$0xff]
  %v3327 = vld [vmem:[%s10 + $0x2b8] sm:$0xff]
  %v3328 = vld [vmem:[%s10 + $0x2c0] sm:$0xff]
  %v3329 = vld [vmem:[%s10 + $0x2c8] sm:$0xff]
  %v3330 = vld [vmem:[%s10 + $0x2d0] sm:$0xff]
  %v3331 = vld [vmem:[%s10 + $0x2d8] sm:$0xff]
  %v3332 = vld [vmem:[%s10 + $0x2e0] sm:$0xff]
  %v3333 = vld [vmem:[%s10 + $0x2e8] sm:$0xff]
  %v3334 = vld [vmem:[%s10 + $0x2f0] sm:$0xff]
  %v3335 = vld [vmem:[%s10 + $0x2f8] sm:$0xff]
  %v3336 = vld [vmem:[%s10 + $0x300] sm:$0xff]
  %v3337 = vld [vmem:[%s10 + $0x308] sm:$0xff]
  %v3338 = vld [vmem:[%s10 + $0x310] sm:$0xff]
  %v3339 = vld [vmem:[%s10 + $0x318] sm:$0xff]
  %v3340 = vld [vmem:[%s10 + $0x320] sm:$0xff]
  %v3341 = vld [vmem:[%s10 + $0x328] sm:$0xff]
  %v3342 = vld [vmem:[%s10 + $0x330] sm:$0xff]
  %v3343 = vld [vmem:[%s10 + $0x338] sm:$0xff]
  %v3344 = vld [vmem:[%s10 + $0x340] sm:$0xff]
  %v3345 = vld [vmem:[%s10 + $0x348] sm:$0xff]
  %v3346 = vld [vmem:[%s10 + $0x350] sm:$0xff]
  %v3347 = vld [vmem:[%s10 + $0x358] sm:$0xff]
  %v3348 = vld [vmem:[%s10 + $0x360] sm:$0xff]
  %v3349 = vld [vmem:[%s10 + $0x368] sm:$0xff]
  %v3350 = vld [vmem:[%s10 + $0x370] sm:$0xff]
  %v3351 = vld [vmem:[%s10 + $0x378] sm:$0xff]
  %v3352 = vld [vmem:[%s10 + $0x380] sm:$0xff]
  %v3353 = vld [vmem:[%s10 + $0x388] sm:$0xff]
  %v3354 = vld [vmem:[%s10 + $0x390] sm:$0xff]
  %v3355 = vld [vmem:[%s10 + $0x398] sm:$0xff]
  %v3356 = vld [vmem:[%s10 + $0x3a0] sm:$0xff]
  %v3357 = vld [vmem:[%s10 + $0x3a8] sm:$0xff]
  %v3358 = vld [vmem:[%s10 + $0x3b0] sm:$0xff]
  %v3359 = vld [vmem:[%s10 + $0x3b8] sm:$0xff]
  %v3360 = vld [vmem:[%s10 + $0x3c0] sm:$0xff]
  %v3361 = vld [vmem:[%s10 + $0x3c8] sm:$0xff]
  %v3362 = vld [vmem:[%s10 + $0x3d0] sm:$0xff]
  %v3363 = vld [vmem:[%s10 + $0x3d8] sm:$0xff]
  %v3364 = vld [vmem:[%s10 + $0x3e0] sm:$0xff]
  %v3365 = vld [vmem:[%s10 + $0x3e8] sm:$0xff]
  %v3366 = vld [vmem:[%s10 + $0x3f0] sm:$0xff]
  %v3367 = vld [vmem:[%s10 + $0x3f8] sm:$0xff]
  %v3368 = vld [vmem:[%s10 + $0x400] sm:$0xff]
  %v3369 = vld [vmem:[%s10 + $0x408] sm:$0xff]
  %v3370 = vld [vmem:[%s10 + $0x410] sm:$0xff]
  %v3371 = vld [vmem:[%s10 + $0x418] sm:$0xff]
  %v3372 = vld [vmem:[%s10 + $0x420] sm:$0xff]
  %v3373 = vld [vmem:[%s10 + $0x428] sm:$0xff]
  %v3374 = vld [vmem:[%s10 + $0x430] sm:$0xff]
  %v3375 = vld [vmem:[%s10 + $0x438] sm:$0xff]
  %v3376 = vld [vmem:[%s10 + $0x440] sm:$0xff]
  %v3377 = vld [vmem:[%s10 + $0x448] sm:$0xff]
  %v3378 = vld [vmem:[%s10 + $0x450] sm:$0xff]
  %v3379 = vld [vmem:[%s10 + $0x458] sm:$0xff]
  %v3380 = vld [vmem:[%s10 + $0x460] sm:$0xff]
  %v3381 = vld [vmem:[%s10 + $0x468] sm:$0xff]
  %v3382 = vld [vmem:[%s10 + $0x470] sm:$0xff]
  %v3383 = vld [vmem:[%s10 + $0x478] sm:$0xff]
  %v3384 = vld [vmem:[%s10 + $0x480] sm:$0xff]
  %v3385 = vld [vmem:[%s10 + $0x488] sm:$0xff]
  %v3386 = vld [vmem:[%s10 + $0x490] sm:$0xff]
  %v3387 = vld [vmem:[%s10 + $0x498] sm:$0xff]
  %v3388 = vld [vmem:[%s10 + $0x4a0] sm:$0xff]
  %v3389 = vld [vmem:[%s10 + $0x4a8] sm:$0xff]
  %v3390 = vld [vmem:[%s10 + $0x4b0] sm:$0xff]
  %v3391 = vld [vmem:[%s10 + $0x4b8] sm:$0xff]
  %v3392 = vld [vmem:[%s10 + $0x4c0] sm:$0xff]
  %v3393 = vld [vmem:[%s10 + $0x4c8] sm:$0xff]
  %v3394 = vld [vmem:[%s10 + $0x4d0] sm:$0xff]
  %v3395 = vld [vmem:[%s10 + $0x4d8] sm:$0xff]
  %v3396 = vld [vmem:[%s10 + $0x4e0] sm:$0xff]
  %v3397 = vld [vmem:[%s10 + $0x4e8] sm:$0xff]
  %v3398 = vld [vmem:[%s10 + $0x4f0] sm:$0xff]
  %v3399 = vld [vmem:[%s10 + $0x4f8] sm:$0xff]
  %v3400 = vld [vmem:[%s10 + $0x500] sm:$0xff]
  %v3401 = vld [vmem:[%s10 + $0x508] sm:$0xff]
  %v3402 = vld [vmem:[%s10 + $0x510] sm:$0xff]
  %v3403 = vld [vmem:[%s10 + $0x518] sm:$0xff]
  %v3404 = vld [vmem:[%s10 + $0x520] sm:$0xff]
  %v3405 = vld [vmem:[%s10 + $0x528] sm:$0xff]
  %v3406 = vld [vmem:[%s10 + $0x530] sm:$0xff]
  %v3407 = vld [vmem:[%s10 + $0x538] sm:$0xff]
  %v3408 = vld [vmem:[%s10 + $0x540] sm:$0xff]
  %v3409 = vld [vmem:[%s10 + $0x548] sm:$0xff]
  %v3410 = vld [vmem:[%s10 + $0x550] sm:$0xff]
  %v3411 = vld [vmem:[%s10 + $0x558] sm:$0xff]
  %v3412 = vld [vmem:[%s10 + $0x560] sm:$0xff]
  %v3413 = vld [vmem:[%s10 + $0x568] sm:$0xff]
  %v3414 = vld [vmem:[%s10 + $0x570] sm:$0xff]
  %v3415 = vld [vmem:[%s10 + $0x578] sm:$0xff]
  %v3416 = vld [vmem:[%s10 + $0x580] sm:$0xff]
  %v3417 = vld [vmem:[%s10 + $0x588] sm:$0xff]
  %v3418 = vld [vmem:[%s10 + $0x590] sm:$0xff]
  %v3419 = vld [vmem:[%s10 + $0x598] sm:$0xff]
  %v3420 = vld [vmem:[%s10 + $0x5a0] sm:$0xff]
  %v3421 = vld [vmem:[%s10 + $0x5a8] sm:$0xff]
  %v3422 = vld [vmem:[%s10 + $0x5b0] sm:$0xff]
  %v3423 = vld [vmem:[%s10 + $0x5b8] sm:$0xff]
  %v3424 = vld [vmem:[%s10 + $0x5c0] sm:$0xff]
  %v3425 = vld [vmem:[%s10 + $0x5c8] sm:$0xff]
  %v3426 = vld [vmem:[%s10 + $0x5d0] sm:$0xff]
  %v3427 = vld [vmem:[%s10 + $0x5d8] sm:$0xff]
  %v3428 = vld [vmem:[%s10 + $0x5e0] sm:$0xff]
  %v3429 = vld [vmem:[%s10 + $0x5e8] sm:$0xff]
  %v3430 = vld [vmem:[%s10 + $0x5f0] sm:$0xff]
  %v3431 = vld [vmem:[%s10 + $0x5f8] sm:$0xff]
  %v3432 = vld [vmem:[%s10 + $0x600] sm:$0xff]
  %v3433 = vld [vmem:[%s10 + $0x608] sm:$0xff]
  %v3434 = vld [vmem:[%s10 + $0x610] sm:$0xff]
  %v3435 = vld [vmem:[%s10 + $0x618] sm:$0xff]
  %v3436 = vld [vmem:[%s10 + $0x620] sm:$0xff]
  %v3437 = vld [vmem:[%s10 + $0x628] sm:$0xff]
  %v3438 = vld [vmem:[%s10 + $0x630] sm:$0xff]
  %v3439 = vld [vmem:[%s10 + $0x638] sm:$0xff]
  %v3440 = vld [vmem:[%s10 + $0x640] sm:$0xff]
  %v3441 = vld [vmem:[%s10 + $0x648] sm:$0xff]
  %v3442 = vld [vmem:[%s10 + $0x650] sm:$0xff]
  %v3443 = vld [vmem:[%s10 + $0x658] sm:$0xff]
  %v3444 = vld [vmem:[%s10 + $0x660] sm:$0xff]
  %v3445 = vld [vmem:[%s10 + $0x668] sm:$0xff]
  %v3446 = vld [vmem:[%s10 + $0x670] sm:$0xff]
  %v3447 = vld [vmem:[%s10 + $0x678] sm:$0xff]
  %v3448 = vld [vmem:[%s10 + $0x680] sm:$0xff]
  %v3449 = vld [vmem:[%s10 + $0x688] sm:$0xff]
  %v3450 = vld [vmem:[%s10 + $0x690] sm:$0xff]
  %v3451 = vld [vmem:[%s10 + $0x698] sm:$0xff]
  %v3452 = vld [vmem:[%s10 + $0x6a0] sm:$0xff]
  %v3453 = vld [vmem:[%s10 + $0x6a8] sm:$0xff]
  %v3454 = vld [vmem:[%s10 + $0x6b0] sm:$0xff]
  %v3455 = vld [vmem:[%s10 + $0x6b8] sm:$0xff]
  %v3456 = vld [vmem:[%s10 + $0x6c0] sm:$0xff]
  %v3457 = vld [vmem:[%s10 + $0x6c8] sm:$0xff]
  %v3458 = vld [vmem:[%s10 + $0x6d0] sm:$0xff]
  %v3459 = vld [vmem:[%s10 + $0x6d8] sm:$0xff]
  %v3460 = vld [vmem:[%s10 + $0x6e0] sm:$0xff]
  %v3461 = vld [vmem:[%s10 + $0x6e8] sm:$0xff]
  %v3462 = vld [vmem:[%s10 + $0x6f0] sm:$0xff]
  %v3463 = vld [vmem:[%s10 + $0x6f8] sm:$0xff]
  %v3464 = vld [vmem:[%s10 + $0x700] sm:$0xff]
  %v3465 = vld [vmem:[%s10 + $0x708] sm:$0xff]
  %v3466 = vld [vmem:[%s10 + $0x710] sm:$0xff]
  %v3467 = vld [vmem:[%s10 + $0x718] sm:$0xff]
  %v3468 = vld [vmem:[%s10 + $0x720] sm:$0xff]
  %v3469 = vld [vmem:[%s10 + $0x728] sm:$0xff]
  %v3470 = vld [vmem:[%s10 + $0x730] sm:$0xff]
  %v3471 = vld [vmem:[%s10 + $0x738] sm:$0xff]
  %v3472 = vld [vmem:[%s10 + $0x740] sm:$0xff]
  %v3473 = vld [vmem:[%s10 + $0x748] sm:$0xff]
  %v3474 = vld [vmem:[%s10 + $0x750] sm:$0xff]
  %v3475 = vld [vmem:[%s10 + $0x758] sm:$0xff]
  %v3476 = vld [vmem:[%s10 + $0x760] sm:$0xff]
  %v3477 = vld [vmem:[%s10 + $0x768] sm:$0xff]
  %v3478 = vld [vmem:[%s10 + $0x770] sm:$0xff]
  %v3479 = vld [vmem:[%s10 + $0x778] sm:$0xff]
  %v3480 = vld [vmem:[%s10 + $0x780] sm:$0xff]
  %v3481 = vld [vmem:[%s10 + $0x788] sm:$0xff]
  %v3482 = vld [vmem:[%s10 + $0x790] sm:$0xff]
  %v3483 = vld [vmem:[%s10 + $0x798] sm:$0xff]
  %v3484 = vld [vmem:[%s10 + $0x7a0] sm:$0xff]
  %v3485 = vld [vmem:[%s10 + $0x7a8] sm:$0xff]
  %v3486 = vld [vmem:[%s10 + $0x7b0] sm:$0xff]
  %v3487 = vld [vmem:[%s10 + $0x7b8] sm:$0xff]
  %v3488 = vld [vmem:[%s10 + $0x7c0] sm:$0xff]
  %v3489 = vld [vmem:[%s10 + $0x7c8] sm:$0xff]
  %v3490 = vld [vmem:[%s10 + $0x7d0] sm:$0xff]
  %v3491 = vld [vmem:[%s10 + $0x7d8] sm:$0xff]
  %v3492 = vld [vmem:[%s10 + $0x7e0] sm:$0xff]
  %v3493 = vld [vmem:[%s10 + $0x7e8] sm:$0xff]
  %v3494 = vld [vmem:[%s10 + $0x7f0] sm:$0xff]
  %v3495 = vld [vmem:[%s10 + $0x7f8] sm:$0xff]
  %v3496 = vld [vmem:[%s10 + $0x800] sm:$0xff]
  %v3497 = vld [vmem:[%s10 + $0x808] sm:$0xff]
  %v3498 = vld [vmem:[%s10 + $0x810] sm:$0xff]
  %v3499 = vld [vmem:[%s10 + $0x818] sm:$0xff]
  %v3500 = vld [vmem:[%s10 + $0x820] sm:$0xff]
  %v3501 = vld [vmem:[%s10 + $0x828] sm:$0xff]
  %v3502 = vld [vmem:[%s10 + $0x830] sm:$0xff]
  %v3503 = vld [vmem:[%s10 + $0x838] sm:$0xff]
  %v3504 = vld [vmem:[%s10 + $0x840] sm:$0xff]
  %v3505 = vld [vmem:[%s10 + $0x848] sm:$0xff]
  %v3506 = vld [vmem:[%s10 + $0x850] sm:$0xff]
  %v3507 = vld [vmem:[%s10 + $0x858] sm:$0xff]
  %v3508 = vld [vmem:[%s10 + $0x860] sm:$0xff]
  %v3509 = vld [vmem:[%s10 + $0x868] sm:$0xff]
  %v3510 = vld [vmem:[%s10 + $0x870] sm:$0xff]
  %v3511 = vld [vmem:[%s10 + $0x878] sm:$0xff]
  %v3512 = vld [vmem:[%s10 + $0x880] sm:$0xff]
  %v3513 = vld [vmem:[%s10 + $0x888] sm:$0xff]
  %v3514 = vld [vmem:[%s10 + $0x890] sm:$0xff]
  %v3515 = vld [vmem:[%s10 + $0x898] sm:$0xff]
  %v3516 = vld [vmem:[%s10 + $0x8a0] sm:$0xff]
  %v3517 = vld [vmem:[%s10 + $0x8a8] sm:$0xff]
  %v3518 = vld [vmem:[%s10 + $0x8b0] sm:$0xff]
  %v3519 = vld [vmem:[%s10 + $0x8b8] sm:$0xff]
  %v3520 = vld [vmem:[%s10 + $0x8c0] sm:$0xff]
  %v3521 = vld [vmem:[%s10 + $0x8c8] sm:$0xff]
  %v3522 = vld [vmem:[%s10 + $0x8d0] sm:$0xff]
  %v3523 = vld [vmem:[%s10 + $0x8d8] sm:$0xff]
  %v3524 = vld [vmem:[%s10 + $0x8e0] sm:$0xff]
  %v3525 = vld [vmem:[%s10 + $0x8e8] sm:$0xff]
  %v3526 = vld [vmem:[%s10 + $0x8f0] sm:$0xff]
  %v3527 = vld [vmem:[%s10 + $0x8f8] sm:$0xff]
  %v3528 = vld [vmem:[%s10 + $0x900] sm:$0xff]
  %v3529 = vld [vmem:[%s10 + $0x908] sm:$0xff]
  %v3530 = vld [vmem:[%s10 + $0x910] sm:$0xff]
  %v3531 = vld [vmem:[%s10 + $0x918] sm:$0xff]
  %v3532 = vld [vmem:[%s10 + $0x920] sm:$0xff]
  %v3533 = vld [vmem:[%s10 + $0x928] sm:$0xff]
  %v3534 = vld [vmem:[%s10 + $0x930] sm:$0xff]
  %v3535 = vld [vmem:[%s10 + $0x938] sm:$0xff]
  %v3536 = vld [vmem:[%s10 + $0x940] sm:$0xff]
  %v3537 = vld [vmem:[%s10 + $0x948] sm:$0xff]
  %v3538 = vld [vmem:[%s10 + $0x950] sm:$0xff]
  %v3539 = vld [vmem:[%s10 + $0x958] sm:$0xff]
  %v3540 = vld [vmem:[%s10 + $0x960] sm:$0xff]
  %v3541 = vld [vmem:[%s10 + $0x968] sm:$0xff]
  %v3542 = vld [vmem:[%s10 + $0x970] sm:$0xff]
  %v3543 = vld [vmem:[%s10 + $0x978] sm:$0xff]
  %v3544 = vld [vmem:[%s10 + $0x980] sm:$0xff]
  %v3545 = vld [vmem:[%s10 + $0x988] sm:$0xff]
  %v3546 = vld [vmem:[%s10 + $0x990] sm:$0xff]
  %v3547 = vld [vmem:[%s10 + $0x998] sm:$0xff]
  %v3548 = vld [vmem:[%s10 + $0x9a0] sm:$0xff]
  %v3549 = vld [vmem:[%s10 + $0x9a8] sm:$0xff]
  %v3550 = vld [vmem:[%s10 + $0x9b0] sm:$0xff]
  %v3551 = vld [vmem:[%s10 + $0x9b8] sm:$0xff]
  %v3552 = vld [vmem:[%s10 + $0x9c0] sm:$0xff]
  %v3553 = vld [vmem:[%s10 + $0x9c8] sm:$0xff]
  %v3554 = vld [vmem:[%s10 + $0x9d0] sm:$0xff]
  %v3555 = vld [vmem:[%s10 + $0x9d8] sm:$0xff]
  %v3556 = vld [vmem:[%s10 + $0x9e0] sm:$0xff]
  %v3557 = vld [vmem:[%s10 + $0x9e8] sm:$0xff]
  %v3558 = vld [vmem:[%s10 + $0x9f0] sm:$0xff]
  %v3559 = vld [vmem:[%s10 + $0x9f8] sm:$0xff]
  %v3560 = vld [vmem:[%s11] sm:$0xff]
  %v3561 = vld [vmem:[%s11 + $0x8] sm:$0xff]
  %v3562 = vld [vmem:[%s11 + $0x10] sm:$0xff]
  %v3563 = vld [vmem:[%s11 + $0x18] sm:$0xff]
  %v3564 = vld [vmem:[%s11 + $0x20] sm:$0xff]
  %v3565 = vld [vmem:[%s11 + $0x28] sm:$0xff]
  %v3566 = vld [vmem:[%s11 + $0x30] sm:$0xff]
  %v3567 = vld [vmem:[%s11 + $0x38] sm:$0xff]
  %v3568 = vld [vmem:[%s11 + $0x40] sm:$0xff]
  %v3569 = vld [vmem:[%s11 + $0x48] sm:$0xff]
  %v3570 = vld [vmem:[%s11 + $0x50] sm:$0xff]
  %v3571 = vld [vmem:[%s11 + $0x58] sm:$0xff]
  %v3572 = vld [vmem:[%s11 + $0x60] sm:$0xff]
  %v3573 = vld [vmem:[%s11 + $0x68] sm:$0xff]
  %v3574 = vld [vmem:[%s11 + $0x70] sm:$0xff]
  %v3575 = vld [vmem:[%s11 + $0x78] sm:$0xff]
  %v3576 = vld [vmem:[%s11 + $0x80] sm:$0xff]
  %v3577 = vld [vmem:[%s11 + $0x88] sm:$0xff]
  %v3578 = vld [vmem:[%s11 + $0x90] sm:$0xff]
  %v3579 = vld [vmem:[%s11 + $0x98] sm:$0xff]
  %v3580 = vld [vmem:[%s11 + $0xa0] sm:$0xff]
  %v3581 = vld [vmem:[%s11 + $0xa8] sm:$0xff]
  %v3582 = vld [vmem:[%s11 + $0xb0] sm:$0xff]
  %v3583 = vld [vmem:[%s11 + $0xb8] sm:$0xff]
  %v3584 = vld [vmem:[%s11 + $0xc0] sm:$0xff]
  %v3585 = vld [vmem:[%s11 + $0xc8] sm:$0xff]
  %v3586 = vld [vmem:[%s11 + $0xd0] sm:$0xff]
  %v3587 = vld [vmem:[%s11 + $0xd8] sm:$0xff]
  %v3588 = vld [vmem:[%s11 + $0xe0] sm:$0xff]
  %v3589 = vld [vmem:[%s11 + $0xe8] sm:$0xff]
  %v3590 = vld [vmem:[%s11 + $0xf0] sm:$0xff]
  %v3591 = vld [vmem:[%s11 + $0xf8] sm:$0xff]
  %v3592 = vld [vmem:[%s11 + $0x100] sm:$0xff]
  %v3593 = vld [vmem:[%s11 + $0x108] sm:$0xff]
  %v3594 = vld [vmem:[%s11 + $0x110] sm:$0xff]
  %v3595 = vld [vmem:[%s11 + $0x118] sm:$0xff]
  %v3596 = vld [vmem:[%s11 + $0x120] sm:$0xff]
  %v3597 = vld [vmem:[%s11 + $0x128] sm:$0xff]
  %v3598 = vld [vmem:[%s11 + $0x130] sm:$0xff]
  %v3599 = vld [vmem:[%s11 + $0x138] sm:$0xff]
  %v3600 = vld [vmem:[%s11 + $0x140] sm:$0xff]
  %v3601 = vld [vmem:[%s11 + $0x148] sm:$0xff]
  %v3602 = vld [vmem:[%s11 + $0x150] sm:$0xff]
  %v3603 = vld [vmem:[%s11 + $0x158] sm:$0xff]
  %v3604 = vld [vmem:[%s11 + $0x160] sm:$0xff]
  %v3605 = vld [vmem:[%s11 + $0x168] sm:$0xff]
  %v3606 = vld [vmem:[%s11 + $0x170] sm:$0xff]
  %v3607 = vld [vmem:[%s11 + $0x178] sm:$0xff]
  %v3608 = vld [vmem:[%s11 + $0x180] sm:$0xff]
  %v3609 = vld [vmem:[%s11 + $0x188] sm:$0xff]
  %v3610 = vld [vmem:[%s11 + $0x190] sm:$0xff]
  %v3611 = vld [vmem:[%s11 + $0x198] sm:$0xff]
  %v3612 = vld [vmem:[%s11 + $0x1a0] sm:$0xff]
  %v3613 = vld [vmem:[%s11 + $0x1a8] sm:$0xff]
  %v3614 = vld [vmem:[%s11 + $0x1b0] sm:$0xff]
  %v3615 = vld [vmem:[%s11 + $0x1b8] sm:$0xff]
  %v3616 = vld [vmem:[%s11 + $0x1c0] sm:$0xff]
  %v3617 = vld [vmem:[%s11 + $0x1c8] sm:$0xff]
  %v3618 = vld [vmem:[%s11 + $0x1d0] sm:$0xff]
  %v3619 = vld [vmem:[%s11 + $0x1d8] sm:$0xff]
  %v3620 = vld [vmem:[%s11 + $0x1e0] sm:$0xff]
  %v3621 = vld [vmem:[%s11 + $0x1e8] sm:$0xff]
  %v3622 = vld [vmem:[%s11 + $0x1f0] sm:$0xff]
  %v3623 = vld [vmem:[%s11 + $0x1f8] sm:$0xff]
  %v3624 = vld [vmem:[%s11 + $0x200] sm:$0xff]
  %v3625 = vld [vmem:[%s11 + $0x208] sm:$0xff]
  %v3626 = vld [vmem:[%s11 + $0x210] sm:$0xff]
  %v3627 = vld [vmem:[%s11 + $0x218] sm:$0xff]
  %v3628 = vld [vmem:[%s11 + $0x220] sm:$0xff]
  %v3629 = vld [vmem:[%s11 + $0x228] sm:$0xff]
  %v3630 = vld [vmem:[%s11 + $0x230] sm:$0xff]
  %v3631 = vld [vmem:[%s11 + $0x238] sm:$0xff]
  %v3632 = vld [vmem:[%s11 + $0x240] sm:$0xff]
  %v3633 = vld [vmem:[%s11 + $0x248] sm:$0xff]
  %v3634 = vld [vmem:[%s11 + $0x250] sm:$0xff]
  %v3635 = vld [vmem:[%s11 + $0x258] sm:$0xff]
  %v3636 = vld [vmem:[%s11 + $0x260] sm:$0xff]
  %v3637 = vld [vmem:[%s11 + $0x268] sm:$0xff]
  %v3638 = vld [vmem:[%s11 + $0x270] sm:$0xff]
  %v3639 = vld [vmem:[%s11 + $0x278] sm:$0xff]
  %v3640 = vld [vmem:[%s11 + $0x280] sm:$0xff]
  %v3641 = vld [vmem:[%s11 + $0x288] sm:$0xff]
  %v3642 = vld [vmem:[%s11 + $0x290] sm:$0xff]
  %v3643 = vld [vmem:[%s11 + $0x298] sm:$0xff]
  %v3644 = vld [vmem:[%s11 + $0x2a0] sm:$0xff]
  %v3645 = vld [vmem:[%s11 + $0x2a8] sm:$0xff]
  %v3646 = vld [vmem:[%s11 + $0x2b0] sm:$0xff]
  %v3647 = vld [vmem:[%s11 + $0x2b8] sm:$0xff]
  %v3648 = vld [vmem:[%s11 + $0x2c0] sm:$0xff]
  %v3649 = vld [vmem:[%s11 + $0x2c8] sm:$0xff]
  %v3650 = vld [vmem:[%s11 + $0x2d0] sm:$0xff]
  %v3651 = vld [vmem:[%s11 + $0x2d8] sm:$0xff]
  %v3652 = vld [vmem:[%s11 + $0x2e0] sm:$0xff]
  %v3653 = vld [vmem:[%s11 + $0x2e8] sm:$0xff]
  %v3654 = vld [vmem:[%s11 + $0x2f0] sm:$0xff]
  %v3655 = vld [vmem:[%s11 + $0x2f8] sm:$0xff]
  %v3656 = vld [vmem:[%s11 + $0x300] sm:$0xff]
  %v3657 = vld [vmem:[%s11 + $0x308] sm:$0xff]
  %v3658 = vld [vmem:[%s11 + $0x310] sm:$0xff]
  %v3659 = vld [vmem:[%s11 + $0x318] sm:$0xff]
  %v3660 = vld [vmem:[%s11 + $0x320] sm:$0xff]
  %v3661 = vld [vmem:[%s11 + $0x328] sm:$0xff]
  %v3662 = vld [vmem:[%s11 + $0x330] sm:$0xff]
  %v3663 = vld [vmem:[%s11 + $0x338] sm:$0xff]
  %v3664 = vld [vmem:[%s11 + $0x340] sm:$0xff]
  %v3665 = vld [vmem:[%s11 + $0x348] sm:$0xff]
  %v3666 = vld [vmem:[%s11 + $0x350] sm:$0xff]
  %v3667 = vld [vmem:[%s11 + $0x358] sm:$0xff]
  %v3668 = vld [vmem:[%s11 + $0x360] sm:$0xff]
  %v3669 = vld [vmem:[%s11 + $0x368] sm:$0xff]
  %v3670 = vld [vmem:[%s11 + $0x370] sm:$0xff]
  %v3671 = vld [vmem:[%s11 + $0x378] sm:$0xff]
  %v3672 = vld [vmem:[%s11 + $0x380] sm:$0xff]
  %v3673 = vld [vmem:[%s11 + $0x388] sm:$0xff]
  %v3674 = vld [vmem:[%s11 + $0x390] sm:$0xff]
  %v3675 = vld [vmem:[%s11 + $0x398] sm:$0xff]
  %v3676 = vld [vmem:[%s11 + $0x3a0] sm:$0xff]
  %v3677 = vld [vmem:[%s11 + $0x3a8] sm:$0xff]
  %v3678 = vld [vmem:[%s11 + $0x3b0] sm:$0xff]
  %v3679 = vld [vmem:[%s11 + $0x3b8] sm:$0xff]
  %v3680 = vld [vmem:[%s11 + $0x3c0] sm:$0xff]
  %v3681 = vld [vmem:[%s11 + $0x3c8] sm:$0xff]
  %v3682 = vld [vmem:[%s11 + $0x3d0] sm:$0xff]
  %v3683 = vld [vmem:[%s11 + $0x3d8] sm:$0xff]
  %v3684 = vld [vmem:[%s11 + $0x3e0] sm:$0xff]
  %v3685 = vld [vmem:[%s11 + $0x3e8] sm:$0xff]
  %v3686 = vld [vmem:[%s11 + $0x3f0] sm:$0xff]
  %v3687 = vld [vmem:[%s11 + $0x3f8] sm:$0xff]
  %v3688 = vld [vmem:[%s11 + $0x400] sm:$0xff]
  %v3689 = vld [vmem:[%s11 + $0x408] sm:$0xff]
  %v3690 = vld [vmem:[%s11 + $0x410] sm:$0xff]
  %v3691 = vld [vmem:[%s11 + $0x418] sm:$0xff]
  %v3692 = vld [vmem:[%s11 + $0x420] sm:$0xff]
  %v3693 = vld [vmem:[%s11 + $0x428] sm:$0xff]
  %v3694 = vld [vmem:[%s11 + $0x430] sm:$0xff]
  %v3695 = vld [vmem:[%s11 + $0x438] sm:$0xff]
  %v3696 = vld [vmem:[%s11 + $0x440] sm:$0xff]
  %v3697 = vld [vmem:[%s11 + $0x448] sm:$0xff]
  %v3698 = vld [vmem:[%s11 + $0x450] sm:$0xff]
  %v3699 = vld [vmem:[%s11 + $0x458] sm:$0xff]
  %v3700 = vld [vmem:[%s11 + $0x460] sm:$0xff]
  %v3701 = vld [vmem:[%s11 + $0x468] sm:$0xff]
  %v3702 = vld [vmem:[%s11 + $0x470] sm:$0xff]
  %v3703 = vld [vmem:[%s11 + $0x478] sm:$0xff]
  %v3704 = vld [vmem:[%s11 + $0x480] sm:$0xff]
  %v3705 = vld [vmem:[%s11 + $0x488] sm:$0xff]
  %v3706 = vld [vmem:[%s11 + $0x490] sm:$0xff]
  %v3707 = vld [vmem:[%s11 + $0x498] sm:$0xff]
  %v3708 = vld [vmem:[%s11 + $0x4a0] sm:$0xff]
  %v3709 = vld [vmem:[%s11 + $0x4a8] sm:$0xff]
  %v3710 = vld [vmem:[%s11 + $0x4b0] sm:$0xff]
  %v3711 = vld [vmem:[%s11 + $0x4b8] sm:$0xff]
  %v3712 = vld [vmem:[%s11 + $0x4c0] sm:$0xff]
  %v3713 = vld [vmem:[%s11 + $0x4c8] sm:$0xff]
  %v3714 = vld [vmem:[%s11 + $0x4d0] sm:$0xff]
  %v3715 = vld [vmem:[%s11 + $0x4d8] sm:$0xff]
  %v3716 = vld [vmem:[%s11 + $0x4e0] sm:$0xff]
  %v3717 = vld [vmem:[%s11 + $0x4e8] sm:$0xff]
  %v3718 = vld [vmem:[%s11 + $0x4f0] sm:$0xff]
  %v3719 = vld [vmem:[%s11 + $0x4f8] sm:$0xff]
  %v3720 = vld [vmem:[%s11 + $0x500] sm:$0xff]
  %v3721 = vld [vmem:[%s11 + $0x508] sm:$0xff]
  %v3722 = vld [vmem:[%s11 + $0x510] sm:$0xff]
  %v3723 = vld [vmem:[%s11 + $0x518] sm:$0xff]
  %v3724 = vld [vmem:[%s11 + $0x520] sm:$0xff]
  %v3725 = vld [vmem:[%s11 + $0x528] sm:$0xff]
  %v3726 = vld [vmem:[%s11 + $0x530] sm:$0xff]
  %v3727 = vld [vmem:[%s11 + $0x538] sm:$0xff]
  %v3728 = vld [vmem:[%s11 + $0x540] sm:$0xff]
  %v3729 = vld [vmem:[%s11 + $0x548] sm:$0xff]
  %v3730 = vld [vmem:[%s11 + $0x550] sm:$0xff]
  %v3731 = vld [vmem:[%s11 + $0x558] sm:$0xff]
  %v3732 = vld [vmem:[%s11 + $0x560] sm:$0xff]
  %v3733 = vld [vmem:[%s11 + $0x568] sm:$0xff]
  %v3734 = vld [vmem:[%s11 + $0x570] sm:$0xff]
  %v3735 = vld [vmem:[%s11 + $0x578] sm:$0xff]
  %v3736 = vld [vmem:[%s11 + $0x580] sm:$0xff]
  %v3737 = vld [vmem:[%s11 + $0x588] sm:$0xff]
  %v3738 = vld [vmem:[%s11 + $0x590] sm:$0xff]
  %v3739 = vld [vmem:[%s11 + $0x598] sm:$0xff]
  %v3740 = vld [vmem:[%s11 + $0x5a0] sm:$0xff]
  %v3741 = vld [vmem:[%s11 + $0x5a8] sm:$0xff]
  %v3742 = vld [vmem:[%s11 + $0x5b0] sm:$0xff]
  %v3743 = vld [vmem:[%s11 + $0x5b8] sm:$0xff]
  %v3744 = vld [vmem:[%s11 + $0x5c0] sm:$0xff]
  %v3745 = vld [vmem:[%s11 + $0x5c8] sm:$0xff]
  %v3746 = vld [vmem:[%s11 + $0x5d0] sm:$0xff]
  %v3747 = vld [vmem:[%s11 + $0x5d8] sm:$0xff]
  %v3748 = vld [vmem:[%s11 + $0x5e0] sm:$0xff]
  %v3749 = vld [vmem:[%s11 + $0x5e8] sm:$0xff]
  %v3750 = vld [vmem:[%s11 + $0x5f0] sm:$0xff]
  %v3751 = vld [vmem:[%s11 + $0x5f8] sm:$0xff]
  %v3752 = vld [vmem:[%s11 + $0x600] sm:$0xff]
  %v3753 = vld [vmem:[%s11 + $0x608] sm:$0xff]
  %v3754 = vld [vmem:[%s11 + $0x610] sm:$0xff]
  %v3755 = vld [vmem:[%s11 + $0x618] sm:$0xff]
  %v3756 = vld [vmem:[%s11 + $0x620] sm:$0xff]
  %v3757 = vld [vmem:[%s11 + $0x628] sm:$0xff]
  %v3758 = vld [vmem:[%s11 + $0x630] sm:$0xff]
  %v3759 = vld [vmem:[%s11 + $0x638] sm:$0xff]
  %v3760 = vld [vmem:[%s11 + $0x640] sm:$0xff]
  %v3761 = vld [vmem:[%s11 + $0x648] sm:$0xff]
  %v3762 = vld [vmem:[%s11 + $0x650] sm:$0xff]
  %v3763 = vld [vmem:[%s11 + $0x658] sm:$0xff]
  %v3764 = vld [vmem:[%s11 + $0x660] sm:$0xff]
  %v3765 = vld [vmem:[%s11 + $0x668] sm:$0xff]
  %v3766 = vld [vmem:[%s11 + $0x670] sm:$0xff]
  %v3767 = vld [vmem:[%s11 + $0x678] sm:$0xff]
  %v3768 = vld [vmem:[%s11 + $0x680] sm:$0xff]
  %v3769 = vld [vmem:[%s11 + $0x688] sm:$0xff]
  %v3770 = vld [vmem:[%s11 + $0x690] sm:$0xff]
  %v3771 = vld [vmem:[%s11 + $0x698] sm:$0xff]
  %v3772 = vld [vmem:[%s11 + $0x6a0] sm:$0xff]
  %v3773 = vld [vmem:[%s11 + $0x6a8] sm:$0xff]
  %v3774 = vld [vmem:[%s11 + $0x6b0] sm:$0xff]
  %v3775 = vld [vmem:[%s11 + $0x6b8] sm:$0xff]
  %v3776 = vld [vmem:[%s11 + $0x6c0] sm:$0xff]
  %v3777 = vld [vmem:[%s11 + $0x6c8] sm:$0xff]
  %v3778 = vld [vmem:[%s11 + $0x6d0] sm:$0xff]
  %v3779 = vld [vmem:[%s11 + $0x6d8] sm:$0xff]
  %v3780 = vld [vmem:[%s11 + $0x6e0] sm:$0xff]
  %v3781 = vld [vmem:[%s11 + $0x6e8] sm:$0xff]
  %v3782 = vld [vmem:[%s11 + $0x6f0] sm:$0xff]
  %v3783 = vld [vmem:[%s11 + $0x6f8] sm:$0xff]
  %v3784 = vld [vmem:[%s11 + $0x700] sm:$0xff]
  %v3785 = vld [vmem:[%s11 + $0x708] sm:$0xff]
  %v3786 = vld [vmem:[%s11 + $0x710] sm:$0xff]
  %v3787 = vld [vmem:[%s11 + $0x718] sm:$0xff]
  %v3788 = vld [vmem:[%s11 + $0x720] sm:$0xff]
  %v3789 = vld [vmem:[%s11 + $0x728] sm:$0xff]
  %v3790 = vld [vmem:[%s11 + $0x730] sm:$0xff]
  %v3791 = vld [vmem:[%s11 + $0x738] sm:$0xff]
  %v3792 = vld [vmem:[%s11 + $0x740] sm:$0xff]
  %v3793 = vld [vmem:[%s11 + $0x748] sm:$0xff]
  %v3794 = vld [vmem:[%s11 + $0x750] sm:$0xff]
  %v3795 = vld [vmem:[%s11 + $0x758] sm:$0xff]
  %v3796 = vld [vmem:[%s11 + $0x760] sm:$0xff]
  %v3797 = vld [vmem:[%s11 + $0x768] sm:$0xff]
  %v3798 = vld [vmem:[%s11 + $0x770] sm:$0xff]
  %v3799 = vld [vmem:[%s11 + $0x778] sm:$0xff]
  %v3800 = vld [vmem:[%s11 + $0x780] sm:$0xff]
  %v3801 = vld [vmem:[%s11 + $0x788] sm:$0xff]
  %v3802 = vld [vmem:[%s11 + $0x790] sm:$0xff]
  %v3803 = vld [vmem:[%s11 + $0x798] sm:$0xff]
  %v3804 = vld [vmem:[%s11 + $0x7a0] sm:$0xff]
  %v3805 = vld [vmem:[%s11 + $0x7a8] sm:$0xff]
  %v3806 = vld [vmem:[%s11 + $0x7b0] sm:$0xff]
  %v3807 = vld [vmem:[%s11 + $0x7b8] sm:$0xff]
  %v3808 = vld [vmem:[%s11 + $0x7c0] sm:$0xff]
  %v3809 = vld [vmem:[%s11 + $0x7c8] sm:$0xff]
  %v3810 = vld [vmem:[%s11 + $0x7d0] sm:$0xff]
  %v3811 = vld [vmem:[%s11 + $0x7d8] sm:$0xff]
  %v3812 = vld [vmem:[%s11 + $0x7e0] sm:$0xff]
  %v3813 = vld [vmem:[%s11 + $0x7e8] sm:$0xff]
  %v3814 = vld [vmem:[%s11 + $0x7f0] sm:$0xff]
  %v3815 = vld [vmem:[%s11 + $0x7f8] sm:$0xff]
  %v3816 = vld [vmem:[%s11 + $0x800] sm:$0xff]
  %v3817 = vld [vmem:[%s11 + $0x808] sm:$0xff]
  %v3818 = vld [vmem:[%s11 + $0x810] sm:$0xff]
  %v3819 = vld [vmem:[%s11 + $0x818] sm:$0xff]
  %v3820 = vld [vmem:[%s11 + $0x820] sm:$0xff]
  %v3821 = vld [vmem:[%s11 + $0x828] sm:$0xff]
  %v3822 = vld [vmem:[%s11 + $0x830] sm:$0xff]
  %v3823 = vld [vmem:[%s11 + $0x838] sm:$0xff]
  %v3824 = vld [vmem:[%s11 + $0x840] sm:$0xff]
  %v3825 = vld [vmem:[%s11 + $0x848] sm:$0xff]
  %v3826 = vld [vmem:[%s11 + $0x850] sm:$0xff]
  %v3827 = vld [vmem:[%s11 + $0x858] sm:$0xff]
  %v3828 = vld [vmem:[%s11 + $0x860] sm:$0xff]
  %v3829 = vld [vmem:[%s11 + $0x868] sm:$0xff]
  %v3830 = vld [vmem:[%s11 + $0x870] sm:$0xff]
  %v3831 = vld [vmem:[%s11 + $0x878] sm:$0xff]
  %v3832 = vld [vmem:[%s11 + $0x880] sm:$0xff]
  %v3833 = vld [vmem:[%s11 + $0x888] sm:$0xff]
  %v3834 = vld [vmem:[%s11 + $0x890] sm:$0xff]
  %v3835 = vld [vmem:[%s11 + $0x898] sm:$0xff]
  %v3836 = vld [vmem:[%s11 + $0x8a0] sm:$0xff]
  %v3837 = vld [vmem:[%s11 + $0x8a8] sm:$0xff]
  %v3838 = vld [vmem:[%s11 + $0x8b0] sm:$0xff]
  %v3839 = vld [vmem:[%s11 + $0x8b8] sm:$0xff]
  %v3840 = vld [vmem:[%s11 + $0x8c0] sm:$0xff]
  %v3841 = vld [vmem:[%s11 + $0x8c8] sm:$0xff]
  %v3842 = vld [vmem:[%s11 + $0x8d0] sm:$0xff]
  %v3843 = vld [vmem:[%s11 + $0x8d8] sm:$0xff]
  %v3844 = vld [vmem:[%s11 + $0x8e0] sm:$0xff]
  %v3845 = vld [vmem:[%s11 + $0x8e8] sm:$0xff]
  %v3846 = vld [vmem:[%s11 + $0x8f0] sm:$0xff]
  %v3847 = vld [vmem:[%s11 + $0x8f8] sm:$0xff]
  %v3848 = vld [vmem:[%s11 + $0x900] sm:$0xff]
  %v3849 = vld [vmem:[%s11 + $0x908] sm:$0xff]
  %v3850 = vld [vmem:[%s11 + $0x910] sm:$0xff]
  %v3851 = vld [vmem:[%s11 + $0x918] sm:$0xff]
  %v3852 = vld [vmem:[%s11 + $0x920] sm:$0xff]
  %v3853 = vld [vmem:[%s11 + $0x928] sm:$0xff]
  %v3854 = vld [vmem:[%s11 + $0x930] sm:$0xff]
  %v3855 = vld [vmem:[%s11 + $0x938] sm:$0xff]
  %v3856 = vld [vmem:[%s11 + $0x940] sm:$0xff]
  %v3857 = vld [vmem:[%s11 + $0x948] sm:$0xff]
  %v3858 = vld [vmem:[%s11 + $0x950] sm:$0xff]
  %v3859 = vld [vmem:[%s11 + $0x958] sm:$0xff]
  %v3860 = vld [vmem:[%s11 + $0x960] sm:$0xff]
  %v3861 = vld [vmem:[%s11 + $0x968] sm:$0xff]
  %v3862 = vld [vmem:[%s11 + $0x970] sm:$0xff]
  %v3863 = vld [vmem:[%s11 + $0x978] sm:$0xff]
  %v3864 = vld [vmem:[%s11 + $0x980] sm:$0xff]
  %v3865 = vld [vmem:[%s11 + $0x988] sm:$0xff]
  %v3866 = vld [vmem:[%s11 + $0x990] sm:$0xff]
  %v3867 = vld [vmem:[%s11 + $0x998] sm:$0xff]
  %v3868 = vld [vmem:[%s11 + $0x9a0] sm:$0xff]
  %v3869 = vld [vmem:[%s11 + $0x9a8] sm:$0xff]
  %v3870 = vld [vmem:[%s11 + $0x9b0] sm:$0xff]
  %v3871 = vld [vmem:[%s11 + $0x9b8] sm:$0xff]
  %v3872 = vld [vmem:[%s11 + $0x9c0] sm:$0xff]
  %v3873 = vld [vmem:[%s11 + $0x9c8] sm:$0xff]
  %v3874 = vld [vmem:[%s11 + $0x9d0] sm:$0xff]
  %v3875 = vld [vmem:[%s11 + $0x9d8] sm:$0xff]
  %v3876 = vld [vmem:[%s11 + $0x9e0] sm:$0xff]
  %v3877 = vld [vmem:[%s11 + $0x9e8] sm:$0xff]
  %v3878 = vld [vmem:[%s11 + $0x9f0] sm:$0xff]
  %v3879 = vld [vmem:[%s11 + $0x9f8] sm:$0xff]
  %v3883 = vcombine.high %v3237, %v3237
  %v3885 = vunpack.c.l.s4 1983009808
  %v3886 = vunpack.c.0.s8 %v3885
  %v3887 = vlaneseq
  %v3888 = vshrl.u32 %v3887, 7
  %v3889 = vsub.s32 %v3886, %v3888
  %v3890 = vrot.slane %v3237, %v3889
  %v3892 = vunpack.c.l.s4 1983009808
  %v3893 = vunpack.c.0.s8 %v3892
  %v3894 = vlaneseq
  %v3895 = vshrl.u32 %v3894, 7
  %v3896 = vsub.s32 %v3893, %v3895
  %v3897 = vrot.slane %v3883, %v3896
  %v3898 = vcombine.high %v3890, %v3890
  %v3899 = vcombine.high %v3897, %v3897
  %v3900 = vcombine.high %v3238, %v3238
  %v3902 = vunpack.c.l.s4 1983009808
  %v3903 = vunpack.c.0.s8 %v3902
  %v3904 = vlaneseq
  %v3905 = vshrl.u32 %v3904, 7
  %v3906 = vsub.s32 %v3903, %v3905
  %v3907 = vrot.slane %v3238, %v3906
  %v3909 = vunpack.c.l.s4 1983009808
  %v3910 = vunpack.c.0.s8 %v3909
  %v3911 = vlaneseq
  %v3912 = vshrl.u32 %v3911, 7
  %v3913 = vsub.s32 %v3910, %v3912
  %v3914 = vrot.slane %v3900, %v3913
  %v3915 = vcombine.high %v3907, %v3907
  %v3916 = vcombine.high %v3914, %v3914
  %v3918 = vunpack.c.l.s4 1983009808
  %v3919 = vunpack.c.0.s8 %v3918
  %v3920 = vlaneseq
  %v3921 = vshrl.u32 %v3920, 7
  %v3922 = vsub.s32 %v3919, %v3921
  %v3923 = vrot.slane %v3239, %v3922
  %v3924 = vcombine.high %v3923, %v3923
  %3935 = vmatprep.subr.mxu0 %v3561
  %3936 = vmatpush1.msra.mxu0 %v3560
  %3937 = vmatprep.subr.mxu0 %v3563
  %3938 = vmatpush1.msra.mxu0 %v3562
  %3939 = vmatprep.subr.mxu0 %v3565
  %3940 = vmatpush1.msra.mxu0 %v3564
  %3941 = vmatprep.subr.mxu0 %v3567
  %3942 = vmatpush1.msra.mxu0 %v3566
  %3943 = vmatprep.subr.mxu0 %v3569
  %3944 = vmatpush1.msra.mxu0 %v3568
  %3945 = vmatprep.subr.mxu0 %v3571
  %3946 = vmatpush1.msra.mxu0 %v3570
  %3947 = vmatprep.subr.mxu0 %v3573
  %3948 = vmatpush1.msra.mxu0 %v3572
  %3949 = vmatprep.subr.mxu0 %v3575
  %3950 = vmatpush1.msra.mxu0 %v3574
  %3951 = vmatprep.subr.mxu0 %v3577
  %3952 = vmatpush1.msra.mxu0 %v3576
  %3953 = vmatprep.subr.mxu0 %v3579
  %3954 = vmatpush1.msra.mxu0 %v3578
  %3955 = vmatprep.subr.mxu0 %v3581
  %3956 = vmatpush1.msra.mxu0 %v3580
  %3957 = vmatprep.subr.mxu0 %v3583
  %3958 = vmatpush1.msra.mxu0 %v3582
  %3959 = vmatprep.subr.mxu0 %v3585
  %3960 = vmatpush1.msra.mxu0 %v3584
  %3961 = vmatprep.subr.mxu0 %v3587
  %3962 = vmatpush1.msra.mxu0 %v3586
  %3963 = vmatprep.subr.mxu0 %v3589
  %3964 = vmatpush1.msra.mxu0 %v3588
  %3965 = vmatprep.subr.mxu0 %v3591
  %3966 = vmatpush1.msra.mxu0 %v3590
  %3967 = vmatprep.subr.mxu0 %v3593
  %3968 = vmatpush1.msra.mxu0 %v3592
  %3969 = vmatprep.subr.mxu0 %v3595
  %3970 = vmatpush1.msra.mxu0 %v3594
  %3971 = vmatprep.subr.mxu0 %v3597
  %3972 = vmatpush1.msra.mxu0 %v3596
  %3973 = vmatprep.subr.mxu0 %v3599
  %3974 = vmatpush1.msra.mxu0 %v3598
  %3975 = vmatprep.subr.mxu0 %v3601
  %3976 = vmatpush1.msra.mxu0 %v3600
  %3977 = vmatprep.subr.mxu0 %v3603
  %3978 = vmatpush1.msra.mxu0 %v3602
  %3979 = vmatprep.subr.mxu0 %v3605
  %3980 = vmatpush1.msra.mxu0 %v3604
  %3981 = vmatprep.subr.mxu0 %v3607
  %3982 = vmatpush1.msra.mxu0 %v3606
  %3983 = vmatprep.subr.mxu0 %v3609
  %3984 = vmatpush1.msra.mxu0 %v3608
  %3985 = vmatprep.subr.mxu0 %v3611
  %3986 = vmatpush1.msra.mxu0 %v3610
  %3987 = vmatprep.subr.mxu0 %v3613
  %3988 = vmatpush1.msra.mxu0 %v3612
  %3989 = vmatprep.subr.mxu0 %v3615
  %3990 = vmatpush1.msra.mxu0 %v3614
  %3991 = vmatprep.subr.mxu0 %v3617
  %3992 = vmatpush1.msra.mxu0 %v3616
  %3993 = vmatprep.subr.mxu0 %v3619
  %3994 = vmatpush1.msra.mxu0 %v3618
  %3995 = vmatprep.subr.mxu0 %v3621
  %3996 = vmatpush1.msra.mxu0 %v3620
  %3997 = vmatprep.subr.mxu0 %v3623
  %3998 = vmatpush1.msra.mxu0 %v3622
  %3999 = vmatprep.mubr.f32.mxu0 %v3898
  %4000 = vmatmul.mubr.f32.gmra.mrb[0].mxu0 %v3890
  %v4001 = vpop.f32.mrb[0].mxu0
  %v4002 = vadd.f32 0.0, %v4001
  %v4003 = vpop.f32.mrb[0].mxu0
  %v4004 = vadd.f32 0.0, %v4003
  %4005 = vdwg.mxu0
  %4006 = vmatprep.subr.mxu0 %v3625
  %4007 = vmatpush1.msra.mxu0 %v3624
  %4008 = vmatprep.subr.mxu0 %v3627
  %4009 = vmatpush1.msra.mxu0 %v3626
  %4010 = vmatprep.subr.mxu0 %v3629
  %4011 = vmatpush1.msra.mxu0 %v3628
  %4012 = vmatprep.subr.mxu0 %v3631
  %4013 = vmatpush1.msra.mxu0 %v3630
  %4014 = vmatprep.subr.mxu0 %v3633
  %4015 = vmatpush1.msra.mxu0 %v3632
  %4016 = vmatprep.subr.mxu0 %v3635
  %4017 = vmatpush1.msra.mxu0 %v3634
  %4018 = vmatprep.subr.mxu0 %v3637
  %4019 = vmatpush1.msra.mxu0 %v3636
  %4020 = vmatprep.subr.mxu0 %v3639
  %4021 = vmatpush1.msra.mxu0 %v3638
  %4022 = vmatprep.subr.mxu0 %v3641
  %4023 = vmatpush1.msra.mxu0 %v3640
  %4024 = vmatprep.subr.mxu0 %v3643
  %4025 = vmatpush1.msra.mxu0 %v3642
  %4026 = vmatprep.subr.mxu0 %v3645
  %4027 = vmatpush1.msra.mxu0 %v3644
  %4028 = vmatprep.subr.mxu0 %v3647
  %4029 = vmatpush1.msra.mxu0 %v3646
  %4030 = vmatprep.subr.mxu0 %v3649
  %4031 = vmatpush1.msra.mxu0 %v3648
  %4032 = vmatprep.subr.mxu0 %v3651
  %4033 = vmatpush1.msra.mxu0 %v3650
  %4034 = vmatprep.subr.mxu0 %v3653
  %4035 = vmatpush1.msra.mxu0 %v3652
  %4036 = vmatprep.subr.mxu0 %v3655
  %4037 = vmatpush1.msra.mxu0 %v3654
  %4038 = vmatprep.subr.mxu0 %v3657
  %4039 = vmatpush1.msra.mxu0 %v3656
  %4040 = vmatprep.subr.mxu0 %v3659
  %4041 = vmatpush1.msra.mxu0 %v3658
  %4042 = vmatprep.subr.mxu0 %v3661
  %4043 = vmatpush1.msra.mxu0 %v3660
  %4044 = vmatprep.subr.mxu0 %v3663
  %4045 = vmatpush1.msra.mxu0 %v3662
  %4046 = vmatprep.subr.mxu0 %v3665
  %4047 = vmatpush1.msra.mxu0 %v3664
  %4048 = vmatprep.subr.mxu0 %v3667
  %4049 = vmatpush1.msra.mxu0 %v3666
  %4050 = vmatprep.subr.mxu0 %v3669
  %4051 = vmatpush1.msra.mxu0 %v3668
  %4052 = vmatprep.subr.mxu0 %v3671
  %4053 = vmatpush1.msra.mxu0 %v3670
  %4054 = vmatprep.subr.mxu0 %v3673
  %4055 = vmatpush1.msra.mxu0 %v3672
  %4056 = vmatprep.subr.mxu0 %v3675
  %4057 = vmatpush1.msra.mxu0 %v3674
  %4058 = vmatprep.subr.mxu0 %v3677
  %4059 = vmatpush1.msra.mxu0 %v3676
  %4060 = vmatprep.subr.mxu0 %v3679
  %4061 = vmatpush1.msra.mxu0 %v3678
  %4062 = vmatprep.subr.mxu0 %v3681
  %4063 = vmatpush1.msra.mxu0 %v3680
  %4064 = vmatprep.subr.mxu0 %v3683
  %4065 = vmatpush1.msra.mxu0 %v3682
  %4066 = vmatprep.subr.mxu0 %v3685
  %4067 = vmatpush1.msra.mxu0 %v3684
  %4068 = vmatprep.subr.mxu0 %v3687
  %4069 = vmatpush1.msra.mxu0 %v3686
  %4070 = vmatprep.mubr.f32.mxu0 %v3899
  %4071 = vmatmul.mubr.f32.gmra.mrb[0].mxu0 %v3897
  %v4072 = vpop.f32.mrb[0].mxu0
  %v4073 = vadd.f32 %v4002, %v4072
  %v4074 = vpop.f32.mrb[0].mxu0
  %v4075 = vadd.f32 %v4004, %v4074
  %4076 = vdwg.mxu0
  %4077 = vmatprep.subr.mxu0 %v3689
  %4078 = vmatpush1.msra.mxu0 %v3688
  %4079 = vmatprep.subr.mxu0 %v3691
  %4080 = vmatpush1.msra.mxu0 %v3690
  %4081 = vmatprep.subr.mxu0 %v3693
  %4082 = vmatpush1.msra.mxu0 %v3692
  %4083 = vmatprep.subr.mxu0 %v3695
  %4084 = vmatpush1.msra.mxu0 %v3694
  %4085 = vmatprep.subr.mxu0 %v3697
  %4086 = vmatpush1.msra.mxu0 %v3696
  %4087 = vmatprep.subr.mxu0 %v3699
  %4088 = vmatpush1.msra.mxu0 %v3698
  %4089 = vmatprep.subr.mxu0 %v3701
  %4090 = vmatpush1.msra.mxu0 %v3700
  %4091 = vmatprep.subr.mxu0 %v3703
  %4092 = vmatpush1.msra.mxu0 %v3702
  %4093 = vmatprep.subr.mxu0 %v3705
  %4094 = vmatpush1.msra.mxu0 %v3704
  %4095 = vmatprep.subr.mxu0 %v3707
  %4096 = vmatpush1.msra.mxu0 %v3706
  %4097 = vmatprep.subr.mxu0 %v3709
  %4098 = vmatpush1.msra.mxu0 %v3708
  %4099 = vmatprep.subr.mxu0 %v3711
  %4100 = vmatpush1.msra.mxu0 %v3710
  %4101 = vmatprep.subr.mxu0 %v3713
  %4102 = vmatpush1.msra.mxu0 %v3712
  %4103 = vmatprep.subr.mxu0 %v3715
  %4104 = vmatpush1.msra.mxu0 %v3714
  %4105 = vmatprep.subr.mxu0 %v3717
  %4106 = vmatpush1.msra.mxu0 %v3716
  %4107 = vmatprep.subr.mxu0 %v3719
  %4108 = vmatpush1.msra.mxu0 %v3718
  %4109 = vmatprep.subr.mxu0 %v3721
  %4110 = vmatpush1.msra.mxu0 %v3720
  %4111 = vmatprep.subr.mxu0 %v3723
  %4112 = vmatpush1.msra.mxu0 %v3722
  %4113 = vmatprep.subr.mxu0 %v3725
  %4114 = vmatpush1.msra.mxu0 %v3724
  %4115 = vmatprep.subr.mxu0 %v3727
  %4116 = vmatpush1.msra.mxu0 %v3726
  %4117 = vmatprep.subr.mxu0 %v3729
  %4118 = vmatpush1.msra.mxu0 %v3728
  %4119 = vmatprep.subr.mxu0 %v3731
  %4120 = vmatpush1.msra.mxu0 %v3730
  %4121 = vmatprep.subr.mxu0 %v3733
  %4122 = vmatpush1.msra.mxu0 %v3732
  %4123 = vmatprep.subr.mxu0 %v3735
  %4124 = vmatpush1.msra.mxu0 %v3734
  %4125 = vmatprep.subr.mxu0 %v3737
  %4126 = vmatpush1.msra.mxu0 %v3736
  %4127 = vmatprep.subr.mxu0 %v3739
  %4128 = vmatpush1.msra.mxu0 %v3738
  %4129 = vmatprep.subr.mxu0 %v3741
  %4130 = vmatpush1.msra.mxu0 %v3740
  %4131 = vmatprep.subr.mxu0 %v3743
  %4132 = vmatpush1.msra.mxu0 %v3742
  %4133 = vmatprep.subr.mxu0 %v3745
  %4134 = vmatpush1.msra.mxu0 %v3744
  %4135 = vmatprep.subr.mxu0 %v3747
  %4136 = vmatpush1.msra.mxu0 %v3746
  %4137 = vmatprep.subr.mxu0 %v3749
  %4138 = vmatpush1.msra.mxu0 %v3748
  %4139 = vmatprep.subr.mxu0 %v3751
  %4140 = vmatpush1.msra.mxu0 %v3750
  %4141 = vmatprep.mubr.f32.mxu0 %v3915
  %4142 = vmatmul.mubr.f32.gmra.mrb[0].mxu0 %v3907
  %v4143 = vpop.f32.mrb[0].mxu0
  %v4144 = vadd.f32 %v4073, %v4143
  %v4145 = vpop.f32.mrb[0].mxu0
  %v4146 = vadd.f32 %v4075, %v4145
  %4147 = vdwg.mxu0
  %4148 = vmatprep.subr.mxu0 %v3753
  %4149 = vmatpush1.msra.mxu0 %v3752
  %4150 = vmatprep.subr.mxu0 %v3755
  %4151 = vmatpush1.msra.mxu0 %v3754
  %4152 = vmatprep.subr.mxu0 %v3757
  %4153 = vmatpush1.msra.mxu0 %v3756
  %4154 = vmatprep.subr.mxu0 %v3759
  %4155 = vmatpush1.msra.mxu0 %v3758
  %4156 = vmatprep.subr.mxu0 %v3761
  %4157 = vmatpush1.msra.mxu0 %v3760
  %4158 = vmatprep.subr.mxu0 %v3763
  %4159 = vmatpush1.msra.mxu0 %v3762
  %4160 = vmatprep.subr.mxu0 %v3765
  %4161 = vmatpush1.msra.mxu0 %v3764
  %4162 = vmatprep.subr.mxu0 %v3767
  %4163 = vmatpush1.msra.mxu0 %v3766
  %4164 = vmatprep.subr.mxu0 %v3769
  %4165 = vmatpush1.msra.mxu0 %v3768
  %4166 = vmatprep.subr.mxu0 %v3771
  %4167 = vmatpush1.msra.mxu0 %v3770
  %4168 = vmatprep.subr.mxu0 %v3773
  %4169 = vmatpush1.msra.mxu0 %v3772
  %4170 = vmatprep.subr.mxu0 %v3775
  %4171 = vmatpush1.msra.mxu0 %v3774
  %4172 = vmatprep.subr.mxu0 %v3777
  %4173 = vmatpush1.msra.mxu0 %v3776
  %4174 = vmatprep.subr.mxu0 %v3779
  %4175 = vmatpush1.msra.mxu0 %v3778
  %4176 = vmatprep.subr.mxu0 %v3781
  %4177 = vmatpush1.msra.mxu0 %v3780
  %4178 = vmatprep.subr.mxu0 %v3783
  %4179 = vmatpush1.msra.mxu0 %v3782
  %4180 = vmatprep.subr.mxu0 %v3785
  %4181 = vmatpush1.msra.mxu0 %v3784
  %4182 = vmatprep.subr.mxu0 %v3787
  %4183 = vmatpush1.msra.mxu0 %v3786
  %4184 = vmatprep.subr.mxu0 %v3789
  %4185 = vmatpush1.msra.mxu0 %v3788
  %4186 = vmatprep.subr.mxu0 %v3791
  %4187 = vmatpush1.msra.mxu0 %v3790
  %4188 = vmatprep.subr.mxu0 %v3793
  %4189 = vmatpush1.msra.mxu0 %v3792
  %4190 = vmatprep.subr.mxu0 %v3795
  %4191 = vmatpush1.msra.mxu0 %v3794
  %4192 = vmatprep.subr.mxu0 %v3797
  %4193 = vmatpush1.msra.mxu0 %v3796
  %4194 = vmatprep.subr.mxu0 %v3799
  %4195 = vmatpush1.msra.mxu0 %v3798
  %4196 = vmatprep.subr.mxu0 %v3801
  %4197 = vmatpush1.msra.mxu0 %v3800
  %4198 = vmatprep.subr.mxu0 %v3803
  %4199 = vmatpush1.msra.mxu0 %v3802
  %4200 = vmatprep.subr.mxu0 %v3805
  %4201 = vmatpush1.msra.mxu0 %v3804
  %4202 = vmatprep.subr.mxu0 %v3807
  %4203 = vmatpush1.msra.mxu0 %v3806
  %4204 = vmatprep.subr.mxu0 %v3809
  %4205 = vmatpush1.msra.mxu0 %v3808
  %4206 = vmatprep.subr.mxu0 %v3811
  %4207 = vmatpush1.msra.mxu0 %v3810
  %4208 = vmatprep.subr.mxu0 %v3813
  %4209 = vmatpush1.msra.mxu0 %v3812
  %4210 = vmatprep.subr.mxu0 %v3815
  %4211 = vmatpush1.msra.mxu0 %v3814
  %4212 = vmatprep.mubr.f32.mxu0 %v3916
  %4213 = vmatmul.mubr.f32.gmra.mrb[0].mxu0 %v3914
  %v4214 = vpop.f32.mrb[0].mxu0
  %v4215 = vadd.f32 %v4144, %v4214
  %v4216 = vpop.f32.mrb[0].mxu0
  %v4217 = vadd.f32 %v4146, %v4216
  %4218 = vdwg.mxu0
  %4219 = vmatprep.subr.mxu0 %v3817
  %4220 = vmatpush1.msra.mxu0 %v3816
  %4221 = vmatprep.subr.mxu0 %v3819
  %4222 = vmatpush1.msra.mxu0 %v3818
  %4223 = vmatprep.subr.mxu0 %v3821
  %4224 = vmatpush1.msra.mxu0 %v3820
  %4225 = vmatprep.subr.mxu0 %v3823
  %4226 = vmatpush1.msra.mxu0 %v3822
  %4227 = vmatprep.subr.mxu0 %v3825
  %4228 = vmatpush1.msra.mxu0 %v3824
  %4229 = vmatprep.subr.mxu0 %v3827
  %4230 = vmatpush1.msra.mxu0 %v3826
  %4231 = vmatprep.subr.mxu0 %v3829
  %4232 = vmatpush1.msra.mxu0 %v3828
  %4233 = vmatprep.subr.mxu0 %v3831
  %4234 = vmatpush1.msra.mxu0 %v3830
  %4235 = vmatprep.subr.mxu0 %v3833
  %4236 = vmatpush1.msra.mxu0 %v3832
  %4237 = vmatprep.subr.mxu0 %v3835
  %4238 = vmatpush1.msra.mxu0 %v3834
  %4239 = vmatprep.subr.mxu0 %v3837
  %4240 = vmatpush1.msra.mxu0 %v3836
  %4241 = vmatprep.subr.mxu0 %v3839
  %4242 = vmatpush1.msra.mxu0 %v3838
  %4243 = vmatprep.subr.mxu0 %v3841
  %4244 = vmatpush1.msra.mxu0 %v3840
  %4245 = vmatprep.subr.mxu0 %v3843
  %4246 = vmatpush1.msra.mxu0 %v3842
  %4247 = vmatprep.subr.mxu0 %v3845
  %4248 = vmatpush1.msra.mxu0 %v3844
  %4249 = vmatprep.subr.mxu0 %v3847
  %4250 = vmatpush1.msra.mxu0 %v3846
  %4251 = vmatprep.subr.mxu0 %v3849
  %4252 = vmatpush1.msra.mxu0 %v3848
  %4253 = vmatprep.subr.mxu0 %v3851
  %4254 = vmatpush1.msra.mxu0 %v3850
  %4255 = vmatprep.subr.mxu0 %v3853
  %4256 = vmatpush1.msra.mxu0 %v3852
  %4257 = vmatprep.subr.mxu0 %v3855
  %4258 = vmatpush1.msra.mxu0 %v3854
  %4259 = vmatprep.subr.mxu0 %v3857
  %4260 = vmatpush1.msra.mxu0 %v3856
  %4261 = vmatprep.subr.mxu0 %v3859
  %4262 = vmatpush1.msra.mxu0 %v3858
  %4263 = vmatprep.subr.mxu0 %v3861
  %4264 = vmatpush1.msra.mxu0 %v3860
  %4265 = vmatprep.subr.mxu0 %v3863
  %4266 = vmatpush1.msra.mxu0 %v3862
  %4267 = vmatprep.subr.mxu0 %v3865
  %4268 = vmatpush1.msra.mxu0 %v3864
  %4269 = vmatprep.subr.mxu0 %v3867
  %4270 = vmatpush1.msra.mxu0 %v3866
  %4271 = vmatprep.subr.mxu0 %v3869
  %4272 = vmatpush1.msra.mxu0 %v3868
  %4273 = vmatprep.subr.mxu0 %v3871
  %4274 = vmatpush1.msra.mxu0 %v3870
  %4275 = vmatprep.subr.mxu0 %v3873
  %4276 = vmatpush1.msra.mxu0 %v3872
  %4277 = vmatprep.subr.mxu0 %v3875
  %4278 = vmatpush1.msra.mxu0 %v3874
  %4279 = vmatprep.subr.mxu0 %v3877
  %4280 = vmatpush1.msra.mxu0 %v3876
  %4281 = vmatprep.subr.mxu0 %v3879
  %4282 = vmatpush1.msra.mxu0 %v3878
  %4283 = vmatprep.mubr.f32.mxu0 %v3924
  %4284 = vmatmul.mubr.f32.gmra.mrb[0].mxu0 %v3923
  %v4285 = vpop.f32.mrb[0].mxu0
  %v4286 = vadd.f32 %v4215, %v4285
  %v4287 = vpop.f32.mrb[0].mxu0
  %v4288 = vadd.f32 %v4217, %v4287
  %4289 = vdwg.mxu0
  %v4293 = vcombine.high %v1643, %v1643
  %v4295 = vunpack.c.l.s4 1983009808
  %v4296 = vunpack.c.0.s8 %v4295
  %v4297 = vlaneseq
  %v4298 = vshrl.u32 %v4297, 7
  %v4299 = vsub.s32 %v4296, %v4298
  %v4300 = vrot.slane %v1643, %v4299
  %v4302 = vunpack.c.l.s4 1983009808
  %v4303 = vunpack.c.0.s8 %v4302
  %v4304 = vlaneseq
  %v4305 = vshrl.u32 %v4304, 7
  %v4306 = vsub.s32 %v4303, %v4305
  %v4307 = vrot.slane %v4293, %v4306
  %v4308 = vcombine.high %v4300, %v4300
  %v4309 = vcombine.high %v4307, %v4307
  %v4310 = vcombine.high %v1644, %v1644
  %v4312 = vunpack.c.l.s4 1983009808
  %v4313 = vunpack.c.0.s8 %v4312
  %v4314 = vlaneseq
  %v4315 = vshrl.u32 %v4314, 7
  %v4316 = vsub.s32 %v4313, %v4315
  %v4317 = vrot.slane %v1644, %v4316
  %v4319 = vunpack.c.l.s4 1983009808
  %v4320 = vunpack.c.0.s8 %v4319
  %v4321 = vlaneseq
  %v4322 = vshrl.u32 %v4321, 7
  %v4323 = vsub.s32 %v4320, %v4322
  %v4324 = vrot.slane %v4310, %v4323
  %v4325 = vcombine.high %v4317, %v4317
  %v4326 = vcombine.high %v4324, %v4324
  %v4328 = vunpack.c.l.s4 1983009808
  %v4329 = vunpack.c.0.s8 %v4328
  %v4330 = vlaneseq
  %v4331 = vshrl.u32 %v4330, 7
  %v4332 = vsub.s32 %v4329, %v4331
  %v4333 = vrot.slane %v1645, %v4332
  %v4334 = vcombine.high %v4333, %v4333
  %4345 = vmatprep.subr.mxu0 %v3241
  %4346 = vmatpush1.msra.mxu0 %v3240
  %4347 = vmatprep.subr.mxu0 %v3243
  %4348 = vmatpush1.msra.mxu0 %v3242
  %4349 = vmatprep.subr.mxu0 %v3245
  %4350 = vmatpush1.msra.mxu0 %v3244
  %4351 = vmatprep.subr.mxu0 %v3247
  %4352 = vmatpush1.msra.mxu0 %v3246
  %4353 = vmatprep.subr.mxu0 %v3249
  %4354 = vmatpush1.msra.mxu0 %v3248
  %4355 = vmatprep.subr.mxu0 %v3251
  %4356 = vmatpush1.msra.mxu0 %v3250
  %4357 = vmatprep.subr.mxu0 %v3253
  %4358 = vmatpush1.msra.mxu0 %v3252
  %4359 = vmatprep.subr.mxu0 %v3255
  %4360 = vmatpush1.msra.mxu0 %v3254
  %4361 = vmatprep.subr.mxu0 %v3257
  %4362 = vmatpush1.msra.mxu0 %v3256
  %4363 = vmatprep.subr.mxu0 %v3259
  %4364 = vmatpush1.msra.mxu0 %v3258
  %4365 = vmatprep.subr.mxu0 %v3261
  %4366 = vmatpush1.msra.mxu0 %v3260
  %4367 = vmatprep.subr.mxu0 %v3263
  %4368 = vmatpush1.msra.mxu0 %v3262
  %4369 = vmatprep.subr.mxu0 %v3265
  %4370 = vmatpush1.msra.mxu0 %v3264
  %4371 = vmatprep.subr.mxu0 %v3267
  %4372 = vmatpush1.msra.mxu0 %v3266
  %4373 = vmatprep.subr.mxu0 %v3269
  %4374 = vmatpush1.msra.mxu0 %v3268
  %4375 = vmatprep.subr.mxu0 %v3271
  %4376 = vmatpush1.msra.mxu0 %v3270
  %4377 = vmatprep.subr.mxu0 %v3273
  %4378 = vmatpush1.msra.mxu0 %v3272
  %4379 = vmatprep.subr.mxu0 %v3275
  %4380 = vmatpush1.msra.mxu0 %v3274
  %4381 = vmatprep.subr.mxu0 %v3277
  %4382 = vmatpush1.msra.mxu0 %v3276
  %4383 = vmatprep.subr.mxu0 %v3279
  %4384 = vmatpush1.msra.mxu0 %v3278
  %4385 = vmatprep.subr.mxu0 %v3281
  %4386 = vmatpush1.msra.mxu0 %v3280
  %4387 = vmatprep.subr.mxu0 %v3283
  %4388 = vmatpush1.msra.mxu0 %v3282
  %4389 = vmatprep.subr.mxu0 %v3285
  %4390 = vmatpush1.msra.mxu0 %v3284
  %4391 = vmatprep.subr.mxu0 %v3287
  %4392 = vmatpush1.msra.mxu0 %v3286
  %4393 = vmatprep.subr.mxu0 %v3289
  %4394 = vmatpush1.msra.mxu0 %v3288
  %4395 = vmatprep.subr.mxu0 %v3291
  %4396 = vmatpush1.msra.mxu0 %v3290
  %4397 = vmatprep.subr.mxu0 %v3293
  %4398 = vmatpush1.msra.mxu0 %v3292
  %4399 = vmatprep.subr.mxu0 %v3295
  %4400 = vmatpush1.msra.mxu0 %v3294
  %4401 = vmatprep.subr.mxu0 %v3297
  %4402 = vmatpush1.msra.mxu0 %v3296
  %4403 = vmatprep.subr.mxu0 %v3299
  %4404 = vmatpush1.msra.mxu0 %v3298
  %4405 = vmatprep.subr.mxu0 %v3301
  %4406 = vmatpush1.msra.mxu0 %v3300
  %4407 = vmatprep.subr.mxu0 %v3303
  %4408 = vmatpush1.msra.mxu0 %v3302
  %4409 = vmatprep.mubr.f32.mxu0 %v4308
  %4410 = vmatmul.mubr.f32.gmra.mrb[0].mxu0 %v4300
  %v4411 = vpop.f32.mrb[0].mxu0
  %v4412 = vadd.f32 %v4286, %v4411
  %v4413 = vpop.f32.mrb[0].mxu0
  %v4414 = vadd.f32 %v4288, %v4413
  %4415 = vdwg.mxu0
  %4416 = vmatprep.subr.mxu0 %v3305
  %4417 = vmatpush1.msra.mxu0 %v3304
  %4418 = vmatprep.subr.mxu0 %v3307
  %4419 = vmatpush1.msra.mxu0 %v3306
  %4420 = vmatprep.subr.mxu0 %v3309
  %4421 = vmatpush1.msra.mxu0 %v3308
  %4422 = vmatprep.subr.mxu0 %v3311
  %4423 = vmatpush1.msra.mxu0 %v3310
  %4424 = vmatprep.subr.mxu0 %v3313
  %4425 = vmatpush1.msra.mxu0 %v3312
  %4426 = vmatprep.subr.mxu0 %v3315
  %4427 = vmatpush1.msra.mxu0 %v3314
  %4428 = vmatprep.subr.mxu0 %v3317
  %4429 = vmatpush1.msra.mxu0 %v3316
  %4430 = vmatprep.subr.mxu0 %v3319
  %4431 = vmatpush1.msra.mxu0 %v3318
  %4432 = vmatprep.subr.mxu0 %v3321
  %4433 = vmatpush1.msra.mxu0 %v3320
  %4434 = vmatprep.subr.mxu0 %v3323
  %4435 = vmatpush1.msra.mxu0 %v3322
  %4436 = vmatprep.subr.mxu0 %v3325
  %4437 = vmatpush1.msra.mxu0 %v3324
  %4438 = vmatprep.subr.mxu0 %v3327
  %4439 = vmatpush1.msra.mxu0 %v3326
  %4440 = vmatprep.subr.mxu0 %v3329
  %4441 = vmatpush1.msra.mxu0 %v3328
  %4442 = vmatprep.subr.mxu0 %v3331
  %4443 = vmatpush1.msra.mxu0 %v3330
  %4444 = vmatprep.subr.mxu0 %v3333
  %4445 = vmatpush1.msra.mxu0 %v3332
  %4446 = vmatprep.subr.mxu0 %v3335
  %4447 = vmatpush1.msra.mxu0 %v3334
  %4448 = vmatprep.subr.mxu0 %v3337
  %4449 = vmatpush1.msra.mxu0 %v3336
  %4450 = vmatprep.subr.mxu0 %v3339
  %4451 = vmatpush1.msra.mxu0 %v3338
  %4452 = vmatprep.subr.mxu0 %v3341
  %4453 = vmatpush1.msra.mxu0 %v3340
  %4454 = vmatprep.subr.mxu0 %v3343
  %4455 = vmatpush1.msra.mxu0 %v3342
  %4456 = vmatprep.subr.mxu0 %v3345
  %4457 = vmatpush1.msra.mxu0 %v3344
  %4458 = vmatprep.subr.mxu0 %v3347
  %4459 = vmatpush1.msra.mxu0 %v3346
  %4460 = vmatprep.subr.mxu0 %v3349
  %4461 = vmatpush1.msra.mxu0 %v3348
  %4462 = vmatprep.subr.mxu0 %v3351
  %4463 = vmatpush1.msra.mxu0 %v3350
  %4464 = vmatprep.subr.mxu0 %v3353
  %4465 = vmatpush1.msra.mxu0 %v3352
  %4466 = vmatprep.subr.mxu0 %v3355
  %4467 = vmatpush1.msra.mxu0 %v3354
  %4468 = vmatprep.subr.mxu0 %v3357
  %4469 = vmatpush1.msra.mxu0 %v3356
  %4470 = vmatprep.subr.mxu0 %v3359
  %4471 = vmatpush1.msra.mxu0 %v3358
  %4472 = vmatprep.subr.mxu0 %v3361
  %4473 = vmatpush1.msra.mxu0 %v3360
  %4474 = vmatprep.subr.mxu0 %v3363
  %4475 = vmatpush1.msra.mxu0 %v3362
  %4476 = vmatprep.subr.mxu0 %v3365
  %4477 = vmatpush1.msra.mxu0 %v3364
  %4478 = vmatprep.subr.mxu0 %v3367
  %4479 = vmatpush1.msra.mxu0 %v3366
  %4480 = vmatprep.mubr.f32.mxu0 %v4309
  %4481 = vmatmul.mubr.f32.gmra.mrb[0].mxu0 %v4307
  %v4482 = vpop.f32.mrb[0].mxu0
  %v4483 = vadd.f32 %v4412, %v4482
  %v4484 = vpop.f32.mrb[0].mxu0
  %v4485 = vadd.f32 %v4414, %v4484
  %4486 = vdwg.mxu0
  %4487 = vmatprep.subr.mxu0 %v3369
  %4488 = vmatpush1.msra.mxu0 %v3368
  %4489 = vmatprep.subr.mxu0 %v3371
  %4490 = vmatpush1.msra.mxu0 %v3370
  %4491 = vmatprep.subr.mxu0 %v3373
  %4492 = vmatpush1.msra.mxu0 %v3372
  %4493 = vmatprep.subr.mxu0 %v3375
  %4494 = vmatpush1.msra.mxu0 %v3374
  %4495 = vmatprep.subr.mxu0 %v3377
  %4496 = vmatpush1.msra.mxu0 %v3376
  %4497 = vmatprep.subr.mxu0 %v3379
  %4498 = vmatpush1.msra.mxu0 %v3378
  %4499 = vmatprep.subr.mxu0 %v3381
  %4500 = vmatpush1.msra.mxu0 %v3380
  %4501 = vmatprep.subr.mxu0 %v3383
  %4502 = vmatpush1.msra.mxu0 %v3382
  %4503 = vmatprep.subr.mxu0 %v3385
  %4504 = vmatpush1.msra.mxu0 %v3384
  %4505 = vmatprep.subr.mxu0 %v3387
  %4506 = vmatpush1.msra.mxu0 %v3386
  %4507 = vmatprep.subr.mxu0 %v3389
  %4508 = vmatpush1.msra.mxu0 %v3388
  %4509 = vmatprep.subr.mxu0 %v3391
  %4510 = vmatpush1.msra.mxu0 %v3390
  %4511 = vmatprep.subr.mxu0 %v3393
  %4512 = vmatpush1.msra.mxu0 %v3392
  %4513 = vmatprep.subr.mxu0 %v3395
  %4514 = vmatpush1.msra.mxu0 %v3394
  %4515 = vmatprep.subr.mxu0 %v3397
  %4516 = vmatpush1.msra.mxu0 %v3396
  %4517 = vmatprep.subr.mxu0 %v3399
  %4518 = vmatpush1.msra.mxu0 %v3398
  %4519 = vmatprep.subr.mxu0 %v3401
  %4520 = vmatpush1.msra.mxu0 %v3400
  %4521 = vmatprep.subr.mxu0 %v3403
  %4522 = vmatpush1.msra.mxu0 %v3402
  %4523 = vmatprep.subr.mxu0 %v3405
  %4524 = vmatpush1.msra.mxu0 %v3404
  %4525 = vmatprep.subr.mxu0 %v3407
  %4526 = vmatpush1.msra.mxu0 %v3406
  %4527 = vmatprep.subr.mxu0 %v3409
  %4528 = vmatpush1.msra.mxu0 %v3408
  %4529 = vmatprep.subr.mxu0 %v3411
  %4530 = vmatpush1.msra.mxu0 %v3410
  %4531 = vmatprep.subr.mxu0 %v3413
  %4532 = vmatpush1.msra.mxu0 %v3412
  %4533 = vmatprep.subr.mxu0 %v3415
  %4534 = vmatpush1.msra.mxu0 %v3414
  %4535 = vmatprep.subr.mxu0 %v3417
  %4536 = vmatpush1.msra.mxu0 %v3416
  %4537 = vmatprep.subr.mxu0 %v3419
  %4538 = vmatpush1.msra.mxu0 %v3418
  %4539 = vmatprep.subr.mxu0 %v3421
  %4540 = vmatpush1.msra.mxu0 %v3420
  %4541 = vmatprep.subr.mxu0 %v3423
  %4542 = vmatpush1.msra.mxu0 %v3422
  %4543 = vmatprep.subr.mxu0 %v3425
  %4544 = vmatpush1.msra.mxu0 %v3424
  %4545 = vmatprep.subr.mxu0 %v3427
  %4546 = vmatpush1.msra.mxu0 %v3426
  %4547 = vmatprep.subr.mxu0 %v3429
  %4548 = vmatpush1.msra.mxu0 %v3428
  %4549 = vmatprep.subr.mxu0 %v3431
  %4550 = vmatpush1.msra.mxu0 %v3430
  %4551 = vmatprep.mubr.f32.mxu0 %v4325
  %4552 = vmatmul.mubr.f32.gmra.mrb[0].mxu0 %v4317
  %v4553 = vpop.f32.mrb[0].mxu0
  %v4554 = vadd.f32 %v4483, %v4553
  %v4555 = vpop.f32.mrb[0].mxu0
  %v4556 = vadd.f32 %v4485, %v4555
  %4557 = vdwg.mxu0
  %4558 = vmatprep.subr.mxu0 %v3433
  %4559 = vmatpush1.msra.mxu0 %v3432
  %4560 = vmatprep.subr.mxu0 %v3435
  %4561 = vmatpush1.msra.mxu0 %v3434
  %4562 = vmatprep.subr.mxu0 %v3437
  %4563 = vmatpush1.msra.mxu0 %v3436
  %4564 = vmatprep.subr.mxu0 %v3439
  %4565 = vmatpush1.msra.mxu0 %v3438
  %4566 = vmatprep.subr.mxu0 %v3441
  %4567 = vmatpush1.msra.mxu0 %v3440
  %4568 = vmatprep.subr.mxu0 %v3443
  %4569 = vmatpush1.msra.mxu0 %v3442
  %4570 = vmatprep.subr.mxu0 %v3445
  %4571 = vmatpush1.msra.mxu0 %v3444
  %4572 = vmatprep.subr.mxu0 %v3447
  %4573 = vmatpush1.msra.mxu0 %v3446
  %4574 = vmatprep.subr.mxu0 %v3449
  %4575 = vmatpush1.msra.mxu0 %v3448
  %4576 = vmatprep.subr.mxu0 %v3451
  %4577 = vmatpush1.msra.mxu0 %v3450
  %4578 = vmatprep.subr.mxu0 %v3453
  %4579 = vmatpush1.msra.mxu0 %v3452
  %4580 = vmatprep.subr.mxu0 %v3455
  %4581 = vmatpush1.msra.mxu0 %v3454
  %4582 = vmatprep.subr.mxu0 %v3457
  %4583 = vmatpush1.msra.mxu0 %v3456
  %4584 = vmatprep.subr.mxu0 %v3459
  %4585 = vmatpush1.msra.mxu0 %v3458
  %4586 = vmatprep.subr.mxu0 %v3461
  %4587 = vmatpush1.msra.mxu0 %v3460
  %4588 = vmatprep.subr.mxu0 %v3463
  %4589 = vmatpush1.msra.mxu0 %v3462
  %4590 = vmatprep.subr.mxu0 %v3465
  %4591 = vmatpush1.msra.mxu0 %v3464
  %4592 = vmatprep.subr.mxu0 %v3467
  %4593 = vmatpush1.msra.mxu0 %v3466
  %4594 = vmatprep.subr.mxu0 %v3469
  %4595 = vmatpush1.msra.mxu0 %v3468
  %4596 = vmatprep.subr.mxu0 %v3471
  %4597 = vmatpush1.msra.mxu0 %v3470
  %4598 = vmatprep.subr.mxu0 %v3473
  %4599 = vmatpush1.msra.mxu0 %v3472
  %4600 = vmatprep.subr.mxu0 %v3475
  %4601 = vmatpush1.msra.mxu0 %v3474
  %4602 = vmatprep.subr.mxu0 %v3477
  %4603 = vmatpush1.msra.mxu0 %v3476
  %4604 = vmatprep.subr.mxu0 %v3479
  %4605 = vmatpush1.msra.mxu0 %v3478
  %4606 = vmatprep.subr.mxu0 %v3481
  %4607 = vmatpush1.msra.mxu0 %v3480
  %4608 = vmatprep.subr.mxu0 %v3483
  %4609 = vmatpush1.msra.mxu0 %v3482
  %4610 = vmatprep.subr.mxu0 %v3485
  %4611 = vmatpush1.msra.mxu0 %v3484
  %4612 = vmatprep.subr.mxu0 %v3487
  %4613 = vmatpush1.msra.mxu0 %v3486
  %4614 = vmatprep.subr.mxu0 %v3489
  %4615 = vmatpush1.msra.mxu0 %v3488
  %4616 = vmatprep.subr.mxu0 %v3491
  %4617 = vmatpush1.msra.mxu0 %v3490
  %4618 = vmatprep.subr.mxu0 %v3493
  %4619 = vmatpush1.msra.mxu0 %v3492
  %4620 = vmatprep.subr.mxu0 %v3495
  %4621 = vmatpush1.msra.mxu0 %v3494
  %4622 = vmatprep.mubr.f32.mxu0 %v4326
  %4623 = vmatmul.mubr.f32.gmra.mrb[0].mxu0 %v4324
  %v4624 = vpop.f32.mrb[0].mxu0
  %v4625 = vadd.f32 %v4554, %v4624
  %v4626 = vpop.f32.mrb[0].mxu0
  %v4627 = vadd.f32 %v4556, %v4626
  %4628 = vdwg.mxu0
  %4629 = vmatprep.subr.mxu0 %v3497
  %4630 = vmatpush1.msra.mxu0 %v3496
  %4631 = vmatprep.subr.mxu0 %v3499
  %4632 = vmatpush1.msra.mxu0 %v3498
  %4633 = vmatprep.subr.mxu0 %v3501
  %4634 = vmatpush1.msra.mxu0 %v3500
  %4635 = vmatprep.subr.mxu0 %v3503
  %4636 = vmatpush1.msra.mxu0 %v3502
  %4637 = vmatprep.subr.mxu0 %v3505
  %4638 = vmatpush1.msra.mxu0 %v3504
  %4639 = vmatprep.subr.mxu0 %v3507
  %4640 = vmatpush1.msra.mxu0 %v3506
  %4641 = vmatprep.subr.mxu0 %v3509
  %4642 = vmatpush1.msra.mxu0 %v3508
  %4643 = vmatprep.subr.mxu0 %v3511
  %4644 = vmatpush1.msra.mxu0 %v3510
  %4645 = vmatprep.subr.mxu0 %v3513
  %4646 = vmatpush1.msra.mxu0 %v3512
  %4647 = vmatprep.subr.mxu0 %v3515
  %4648 = vmatpush1.msra.mxu0 %v3514
  %4649 = vmatprep.subr.mxu0 %v3517
  %4650 = vmatpush1.msra.mxu0 %v3516
  %4651 = vmatprep.subr.mxu0 %v3519
  %4652 = vmatpush1.msra.mxu0 %v3518
  %4653 = vmatprep.subr.mxu0 %v3521
  %4654 = vmatpush1.msra.mxu0 %v3520
  %4655 = vmatprep.subr.mxu0 %v3523
  %4656 = vmatpush1.msra.mxu0 %v3522
  %4657 = vmatprep.subr.mxu0 %v3525
  %4658 = vmatpush1.msra.mxu0 %v3524
  %4659 = vmatprep.subr.mxu0 %v3527
  %4660 = vmatpush1.msra.mxu0 %v3526
  %4661 = vmatprep.subr.mxu0 %v3529
  %4662 = vmatpush1.msra.mxu0 %v3528
  %4663 = vmatprep.subr.mxu0 %v3531
  %4664 = vmatpush1.msra.mxu0 %v3530
  %4665 = vmatprep.subr.mxu0 %v3533
  %4666 = vmatpush1.msra.mxu0 %v3532
  %4667 = vmatprep.subr.mxu0 %v3535
  %4668 = vmatpush1.msra.mxu0 %v3534
  %4669 = vmatprep.subr.mxu0 %v3537
  %4670 = vmatpush1.msra.mxu0 %v3536
  %4671 = vmatprep.subr.mxu0 %v3539
  %4672 = vmatpush1.msra.mxu0 %v3538
  %4673 = vmatprep.subr.mxu0 %v3541
  %4674 = vmatpush1.msra.mxu0 %v3540
  %4675 = vmatprep.subr.mxu0 %v3543
  %4676 = vmatpush1.msra.mxu0 %v3542
  %4677 = vmatprep.subr.mxu0 %v3545
  %4678 = vmatpush1.msra.mxu0 %v3544
  %4679 = vmatprep.subr.mxu0 %v3547
  %4680 = vmatpush1.msra.mxu0 %v3546
  %4681 = vmatprep.subr.mxu0 %v3549
  %4682 = vmatpush1.msra.mxu0 %v3548
  %4683 = vmatprep.subr.mxu0 %v3551
  %4684 = vmatpush1.msra.mxu0 %v3550
  %4685 = vmatprep.subr.mxu0 %v3553
  %4686 = vmatpush1.msra.mxu0 %v3552
  %4687 = vmatprep.subr.mxu0 %v3555
  %4688 = vmatpush1.msra.mxu0 %v3554
  %4689 = vmatprep.subr.mxu0 %v3557
  %4690 = vmatpush1.msra.mxu0 %v3556
  %4691 = vmatprep.subr.mxu0 %v3559
  %4692 = vmatpush1.msra.mxu0 %v3558
  %4693 = vmatprep.mubr.f32.mxu0 %v4334
  %4694 = vmatmul.mubr.f32.gmra.mrb[0].mxu0 %v4333
  %v4695 = vpop.f32.mrb[0].mxu0
  %v4696 = vadd.f32 %v4625, %v4695
  %v4697 = vpop.f32.mrb[0].mxu0
  %v4698 = vadd.f32 %v4627, %v4697
  %4699 = vdwg.mxu0
  %v4700 = vld [vmem:[%s12] sm:$0x3]
  %v4702 = vlaneseq
  %v4703 = vshrl.u32 %v4702, 7
  %v4704 = vsub.s32 0, %v4703
  %v4705 = vrot.slane %v4700, %v4704
  %v4706 = vlaneseq
  %v4707 = vshrl.u32 %v4706, 7
  %v4708 = vsub.s32 1, %v4707
  %v4709 = vrot.slane %v4700, %v4708
  %v4712 = vadd.f32 %v4696, %v4705
  %v4713 = vadd.f32 %v4698, %v4709
  %v4714 = vmax.f32 %v4712, 0.0
  %v4715 = vmax.f32 %v4713, 0.0
  %v4716 = vld [vmem:[%s13] sm:$0xff]
  %v4717 = vld [vmem:[%s13 + $0x8] sm:$0xff]
  %v4718 = vld [vmem:[%s13 + $0x10] sm:$0xff]
  %v4719 = vld [vmem:[%s13 + $0x18] sm:$0xff]
  %v4720 = vld [vmem:[%s13 + $0x20] sm:$0xff]
  %v4721 = vld [vmem:[%s13 + $0x28] sm:$0xff]
  %v4722 = vld [vmem:[%s13 + $0x30] sm:$0xff]
  %v4723 = vld [vmem:[%s13 + $0x38] sm:$0xff]
  %v4724 = vld [vmem:[%s13 + $0x40] sm:$0xff]
  %v4725 = vld [vmem:[%s13 + $0x48] sm:$0xff]
  %v4726 = vld [vmem:[%s13 + $0x50] sm:$0xff]
  %v4727 = vld [vmem:[%s13 + $0x58] sm:$0xff]
  %v4728 = vld [vmem:[%s13 + $0x60] sm:$0xff]
  %v4729 = vld [vmem:[%s13 + $0x68] sm:$0xff]
  %v4730 = vld [vmem:[%s13 + $0x70] sm:$0xff]
  %v4731 = vld [vmem:[%s13 + $0x78] sm:$0xff]
  %v4732 = vld [vmem:[%s13 + $0x80] sm:$0xff]
  %v4733 = vld [vmem:[%s13 + $0x88] sm:$0xff]
  %v4734 = vld [vmem:[%s13 + $0x90] sm:$0xff]
  %v4735 = vld [vmem:[%s13 + $0x98] sm:$0xff]
  %v4736 = vld [vmem:[%s13 + $0xa0] sm:$0xff]
  %v4737 = vld [vmem:[%s13 + $0xa8] sm:$0xff]
  %v4738 = vld [vmem:[%s13 + $0xb0] sm:$0xff]
  %v4739 = vld [vmem:[%s13 + $0xb8] sm:$0xff]
  %v4740 = vld [vmem:[%s13 + $0xc0] sm:$0xff]
  %v4741 = vld [vmem:[%s13 + $0xc8] sm:$0xff]
  %v4742 = vld [vmem:[%s13 + $0xd0] sm:$0xff]
  %v4743 = vld [vmem:[%s13 + $0xd8] sm:$0xff]
  %v4744 = vld [vmem:[%s13 + $0xe0] sm:$0xff]
  %v4745 = vld [vmem:[%s13 + $0xe8] sm:$0xff]
  %v4746 = vld [vmem:[%s13 + $0xf0] sm:$0xff]
  %v4747 = vld [vmem:[%s13 + $0xf8] sm:$0xff]
  %v4748 = vld [vmem:[#allocation2] sm:$0x1]
  %v4750 = vlaneseq
  %v4751 = vshrl.u32 %v4750, 7
  %v4752 = vsub.s32 0, %v4751
  %v4753 = vrot.slane %v4748, %v4752
  %4755 = vmatprep.subr.mxu0 0.0
  %4756 = vmatpush1.msra.mxu0 %v4716
  %4757 = vmatprep.subr.mxu0 0.0
  %4758 = vmatpush1.msra.mxu0 %v4717
  %4759 = vmatprep.subr.mxu0 0.0
  %4760 = vmatpush1.msra.mxu0 %v4718
  %4761 = vmatprep.subr.mxu0 0.0
  %4762 = vmatpush1.msra.mxu0 %v4719
  %4763 = vmatprep.subr.mxu0 0.0
  %4764 = vmatpush1.msra.mxu0 %v4720
  %4765 = vmatprep.subr.mxu0 0.0
  %4766 = vmatpush1.msra.mxu0 %v4721
  %4767 = vmatprep.subr.mxu0 0.0
  %4768 = vmatpush1.msra.mxu0 %v4722
  %4769 = vmatprep.subr.mxu0 0.0
  %4770 = vmatpush1.msra.mxu0 %v4723
  %4771 = vmatprep.subr.mxu0 0.0
  %4772 = vmatpush1.msra.mxu0 %v4724
  %4773 = vmatprep.subr.mxu0 0.0
  %4774 = vmatpush1.msra.mxu0 %v4725
  %4775 = vmatprep.subr.mxu0 0.0
  %4776 = vmatpush1.msra.mxu0 %v4726
  %4777 = vmatprep.subr.mxu0 0.0
  %4778 = vmatpush1.msra.mxu0 %v4727
  %4779 = vmatprep.subr.mxu0 0.0
  %4780 = vmatpush1.msra.mxu0 %v4728
  %4781 = vmatprep.subr.mxu0 0.0
  %4782 = vmatpush1.msra.mxu0 %v4729
  %4783 = vmatprep.subr.mxu0 0.0
  %4784 = vmatpush1.msra.mxu0 %v4730
  %4785 = vmatprep.subr.mxu0 0.0
  %4786 = vmatpush1.msra.mxu0 %v4731
  %4787 = vmatprep.subr.mxu0 0.0
  %4788 = vmatpush1.msra.mxu0 %v4732
  %4789 = vmatprep.subr.mxu0 0.0
  %4790 = vmatpush1.msra.mxu0 %v4733
  %4791 = vmatprep.subr.mxu0 0.0
  %4792 = vmatpush1.msra.mxu0 %v4734
  %4793 = vmatprep.subr.mxu0 0.0
  %4794 = vmatpush1.msra.mxu0 %v4735
  %4795 = vmatprep.subr.mxu0 0.0
  %4796 = vmatpush1.msra.mxu0 %v4736
  %4797 = vmatprep.subr.mxu0 0.0
  %4798 = vmatpush1.msra.mxu0 %v4737
  %4799 = vmatprep.subr.mxu0 0.0
  %4800 = vmatpush1.msra.mxu0 %v4738
  %4801 = vmatprep.subr.mxu0 0.0
  %4802 = vmatpush1.msra.mxu0 %v4739
  %4803 = vmatprep.subr.mxu0 0.0
  %4804 = vmatpush1.msra.mxu0 %v4740
  %4805 = vmatprep.subr.mxu0 0.0
  %4806 = vmatpush1.msra.mxu0 %v4741
  %4807 = vmatprep.subr.mxu0 0.0
  %4808 = vmatpush1.msra.mxu0 %v4742
  %4809 = vmatprep.subr.mxu0 0.0
  %4810 = vmatpush1.msra.mxu0 %v4743
  %4811 = vmatprep.subr.mxu0 0.0
  %4812 = vmatpush1.msra.mxu0 %v4744
  %4813 = vmatprep.subr.mxu0 0.0
  %4814 = vmatpush1.msra.mxu0 %v4745
  %4815 = vmatprep.subr.mxu0 0.0
  %4816 = vmatpush1.msra.mxu0 %v4746
  %4817 = vmatprep.subr.mxu0 0.0
  %4818 = vmatpush1.msra.mxu0 %v4747
  %4819 = vmatprep.mubr.f32.mxu0 %v4715
  %4820 = vmatmul.mubr.f32.gmra.mrb[0].mxu0 %v4714
  %v4821 = vpop.f32.mrb[0].mxu0
  %v4822 = vadd.f32 %v4753, %v4821
  %v4823 = vpop.f32.mrb[0].mxu0
  %4824 = vdwg.mxu0
  %v4825 = vxor.u32 %v4822, 2147483648
  %v4826 = vmul.f32 %v4825, 1.442695
  %v4827 = vpow.pop %v4826
  %v4828 = vadd.f32 %v4827, 1.0
  %v4829 = vrcp.pop %v4828
  %v4830 = vmul.f32 1.0, %v4829
  %vm4831 = vcmask 1024
  %4832 = vst.msk [vmem:[%s15] sm:$0x3] %vm4831, %v4830
  // Predicated region
  $region62: #{multi_branch_forward.5} parent=0 // pred_check
    _
  $region63: #{multi_branch_forward.5} parent=0 // pred_check_branch
    %4834 = sbr.rel (0) target = $region65
  $region64: #{multi_branch_forward.5} parent=0 // pred_region
    _
  $region65: #{multi_branch_forward.5} parent=0 // pred_fallthru
    _
  // Predicated region
  $region66: #{multi_branch_forward.5} parent=0 // pred_check
    _
  $region67: #{multi_branch_forward.5} parent=0 // pred_check_branch
    %4836 = sbr.rel (0) target = $region69
  $region68: #{multi_branch_forward.5} parent=0 // pred_region
    _
  $region69: #{multi_branch_forward.5} parent=0 // pred_fallthru
    _

</llo_original>
